<compile_context>
chip_gen: v5e
topology: v5e:2x2
jax: 0.10.0
libtpu: 0.0.40
codegen_flags: <defaults>
</compile_context>

<pallas_src>
import functools

import jax
import jax.numpy as jnp
from jax.experimental import pallas as pl
from jax.experimental.pallas import tpu as pltpu

BF16 = jnp.bfloat16
F32 = jnp.float32


# ---------------------------------------------------------------- generic fused kernel

def _mm(x, w, b):
    """1x1 conv as an MXU matmul: bf16 operands, f32 accumulate, f32 (BN-folded) bias."""
    return jnp.dot(x.astype(w.dtype), w, preferred_element_type=F32) + b


def _relu(x):
    return jnp.maximum(x, 0.0)


def _generic_kernel(*refs, n_in, n_w, n_out, fn):
    """refs = (*activation tiles, *(w, b) pairs, *output tiles).

    `fn(xs, wbs)` is a pure jnp closure chaining 1x1 convs / pointwise ops entirely
    in VMEM/registers and returning `n_out` (tp, cout_j) f32 tiles.
    """
    xs = [refs[i][...] for i in range(n_in)]
    wbs = [(refs[n_in + 2 * i][...], refs[n_in + 2 * i + 1][...]) for i in range(n_w)]
    outs = fn(xs, wbs)
    base = n_in + 2 * n_w
    for j in range(n_out):
        refs[base + j][...] = outs[j].astype(refs[base + j].dtype)


def _choose_tile(p, cap=1024):
    """Largest row tile that (a) divides P, (b) is a multiple of 8 (sublane rule),
    (c) leaves >=2 grid steps when possible.  Falls back to full extent for tiny P."""
    if p <= 16:
        return p
    limit = min(cap, max(8, (p // 2) // 8 * 8))
    for t in range(limit - limit % 8, 7, -8):
        if p % t == 0:
            return t
    return p


def fused(inputs, wparams, out_channels, fn, out_dtypes=None, tile_cap=1024):
    """Run a whole chain of 1x1 convs / pointwise ops as ONE pallas_call.

    inputs       : list of NHWC arrays sharing (N, H, W).
    wparams      : list of {"w": (cin, cout) bf16 (BN pre-folded), "b": (cout,) f32}.
    out_channels : list of per-output channel counts.
    fn(xs, wbs)  : jnp closure mapping loaded tiles -> list of output tiles.
    """
    n, h, w0, _ = inputs[0].shape
    p = n * h * w0
    tp = _choose_tile(p, tile_cap)
    n_in, n_w, n_out = len(inputs), len(wparams), len(out_channels)
    if out_dtypes is None:
        out_dtypes = [BF16] * n_out

    args, in_specs = [], []
    for a in inputs:
        c = a.shape[-1]
        args.append(a.reshape(p, c))
        in_specs.append(pl.BlockSpec((tp, c), lambda i: (i, 0)))
    for prm in wparams:
        cin, cout = prm["w"].shape
        args += [prm["w"], prm["b"].reshape(1, cout)]
        in_specs += [pl.BlockSpec((cin, cout), lambda i: (0, 0)),
                     pl.BlockSpec((1, cout), lambda i: (0, 0))]

    out_shape = tuple(jax.ShapeDtypeStruct((p, c), dt)
                      for c, dt in zip(out_channels, out_dtypes))
    out_specs = tuple(pl.BlockSpec((tp, c), lambda i: (i, 0)) for c in out_channels)

    outs = pl.pallas_call(
        functools.partial(_generic_kernel, n_in=n_in, n_w=n_w, n_out=n_out, fn=fn),
        out_shape=out_shape,
        grid=(p // tp,),
        in_specs=in_specs,
        out_specs=out_specs,
        compiler_params=pltpu.CompilerParams(dimension_semantics=("parallel",)),
    )(*args)
    if not isinstance(outs, (list, tuple)):
        outs = (outs,)
    return [o.reshape(n, h, w0, c) for o, c in zip(outs, out_channels)]


def upsample_nn(x, s):
    # Glue-level NN replication of *small, low-resolution* tensors only (1x1 convs
    # commute with NN upsampling, so all heavy work already ran at low resolution).
    if s == 1:
        return x
    return jnp.repeat(jnp.repeat(x, s, axis=1), s, axis=2)


# --------------------------------------------------------------------------- params

_SPECS = [
    ("bb0", 3, 512, True), ("bb1", 3, 320, True), ("bb2", 3, 128, True), ("bb3", 3, 64, True),
    ("decode", 512, 512, True),
    ("decode0", 512, 320, True),
    ("decode1", 320, 128, True),
    ("decode2", 128, 64, True),
    ("convformer0", 320, 320, True),
    ("convformer1", 128, 128, True),
    ("convformer2", 64, 64, True),
    ("conv1", 512, 128, False),
    ("conv2", 128, 128, False),
    ("conv_bn_act0", 320, 320, True),
    ("conv_bn_act1", 128, 128, True),
    ("conv_bn_act2", 64, 64, True),
    ("decode11", 128, 128, True),
    ("upscale_final", 128, 32, True),
    ("decode_final", 64, 32, True),
    ("conv_bn_act_final", 32, 32, True),
    ("conv_final", 32, 1, False),
]


def _init_conv(key, cin, cout, bn=True):
    k1, k2, k3, k4, k5 = jax.random.split(key, 5)
    w = jax.random.normal(k1, (cin, cout), F32) * (1.0 / jnp.sqrt(cin))
    conv_b = 0.05 * jax.random.normal(k2, (cout,), F32)
    if bn:
        gamma = 1.0 + 0.1 * jax.random.normal(k3, (cout,), F32)
        beta = 0.1 * jax.random.normal(k4, (cout,), F32)
        mean = 0.1 * jax.random.normal(k5, (cout,), F32)
        var = jnp.ones((cout,), F32)
        scale = gamma / jnp.sqrt(var + 1e-5)
        bias = beta + (conv_b - mean) * scale
    else:
        scale = jnp.ones((cout,), F32)
        bias = conv_b
    # BN scale folded straight into the bf16 weights; bias kept in f32.
    return {"w": (w * scale[None, :]).astype(BF16), "b": bias}


def init_params(key):
    keys = jax.random.split(key, len(_SPECS))
    return {name: _init_conv(k, cin, cout, bn)
            for k, (name, cin, cout, bn) in zip(keys, _SPECS)}


# ---------------------------------------------------------------------------- model

def backbone_stub(params, x_nchw):
    # TODO(synk): CAFormerS18 (pretrained keras backbone) is not translatable; replaced by a
    #             deterministic avg-pool + 1x1-projection stub, kept in plain XLA (Cin=3
    #             matmuls on tiny feature maps are pure overhead as pallas_calls).
    x = jnp.transpose(x_nchw, (0, 2, 3, 1)).astype(F32)   # -> NHWC
    n, h, w, c = x.shape
    feats = []
    for factor, name in zip((32, 16, 8, 4), ("bb0", "bb1", "bb2", "bb3")):
        pooled = x.reshape(n, h // factor, factor, w // factor, factor, c).mean(axis=(2, 4))
        f = jnp.dot(pooled.astype(BF16), params[name]["w"],
                    preferred_element_type=F32) + params[name]["b"]
        feats.append(f.astype(BF16))
    # [stack4: 512ch @H/32, stack3: 320ch @H/16, stack2: 128ch @H/8, stack1: 64ch @H/4]
    return feats


def custom_model_forward(params, x_nchw):
    P = params
    l0, l1, l2, l3 = backbone_stub(params, x_nchw)

    # --- Site A: everything that consumes the H/32 feature l0 (3 matmuls, 2 outputs)
    #   d0 = conv_bn_act(decode0)(l0)                        (x2 upsample deferred)
    #   u1 = act1(conv1( conv_bn_act(decode)(l0) ))          (x4 upsample deferred)
    def site_a(xs, wbs):
        (x,) = xs
        (w_dec, b_dec), (w_c1, b_c1), (w_d0, b_d0) = wbs
        y = _relu(_mm(x, w_dec, b_dec))            # decode conv 512->512
        u1 = _relu(_mm(y, w_c1, b_c1))             # conv1 + act1  512->128
        d0 = _relu(_mm(x, w_d0, b_d0))             # decode0 conv 512->320
        return [d0, u1]
    d0, u1 = fused([l0], [P["decode"], P["conv1"], P["decode0"]], [320, 128], site_a)

    # --- Site B: loop i = 0, all @H/16 (convformer0 + merge + conv_bn_act0 + decode1)
    def site_b(xs, wbs):
        x0, l = xs
        (w_cf, b_cf), (w_cba, b_cba), (w_d1, b_d1) = wbs
        cf = _relu(_mm(l, w_cf, b_cf)) + l.astype(F32)     # convformer0 (residual)
        m = x0.astype(F32) + cf                            # merge
        a = _relu(_mm(m, w_cba, b_cba))                    # conv_bn_act0
        return [_relu(_mm(a, w_d1, b_d1))]                 # decode1 conv (x2 deferred)
    (d1,) = fused([upsample_nn(d0, 2), l1],
                  [P["convformer0"], P["conv_bn_act0"], P["decode1"]], [128], site_b)

    # --- Site C: loop i = 1 first half @H/16: x + upscale_feature, conv2 + act2
    def site_c(xs, wbs):
        a, b = xs
        (w, bb) = wbs[0]
        return [_relu(_mm(a.astype(F32) + b.astype(F32), w, bb))]
    (t,) = fused([d1, upsample_nn(u1, 2)], [P["conv2"]], [128], site_c)

    # --- Site D: loop i = 1 second half + everything consuming x2, all @H/8
    #   (convformer1, merge, conv_bn_act1, decode11->upscale_final chain, decode2)
    def site_d(xs, wbs):
        x0, l = xs
        (w_cf, b_cf), (w_cba, b_cba), (w_d11, b_d11), (w_uf, b_uf), (w_d2, b_d2) = wbs
        cf = _relu(_mm(l, w_cf, b_cf)) + l.astype(F32)     # convformer1 (residual)
        m = x0.astype(F32) + cf                            # merge
        x2 = _relu(_mm(m, w_cba, b_cba))                   # conv_bn_act1
        y = _relu(_mm(x2, w_d11, b_d11))                   # decode11 conv (x8 deferred)
        uf = _relu(_mm(y, w_uf, b_uf))                     # upscale_final 128->32
        d2 = _relu(_mm(x2, w_d2, b_d2))                    # decode2 conv (x2 deferred)
        return [uf, d2]
    uf, d2 = fused([upsample_nn(t, 2), l2],
                   [P["convformer1"], P["conv_bn_act1"], P["decode11"],
                    P["upscale_final"], P["decode2"]], [32, 64], site_d)

    # --- Site E: loop i = 2 + whole tail, all evaluated @H/4 (5 matmuls, 1ch output)
    #   (the sum of the x4- and x8-upsampled sources is constant on 4x4 blocks of the
    #    full-res image, so the pointwise tail runs at H/4 and is expanded last)
    def site_e(xs, wbs):
        x0, l, up = xs
        (w_cf, b_cf), (w_cba, b_cba), (w_df, b_df), (w_cbf, b_cbf), (w_fin, b_fin) = wbs
        cf = _relu(_mm(l, w_cf, b_cf)) + l.astype(F32)     # convformer2 (residual)
        m = x0.astype(F32) + cf                            # merge
        a = _relu(_mm(m, w_cba, b_cba))                    # conv_bn_act2
        d = _relu(_mm(a, w_df, b_df))                      # decode_final conv (x4 deferred)
        s = d + up.astype(F32)                             # + upscale_final feature
        f = _relu(_mm(s, w_cbf, b_cbf))                    # conv_bn_act_final
        return [jax.nn.sigmoid(_mm(f, w_fin, b_fin))]      # conv_final + sigmoid
    (y4,) = fused([upsample_nn(d2, 2), l3, upsample_nn(uf, 2)],
                  [P["convformer2"], P["conv_bn_act2"], P["decode_final"],
                   P["conv_bn_act_final"], P["conv_final"]], [1], site_e,
                  out_dtypes=[F32])

    y = upsample_nn(y4, 4)                                 # full res, 1ch
    return jnp.transpose(y, (0, 3, 1, 2))                  # -> NCHW


# ------------------------------------------------------ plain-XLA reference (checking)

def _ref_conv(x, prm, act="relu"):
    y = jnp.dot(x.astype(BF16), prm["w"], preferred_element_type=F32) + prm["b"]
    if act == "relu":
        return jnp.maximum(y, 0.0)
    if act == "sigmoid":
        return jax.nn.sigmoid(y)
    return y


def reference_forward(params, x_nchw):
    """Original (unfused, full-resolution) graph order, same folded bf16 weights.
    bf16 rounding is applied at the same points where the Pallas path stores to HBM."""
    r16 = lambda a: a.astype(BF16).astype(F32)
    l0, l1, l2, l3 = backbone_stub(params, x_nchw)
    x = l0
    upscale_feature = upsample_nn(_ref_conv(x, params["decode"]), 4)            # H/8, 512
    # i = 0
    x = upsample_nn(r16(_ref_conv(x, params["decode0"])), 2)                    # H/16, 320
    lf = _ref_conv(l1, params["convformer0"]) + l1.astype(F32)
    x = x + lf
    x = _ref_conv(x, params["conv_bn_act0"])
    # i = 1
    x = upsample_nn(r16(_ref_conv(x, params["decode1"])), 2)                    # H/8, 128
    lf = _ref_conv(l2, params["convformer1"]) + l2.astype(F32)
    upscale_feature = r16(_ref_conv(upscale_feature, params["conv1"]))          # H/8, 128
    x = x + upscale_feature
    x = r16(_ref_conv(x, params["conv2"]))
    x = x + lf
    x = _ref_conv(x, params["conv_bn_act1"])
    upscale_feature = upsample_nn(_ref_conv(x, params["decode11"]), 8)          # full, 128
    # i = 2
    x = upsample_nn(r16(_ref_conv(x, params["decode2"])), 2)                    # H/4, 64
    lf = _ref_conv(l3, params["convformer2"]) + l3.astype(F32)
    x = x + lf
    x = _ref_conv(x, params["conv_bn_act2"])
    # tail (full resolution, as in the original module)
    upscale_feature = r16(_ref_conv(upscale_feature, params["upscale_final"]))  # full, 32
    x = upsample_nn(_ref_conv(x, params["decode_final"]), 4)                    # full, 32
    x = x + upscale_feature
    x = _ref_conv(x, params["conv_bn_act_final"])
    y = _ref_conv(x, params["conv_final"], act="sigmoid")
    return jnp.transpose(y, (0, 3, 1, 2))


# ----------------------------------------------------------------------------- main

if __name__ == "__main__":
    key = jax.random.PRNGKey(0)
    kp, kx = jax.random.split(key)

    IMG = 64          # small stand-in for img_size=256 (spatial only; channels per spec)
    N = 2
    params = init_params(kp)
    x = jax.random.normal(kx, (N, 3, IMG, IMG), F32)   # NCHW like PyTorch

    fwd = jax.jit(custom_model_forward)
    out = jax.block_until_ready(fwd(params, x))

    assert out.shape == (N, 1, IMG, IMG), out.shape
    assert bool(jnp.all(jnp.isfinite(out)))
    assert bool(jnp.all((out >= 0.0) & (out <= 1.0)))   # sigmoid output range

    ref = jax.block_until_ready(jax.jit(reference_forward)(params, x))
    max_err = float(jnp.max(jnp.abs(out - ref)))
    assert max_err < 1e-2, f"mismatch vs unfused reference: {max_err}"

    print("KERNEL_OK")
</pallas_src>

<mosaic_0001>
module attributes {stable_mosaic.version = 11 : i64} {
  func.func @_generic_kernel(%arg0: i32, %arg1: memref<8x512xbf16, #tpu.memory_space<vmem>>, %arg2: memref<512x512xbf16, #tpu.memory_space<vmem>>, %arg3: memref<1x512xf32, #tpu.memory_space<vmem>>, %arg4: memref<512x128xbf16, #tpu.memory_space<vmem>>, %arg5: memref<1x128xf32, #tpu.memory_space<vmem>>, %arg6: memref<512x320xbf16, #tpu.memory_space<vmem>>, %arg7: memref<1x320xf32, #tpu.memory_space<vmem>>, %arg8: memref<8x320xbf16, #tpu.memory_space<vmem>>, %arg9: memref<8x128xbf16, #tpu.memory_space<vmem>>) attributes {dimension_semantics = [#tpu.dimension_semantics<parallel>], iteration_bounds = array<i64: 1>, scalar_prefetch = 0 : i64, scratch_operands = 0 : i64, tpu.core_type = #tpu.core_type<tc>, window_params = [{transform_indices = @transform_0, window_bounds = array<i64: 8, 512>}, {pipeline_mode = #tpu.pipeline_mode<synchronous>, transform_indices = @transform_1, window_bounds = array<i64: 512, 512>}, {pipeline_mode = #tpu.pipeline_mode<synchronous>, transform_indices = @transform_2, window_bounds = array<i64: 1, 512>}, {pipeline_mode = #tpu.pipeline_mode<synchronous>, transform_indices = @transform_3, window_bounds = array<i64: 512, 128>}, {pipeline_mode = #tpu.pipeline_mode<synchronous>, transform_indices = @transform_4, window_bounds = array<i64: 1, 128>}, {pipeline_mode = #tpu.pipeline_mode<synchronous>, transform_indices = @transform_5, window_bounds = array<i64: 512, 320>}, {pipeline_mode = #tpu.pipeline_mode<synchronous>, transform_indices = @transform_6, window_bounds = array<i64: 1, 320>}, {transform_indices = @transform_7, window_bounds = array<i64: 8, 320>}, {transform_indices = @transform_8, window_bounds = array<i64: 8, 128>}]} {
    %c0 = arith.constant 0 : index
    %c0_0 = arith.constant 0 : index
    %0 = vector.load %arg1[%c0, %c0_0] : memref<8x512xbf16, #tpu.memory_space<vmem>>, vector<8x512xbf16>
    %c0_1 = arith.constant 0 : index
    %c0_2 = arith.constant 0 : index
    %1 = vector.load %arg2[%c0_1, %c0_2] : memref<512x512xbf16, #tpu.memory_space<vmem>>, vector<512x512xbf16>
    %c0_3 = arith.constant 0 : index
    %c0_4 = arith.constant 0 : index
    %2 = vector.load %arg3[%c0_3, %c0_4] : memref<1x512xf32, #tpu.memory_space<vmem>>, vector<1x512xf32>
    %c0_5 = arith.constant 0 : index
    %c0_6 = arith.constant 0 : index
    %3 = vector.load %arg4[%c0_5, %c0_6] : memref<512x128xbf16, #tpu.memory_space<vmem>>, vector<512x128xbf16>
    %c0_7 = arith.constant 0 : index
    %c0_8 = arith.constant 0 : index
    %4 = vector.load %arg5[%c0_7, %c0_8] : memref<1x128xf32, #tpu.memory_space<vmem>>, vector<1x128xf32>
    %c0_9 = arith.constant 0 : index
    %c0_10 = arith.constant 0 : index
    %5 = vector.load %arg6[%c0_9, %c0_10] : memref<512x320xbf16, #tpu.memory_space<vmem>>, vector<512x320xbf16>
    %c0_11 = arith.constant 0 : index
    %c0_12 = arith.constant 0 : index
    %6 = vector.load %arg7[%c0_11, %c0_12] : memref<1x320xf32, #tpu.memory_space<vmem>>, vector<1x320xf32>
    %cst = arith.constant dense<0.000000e+00> : vector<8x512xf32>
    %7 = tpu.matmul %0, %1, %cst {dimension_numbers = #tpu.dot_dimension_numbers<[1], [0], [0], [1], [0, 0, 1, 1], [], []>} : vector<8x512xbf16>, vector<512x512xbf16>, vector<8x512xf32> -> vector<8x512xf32>
    %8 = vector.broadcast %2 : vector<1x512xf32> to vector<8x512xf32>
    %9 = arith.addf %7, %8 : vector<8x512xf32>
    %cst_13 = arith.constant 0.000000e+00 : f32
    %10 = vector.broadcast %cst_13 : f32 to vector<8x512xf32>
    %11 = arith.maximumf %9, %10 : vector<8x512xf32>
    %12 = arith.truncf %11 : vector<8x512xf32> to vector<8x512xbf16>
    %cst_14 = arith.constant dense<0.000000e+00> : vector<8x128xf32>
    %13 = tpu.matmul %12, %3, %cst_14 {dimension_numbers = #tpu.dot_dimension_numbers<[1], [0], [0], [1], [0, 0, 1, 1], [], []>} : vector<8x512xbf16>, vector<512x128xbf16>, vector<8x128xf32> -> vector<8x128xf32>
    %14 = vector.broadcast %4 : vector<1x128xf32> to vector<8x128xf32>
    %15 = arith.addf %13, %14 : vector<8x128xf32>
    %cst_15 = arith.constant 0.000000e+00 : f32
    %16 = vector.broadcast %cst_15 : f32 to vector<8x128xf32>
    %17 = arith.maximumf %15, %16 : vector<8x128xf32>
    %cst_16 = arith.constant dense<0.000000e+00> : vector<8x320xf32>
    %18 = tpu.matmul %0, %5, %cst_16 {dimension_numbers = #tpu.dot_dimension_numbers<[1], [0], [0], [1], [0, 0, 1, 1], [], []>} : vector<8x512xbf16>, vector<512x320xbf16>, vector<8x320xf32> -> vector<8x320xf32>
    %19 = vector.broadcast %6 : vector<1x320xf32> to vector<8x320xf32>
    %20 = arith.addf %18, %19 : vector<8x320xf32>
    %cst_17 = arith.constant 0.000000e+00 : f32
    %21 = vector.broadcast %cst_17 : f32 to vector<8x320xf32>
    %22 = arith.maximumf %20, %21 : vector<8x320xf32>
    %23 = arith.truncf %22 : vector<8x320xf32> to vector<8x320xbf16>
    %c0_18 = arith.constant 0 : index
    %c0_19 = arith.constant 0 : index
    %24 = vector.load %arg8[%c0_18, %c0_19] : memref<8x320xbf16, #tpu.memory_space<vmem>>, vector<8x320xbf16>
    tpu.vector_store %arg8[%c0_18, %c0_19], %23 {strides = array<i32>} : memref<8x320xbf16, #tpu.memory_space<vmem>>, vector<8x320xbf16>,
    %25 = arith.truncf %17 : vector<8x128xf32> to vector<8x128xbf16>
    %c0_20 = arith.constant 0 : index
    %c0_21 = arith.constant 0 : index
    %26 = vector.load %arg9[%c0_20, %c0_21] : memref<8x128xbf16, #tpu.memory_space<vmem>>, vector<8x128xbf16>
    tpu.vector_store %arg9[%c0_20, %c0_21], %25 {strides = array<i32>} : memref<8x128xbf16, #tpu.memory_space<vmem>>, vector<8x128xbf16>,
    return
  }
  func.func @transform_0(%arg0: i32) -> (i32, i32) {
    %c0_i32 = arith.constant 0 : i32
    %c0_i32_0 = arith.constant 0 : i32
    return %arg0, %c0_i32 : i32, i32
  }
  func.func @transform_1(%arg0: i32) -> (i32, i32) {
    %c0_i32 = arith.constant 0 : i32
    %c0_i32_0 = arith.constant 0 : i32
    %c0_i32_1 = arith.constant 0 : i32
    return %c0_i32, %c0_i32_0 : i32, i32
  }
  func.func @transform_2(%arg0: i32) -> (i32, i32) {
    %c0_i32 = arith.constant 0 : i32
    %c0_i32_0 = arith.constant 0 : i32
    %c0_i32_1 = arith.constant 0 : i32
    return %c0_i32, %c0_i32_0 : i32, i32
  }
  func.func @transform_3(%arg0: i32) -> (i32, i32) {
    %c0_i32 = arith.constant 0 : i32
    %c0_i32_0 = arith.constant 0 : i32
    %c0_i32_1 = arith.constant 0 : i32
    return %c0_i32, %c0_i32_0 : i32, i32
  }
  func.func @transform_4(%arg0: i32) -> (i32, i32) {
    %c0_i32 = arith.constant 0 : i32
    %c0_i32_0 = arith.constant 0 : i32
    %c0_i32_1 = arith.constant 0 : i32
    return %c0_i32, %c0_i32_0 : i32, i32
  }
  func.func @transform_5(%arg0: i32) -> (i32, i32) {
    %c0_i32 = arith.constant 0 : i32
    %c0_i32_0 = arith.constant 0 : i32
    %c0_i32_1 = arith.constant 0 : i32
    return %c0_i32, %c0_i32_0 : i32, i32
  }
  func.func @transform_6(%arg0: i32) -> (i32, i32) {
    %c0_i32 = arith.constant 0 : i32
    %c0_i32_0 = arith.constant 0 : i32
    %c0_i32_1 = arith.constant 0 : i32
    return %c0_i32, %c0_i32_0 : i32, i32
  }
  func.func @transform_7(%arg0: i32) -> (i32, i32) {
    %c0_i32 = arith.constant 0 : i32
    %c0_i32_0 = arith.constant 0 : i32
    return %arg0, %c0_i32 : i32, i32
  }
  func.func @transform_8(%arg0: i32) -> (i32, i32) {
    %c0_i32 = arith.constant 0 : i32
    %c0_i32_0 = arith.constant 0 : i32
    return %arg0, %c0_i32 : i32, i32
  }
}

module attributes {stable_mosaic.version = 11 : i64} {
  func.func @_generic_kernel(%arg0: i32, %arg1: memref<16x320xbf16, #tpu.memory_space<vmem>>, %arg2: memref<16x320xbf16, #tpu.memory_space<vmem>>, %arg3: memref<320x320xbf16, #tpu.memory_space<vmem>>, %arg4: memref<1x320xf32, #tpu.memory_space<vmem>>, %arg5: memref<320x320xbf16, #tpu.memory_space<vmem>>, %arg6: memref<1x320xf32, #tpu.memory_space<vmem>>, %arg7: memref<320x128xbf16, #tpu.memory_space<vmem>>, %arg8: memref<1x128xf32, #tpu.memory_space<vmem>>, %arg9: memref<16x128xbf16, #tpu.memory_space<vmem>>) attributes {dimension_semantics = [#tpu.dimension_semantics<parallel>], iteration_bounds = array<i64: 2>, scalar_prefetch = 0 : i64, scratch_operands = 0 : i64, tpu.core_type = #tpu.core_type<tc>, window_params = [{transform_indices = @transform_0, window_bounds = array<i64: 16, 320>}, {transform_indices = @transform_1, window_bounds = array<i64: 16, 320>}, {pipeline_mode = #tpu.pipeline_mode<synchronous>, transform_indices = @transform_2, window_bounds = array<i64: 320, 320>}, {pipeline_mode = #tpu.pipeline_mode<synchronous>, transform_indices = @transform_3, window_bounds = array<i64: 1, 320>}, {pipeline_mode = #tpu.pipeline_mode<synchronous>, transform_indices = @transform_4, window_bounds = array<i64: 320, 320>}, {pipeline_mode = #tpu.pipeline_mode<synchronous>, transform_indices = @transform_5, window_bounds = array<i64: 1, 320>}, {pipeline_mode = #tpu.pipeline_mode<synchronous>, transform_indices = @transform_6, window_bounds = array<i64: 320, 128>}, {pipeline_mode = #tpu.pipeline_mode<synchronous>, transform_indices = @transform_7, window_bounds = array<i64: 1, 128>}, {transform_indices = @transform_8, window_bounds = array<i64: 16, 128>}]} {
    %c0 = arith.constant 0 : index
    %c0_0 = arith.constant 0 : index
    %0 = vector.load %arg1[%c0, %c0_0] : memref<16x320xbf16, #tpu.memory_space<vmem>>, vector<16x320xbf16>
    %c0_1 = arith.constant 0 : index
    %c0_2 = arith.constant 0 : index
    %1 = vector.load %arg2[%c0_1, %c0_2] : memref<16x320xbf16, #tpu.memory_space<vmem>>, vector<16x320xbf16>
    %c0_3 = arith.constant 0 : index
    %c0_4 = arith.constant 0 : index
    %2 = vector.load %arg3[%c0_3, %c0_4] : memref<320x320xbf16, #tpu.memory_space<vmem>>, vector<320x320xbf16>
    %c0_5 = arith.constant 0 : index
    %c0_6 = arith.constant 0 : index
    %3 = vector.load %arg4[%c0_5, %c0_6] : memref<1x320xf32, #tpu.memory_space<vmem>>, vector<1x320xf32>
    %c0_7 = arith.constant 0 : index
    %c0_8 = arith.constant 0 : index
    %4 = vector.load %arg5[%c0_7, %c0_8] : memref<320x320xbf16, #tpu.memory_space<vmem>>, vector<320x320xbf16>
    %c0_9 = arith.constant 0 : index
    %c0_10 = arith.constant 0 : index
    %5 = vector.load %arg6[%c0_9, %c0_10] : memref<1x320xf32, #tpu.memory_space<vmem>>, vector<1x320xf32>
    %c0_11 = arith.constant 0 : index
    %c0_12 = arith.constant 0 : index
    %6 = vector.load %arg7[%c0_11, %c0_12] : memref<320x128xbf16, #tpu.memory_space<vmem>>, vector<320x128xbf16>
    %c0_13 = arith.constant 0 : index
    %c0_14 = arith.constant 0 : index
    %7 = vector.load %arg8[%c0_13, %c0_14] : memref<1x128xf32, #tpu.memory_space<vmem>>, vector<1x128xf32>
    %cst = arith.constant dense<0.000000e+00> : vector<16x320xf32>
    %8 = tpu.matmul %1, %2, %cst {dimension_numbers = #tpu.dot_dimension_numbers<[1], [0], [0], [1], [0, 0, 1, 1], [], []>} : vector<16x320xbf16>, vector<320x320xbf16>, vector<16x320xf32> -> vector<16x320xf32>
    %9 = vector.broadcast %3 : vector<1x320xf32> to vector<16x320xf32>
    %10 = arith.addf %8, %9 : vector<16x320xf32>
    %cst_15 = arith.constant 0.000000e+00 : f32
    %11 = vector.broadcast %cst_15 : f32 to vector<16x320xf32>
    %12 = arith.maximumf %10, %11 : vector<16x320xf32>
    %13 = arith.extf %1 : vector<16x320xbf16> to vector<16x320xf32>
    %14 = arith.addf %12, %13 : vector<16x320xf32>
    %15 = arith.extf %0 : vector<16x320xbf16> to vector<16x320xf32>
    %16 = arith.addf %15, %14 : vector<16x320xf32>
    %17 = arith.truncf %16 : vector<16x320xf32> to vector<16x320xbf16>
    %cst_16 = arith.constant dense<0.000000e+00> : vector<16x320xf32>
    %18 = tpu.matmul %17, %4, %cst_16 {dimension_numbers = #tpu.dot_dimension_numbers<[1], [0], [0], [1], [0, 0, 1, 1], [], []>} : vector<16x320xbf16>, vector<320x320xbf16>, vector<16x320xf32> -> vector<16x320xf32>
    %19 = vector.broadcast %5 : vector<1x320xf32> to vector<16x320xf32>
    %20 = arith.addf %18, %19 : vector<16x320xf32>
    %cst_17 = arith.constant 0.000000e+00 : f32
    %21 = vector.broadcast %cst_17 : f32 to vector<16x320xf32>
    %22 = arith.maximumf %20, %21 : vector<16x320xf32>
    %23 = arith.truncf %22 : vector<16x320xf32> to vector<16x320xbf16>
    %cst_18 = arith.constant dense<0.000000e+00> : vector<16x128xf32>
    %24 = tpu.matmul %23, %6, %cst_18 {dimension_numbers = #tpu.dot_dimension_numbers<[1], [0], [0], [1], [0, 0, 1, 1], [], []>} : vector<16x320xbf16>, vector<320x128xbf16>, vector<16x128xf32> -> vector<16x128xf32>
    %25 = vector.broadcast %7 : vector<1x128xf32> to vector<16x128xf32>
    %26 = arith.addf %24, %25 : vector<16x128xf32>
    %cst_19 = arith.constant 0.000000e+00 : f32
    %27 = vector.broadcast %cst_19 : f32 to vector<16x128xf32>
    %28 = arith.maximumf %26, %27 : vector<16x128xf32>
    %29 = arith.truncf %28 : vector<16x128xf32> to vector<16x128xbf16>
    %c0_20 = arith.constant 0 : index
    %c0_21 = arith.constant 0 : index
    %30 = vector.load %arg9[%c0_20, %c0_21] : memref<16x128xbf16, #tpu.memory_space<vmem>>, vector<16x128xbf16>
    tpu.vector_store %arg9[%c0_20, %c0_21], %29 {strides = array<i32>} : memref<16x128xbf16, #tpu.memory_space<vmem>>, vector<16x128xbf16>,
    return
  }
  func.func @transform_0(%arg0: i32) -> (i32, i32) {
    %c0_i32 = arith.constant 0 : i32
    %c0_i32_0 = arith.constant 0 : i32
    return %arg0, %c0_i32 : i32, i32
  }
  func.func @transform_1(%arg0: i32) -> (i32, i32) {
    %c0_i32 = arith.constant 0 : i32
    %c0_i32_0 = arith.constant 0 : i32
    return %arg0, %c0_i32 : i32, i32
  }
  func.func @transform_2(%arg0: i32) -> (i32, i32) {
    %c0_i32 = arith.constant 0 : i32
    %c0_i32_0 = arith.constant 0 : i32
    %c0_i32_1 = arith.constant 0 : i32
    return %c0_i32, %c0_i32_0 : i32, i32
  }
  func.func @transform_3(%arg0: i32) -> (i32, i32) {
    %c0_i32 = arith.constant 0 : i32
    %c0_i32_0 = arith.constant 0 : i32
    %c0_i32_1 = arith.constant 0 : i32
    return %c0_i32, %c0_i32_0 : i32, i32
  }
  func.func @transform_4(%arg0: i32) -> (i32, i32) {
    %c0_i32 = arith.constant 0 : i32
    %c0_i32_0 = arith.constant 0 : i32
    %c0_i32_1 = arith.constant 0 : i32
    return %c0_i32, %c0_i32_0 : i32, i32
  }
  func.func @transform_5(%arg0: i32) -> (i32, i32) {
    %c0_i32 = arith.constant 0 : i32
    %c0_i32_0 = arith.constant 0 : i32
    %c0_i32_1 = arith.constant 0 : i32
    return %c0_i32, %c0_i32_0 : i32, i32
  }
  func.func @transform_6(%arg0: i32) -> (i32, i32) {
    %c0_i32 = arith.constant 0 : i32
    %c0_i32_0 = arith.constant 0 : i32
    %c0_i32_1 = arith.constant 0 : i32
    return %c0_i32, %c0_i32_0 : i32, i32
  }
  func.func @transform_7(%arg0: i32) -> (i32, i32) {
    %c0_i32 = arith.constant 0 : i32
    %c0_i32_0 = arith.constant 0 : i32
    %c0_i32_1 = arith.constant 0 : i32
    return %c0_i32, %c0_i32_0 : i32, i32
  }
  func.func @transform_8(%arg0: i32) -> (i32, i32) {
    %c0_i32 = arith.constant 0 : i32
    %c0_i32_0 = arith.constant 0 : i32
    return %arg0, %c0_i32 : i32, i32
  }
}

module attributes {stable_mosaic.version = 11 : i64} {
  func.func @_generic_kernel(%arg0: i32, %arg1: memref<16x128xbf16, #tpu.memory_space<vmem>>, %arg2: memref<16x128xbf16, #tpu.memory_space<vmem>>, %arg3: memref<128x128xbf16, #tpu.memory_space<vmem>>, %arg4: memref<1x128xf32, #tpu.memory_space<vmem>>, %arg5: memref<16x128xbf16, #tpu.memory_space<vmem>>) attributes {dimension_semantics = [#tpu.dimension_semantics<parallel>], iteration_bounds = array<i64: 2>, scalar_prefetch = 0 : i64, scratch_operands = 0 : i64, tpu.core_type = #tpu.core_type<tc>, window_params = [{transform_indices = @transform_0, window_bounds = array<i64: 16, 128>}, {transform_indices = @transform_1, window_bounds = array<i64: 16, 128>}, {pipeline_mode = #tpu.pipeline_mode<synchronous>, transform_indices = @transform_2, window_bounds = array<i64: 128, 128>}, {pipeline_mode = #tpu.pipeline_mode<synchronous>, transform_indices = @transform_3, window_bounds = array<i64: 1, 128>}, {transform_indices = @transform_4, window_bounds = array<i64: 16, 128>}]} {
    %c0 = arith.constant 0 : index
    %c0_0 = arith.constant 0 : index
    %0 = vector.load %arg1[%c0, %c0_0] : memref<16x128xbf16, #tpu.memory_space<vmem>>, vector<16x128xbf16>
    %c0_1 = arith.constant 0 : index
    %c0_2 = arith.constant 0 : index
    %1 = vector.load %arg2[%c0_1, %c0_2] : memref<16x128xbf16, #tpu.memory_space<vmem>>, vector<16x128xbf16>
    %c0_3 = arith.constant 0 : index
    %c0_4 = arith.constant 0 : index
    %2 = vector.load %arg3[%c0_3, %c0_4] : memref<128x128xbf16, #tpu.memory_space<vmem>>, vector<128x128xbf16>
    %c0_5 = arith.constant 0 : index
    %c0_6 = arith.constant 0 : index
    %3 = vector.load %arg4[%c0_5, %c0_6] : memref<1x128xf32, #tpu.memory_space<vmem>>, vector<1x128xf32>
    %4 = arith.extf %0 : vector<16x128xbf16> to vector<16x128xf32>
    %5 = arith.extf %1 : vector<16x128xbf16> to vector<16x128xf32>
    %6 = arith.addf %4, %5 : vector<16x128xf32>
    %7 = arith.truncf %6 : vector<16x128xf32> to vector<16x128xbf16>
    %cst = arith.constant dense<0.000000e+00> : vector<16x128xf32>
    %8 = tpu.matmul %7, %2, %cst {dimension_numbers = #tpu.dot_dimension_numbers<[1], [0], [0], [1], [0, 0, 1, 1], [], []>} : vector<16x128xbf16>, vector<128x128xbf16>, vector<16x128xf32> -> vector<16x128xf32>
    %9 = vector.broadcast %3 : vector<1x128xf32> to vector<16x128xf32>
    %10 = arith.addf %8, %9 : vector<16x128xf32>
    %cst_7 = arith.constant 0.000000e+00 : f32
    %11 = vector.broadcast %cst_7 : f32 to vector<16x128xf32>
    %12 = arith.maximumf %10, %11 : vector<16x128xf32>
    %13 = arith.truncf %12 : vector<16x128xf32> to vector<16x128xbf16>
    %c0_8 = arith.constant 0 : index
    %c0_9 = arith.constant 0 : index
    %14 = vector.load %arg5[%c0_8, %c0_9] : memref<16x128xbf16, #tpu.memory_space<vmem>>, vector<16x128xbf16>
    tpu.vector_store %arg5[%c0_8, %c0_9], %13 {strides = array<i32>} : memref<16x128xbf16, #tpu.memory_space<vmem>>, vector<16x128xbf16>,
    return
  }
  func.func @transform_0(%arg0: i32) -> (i32, i32) {
    %c0_i32 = arith.constant 0 : i32
    %c0_i32_0 = arith.constant 0 : i32
    return %arg0, %c0_i32 : i32, i32
  }
  func.func @transform_1(%arg0: i32) -> (i32, i32) {
    %c0_i32 = arith.constant 0 : i32
    %c0_i32_0 = arith.constant 0 : i32
    return %arg0, %c0_i32 : i32, i32
  }
  func.func @transform_2(%arg0: i32) -> (i32, i32) {
    %c0_i32 = arith.constant 0 : i32
    %c0_i32_0 = arith.constant 0 : i32
    %c0_i32_1 = arith.constant 0 : i32
    return %c0_i32, %c0_i32_0 : i32, i32
  }
  func.func @transform_3(%arg0: i32) -> (i32, i32) {
    %c0_i32 = arith.constant 0 : i32
    %c0_i32_0 = arith.constant 0 : i32
    %c0_i32_1 = arith.constant 0 : i32
    return %c0_i32, %c0_i32_0 : i32, i32
  }
  func.func @transform_4(%arg0: i32) -> (i32, i32) {
    %c0_i32 = arith.constant 0 : i32
    %c0_i32_0 = arith.constant 0 : i32
    return %arg0, %c0_i32 : i32, i32
  }
}

module attributes {stable_mosaic.version = 11 : i64} {
  func.func @_generic_kernel(%arg0: i32, %arg1: memref<64x128xbf16, #tpu.memory_space<vmem>>, %arg2: memref<64x128xbf16, #tpu.memory_space<vmem>>, %arg3: memref<128x128xbf16, #tpu.memory_space<vmem>>, %arg4: memref<1x128xf32, #tpu.memory_space<vmem>>, %arg5: memref<128x128xbf16, #tpu.memory_space<vmem>>, %arg6: memref<1x128xf32, #tpu.memory_space<vmem>>, %arg7: memref<128x128xbf16, #tpu.memory_space<vmem>>, %arg8: memref<1x128xf32, #tpu.memory_space<vmem>>, %arg9: memref<128x32xbf16, #tpu.memory_space<vmem>>, %arg10: memref<1x32xf32, #tpu.memory_space<vmem>>, %arg11: memref<128x64xbf16, #tpu.memory_space<vmem>>, %arg12: memref<1x64xf32, #tpu.memory_space<vmem>>, %arg13: memref<64x32xbf16, #tpu.memory_space<vmem>>, %arg14: memref<64x64xbf16, #tpu.memory_space<vmem>>) attributes {dimension_semantics = [#tpu.dimension_semantics<parallel>], iteration_bounds = array<i64: 2>, scalar_prefetch = 0 : i64, scratch_operands = 0 : i64, tpu.core_type = #tpu.core_type<tc>, window_params = [{transform_indices = @transform_0, window_bounds = array<i64: 64, 128>}, {transform_indices = @transform_1, window_bounds = array<i64: 64, 128>}, {pipeline_mode = #tpu.pipeline_mode<synchronous>, transform_indices = @transform_2, window_bounds = array<i64: 128, 128>}, {pipeline_mode = #tpu.pipeline_mode<synchronous>, transform_indices = @transform_3, window_bounds = array<i64: 1, 128>}, {pipeline_mode = #tpu.pipeline_mode<synchronous>, transform_indices = @transform_4, window_bounds = array<i64: 128, 128>}, {pipeline_mode = #tpu.pipeline_mode<synchronous>, transform_indices = @transform_5, window_bounds = array<i64: 1, 128>}, {pipeline_mode = #tpu.pipeline_mode<synchronous>, transform_indices = @transform_6, window_bounds = array<i64: 128, 128>}, {pipeline_mode = #tpu.pipeline_mode<synchronous>, transform_indices = @transform_7, window_bounds = array<i64: 1, 128>}, {pipeline_mode = #tpu.pipeline_mode<synchronous>, transform_indices = @transform_8, window_bounds = array<i64: 128, 32>}, {pipeline_mode = #tpu.pipeline_mode<synchronous>, transform_indices = @transform_9, window_bounds = array<i64: 1, 32>}, {pipeline_mode = #tpu.pipeline_mode<synchronous>, transform_indices = @transform_10, window_bounds = array<i64: 128, 64>}, {pipeline_mode = #tpu.pipeline_mode<synchronous>, transform_indices = @transform_11, window_bounds = array<i64: 1, 64>}, {transform_indices = @transform_12, window_bounds = array<i64: 64, 32>}, {transform_indices = @transform_13, window_bounds = array<i64: 64, 64>}]} {
    %c0 = arith.constant 0 : index
    %c0_0 = arith.constant 0 : index
    %0 = vector.load %arg1[%c0, %c0_0] : memref<64x128xbf16, #tpu.memory_space<vmem>>, vector<64x128xbf16>
    %c0_1 = arith.constant 0 : index
    %c0_2 = arith.constant 0 : index
    %1 = vector.load %arg2[%c0_1, %c0_2] : memref<64x128xbf16, #tpu.memory_space<vmem>>, vector<64x128xbf16>
    %c0_3 = arith.constant 0 : index
    %c0_4 = arith.constant 0 : index
    %2 = vector.load %arg3[%c0_3, %c0_4] : memref<128x128xbf16, #tpu.memory_space<vmem>>, vector<128x128xbf16>
    %c0_5 = arith.constant 0 : index
    %c0_6 = arith.constant 0 : index
    %3 = vector.load %arg4[%c0_5, %c0_6] : memref<1x128xf32, #tpu.memory_space<vmem>>, vector<1x128xf32>
    %c0_7 = arith.constant 0 : index
    %c0_8 = arith.constant 0 : index
    %4 = vector.load %arg5[%c0_7, %c0_8] : memref<128x128xbf16, #tpu.memory_space<vmem>>, vector<128x128xbf16>
    %c0_9 = arith.constant 0 : index
    %c0_10 = arith.constant 0 : index
    %5 = vector.load %arg6[%c0_9, %c0_10] : memref<1x128xf32, #tpu.memory_space<vmem>>, vector<1x128xf32>
    %c0_11 = arith.constant 0 : index
    %c0_12 = arith.constant 0 : index
    %6 = vector.load %arg7[%c0_11, %c0_12] : memref<128x128xbf16, #tpu.memory_space<vmem>>, vector<128x128xbf16>
    %c0_13 = arith.constant 0 : index
    %c0_14 = arith.constant 0 : index
    %7 = vector.load %arg8[%c0_13, %c0_14] : memref<1x128xf32, #tpu.memory_space<vmem>>, vector<1x128xf32>
    %c0_15 = arith.constant 0 : index
    %c0_16 = arith.constant 0 : index
    %8 = vector.load %arg9[%c0_15, %c0_16] : memref<128x32xbf16, #tpu.memory_space<vmem>>, vector<128x32xbf16>
    %c0_17 = arith.constant 0 : index
    %c0_18 = arith.constant 0 : index
    %9 = vector.load %arg10[%c0_17, %c0_18] : memref<1x32xf32, #tpu.memory_space<vmem>>, vector<1x32xf32>
    %c0_19 = arith.constant 0 : index
    %c0_20 = arith.constant 0 : index
    %10 = vector.load %arg11[%c0_19, %c0_20] : memref<128x64xbf16, #tpu.memory_space<vmem>>, vector<128x64xbf16>
    %c0_21 = arith.constant 0 : index
    %c0_22 = arith.constant 0 : index
    %11 = vector.load %arg12[%c0_21, %c0_22] : memref<1x64xf32, #tpu.memory_space<vmem>>, vector<1x64xf32>
    %cst = arith.constant dense<0.000000e+00> : vector<64x128xf32>
    %12 = tpu.matmul %1, %2, %cst {dimension_numbers = #tpu.dot_dimension_numbers<[1], [0], [0], [1], [0, 0, 1, 1], [], []>} : vector<64x128xbf16>, vector<128x128xbf16>, vector<64x128xf32> -> vector<64x128xf32>
    %13 = vector.broadcast %3 : vector<1x128xf32> to vector<64x128xf32>
    %14 = arith.addf %12, %13 : vector<64x128xf32>
    %cst_23 = arith.constant 0.000000e+00 : f32
    %15 = vector.broadcast %cst_23 : f32 to vector<64x128xf32>
    %16 = arith.maximumf %14, %15 : vector<64x128xf32>
    %17 = arith.extf %1 : vector<64x128xbf16> to vector<64x128xf32>
    %18 = arith.addf %16, %17 : vector<64x128xf32>
    %19 = arith.extf %0 : vector<64x128xbf16> to vector<64x128xf32>
    %20 = arith.addf %19, %18 : vector<64x128xf32>
    %21 = arith.truncf %20 : vector<64x128xf32> to vector<64x128xbf16>
    %cst_24 = arith.constant dense<0.000000e+00> : vector<64x128xf32>
    %22 = tpu.matmul %21, %4, %cst_24 {dimension_numbers = #tpu.dot_dimension_numbers<[1], [0], [0], [1], [0, 0, 1, 1], [], []>} : vector<64x128xbf16>, vector<128x128xbf16>, vector<64x128xf32> -> vector<64x128xf32>
    %23 = vector.broadcast %5 : vector<1x128xf32> to vector<64x128xf32>
    %24 = arith.addf %22, %23 : vector<64x128xf32>
    %cst_25 = arith.constant 0.000000e+00 : f32
    %25 = vector.broadcast %cst_25 : f32 to vector<64x128xf32>
    %26 = arith.maximumf %24, %25 : vector<64x128xf32>
    %27 = arith.truncf %26 : vector<64x128xf32> to vector<64x128xbf16>
    %cst_26 = arith.constant dense<0.000000e+00> : vector<64x128xf32>
    %28 = tpu.matmul %27, %6, %cst_26 {dimension_numbers = #tpu.dot_dimension_numbers<[1], [0], [0], [1], [0, 0, 1, 1], [], []>} : vector<64x128xbf16>, vector<128x128xbf16>, vector<64x128xf32> -> vector<64x128xf32>
    %29 = vector.broadcast %7 : vector<1x128xf32> to vector<64x128xf32>
    %30 = arith.addf %28, %29 : vector<64x128xf32>
    %cst_27 = arith.constant 0.000000e+00 : f32
    %31 = vector.broadcast %cst_27 : f32 to vector<64x128xf32>
    %32 = arith.maximumf %30, %31 : vector<64x128xf32>
    %33 = arith.truncf %32 : vector<64x128xf32> to vector<64x128xbf16>
    %cst_28 = arith.constant dense<0.000000e+00> : vector<64x32xf32>
    %34 = tpu.matmul %33, %8, %cst_28 {dimension_numbers = #tpu.dot_dimension_numbers<[1], [0], [0], [1], [0, 0, 1, 1], [], []>} : vector<64x128xbf16>, vector<128x32xbf16>, vector<64x32xf32> -> vector<64x32xf32>
    %35 = vector.broadcast %9 : vector<1x32xf32> to vector<64x32xf32>
    %36 = arith.addf %34, %35 : vector<64x32xf32>
    %cst_29 = arith.constant 0.000000e+00 : f32
    %37 = vector.broadcast %cst_29 : f32 to vector<64x32xf32>
    %38 = arith.maximumf %36, %37 : vector<64x32xf32>
    %39 = arith.truncf %26 : vector<64x128xf32> to vector<64x128xbf16>
    %cst_30 = arith.constant dense<0.000000e+00> : vector<64x64xf32>
    %40 = tpu.matmul %39, %10, %cst_30 {dimension_numbers = #tpu.dot_dimension_numbers<[1], [0], [0], [1], [0, 0, 1, 1], [], []>} : vector<64x128xbf16>, vector<128x64xbf16>, vector<64x64xf32> -> vector<64x64xf32>
    %41 = vector.broadcast %11 : vector<1x64xf32> to vector<64x64xf32>
    %42 = arith.addf %40, %41 : vector<64x64xf32>
    %cst_31 = arith.constant 0.000000e+00 : f32
    %43 = vector.broadcast %cst_31 : f32 to vector<64x64xf32>
    %44 = arith.maximumf %42, %43 : vector<64x64xf32>
    %45 = arith.truncf %38 : vector<64x32xf32> to vector<64x32xbf16>
    %c0_32 = arith.constant 0 : index
    %c0_33 = arith.constant 0 : index
    %46 = vector.load %arg13[%c0_32, %c0_33] : memref<64x32xbf16, #tpu.memory_space<vmem>>, vector<64x32xbf16>
    tpu.vector_store %arg13[%c0_32, %c0_33], %45 {strides = array<i32>} : memref<64x32xbf16, #tpu.memory_space<vmem>>, vector<64x32xbf16>,
    %47 = arith.truncf %44 : vector<64x64xf32> to vector<64x64xbf16>
    %c0_34 = arith.constant 0 : index
    %c0_35 = arith.constant 0 : index
    %48 = vector.load %arg14[%c0_34, %c0_35] : memref<64x64xbf16, #tpu.memory_space<vmem>>, vector<64x64xbf16>
    tpu.vector_store %arg14[%c0_34, %c0_35], %47 {strides = array<i32>} : memref<64x64xbf16, #tpu.memory_space<vmem>>, vector<64x64xbf16>,
    return
  }
  func.func @transform_0(%arg0: i32) -> (i32, i32) {
    %c0_i32 = arith.constant 0 : i32
    %c0_i32_0 = arith.constant 0 : i32
    return %arg0, %c0_i32 : i32, i32
  }
  func.func @transform_1(%arg0: i32) -> (i32, i32) {
    %c0_i32 = arith.constant 0 : i32
    %c0_i32_0 = arith.constant 0 : i32
    return %arg0, %c0_i32 : i32, i32
  }
  func.func @transform_2(%arg0: i32) -> (i32, i32) {
    %c0_i32 = arith.constant 0 : i32
    %c0_i32_0 = arith.constant 0 : i32
    %c0_i32_1 = arith.constant 0 : i32
    return %c0_i32, %c0_i32_0 : i32, i32
  }
  func.func @transform_3(%arg0: i32) -> (i32, i32) {
    %c0_i32 = arith.constant 0 : i32
    %c0_i32_0 = arith.constant 0 : i32
    %c0_i32_1 = arith.constant 0 : i32
    return %c0_i32, %c0_i32_0 : i32, i32
  }
  func.func @transform_4(%arg0: i32) -> (i32, i32) {
    %c0_i32 = arith.constant 0 : i32
    %c0_i32_0 = arith.constant 0 : i32
    %c0_i32_1 = arith.constant 0 : i32
    return %c0_i32, %c0_i32_0 : i32, i32
  }
  func.func @transform_5(%arg0: i32) -> (i32, i32) {
    %c0_i32 = arith.constant 0 : i32
    %c0_i32_0 = arith.constant 0 : i32
    %c0_i32_1 = arith.constant 0 : i32
    return %c0_i32, %c0_i32_0 : i32, i32
  }
  func.func @transform_6(%arg0: i32) -> (i32, i32) {
    %c0_i32 = arith.constant 0 : i32
    %c0_i32_0 = arith.constant 0 : i32
    %c0_i32_1 = arith.constant 0 : i32
    return %c0_i32, %c0_i32_0 : i32, i32
  }
  func.func @transform_7(%arg0: i32) -> (i32, i32) {
    %c0_i32 = arith.constant 0 : i32
    %c0_i32_0 = arith.constant 0 : i32
    %c0_i32_1 = arith.constant 0 : i32
    return %c0_i32, %c0_i32_0 : i32, i32
  }
  func.func @transform_8(%arg0: i32) -> (i32, i32) {
    %c0_i32 = arith.constant 0 : i32
    %c0_i32_0 = arith.constant 0 : i32
    %c0_i32_1 = arith.constant 0 : i32
    return %c0_i32, %c0_i32_0 : i32, i32
  }
  func.func @transform_9(%arg0: i32) -> (i32, i32) {
    %c0_i32 = arith.constant 0 : i32
    %c0_i32_0 = arith.constant 0 : i32
    %c0_i32_1 = arith.constant 0 : i32
    return %c0_i32, %c0_i32_0 : i32, i32
  }
  func.func @transform_10(%arg0: i32) -> (i32, i32) {
    %c0_i32 = arith.constant 0 : i32
    %c0_i32_0 = arith.constant 0 : i32
    %c0_i32_1 = arith.constant 0 : i32
    return %c0_i32, %c0_i32_0 : i32, i32
  }
  func.func @transform_11(%arg0: i32) -> (i32, i32) {
    %c0_i32 = arith.constant 0 : i32
    %c0_i32_0 = arith.constant 0 : i32
    %c0_i32_1 = arith.constant 0 : i32
    return %c0_i32, %c0_i32_0 : i32, i32
  }
  func.func @transform_12(%arg0: i32) -> (i32, i32) {
    %c0_i32 = arith.constant 0 : i32
    %c0_i32_0 = arith.constant 0 : i32
    return %arg0, %c0_i32 : i32, i32
  }
  func.func @transform_13(%arg0: i32) -> (i32, i32) {
    %c0_i32 = arith.constant 0 : i32
    %c0_i32_0 = arith.constant 0 : i32
    return %arg0, %c0_i32 : i32, i32
  }
}

module attributes {stable_mosaic.version = 11 : i64} {
  func.func @_generic_kernel(%arg0: i32, %arg1: memref<256x64xbf16, #tpu.memory_space<vmem>>, %arg2: memref<256x64xbf16, #tpu.memory_space<vmem>>, %arg3: memref<256x32xbf16, #tpu.memory_space<vmem>>, %arg4: memref<64x64xbf16, #tpu.memory_space<vmem>>, %arg5: memref<1x64xf32, #tpu.memory_space<vmem>>, %arg6: memref<64x64xbf16, #tpu.memory_space<vmem>>, %arg7: memref<1x64xf32, #tpu.memory_space<vmem>>, %arg8: memref<64x32xbf16, #tpu.memory_space<vmem>>, %arg9: memref<1x32xf32, #tpu.memory_space<vmem>>, %arg10: memref<32x32xbf16, #tpu.memory_space<vmem>>, %arg11: memref<1x32xf32, #tpu.memory_space<vmem>>, %arg12: memref<32x1xbf16, #tpu.memory_space<vmem>>, %arg13: memref<1x1xf32, #tpu.memory_space<vmem>>, %arg14: memref<256x1xf32, #tpu.memory_space<vmem>>) attributes {dimension_semantics = [#tpu.dimension_semantics<parallel>], iteration_bounds = array<i64: 2>, scalar_prefetch = 0 : i64, scratch_operands = 0 : i64, tpu.core_type = #tpu.core_type<tc>, window_params = [{transform_indices = @transform_0, window_bounds = array<i64: 256, 64>}, {transform_indices = @transform_1, window_bounds = array<i64: 256, 64>}, {transform_indices = @transform_2, window_bounds = array<i64: 256, 32>}, {pipeline_mode = #tpu.pipeline_mode<synchronous>, transform_indices = @transform_3, window_bounds = array<i64: 64, 64>}, {pipeline_mode = #tpu.pipeline_mode<synchronous>, transform_indices = @transform_4, window_bounds = array<i64: 1, 64>}, {pipeline_mode = #tpu.pipeline_mode<synchronous>, transform_indices = @transform_5, window_bounds = array<i64: 64, 64>}, {pipeline_mode = #tpu.pipeline_mode<synchronous>, transform_indices = @transform_6, window_bounds = array<i64: 1, 64>}, {pipeline_mode = #tpu.pipeline_mode<synchronous>, transform_indices = @transform_7, window_bounds = array<i64: 64, 32>}, {pipeline_mode = #tpu.pipeline_mode<synchronous>, transform_indices = @transform_8, window_bounds = array<i64: 1, 32>}, {pipeline_mode = #tpu.pipeline_mode<synchronous>, transform_indices = @transform_9, window_bounds = array<i64: 32, 32>}, {pipeline_mode = #tpu.pipeline_mode<synchronous>, transform_indices = @transform_10, window_bounds = array<i64: 1, 32>}, {pipeline_mode = #tpu.pipeline_mode<synchronous>, transform_indices = @transform_11, window_bounds = array<i64: 32, 1>}, {pipeline_mode = #tpu.pipeline_mode<synchronous>, transform_indices = @transform_12, window_bounds = array<i64: 1, 1>}, {transform_indices = @transform_13, window_bounds = array<i64: 256, 1>}]} {
    %c0 = arith.constant 0 : index
    %c0_0 = arith.constant 0 : index
    %0 = vector.load %arg1[%c0, %c0_0] : memref<256x64xbf16, #tpu.memory_space<vmem>>, vector<256x64xbf16>
    %c0_1 = arith.constant 0 : index
    %c0_2 = arith.constant 0 : index
    %1 = vector.load %arg2[%c0_1, %c0_2] : memref<256x64xbf16, #tpu.memory_space<vmem>>, vector<256x64xbf16>
    %c0_3 = arith.constant 0 : index
    %c0_4 = arith.constant 0 : index
    %2 = vector.load %arg3[%c0_3, %c0_4] : memref<256x32xbf16, #tpu.memory_space<vmem>>, vector<256x32xbf16>
    %c0_5 = arith.constant 0 : index
    %c0_6 = arith.constant 0 : index
    %3 = vector.load %arg4[%c0_5, %c0_6] : memref<64x64xbf16, #tpu.memory_space<vmem>>, vector<64x64xbf16>
    %c0_7 = arith.constant 0 : index
    %c0_8 = arith.constant 0 : index
    %4 = vector.load %arg5[%c0_7, %c0_8] : memref<1x64xf32, #tpu.memory_space<vmem>>, vector<1x64xf32>
    %c0_9 = arith.constant 0 : index
    %c0_10 = arith.constant 0 : index
    %5 = vector.load %arg6[%c0_9, %c0_10] : memref<64x64xbf16, #tpu.memory_space<vmem>>, vector<64x64xbf16>
    %c0_11 = arith.constant 0 : index
    %c0_12 = arith.constant 0 : index
    %6 = vector.load %arg7[%c0_11, %c0_12] : memref<1x64xf32, #tpu.memory_space<vmem>>, vector<1x64xf32>
    %c0_13 = arith.constant 0 : index
    %c0_14 = arith.constant 0 : index
    %7 = vector.load %arg8[%c0_13, %c0_14] : memref<64x32xbf16, #tpu.memory_space<vmem>>, vector<64x32xbf16>
    %c0_15 = arith.constant 0 : index
    %c0_16 = arith.constant 0 : index
    %8 = vector.load %arg9[%c0_15, %c0_16] : memref<1x32xf32, #tpu.memory_space<vmem>>, vector<1x32xf32>
    %c0_17 = arith.constant 0 : index
    %c0_18 = arith.constant 0 : index
    %9 = vector.load %arg10[%c0_17, %c0_18] : memref<32x32xbf16, #tpu.memory_space<vmem>>, vector<32x32xbf16>
    %c0_19 = arith.constant 0 : index
    %c0_20 = arith.constant 0 : index
    %10 = vector.load %arg11[%c0_19, %c0_20] : memref<1x32xf32, #tpu.memory_space<vmem>>, vector<1x32xf32>
    %c0_21 = arith.constant 0 : index
    %c0_22 = arith.constant 0 : index
    %11 = vector.load %arg12[%c0_21, %c0_22] : memref<32x1xbf16, #tpu.memory_space<vmem>>, vector<32x1xbf16>
    %c0_23 = arith.constant 0 : index
    %c0_24 = arith.constant 0 : index
    %12 = vector.load %arg13[%c0_23, %c0_24] : memref<1x1xf32, #tpu.memory_space<vmem>>, vector<1x1xf32>
    %cst = arith.constant dense<0.000000e+00> : vector<256x64xf32>
    %13 = tpu.matmul %1, %3, %cst {dimension_numbers = #tpu.dot_dimension_numbers<[1], [0], [0], [1], [0, 0, 1, 1], [], []>} : vector<256x64xbf16>, vector<64x64xbf16>, vector<256x64xf32> -> vector<256x64xf32>
    %14 = vector.broadcast %4 : vector<1x64xf32> to vector<256x64xf32>
    %15 = arith.addf %13, %14 : vector<256x64xf32>
    %cst_25 = arith.constant 0.000000e+00 : f32
    %16 = vector.broadcast %cst_25 : f32 to vector<256x64xf32>
    %17 = arith.maximumf %15, %16 : vector<256x64xf32>
    %18 = arith.extf %1 : vector<256x64xbf16> to vector<256x64xf32>
    %19 = arith.addf %17, %18 : vector<256x64xf32>
    %20 = arith.extf %0 : vector<256x64xbf16> to vector<256x64xf32>
    %21 = arith.addf %20, %19 : vector<256x64xf32>
    %22 = arith.truncf %21 : vector<256x64xf32> to vector<256x64xbf16>
    %cst_26 = arith.constant dense<0.000000e+00> : vector<256x64xf32>
    %23 = tpu.matmul %22, %5, %cst_26 {dimension_numbers = #tpu.dot_dimension_numbers<[1], [0], [0], [1], [0, 0, 1, 1], [], []>} : vector<256x64xbf16>, vector<64x64xbf16>, vector<256x64xf32> -> vector<256x64xf32>
    %24 = vector.broadcast %6 : vector<1x64xf32> to vector<256x64xf32>
    %25 = arith.addf %23, %24 : vector<256x64xf32>
    %cst_27 = arith.constant 0.000000e+00 : f32
    %26 = vector.broadcast %cst_27 : f32 to vector<256x64xf32>
    %27 = arith.maximumf %25, %26 : vector<256x64xf32>
    %28 = arith.truncf %27 : vector<256x64xf32> to vector<256x64xbf16>
    %cst_28 = arith.constant dense<0.000000e+00> : vector<256x32xf32>
    %29 = tpu.matmul %28, %7, %cst_28 {dimension_numbers = #tpu.dot_dimension_numbers<[1], [0], [0], [1], [0, 0, 1, 1], [], []>} : vector<256x64xbf16>, vector<64x32xbf16>, vector<256x32xf32> -> vector<256x32xf32>
    %30 = vector.broadcast %8 : vector<1x32xf32> to vector<256x32xf32>
    %31 = arith.addf %29, %30 : vector<256x32xf32>
    %cst_29 = arith.constant 0.000000e+00 : f32
    %32 = vector.broadcast %cst_29 : f32 to vector<256x32xf32>
    %33 = arith.maximumf %31, %32 : vector<256x32xf32>
    %34 = arith.extf %2 : vector<256x32xbf16> to vector<256x32xf32>
    %35 = arith.addf %33, %34 : vector<256x32xf32>
    %36 = arith.truncf %35 : vector<256x32xf32> to vector<256x32xbf16>
    %cst_30 = arith.constant dense<0.000000e+00> : vector<256x32xf32>
    %37 = tpu.matmul %36, %9, %cst_30 {dimension_numbers = #tpu.dot_dimension_numbers<[1], [0], [0], [1], [0, 0, 1, 1], [], []>} : vector<256x32xbf16>, vector<32x32xbf16>, vector<256x32xf32> -> vector<256x32xf32>
    %38 = vector.broadcast %10 : vector<1x32xf32> to vector<256x32xf32>
    %39 = arith.addf %37, %38 : vector<256x32xf32>
    %cst_31 = arith.constant 0.000000e+00 : f32
    %40 = vector.broadcast %cst_31 : f32 to vector<256x32xf32>
    %41 = arith.maximumf %39, %40 : vector<256x32xf32>
    %42 = arith.truncf %41 : vector<256x32xf32> to vector<256x32xbf16>
    %cst_32 = arith.constant dense<0.000000e+00> : vector<256x1xf32>
    %43 = tpu.matmul %42, %11, %cst_32 {dimension_numbers = #tpu.dot_dimension_numbers<[1], [0], [0], [1], [0, 0, 1, 1], [], []>} : vector<256x32xbf16>, vector<32x1xbf16>, vector<256x1xf32> -> vector<256x1xf32>
    %44 = vector.broadcast %12 : vector<1x1xf32> to vector<256x1xf32>
    %45 = arith.addf %43, %44 : vector<256x1xf32>
    %46 = arith.negf %45 : vector<256x1xf32>
    %47 = math.exp %46 : vector<256x1xf32>
    %cst_33 = arith.constant 1.000000e+00 : f32
    %48 = vector.broadcast %cst_33 : f32 to vector<256x1xf32>
    %49 = arith.addf %48, %47 : vector<256x1xf32>
    %50 = arith.divf %48, %49 : vector<256x1xf32>
    %c0_34 = arith.constant 0 : index
    %c0_35 = arith.constant 0 : index
    %51 = vector.load %arg14[%c0_34, %c0_35] : memref<256x1xf32, #tpu.memory_space<vmem>>, vector<256x1xf32>
    tpu.vector_store %arg14[%c0_34, %c0_35], %50 {strides = array<i32>} : memref<256x1xf32, #tpu.memory_space<vmem>>, vector<256x1xf32>,
    return
  }
  func.func @transform_0(%arg0: i32) -> (i32, i32) {
    %c0_i32 = arith.constant 0 : i32
    %c0_i32_0 = arith.constant 0 : i32
    return %arg0, %c0_i32 : i32, i32
  }
  func.func @transform_1(%arg0: i32) -> (i32, i32) {
    %c0_i32 = arith.constant 0 : i32
    %c0_i32_0 = arith.constant 0 : i32
    return %arg0, %c0_i32 : i32, i32
  }
  func.func @transform_2(%arg0: i32) -> (i32, i32) {
    %c0_i32 = arith.constant 0 : i32
    %c0_i32_0 = arith.constant 0 : i32
    return %arg0, %c0_i32 : i32, i32
  }
  func.func @transform_3(%arg0: i32) -> (i32, i32) {
    %c0_i32 = arith.constant 0 : i32
    %c0_i32_0 = arith.constant 0 : i32
    %c0_i32_1 = arith.constant 0 : i32
    return %c0_i32, %c0_i32_0 : i32, i32
  }
  func.func @transform_4(%arg0: i32) -> (i32, i32) {
    %c0_i32 = arith.constant 0 : i32
    %c0_i32_0 = arith.constant 0 : i32
    %c0_i32_1 = arith.constant 0 : i32
    return %c0_i32, %c0_i32_0 : i32, i32
  }
  func.func @transform_5(%arg0: i32) -> (i32, i32) {
    %c0_i32 = arith.constant 0 : i32
    %c0_i32_0 = arith.constant 0 : i32
    %c0_i32_1 = arith.constant 0 : i32
    return %c0_i32, %c0_i32_0 : i32, i32
  }
  func.func @transform_6(%arg0: i32) -> (i32, i32) {
    %c0_i32 = arith.constant 0 : i32
    %c0_i32_0 = arith.constant 0 : i32
    %c0_i32_1 = arith.constant 0 : i32
    return %c0_i32, %c0_i32_0 : i32, i32
  }
  func.func @transform_7(%arg0: i32) -> (i32, i32) {
    %c0_i32 = arith.constant 0 : i32
    %c0_i32_0 = arith.constant 0 : i32
    %c0_i32_1 = arith.constant 0 : i32
    return %c0_i32, %c0_i32_0 : i32, i32
  }
  func.func @transform_8(%arg0: i32) -> (i32, i32) {
    %c0_i32 = arith.constant 0 : i32
    %c0_i32_0 = arith.constant 0 : i32
    %c0_i32_1 = arith.constant 0 : i32
    return %c0_i32, %c0_i32_0 : i32, i32
  }
  func.func @transform_9(%arg0: i32) -> (i32, i32) {
    %c0_i32 = arith.constant 0 : i32
    %c0_i32_0 = arith.constant 0 : i32
    %c0_i32_1 = arith.constant 0 : i32
    return %c0_i32, %c0_i32_0 : i32, i32
  }
  func.func @transform_10(%arg0: i32) -> (i32, i32) {
    %c0_i32 = arith.constant 0 : i32
    %c0_i32_0 = arith.constant 0 : i32
    %c0_i32_1 = arith.constant 0 : i32
    return %c0_i32, %c0_i32_0 : i32, i32
  }
  func.func @transform_11(%arg0: i32) -> (i32, i32) {
    %c0_i32 = arith.constant 0 : i32
    %c0_i32_0 = arith.constant 0 : i32
    %c0_i32_1 = arith.constant 0 : i32
    return %c0_i32, %c0_i32_0 : i32, i32
  }
  func.func @transform_12(%arg0: i32) -> (i32, i32) {
    %c0_i32 = arith.constant 0 : i32
    %c0_i32_0 = arith.constant 0 : i32
    %c0_i32_1 = arith.constant 0 : i32
    return %c0_i32, %c0_i32_0 : i32, i32
  }
  func.func @transform_13(%arg0: i32) -> (i32, i32) {
    %c0_i32 = arith.constant 0 : i32
    %c0_i32_0 = arith.constant 0 : i32
    return %arg0, %c0_i32 : i32, i32
  }
}

</mosaic_0001>

<llo_original>
// kernel: custom_model_forward.5
$region0: #{custom_model_forward.5}
  #allocation0 [shape = 'u32[]', space=smem, size = 0x4, offset = 0x4, fixed_abs, tag = 'smem constant byte address 0x4 - core index']
  #allocation1 [shape = 'u32[72,128]{1,0:T(1,128)}', space=vmem, size = 0x9000, scoped, tag = 'internal scratch']
  %s0 = inlined_call_operand.vmem [shape: bf16[8,512], index: 0, kind: input, shape index: {}]
  %s1 = inlined_call_operand.hbm [shape: bf16[512,512], index: 1, kind: input, shape index: {}]
  %s2 = inlined_call_operand.hbm [shape: f32[1,512], index: 2, kind: input, shape index: {}]
  %s3 = inlined_call_operand.hbm [shape: bf16[512,128], index: 3, kind: input, shape index: {}]
  %s4 = inlined_call_operand.hbm [shape: f32[1,128], index: 4, kind: input, shape index: {}]
  %s5 = inlined_call_operand.vmem [shape: bf16[512,320], index: 5, kind: input, shape index: {}]
  %s6 = inlined_call_operand.vmem [shape: f32[1,320], index: 6, kind: input, shape index: {}]
  %s7 = inlined_call_operand.vmem [shape: bf16[8,320], index: 7, kind: output, shape index: {0}]
  %s8 = inlined_call_operand.vmem [shape: bf16[8,128], index: 8, kind: output, shape index: {1}]
  %9 = xla_tuple %s7, %s8
  %s10 = sld [smem:[#allocation0]]
  $region62: #{custom_model_forward.5} parent=0
    _
  %s12 = ssub.s32 1, %s10
  %s13 = scalar_select 0, %s12, %s10
  $region1: #{custom_model_forward.5} parent=0
    #allocation2 [shape = 'u8[524288]{0}', space=vmem, size = 0x80000, scoped, tag = 'input window, operand 1, single buffered']
    #allocation3 [shape = 's32[1]{0}', space=sflag, size = 0x4, scoped, tag = 'scoped memory for custom_model_forward.5']
    #allocation4 [shape = 'u8[2048]{0}', space=vmem, size = 0x800, scoped, tag = 'input window, operand 2, single buffered']
    #allocation5 [shape = 's32[1]{0}', space=sflag, size = 0x4, scoped, tag = 'scoped memory for custom_model_forward.5']
    #allocation6 [shape = 'u8[131072]{0}', space=vmem, size = 0x20000, scoped, tag = 'input window, operand 3, single buffered']
    #allocation7 [shape = 'u8[512]{0}', space=vmem, size = 0x400, scoped, tag = 'input window, operand 4, single buffered']
    #allocation8 [shape = 's32[1]{0}', space=sflag, size = 0x4, scoped, tag = 'scoped memory for custom_model_forward.5']
    %14 = vsyncpa [#allocation3], 0
    %15 = vsyncpa [#allocation5], 0
    %16 = vsyncpa [#allocation8], 0
    // Predicated region
    $region2: #{custom_model_forward.5} parent=1 // pred_check
      _
    $region3: #{custom_model_forward.5} parent=1 // pred_check_branch
      %18 = sbr.rel (0) target = $region5
    $region4: #{custom_model_forward.5} parent=1 // pred_region
      _
    $region5: #{custom_model_forward.5} parent=1 // pred_fallthru
      _
    // Predicated region
    $region6: #{custom_model_forward.5} parent=1 // pred_check
      _
    $region7: #{custom_model_forward.5} parent=1 // pred_check_branch
      %20 = sbr.rel (0) target = $region9
    $region8: #{custom_model_forward.5} parent=1 // pred_region
      %22 = vsyncadd [#allocation3], 0
      %s23 = sshll.u32 %s1, 4
      %s24 = int_to_ptr.hbm [resolvable:$true] %s23
      %s25 = sshll.u32 [#allocation2], 4
      %s26 = int_to_ptr.vmem [resolvable:$true] %s25
      %31 = dma.hbm_to_vmem [thread:$0]  %s24, 16384, %s26, [#allocation3], 256, 256, 16
    $region9: #{custom_model_forward.5} parent=1 // pred_fallthru
      _
    // Predicated region
    $region10: #{custom_model_forward.5} parent=1 // pred_check
      _
    $region11: #{custom_model_forward.5} parent=1 // pred_check_branch
      %33 = sbr.rel (0) target = $region13
    $region12: #{custom_model_forward.5} parent=1 // pred_region
      %35 = vsyncadd [#allocation5], 0
      %s37 = sshll.u32 %s2, 4
      %s38 = int_to_ptr.hbm [resolvable:$true] %s37
      %s39 = sshll.u32 [#allocation4], 4
      %s40 = int_to_ptr.vmem [resolvable:$true] %s39
      %42 = dma.hbm_to_vmem [thread:$0]  %s38, 64, %s40, [#allocation5]
    $region13: #{custom_model_forward.5} parent=1 // pred_fallthru
      _
    // Predicated region
    $region14: #{custom_model_forward.5} parent=1 // pred_check
      _
    $region15: #{custom_model_forward.5} parent=1 // pred_check_branch
      %44 = sbr.rel (0) target = $region17
    $region16: #{custom_model_forward.5} parent=1 // pred_region
      %46 = vsyncadd [#allocation5], 0
      %s47 = sshll.u32 %s3, 4
      %s48 = int_to_ptr.hbm [resolvable:$true] %s47
      %s49 = sshll.u32 [#allocation6], 4
      %s50 = int_to_ptr.vmem [resolvable:$true] %s49
      %55 = dma.hbm_to_vmem [thread:$0]  %s48, 4096, %s50, [#allocation5], 64, 64, 4
    $region17: #{custom_model_forward.5} parent=1 // pred_fallthru
      _
    // Predicated region
    $region18: #{custom_model_forward.5} parent=1 // pred_check
      _
    $region19: #{custom_model_forward.5} parent=1 // pred_check_branch
      %57 = sbr.rel (0) target = $region21
    $region20: #{custom_model_forward.5} parent=1 // pred_region
      %59 = vsyncadd [#allocation8], 0
      %s61 = sshll.u32 %s4, 4
      %s62 = int_to_ptr.hbm [resolvable:$true] %s61
      %s63 = sshll.u32 [#allocation7], 4
      %s64 = int_to_ptr.vmem [resolvable:$true] %s63
      %66 = dma.hbm_to_vmem [thread:$0]  %s62, 16, %s64, [#allocation8]
    $region21: #{custom_model_forward.5} parent=1 // pred_fallthru
      _
    // Predicated region
    $region22: #{custom_model_forward.5} parent=1 // pred_check
      _
    $region23: #{custom_model_forward.5} parent=1 // pred_check_branch
      %68 = sbr.rel (0) target = $region25
    $region24: #{custom_model_forward.5} parent=1 // pred_region
      _
    $region25: #{custom_model_forward.5} parent=1 // pred_fallthru
      _
    // Predicated region
    $region26: #{custom_model_forward.5} parent=1 // pred_check
      _
    $region27: #{custom_model_forward.5} parent=1 // pred_check_branch
      %70 = sbr.rel (0) target = $region29
    $region28: #{custom_model_forward.5} parent=1 // pred_region
      _
    $region29: #{custom_model_forward.5} parent=1 // pred_fallthru
      _
    // Predicated region
    $region30: #{custom_model_forward.5} parent=1 // pred_check
      _
    $region31: #{custom_model_forward.5} parent=1 // pred_check_branch
      %72 = sbr.rel (0) target = $region33
    $region32: #{custom_model_forward.5} parent=1 // pred_region
      %74 = dma.done [#allocation3], 16384
    $region33: #{custom_model_forward.5} parent=1 // pred_fallthru
      _
    // Predicated region
    $region34: #{custom_model_forward.5} parent=1 // pred_check
      _
    $region35: #{custom_model_forward.5} parent=1 // pred_check_branch
      %76 = sbr.rel (0) target = $region37
    $region36: #{custom_model_forward.5} parent=1 // pred_region
      %78 = dma.done [#allocation5], 64
    $region37: #{custom_model_forward.5} parent=1 // pred_fallthru
      _
    // Predicated region
    $region38: #{custom_model_forward.5} parent=1 // pred_check
      _
    $region39: #{custom_model_forward.5} parent=1 // pred_check_branch
      %80 = sbr.rel (0) target = $region41
    $region40: #{custom_model_forward.5} parent=1 // pred_region
      %82 = dma.done [#allocation5], 4096
    $region41: #{custom_model_forward.5} parent=1 // pred_fallthru
      _
    // Predicated region
    $region42: #{custom_model_forward.5} parent=1 // pred_check
      _
    $region43: #{custom_model_forward.5} parent=1 // pred_check_branch
      %84 = sbr.rel (0) target = $region45
    $region44: #{custom_model_forward.5} parent=1 // pred_region
      %86 = dma.done [#allocation8], 16
    $region45: #{custom_model_forward.5} parent=1 // pred_fallthru
      _
    %v87 = vld [vmem:[%s0] sm:$0xff]
    %v88 = vld [vmem:[%s0 + $0x8] sm:$0xff]
    %v89 = vld [vmem:[#allocation2] sm:$0xff]
    %v90 = vld [vmem:[#allocation2 + $0x8] sm:$0xff]
    %v91 = vld [vmem:[#allocation2 + $0x10] sm:$0xff]
    %v92 = vld [vmem:[#allocation2 + $0x18] sm:$0xff]
    %v93 = vld [vmem:[#allocation2 + $0x20] sm:$0xff]
    %v94 = vld [vmem:[#allocation2 + $0x28] sm:$0xff]
    %v95 = vld [vmem:[#allocation2 + $0x30] sm:$0xff]
    %v96 = vld [vmem:[#allocation2 + $0x38] sm:$0xff]
    %v97 = vld [vmem:[#allocation2 + $0x40] sm:$0xff]
    %v98 = vld [vmem:[#allocation2 + $0x48] sm:$0xff]
    %v99 = vld [vmem:[#allocation2 + $0x50] sm:$0xff]
    %v100 = vld [vmem:[#allocation2 + $0x58] sm:$0xff]
    %v101 = vld [vmem:[#allocation2 + $0x60] sm:$0xff]
    %v102 = vld [vmem:[#allocation2 + $0x68] sm:$0xff]
    %v103 = vld [vmem:[#allocation2 + $0x70] sm:$0xff]
    %v104 = vld [vmem:[#allocation2 + $0x78] sm:$0xff]
    %v105 = vld [vmem:[#allocation2 + $0x80] sm:$0xff]
    %v106 = vld [vmem:[#allocation2 + $0x88] sm:$0xff]
    %v107 = vld [vmem:[#allocation2 + $0x90] sm:$0xff]
    %v108 = vld [vmem:[#allocation2 + $0x98] sm:$0xff]
    %v109 = vld [vmem:[#allocation2 + $0xa0] sm:$0xff]
    %v110 = vld [vmem:[#allocation2 + $0xa8] sm:$0xff]
    %v111 = vld [vmem:[#allocation2 + $0xb0] sm:$0xff]
    %v112 = vld [vmem:[#allocation2 + $0xb8] sm:$0xff]
    %v113 = vld [vmem:[#allocation2 + $0xc0] sm:$0xff]
    %v114 = vld [vmem:[#allocation2 + $0xc8] sm:$0xff]
    %v115 = vld [vmem:[#allocation2 + $0xd0] sm:$0xff]
    %v116 = vld [vmem:[#allocation2 + $0xd8] sm:$0xff]
    %v117 = vld [vmem:[#allocation2 + $0xe0] sm:$0xff]
    %v118 = vld [vmem:[#allocation2 + $0xe8] sm:$0xff]
    %v119 = vld [vmem:[#allocation2 + $0xf0] sm:$0xff]
    %v120 = vld [vmem:[#allocation2 + $0xf8] sm:$0xff]
    %v121 = vld [vmem:[#allocation2 + $0x100] sm:$0xff]
    %v122 = vld [vmem:[#allocation2 + $0x108] sm:$0xff]
    %v123 = vld [vmem:[#allocation2 + $0x110] sm:$0xff]
    %v124 = vld [vmem:[#allocation2 + $0x118] sm:$0xff]
    %v125 = vld [vmem:[#allocation2 + $0x120] sm:$0xff]
    %v126 = vld [vmem:[#allocation2 + $0x128] sm:$0xff]
    %v127 = vld [vmem:[#allocation2 + $0x130] sm:$0xff]
    %v128 = vld [vmem:[#allocation2 + $0x138] sm:$0xff]
    %v129 = vld [vmem:[#allocation2 + $0x140] sm:$0xff]
    %v130 = vld [vmem:[#allocation2 + $0x148] sm:$0xff]
    %v131 = vld [vmem:[#allocation2 + $0x150] sm:$0xff]
    %v132 = vld [vmem:[#allocation2 + $0x158] sm:$0xff]
    %v133 = vld [vmem:[#allocation2 + $0x160] sm:$0xff]
    %v134 = vld [vmem:[#allocation2 + $0x168] sm:$0xff]
    %v135 = vld [vmem:[#allocation2 + $0x170] sm:$0xff]
    %v136 = vld [vmem:[#allocation2 + $0x178] sm:$0xff]
    %v137 = vld [vmem:[#allocation2 + $0x180] sm:$0xff]
    %v138 = vld [vmem:[#allocation2 + $0x188] sm:$0xff]
    %v139 = vld [vmem:[#allocation2 + $0x190] sm:$0xff]
    %v140 = vld [vmem:[#allocation2 + $0x198] sm:$0xff]
    %v141 = vld [vmem:[#allocation2 + $0x1a0] sm:$0xff]
    %v142 = vld [vmem:[#allocation2 + $0x1a8] sm:$0xff]
    %v143 = vld [vmem:[#allocation2 + $0x1b0] sm:$0xff]
    %v144 = vld [vmem:[#allocation2 + $0x1b8] sm:$0xff]
    %v145 = vld [vmem:[#allocation2 + $0x1c0] sm:$0xff]
    %v146 = vld [vmem:[#allocation2 + $0x1c8] sm:$0xff]
    %v147 = vld [vmem:[#allocation2 + $0x1d0] sm:$0xff]
    %v148 = vld [vmem:[#allocation2 + $0x1d8] sm:$0xff]
    %v149 = vld [vmem:[#allocation2 + $0x1e0] sm:$0xff]
    %v150 = vld [vmem:[#allocation2 + $0x1e8] sm:$0xff]
    %v151 = vld [vmem:[#allocation2 + $0x1f0] sm:$0xff]
    %v152 = vld [vmem:[#allocation2 + $0x1f8] sm:$0xff]
    %v153 = vld [vmem:[#allocation2 + $0x200] sm:$0xff]
    %v154 = vld [vmem:[#allocation2 + $0x208] sm:$0xff]
    %v155 = vld [vmem:[#allocation2 + $0x210] sm:$0xff]
    %v156 = vld [vmem:[#allocation2 + $0x218] sm:$0xff]
    %v157 = vld [vmem:[#allocation2 + $0x220] sm:$0xff]
    %v158 = vld [vmem:[#allocation2 + $0x228] sm:$0xff]
    %v159 = vld [vmem:[#allocation2 + $0x230] sm:$0xff]
    %v160 = vld [vmem:[#allocation2 + $0x238] sm:$0xff]
    %v161 = vld [vmem:[#allocation2 + $0x240] sm:$0xff]
    %v162 = vld [vmem:[#allocation2 + $0x248] sm:$0xff]
    %v163 = vld [vmem:[#allocation2 + $0x250] sm:$0xff]
    %v164 = vld [vmem:[#allocation2 + $0x258] sm:$0xff]
    %v165 = vld [vmem:[#allocation2 + $0x260] sm:$0xff]
    %v166 = vld [vmem:[#allocation2 + $0x268] sm:$0xff]
    %v167 = vld [vmem:[#allocation2 + $0x270] sm:$0xff]
    %v168 = vld [vmem:[#allocation2 + $0x278] sm:$0xff]
    %v169 = vld [vmem:[#allocation2 + $0x280] sm:$0xff]
    %v170 = vld [vmem:[#allocation2 + $0x288] sm:$0xff]
    %v171 = vld [vmem:[#allocation2 + $0x290] sm:$0xff]
    %v172 = vld [vmem:[#allocation2 + $0x298] sm:$0xff]
    %v173 = vld [vmem:[#allocation2 + $0x2a0] sm:$0xff]
    %v174 = vld [vmem:[#allocation2 + $0x2a8] sm:$0xff]
    %v175 = vld [vmem:[#allocation2 + $0x2b0] sm:$0xff]
    %v176 = vld [vmem:[#allocation2 + $0x2b8] sm:$0xff]
    %v177 = vld [vmem:[#allocation2 + $0x2c0] sm:$0xff]
    %v178 = vld [vmem:[#allocation2 + $0x2c8] sm:$0xff]
    %v179 = vld [vmem:[#allocation2 + $0x2d0] sm:$0xff]
    %v180 = vld [vmem:[#allocation2 + $0x2d8] sm:$0xff]
    %v181 = vld [vmem:[#allocation2 + $0x2e0] sm:$0xff]
    %v182 = vld [vmem:[#allocation2 + $0x2e8] sm:$0xff]
    %v183 = vld [vmem:[#allocation2 + $0x2f0] sm:$0xff]
    %v184 = vld [vmem:[#allocation2 + $0x2f8] sm:$0xff]
    %v185 = vld [vmem:[#allocation2 + $0x300] sm:$0xff]
    %v186 = vld [vmem:[#allocation2 + $0x308] sm:$0xff]
    %v187 = vld [vmem:[#allocation2 + $0x310] sm:$0xff]
    %v188 = vld [vmem:[#allocation2 + $0x318] sm:$0xff]
    %v189 = vld [vmem:[#allocation2 + $0x320] sm:$0xff]
    %v190 = vld [vmem:[#allocation2 + $0x328] sm:$0xff]
    %v191 = vld [vmem:[#allocation2 + $0x330] sm:$0xff]
    %v192 = vld [vmem:[#allocation2 + $0x338] sm:$0xff]
    %v193 = vld [vmem:[#allocation2 + $0x340] sm:$0xff]
    %v194 = vld [vmem:[#allocation2 + $0x348] sm:$0xff]
    %v195 = vld [vmem:[#allocation2 + $0x350] sm:$0xff]
    %v196 = vld [vmem:[#allocation2 + $0x358] sm:$0xff]
    %v197 = vld [vmem:[#allocation2 + $0x360] sm:$0xff]
    %v198 = vld [vmem:[#allocation2 + $0x368] sm:$0xff]
    %v199 = vld [vmem:[#allocation2 + $0x370] sm:$0xff]
    %v200 = vld [vmem:[#allocation2 + $0x378] sm:$0xff]
    %v201 = vld [vmem:[#allocation2 + $0x380] sm:$0xff]
    %v202 = vld [vmem:[#allocation2 + $0x388] sm:$0xff]
    %v203 = vld [vmem:[#allocation2 + $0x390] sm:$0xff]
    %v204 = vld [vmem:[#allocation2 + $0x398] sm:$0xff]
    %v205 = vld [vmem:[#allocation2 + $0x3a0] sm:$0xff]
    %v206 = vld [vmem:[#allocation2 + $0x3a8] sm:$0xff]
    %v207 = vld [vmem:[#allocation2 + $0x3b0] sm:$0xff]
    %v208 = vld [vmem:[#allocation2 + $0x3b8] sm:$0xff]
    %v209 = vld [vmem:[#allocation2 + $0x3c0] sm:$0xff]
    %v210 = vld [vmem:[#allocation2 + $0x3c8] sm:$0xff]
    %v211 = vld [vmem:[#allocation2 + $0x3d0] sm:$0xff]
    %v212 = vld [vmem:[#allocation2 + $0x3d8] sm:$0xff]
    %v213 = vld [vmem:[#allocation2 + $0x3e0] sm:$0xff]
    %v214 = vld [vmem:[#allocation2 + $0x3e8] sm:$0xff]
    %v215 = vld [vmem:[#allocation2 + $0x3f0] sm:$0xff]
    %v216 = vld [vmem:[#allocation2 + $0x3f8] sm:$0xff]
    %v217 = vld [vmem:[#allocation4] sm:$0xf]
    %v218 = vld [vmem:[#allocation6] sm:$0xf]
    %v219 = vld [vmem:[#allocation6 + $0x4] sm:$0xf]
    %v220 = vld [vmem:[#allocation6 + $0x8] sm:$0xf]
    %v221 = vld [vmem:[#allocation6 + $0xc] sm:$0xf]
    %v222 = vld [vmem:[#allocation6 + $0x10] sm:$0xf]
    %v223 = vld [vmem:[#allocation6 + $0x14] sm:$0xf]
    %v224 = vld [vmem:[#allocation6 + $0x18] sm:$0xf]
    %v225 = vld [vmem:[#allocation6 + $0x1c] sm:$0xf]
    %v226 = vld [vmem:[#allocation6 + $0x20] sm:$0xf]
    %v227 = vld [vmem:[#allocation6 + $0x24] sm:$0xf]
    %v228 = vld [vmem:[#allocation6 + $0x28] sm:$0xf]
    %v229 = vld [vmem:[#allocation6 + $0x2c] sm:$0xf]
    %v230 = vld [vmem:[#allocation6 + $0x30] sm:$0xf]
    %v231 = vld [vmem:[#allocation6 + $0x34] sm:$0xf]
    %v232 = vld [vmem:[#allocation6 + $0x38] sm:$0xf]
    %v233 = vld [vmem:[#allocation6 + $0x3c] sm:$0xf]
    %v234 = vld [vmem:[#allocation6 + $0x40] sm:$0xf]
    %v235 = vld [vmem:[#allocation6 + $0x44] sm:$0xf]
    %v236 = vld [vmem:[#allocation6 + $0x48] sm:$0xf]
    %v237 = vld [vmem:[#allocation6 + $0x4c] sm:$0xf]
    %v238 = vld [vmem:[#allocation6 + $0x50] sm:$0xf]
    %v239 = vld [vmem:[#allocation6 + $0x54] sm:$0xf]
    %v240 = vld [vmem:[#allocation6 + $0x58] sm:$0xf]
    %v241 = vld [vmem:[#allocation6 + $0x5c] sm:$0xf]
    %v242 = vld [vmem:[#allocation6 + $0x60] sm:$0xf]
    %v243 = vld [vmem:[#allocation6 + $0x64] sm:$0xf]
    %v244 = vld [vmem:[#allocation6 + $0x68] sm:$0xf]
    %v245 = vld [vmem:[#allocation6 + $0x6c] sm:$0xf]
    %v246 = vld [vmem:[#allocation6 + $0x70] sm:$0xf]
    %v247 = vld [vmem:[#allocation6 + $0x74] sm:$0xf]
    %v248 = vld [vmem:[#allocation6 + $0x78] sm:$0xf]
    %v249 = vld [vmem:[#allocation6 + $0x7c] sm:$0xf]
    %v250 = vld [vmem:[#allocation6 + $0x80] sm:$0xf]
    %v251 = vld [vmem:[#allocation6 + $0x84] sm:$0xf]
    %v252 = vld [vmem:[#allocation6 + $0x88] sm:$0xf]
    %v253 = vld [vmem:[#allocation6 + $0x8c] sm:$0xf]
    %v254 = vld [vmem:[#allocation6 + $0x90] sm:$0xf]
    %v255 = vld [vmem:[#allocation6 + $0x94] sm:$0xf]
    %v256 = vld [vmem:[#allocation6 + $0x98] sm:$0xf]
    %v257 = vld [vmem:[#allocation6 + $0x9c] sm:$0xf]
    %v258 = vld [vmem:[#allocation6 + $0xa0] sm:$0xf]
    %v259 = vld [vmem:[#allocation6 + $0xa4] sm:$0xf]
    %v260 = vld [vmem:[#allocation6 + $0xa8] sm:$0xf]
    %v261 = vld [vmem:[#allocation6 + $0xac] sm:$0xf]
    %v262 = vld [vmem:[#allocation6 + $0xb0] sm:$0xf]
    %v263 = vld [vmem:[#allocation6 + $0xb4] sm:$0xf]
    %v264 = vld [vmem:[#allocation6 + $0xb8] sm:$0xf]
    %v265 = vld [vmem:[#allocation6 + $0xbc] sm:$0xf]
    %v266 = vld [vmem:[#allocation6 + $0xc0] sm:$0xf]
    %v267 = vld [vmem:[#allocation6 + $0xc4] sm:$0xf]
    %v268 = vld [vmem:[#allocation6 + $0xc8] sm:$0xf]
    %v269 = vld [vmem:[#allocation6 + $0xcc] sm:$0xf]
    %v270 = vld [vmem:[#allocation6 + $0xd0] sm:$0xf]
    %v271 = vld [vmem:[#allocation6 + $0xd4] sm:$0xf]
    %v272 = vld [vmem:[#allocation6 + $0xd8] sm:$0xf]
    %v273 = vld [vmem:[#allocation6 + $0xdc] sm:$0xf]
    %v274 = vld [vmem:[#allocation6 + $0xe0] sm:$0xf]
    %v275 = vld [vmem:[#allocation6 + $0xe4] sm:$0xf]
    %v276 = vld [vmem:[#allocation6 + $0xe8] sm:$0xf]
    %v277 = vld [vmem:[#allocation6 + $0xec] sm:$0xf]
    %v278 = vld [vmem:[#allocation6 + $0xf0] sm:$0xf]
    %v279 = vld [vmem:[#allocation6 + $0xf4] sm:$0xf]
    %v280 = vld [vmem:[#allocation6 + $0xf8] sm:$0xf]
    %v281 = vld [vmem:[#allocation6 + $0xfc] sm:$0xf]
    %v282 = vld [vmem:[#allocation7] sm:$0x1]
    %v283 = vld [vmem:[%s5] sm:$0xff]
    %v284 = vld [vmem:[%s5 + $0x8] sm:$0xf]
    %v285 = vld [vmem:[%s5 + $0xc] sm:$0xff]
    %v286 = vld [vmem:[%s5 + $0x14] sm:$0xf]
    %v287 = vld [vmem:[%s5 + $0x18] sm:$0xff]
    %v288 = vld [vmem:[%s5 + $0x20] sm:$0xf]
    %v289 = vld [vmem:[%s5 + $0x24] sm:$0xff]
    %v290 = vld [vmem:[%s5 + $0x2c] sm:$0xf]
    %v291 = vld [vmem:[%s5 + $0x30] sm:$0xff]
    %v292 = vld [vmem:[%s5 + $0x38] sm:$0xf]
    %v293 = vld [vmem:[%s5 + $0x3c] sm:$0xff]
    %v294 = vld [vmem:[%s5 + $0x44] sm:$0xf]
    %v295 = vld [vmem:[%s5 + $0x48] sm:$0xff]
    %v296 = vld [vmem:[%s5 + $0x50] sm:$0xf]
    %v297 = vld [vmem:[%s5 + $0x54] sm:$0xff]
    %v298 = vld [vmem:[%s5 + $0x5c] sm:$0xf]
    %v299 = vld [vmem:[%s5 + $0x60] sm:$0xff]
    %v300 = vld [vmem:[%s5 + $0x68] sm:$0xf]
    %v301 = vld [vmem:[%s5 + $0x6c] sm:$0xff]
    %v302 = vld [vmem:[%s5 + $0x74] sm:$0xf]
    %v303 = vld [vmem:[%s5 + $0x78] sm:$0xff]
    %v304 = vld [vmem:[%s5 + $0x80] sm:$0xf]
    %v305 = vld [vmem:[%s5 + $0x84] sm:$0xff]
    %v306 = vld [vmem:[%s5 + $0x8c] sm:$0xf]
    %v307 = vld [vmem:[%s5 + $0x90] sm:$0xff]
    %v308 = vld [vmem:[%s5 + $0x98] sm:$0xf]
    %v309 = vld [vmem:[%s5 + $0x9c] sm:$0xff]
    %v310 = vld [vmem:[%s5 + $0xa4] sm:$0xf]
    %v311 = vld [vmem:[%s5 + $0xa8] sm:$0xff]
    %v312 = vld [vmem:[%s5 + $0xb0] sm:$0xf]
    %v313 = vld [vmem:[%s5 + $0xb4] sm:$0xff]
    %v314 = vld [vmem:[%s5 + $0xbc] sm:$0xf]
    %v315 = vld [vmem:[%s5 + $0xc0] sm:$0xff]
    %v316 = vld [vmem:[%s5 + $0xc8] sm:$0xf]
    %v317 = vld [vmem:[%s5 + $0xcc] sm:$0xff]
    %v318 = vld [vmem:[%s5 + $0xd4] sm:$0xf]
    %v319 = vld [vmem:[%s5 + $0xd8] sm:$0xff]
    %v320 = vld [vmem:[%s5 + $0xe0] sm:$0xf]
    %v321 = vld [vmem:[%s5 + $0xe4] sm:$0xff]
    %v322 = vld [vmem:[%s5 + $0xec] sm:$0xf]
    %v323 = vld [vmem:[%s5 + $0xf0] sm:$0xff]
    %v324 = vld [vmem:[%s5 + $0xf8] sm:$0xf]
    %v325 = vld [vmem:[%s5 + $0xfc] sm:$0xff]
    %v326 = vld [vmem:[%s5 + $0x104] sm:$0xf]
    %v327 = vld [vmem:[%s5 + $0x108] sm:$0xff]
    %v328 = vld [vmem:[%s5 + $0x110] sm:$0xf]
    %v329 = vld [vmem:[%s5 + $0x114] sm:$0xff]
    %v330 = vld [vmem:[%s5 + $0x11c] sm:$0xf]
    %v331 = vld [vmem:[%s5 + $0x120] sm:$0xff]
    %v332 = vld [vmem:[%s5 + $0x128] sm:$0xf]
    %v333 = vld [vmem:[%s5 + $0x12c] sm:$0xff]
    %v334 = vld [vmem:[%s5 + $0x134] sm:$0xf]
    %v335 = vld [vmem:[%s5 + $0x138] sm:$0xff]
    %v336 = vld [vmem:[%s5 + $0x140] sm:$0xf]
    %v337 = vld [vmem:[%s5 + $0x144] sm:$0xff]
    %v338 = vld [vmem:[%s5 + $0x14c] sm:$0xf]
    %v339 = vld [vmem:[%s5 + $0x150] sm:$0xff]
    %v340 = vld [vmem:[%s5 + $0x158] sm:$0xf]
    %v341 = vld [vmem:[%s5 + $0x15c] sm:$0xff]
    %v342 = vld [vmem:[%s5 + $0x164] sm:$0xf]
    %v343 = vld [vmem:[%s5 + $0x168] sm:$0xff]
    %v344 = vld [vmem:[%s5 + $0x170] sm:$0xf]
    %v345 = vld [vmem:[%s5 + $0x174] sm:$0xff]
    %v346 = vld [vmem:[%s5 + $0x17c] sm:$0xf]
    %v347 = vld [vmem:[%s5 + $0x180] sm:$0xff]
    %v348 = vld [vmem:[%s5 + $0x188] sm:$0xf]
    %v349 = vld [vmem:[%s5 + $0x18c] sm:$0xff]
    %v350 = vld [vmem:[%s5 + $0x194] sm:$0xf]
    %v351 = vld [vmem:[%s5 + $0x198] sm:$0xff]
    %v352 = vld [vmem:[%s5 + $0x1a0] sm:$0xf]
    %v353 = vld [vmem:[%s5 + $0x1a4] sm:$0xff]
    %v354 = vld [vmem:[%s5 + $0x1ac] sm:$0xf]
    %v355 = vld [vmem:[%s5 + $0x1b0] sm:$0xff]
    %v356 = vld [vmem:[%s5 + $0x1b8] sm:$0xf]
    %v357 = vld [vmem:[%s5 + $0x1bc] sm:$0xff]
    %v358 = vld [vmem:[%s5 + $0x1c4] sm:$0xf]
    %v359 = vld [vmem:[%s5 + $0x1c8] sm:$0xff]
    %v360 = vld [vmem:[%s5 + $0x1d0] sm:$0xf]
    %v361 = vld [vmem:[%s5 + $0x1d4] sm:$0xff]
    %v362 = vld [vmem:[%s5 + $0x1dc] sm:$0xf]
    %v363 = vld [vmem:[%s5 + $0x1e0] sm:$0xff]
    %v364 = vld [vmem:[%s5 + $0x1e8] sm:$0xf]
    %v365 = vld [vmem:[%s5 + $0x1ec] sm:$0xff]
    %v366 = vld [vmem:[%s5 + $0x1f4] sm:$0xf]
    %v367 = vld [vmem:[%s5 + $0x1f8] sm:$0xff]
    %v368 = vld [vmem:[%s5 + $0x200] sm:$0xf]
    %v369 = vld [vmem:[%s5 + $0x204] sm:$0xff]
    %v370 = vld [vmem:[%s5 + $0x20c] sm:$0xf]
    %v371 = vld [vmem:[%s5 + $0x210] sm:$0xff]
    %v372 = vld [vmem:[%s5 + $0x218] sm:$0xf]
    %v373 = vld [vmem:[%s5 + $0x21c] sm:$0xff]
    %v374 = vld [vmem:[%s5 + $0x224] sm:$0xf]
    %v375 = vld [vmem:[%s5 + $0x228] sm:$0xff]
    %v376 = vld [vmem:[%s5 + $0x230] sm:$0xf]
    %v377 = vld [vmem:[%s5 + $0x234] sm:$0xff]
    %v378 = vld [vmem:[%s5 + $0x23c] sm:$0xf]
    %v379 = vld [vmem:[%s5 + $0x240] sm:$0xff]
    %v380 = vld [vmem:[%s5 + $0x248] sm:$0xf]
    %v381 = vld [vmem:[%s5 + $0x24c] sm:$0xff]
    %v382 = vld [vmem:[%s5 + $0x254] sm:$0xf]
    %v383 = vld [vmem:[%s5 + $0x258] sm:$0xff]
    %v384 = vld [vmem:[%s5 + $0x260] sm:$0xf]
    %v385 = vld [vmem:[%s5 + $0x264] sm:$0xff]
    %v386 = vld [vmem:[%s5 + $0x26c] sm:$0xf]
    %v387 = vld [vmem:[%s5 + $0x270] sm:$0xff]
    %v388 = vld [vmem:[%s5 + $0x278] sm:$0xf]
    %v389 = vld [vmem:[%s5 + $0x27c] sm:$0xff]
    %v390 = vld [vmem:[%s5 + $0x284] sm:$0xf]
    %v391 = vld [vmem:[%s5 + $0x288] sm:$0xff]
    %v392 = vld [vmem:[%s5 + $0x290] sm:$0xf]
    %v393 = vld [vmem:[%s5 + $0x294] sm:$0xff]
    %v394 = vld [vmem:[%s5 + $0x29c] sm:$0xf]
    %v395 = vld [vmem:[%s5 + $0x2a0] sm:$0xff]
    %v396 = vld [vmem:[%s5 + $0x2a8] sm:$0xf]
    %v397 = vld [vmem:[%s5 + $0x2ac] sm:$0xff]
    %v398 = vld [vmem:[%s5 + $0x2b4] sm:$0xf]
    %v399 = vld [vmem:[%s5 + $0x2b8] sm:$0xff]
    %v400 = vld [vmem:[%s5 + $0x2c0] sm:$0xf]
    %v401 = vld [vmem:[%s5 + $0x2c4] sm:$0xff]
    %v402 = vld [vmem:[%s5 + $0x2cc] sm:$0xf]
    %v403 = vld [vmem:[%s5 + $0x2d0] sm:$0xff]
    %v404 = vld [vmem:[%s5 + $0x2d8] sm:$0xf]
    %v405 = vld [vmem:[%s5 + $0x2dc] sm:$0xff]
    %v406 = vld [vmem:[%s5 + $0x2e4] sm:$0xf]
    %v407 = vld [vmem:[%s5 + $0x2e8] sm:$0xff]
    %v408 = vld [vmem:[%s5 + $0x2f0] sm:$0xf]
    %v409 = vld [vmem:[%s5 + $0x2f4] sm:$0xff]
    %v410 = vld [vmem:[%s5 + $0x2fc] sm:$0xf]
    %v411 = vld [vmem:[%s6] sm:$0x7]
    %v413 = vperm.slane %v217, 0
    %v414 = vperm.slane %v217, 1
    %v415 = vperm.slane %v217, 2
    %v416 = vperm.slane %v217, 3
    %v423 = vunpack.c.l.b16 %v87
    %v424 = vunpack.c.h.b16 %v87
    %v425 = vunpack.c.l.b16 %v88
    %v426 = vunpack.c.h.b16 %v88
    %v427 = vpack.c.b16 %v423, %v423
    %v428 = vpack.c.b16 %v424, %v424
    %v429 = vpack.c.b16 %v425, %v425
    %v430 = vpack.c.b16 %v426, %v426
    %v563 = vunpack.c.l.b16 %v89
    %v564 = vunpack.c.h.b16 %v89
    %v565 = vunpack.c.l.b16 %v90
    %v566 = vunpack.c.h.b16 %v90
    %v567 = vunpack.c.l.b16 %v91
    %v568 = vunpack.c.h.b16 %v91
    %v569 = vunpack.c.l.b16 %v92
    %v570 = vunpack.c.h.b16 %v92
    %v571 = vunpack.c.l.b16 %v93
    %v572 = vunpack.c.h.b16 %v93
    %v573 = vunpack.c.l.b16 %v94
    %v574 = vunpack.c.h.b16 %v94
    %v575 = vunpack.c.l.b16 %v95
    %v576 = vunpack.c.h.b16 %v95
    %v577 = vunpack.c.l.b16 %v96
    %v578 = vunpack.c.h.b16 %v96
    %v579 = vunpack.c.l.b16 %v97
    %v580 = vunpack.c.h.b16 %v97
    %v581 = vunpack.c.l.b16 %v98
    %v582 = vunpack.c.h.b16 %v98
    %v583 = vunpack.c.l.b16 %v99
    %v584 = vunpack.c.h.b16 %v99
    %v585 = vunpack.c.l.b16 %v100
    %v586 = vunpack.c.h.b16 %v100
    %v587 = vunpack.c.l.b16 %v101
    %v588 = vunpack.c.h.b16 %v101
    %v589 = vunpack.c.l.b16 %v102
    %v590 = vunpack.c.h.b16 %v102
    %v591 = vunpack.c.l.b16 %v103
    %v592 = vunpack.c.h.b16 %v103
    %v593 = vunpack.c.l.b16 %v104
    %v594 = vunpack.c.h.b16 %v104
    %v595 = vunpack.c.l.b16 %v105
    %v596 = vunpack.c.h.b16 %v105
    %v597 = vunpack.c.l.b16 %v106
    %v598 = vunpack.c.h.b16 %v106
    %v599 = vunpack.c.l.b16 %v107
    %v600 = vunpack.c.h.b16 %v107
    %v601 = vunpack.c.l.b16 %v108
    %v602 = vunpack.c.h.b16 %v108
    %v603 = vunpack.c.l.b16 %v109
    %v604 = vunpack.c.h.b16 %v109
    %v605 = vunpack.c.l.b16 %v110
    %v606 = vunpack.c.h.b16 %v110
    %v607 = vunpack.c.l.b16 %v111
    %v608 = vunpack.c.h.b16 %v111
    %v609 = vunpack.c.l.b16 %v112
    %v610 = vunpack.c.h.b16 %v112
    %v611 = vunpack.c.l.b16 %v113
    %v612 = vunpack.c.h.b16 %v113
    %v613 = vunpack.c.l.b16 %v114
    %v614 = vunpack.c.h.b16 %v114
    %v615 = vunpack.c.l.b16 %v115
    %v616 = vunpack.c.h.b16 %v115
    %v617 = vunpack.c.l.b16 %v116
    %v618 = vunpack.c.h.b16 %v116
    %v619 = vunpack.c.l.b16 %v117
    %v620 = vunpack.c.h.b16 %v117
    %v621 = vunpack.c.l.b16 %v118
    %v622 = vunpack.c.h.b16 %v118
    %v623 = vunpack.c.l.b16 %v119
    %v624 = vunpack.c.h.b16 %v119
    %v625 = vunpack.c.l.b16 %v120
    %v626 = vunpack.c.h.b16 %v120
    %v627 = vunpack.c.l.b16 %v121
    %v628 = vunpack.c.h.b16 %v121
    %v629 = vunpack.c.l.b16 %v122
    %v630 = vunpack.c.h.b16 %v122
    %v631 = vunpack.c.l.b16 %v123
    %v632 = vunpack.c.h.b16 %v123
    %v633 = vunpack.c.l.b16 %v124
    %v634 = vunpack.c.h.b16 %v124
    %v635 = vunpack.c.l.b16 %v125
    %v636 = vunpack.c.h.b16 %v125
    %v637 = vunpack.c.l.b16 %v126
    %v638 = vunpack.c.h.b16 %v126
    %v639 = vunpack.c.l.b16 %v127
    %v640 = vunpack.c.h.b16 %v127
    %v641 = vunpack.c.l.b16 %v128
    %v642 = vunpack.c.h.b16 %v128
    %v643 = vunpack.c.l.b16 %v129
    %v644 = vunpack.c.h.b16 %v129
    %v645 = vunpack.c.l.b16 %v130
    %v646 = vunpack.c.h.b16 %v130
    %v647 = vunpack.c.l.b16 %v131
    %v648 = vunpack.c.h.b16 %v131
    %v649 = vunpack.c.l.b16 %v132
    %v650 = vunpack.c.h.b16 %v132
    %v651 = vunpack.c.l.b16 %v133
    %v652 = vunpack.c.h.b16 %v133
    %v653 = vunpack.c.l.b16 %v134
    %v654 = vunpack.c.h.b16 %v134
    %v655 = vunpack.c.l.b16 %v135
    %v656 = vunpack.c.h.b16 %v135
    %v657 = vunpack.c.l.b16 %v136
    %v658 = vunpack.c.h.b16 %v136
    %v659 = vunpack.c.l.b16 %v137
    %v660 = vunpack.c.h.b16 %v137
    %v661 = vunpack.c.l.b16 %v138
    %v662 = vunpack.c.h.b16 %v138
    %v663 = vunpack.c.l.b16 %v139
    %v664 = vunpack.c.h.b16 %v139
    %v665 = vunpack.c.l.b16 %v140
    %v666 = vunpack.c.h.b16 %v140
    %v667 = vunpack.c.l.b16 %v141
    %v668 = vunpack.c.h.b16 %v141
    %v669 = vunpack.c.l.b16 %v142
    %v670 = vunpack.c.h.b16 %v142
    %v671 = vunpack.c.l.b16 %v143
    %v672 = vunpack.c.h.b16 %v143
    %v673 = vunpack.c.l.b16 %v144
    %v674 = vunpack.c.h.b16 %v144
    %v675 = vunpack.c.l.b16 %v145
    %v676 = vunpack.c.h.b16 %v145
    %v677 = vunpack.c.l.b16 %v146
    %v678 = vunpack.c.h.b16 %v146
    %v679 = vunpack.c.l.b16 %v147
    %v680 = vunpack.c.h.b16 %v147
    %v681 = vunpack.c.l.b16 %v148
    %v682 = vunpack.c.h.b16 %v148
    %v683 = vunpack.c.l.b16 %v149
    %v684 = vunpack.c.h.b16 %v149
    %v685 = vunpack.c.l.b16 %v150
    %v686 = vunpack.c.h.b16 %v150
    %v687 = vunpack.c.l.b16 %v151
    %v688 = vunpack.c.h.b16 %v151
    %v689 = vunpack.c.l.b16 %v152
    %v690 = vunpack.c.h.b16 %v152
    %v691 = vunpack.c.l.b16 %v153
    %v692 = vunpack.c.h.b16 %v153
    %v693 = vunpack.c.l.b16 %v154
    %v694 = vunpack.c.h.b16 %v154
    %v695 = vunpack.c.l.b16 %v155
    %v696 = vunpack.c.h.b16 %v155
    %v697 = vunpack.c.l.b16 %v156
    %v698 = vunpack.c.h.b16 %v156
    %v699 = vunpack.c.l.b16 %v157
    %v700 = vunpack.c.h.b16 %v157
    %v701 = vunpack.c.l.b16 %v158
    %v702 = vunpack.c.h.b16 %v158
    %v703 = vunpack.c.l.b16 %v159
    %v704 = vunpack.c.h.b16 %v159
    %v705 = vunpack.c.l.b16 %v160
    %v706 = vunpack.c.h.b16 %v160
    %v707 = vunpack.c.l.b16 %v161
    %v708 = vunpack.c.h.b16 %v161
    %v709 = vunpack.c.l.b16 %v162
    %v710 = vunpack.c.h.b16 %v162
    %v711 = vunpack.c.l.b16 %v163
    %v712 = vunpack.c.h.b16 %v163
    %v713 = vunpack.c.l.b16 %v164
    %v714 = vunpack.c.h.b16 %v164
    %v715 = vunpack.c.l.b16 %v165
    %v716 = vunpack.c.h.b16 %v165
    %v717 = vunpack.c.l.b16 %v166
    %v718 = vunpack.c.h.b16 %v166
    %v719 = vunpack.c.l.b16 %v167
    %v720 = vunpack.c.h.b16 %v167
    %v721 = vunpack.c.l.b16 %v168
    %v722 = vunpack.c.h.b16 %v168
    %v723 = vunpack.c.l.b16 %v169
    %v724 = vunpack.c.h.b16 %v169
    %v725 = vunpack.c.l.b16 %v170
    %v726 = vunpack.c.h.b16 %v170
    %v727 = vunpack.c.l.b16 %v171
    %v728 = vunpack.c.h.b16 %v171
    %v729 = vunpack.c.l.b16 %v172
    %v730 = vunpack.c.h.b16 %v172
    %v731 = vunpack.c.l.b16 %v173
    %v732 = vunpack.c.h.b16 %v173
    %v733 = vunpack.c.l.b16 %v174
    %v734 = vunpack.c.h.b16 %v174
    %v735 = vunpack.c.l.b16 %v175
    %v736 = vunpack.c.h.b16 %v175
    %v737 = vunpack.c.l.b16 %v176
    %v738 = vunpack.c.h.b16 %v176
    %v739 = vunpack.c.l.b16 %v177
    %v740 = vunpack.c.h.b16 %v177
    %v741 = vunpack.c.l.b16 %v178
    %v742 = vunpack.c.h.b16 %v178
    %v743 = vunpack.c.l.b16 %v179
    %v744 = vunpack.c.h.b16 %v179
    %v745 = vunpack.c.l.b16 %v180
    %v746 = vunpack.c.h.b16 %v180
    %v747 = vunpack.c.l.b16 %v181
    %v748 = vunpack.c.h.b16 %v181
    %v749 = vunpack.c.l.b16 %v182
    %v750 = vunpack.c.h.b16 %v182
    %v751 = vunpack.c.l.b16 %v183
    %v752 = vunpack.c.h.b16 %v183
    %v753 = vunpack.c.l.b16 %v184
    %v754 = vunpack.c.h.b16 %v184
    %v755 = vunpack.c.l.b16 %v185
    %v756 = vunpack.c.h.b16 %v185
    %v757 = vunpack.c.l.b16 %v186
    %v758 = vunpack.c.h.b16 %v186
    %v759 = vunpack.c.l.b16 %v187
    %v760 = vunpack.c.h.b16 %v187
    %v761 = vunpack.c.l.b16 %v188
    %v762 = vunpack.c.h.b16 %v188
    %v763 = vunpack.c.l.b16 %v189
    %v764 = vunpack.c.h.b16 %v189
    %v765 = vunpack.c.l.b16 %v190
    %v766 = vunpack.c.h.b16 %v190
    %v767 = vunpack.c.l.b16 %v191
    %v768 = vunpack.c.h.b16 %v191
    %v769 = vunpack.c.l.b16 %v192
    %v770 = vunpack.c.h.b16 %v192
    %v771 = vunpack.c.l.b16 %v193
    %v772 = vunpack.c.h.b16 %v193
    %v773 = vunpack.c.l.b16 %v194
    %v774 = vunpack.c.h.b16 %v194
    %v775 = vunpack.c.l.b16 %v195
    %v776 = vunpack.c.h.b16 %v195
    %v777 = vunpack.c.l.b16 %v196
    %v778 = vunpack.c.h.b16 %v196
    %v779 = vunpack.c.l.b16 %v197
    %v780 = vunpack.c.h.b16 %v197
    %v781 = vunpack.c.l.b16 %v198
    %v782 = vunpack.c.h.b16 %v198
    %v783 = vunpack.c.l.b16 %v199
    %v784 = vunpack.c.h.b16 %v199
    %v785 = vunpack.c.l.b16 %v200
    %v786 = vunpack.c.h.b16 %v200
    %v787 = vunpack.c.l.b16 %v201
    %v788 = vunpack.c.h.b16 %v201
    %v789 = vunpack.c.l.b16 %v202
    %v790 = vunpack.c.h.b16 %v202
    %v791 = vunpack.c.l.b16 %v203
    %v792 = vunpack.c.h.b16 %v203
    %v793 = vunpack.c.l.b16 %v204
    %v794 = vunpack.c.h.b16 %v204
    %v795 = vunpack.c.l.b16 %v205
    %v796 = vunpack.c.h.b16 %v205
    %v797 = vunpack.c.l.b16 %v206
    %v798 = vunpack.c.h.b16 %v206
    %v799 = vunpack.c.l.b16 %v207
    %v800 = vunpack.c.h.b16 %v207
    %v801 = vunpack.c.l.b16 %v208
    %v802 = vunpack.c.h.b16 %v208
    %v803 = vunpack.c.l.b16 %v209
    %v804 = vunpack.c.h.b16 %v209
    %v805 = vunpack.c.l.b16 %v210
    %v806 = vunpack.c.h.b16 %v210
    %v807 = vunpack.c.l.b16 %v211
    %v808 = vunpack.c.h.b16 %v211
    %v809 = vunpack.c.l.b16 %v212
    %v810 = vunpack.c.h.b16 %v212
    %v811 = vunpack.c.l.b16 %v213
    %v812 = vunpack.c.h.b16 %v213
    %v813 = vunpack.c.l.b16 %v214
    %v814 = vunpack.c.h.b16 %v214
    %v815 = vunpack.c.l.b16 %v215
    %v816 = vunpack.c.h.b16 %v215
    %v817 = vunpack.c.l.b16 %v216
    %v818 = vunpack.c.h.b16 %v216
    %v819 = vpack.c.b16 %v567, %v563
    %v820 = vpack.c.b16 %v568, %v564
    %v821 = vpack.c.b16 %v569, %v565
    %v822 = vpack.c.b16 %v570, %v566
    %v823 = vpack.c.b16 %v575, %v571
    %v824 = vpack.c.b16 %v576, %v572
    %v825 = vpack.c.b16 %v577, %v573
    %v826 = vpack.c.b16 %v578, %v574
    %v827 = vpack.c.b16 %v583, %v579
    %v828 = vpack.c.b16 %v584, %v580
    %v829 = vpack.c.b16 %v585, %v581
    %v830 = vpack.c.b16 %v586, %v582
    %v831 = vpack.c.b16 %v591, %v587
    %v832 = vpack.c.b16 %v592, %v588
    %v833 = vpack.c.b16 %v593, %v589
    %v834 = vpack.c.b16 %v594, %v590
    %v835 = vpack.c.b16 %v599, %v595
    %v836 = vpack.c.b16 %v600, %v596
    %v837 = vpack.c.b16 %v601, %v597
    %v838 = vpack.c.b16 %v602, %v598
    %v839 = vpack.c.b16 %v607, %v603
    %v840 = vpack.c.b16 %v608, %v604
    %v841 = vpack.c.b16 %v609, %v605
    %v842 = vpack.c.b16 %v610, %v606
    %v843 = vpack.c.b16 %v615, %v611
    %v844 = vpack.c.b16 %v616, %v612
    %v845 = vpack.c.b16 %v617, %v613
    %v846 = vpack.c.b16 %v618, %v614
    %v847 = vpack.c.b16 %v623, %v619
    %v848 = vpack.c.b16 %v624, %v620
    %v849 = vpack.c.b16 %v625, %v621
    %v850 = vpack.c.b16 %v626, %v622
    %v851 = vpack.c.b16 %v631, %v627
    %v852 = vpack.c.b16 %v632, %v628
    %v853 = vpack.c.b16 %v633, %v629
    %v854 = vpack.c.b16 %v634, %v630
    %v855 = vpack.c.b16 %v639, %v635
    %v856 = vpack.c.b16 %v640, %v636
    %v857 = vpack.c.b16 %v641, %v637
    %v858 = vpack.c.b16 %v642, %v638
    %v859 = vpack.c.b16 %v647, %v643
    %v860 = vpack.c.b16 %v648, %v644
    %v861 = vpack.c.b16 %v649, %v645
    %v862 = vpack.c.b16 %v650, %v646
    %v863 = vpack.c.b16 %v655, %v651
    %v864 = vpack.c.b16 %v656, %v652
    %v865 = vpack.c.b16 %v657, %v653
    %v866 = vpack.c.b16 %v658, %v654
    %v867 = vpack.c.b16 %v663, %v659
    %v868 = vpack.c.b16 %v664, %v660
    %v869 = vpack.c.b16 %v665, %v661
    %v870 = vpack.c.b16 %v666, %v662
    %v871 = vpack.c.b16 %v671, %v667
    %v872 = vpack.c.b16 %v672, %v668
    %v873 = vpack.c.b16 %v673, %v669
    %v874 = vpack.c.b16 %v674, %v670
    %v875 = vpack.c.b16 %v679, %v675
    %v876 = vpack.c.b16 %v680, %v676
    %v877 = vpack.c.b16 %v681, %v677
    %v878 = vpack.c.b16 %v682, %v678
    %v879 = vpack.c.b16 %v687, %v683
    %v880 = vpack.c.b16 %v688, %v684
    %v881 = vpack.c.b16 %v689, %v685
    %v882 = vpack.c.b16 %v690, %v686
    %v883 = vpack.c.b16 %v695, %v691
    %v884 = vpack.c.b16 %v696, %v692
    %v885 = vpack.c.b16 %v697, %v693
    %v886 = vpack.c.b16 %v698, %v694
    %v887 = vpack.c.b16 %v703, %v699
    %v888 = vpack.c.b16 %v704, %v700
    %v889 = vpack.c.b16 %v705, %v701
    %v890 = vpack.c.b16 %v706, %v702
    %v891 = vpack.c.b16 %v711, %v707
    %v892 = vpack.c.b16 %v712, %v708
    %v893 = vpack.c.b16 %v713, %v709
    %v894 = vpack.c.b16 %v714, %v710
    %v895 = vpack.c.b16 %v719, %v715
    %v896 = vpack.c.b16 %v720, %v716
    %v897 = vpack.c.b16 %v721, %v717
    %v898 = vpack.c.b16 %v722, %v718
    %v899 = vpack.c.b16 %v727, %v723
    %v900 = vpack.c.b16 %v728, %v724
    %v901 = vpack.c.b16 %v729, %v725
    %v902 = vpack.c.b16 %v730, %v726
    %v903 = vpack.c.b16 %v735, %v731
    %v904 = vpack.c.b16 %v736, %v732
    %v905 = vpack.c.b16 %v737, %v733
    %v906 = vpack.c.b16 %v738, %v734
    %v907 = vpack.c.b16 %v743, %v739
    %v908 = vpack.c.b16 %v744, %v740
    %v909 = vpack.c.b16 %v745, %v741
    %v910 = vpack.c.b16 %v746, %v742
    %v911 = vpack.c.b16 %v751, %v747
    %v912 = vpack.c.b16 %v752, %v748
    %v913 = vpack.c.b16 %v753, %v749
    %v914 = vpack.c.b16 %v754, %v750
    %v915 = vpack.c.b16 %v759, %v755
    %v916 = vpack.c.b16 %v760, %v756
    %v917 = vpack.c.b16 %v761, %v757
    %v918 = vpack.c.b16 %v762, %v758
    %v919 = vpack.c.b16 %v767, %v763
    %v920 = vpack.c.b16 %v768, %v764
    %v921 = vpack.c.b16 %v769, %v765
    %v922 = vpack.c.b16 %v770, %v766
    %v923 = vpack.c.b16 %v775, %v771
    %v924 = vpack.c.b16 %v776, %v772
    %v925 = vpack.c.b16 %v777, %v773
    %v926 = vpack.c.b16 %v778, %v774
    %v927 = vpack.c.b16 %v783, %v779
    %v928 = vpack.c.b16 %v784, %v780
    %v929 = vpack.c.b16 %v785, %v781
    %v930 = vpack.c.b16 %v786, %v782
    %v931 = vpack.c.b16 %v791, %v787
    %v932 = vpack.c.b16 %v792, %v788
    %v933 = vpack.c.b16 %v793, %v789
    %v934 = vpack.c.b16 %v794, %v790
    %v935 = vpack.c.b16 %v799, %v795
    %v936 = vpack.c.b16 %v800, %v796
    %v937 = vpack.c.b16 %v801, %v797
    %v938 = vpack.c.b16 %v802, %v798
    %v939 = vpack.c.b16 %v807, %v803
    %v940 = vpack.c.b16 %v808, %v804
    %v941 = vpack.c.b16 %v809, %v805
    %v942 = vpack.c.b16 %v810, %v806
    %v943 = vpack.c.b16 %v815, %v811
    %v944 = vpack.c.b16 %v816, %v812
    %v945 = vpack.c.b16 %v817, %v813
    %v946 = vpack.c.b16 %v818, %v814
    %1075 = vmatpush.bf16.msra.mxu0 %v847
    %1076 = vmatpush.bf16.msra.mxu0 %v843
    %1077 = vmatpush.bf16.msra.mxu0 %v839
    %1078 = vmatpush.bf16.msra.mxu0 %v835
    %1079 = vmatpush.bf16.msra.mxu0 %v831
    %1080 = vmatpush.bf16.msra.mxu0 %v827
    %1081 = vmatpush.bf16.msra.mxu0 %v823
    %1082 = vmatpush.bf16.msra.mxu0 %v819
    %1083 = vmatmul.bf16.gmra.mxu0 %v427
    %v1084 = vpop.f32.mrf.mxu0
    %v1085 = vadd.f32 %v413, %v1084
    %v1086 = vpop.f32.mrf.mxu0
    %1087 = vdwg.mxu0
    %1088 = vmatpush.bf16.msra.mxu0 %v879
    %1089 = vmatpush.bf16.msra.mxu0 %v875
    %1090 = vmatpush.bf16.msra.mxu0 %v871
    %1091 = vmatpush.bf16.msra.mxu0 %v867
    %1092 = vmatpush.bf16.msra.mxu0 %v863
    %1093 = vmatpush.bf16.msra.mxu0 %v859
    %1094 = vmatpush.bf16.msra.mxu0 %v855
    %1095 = vmatpush.bf16.msra.mxu0 %v851
    %1096 = vmatmul.bf16.gmra.mxu0 %v428
    %v1097 = vpop.f32.mrf.mxu0
    %v1098 = vadd.f32 %v1085, %v1097
    %v1099 = vpop.f32.mrf.mxu0
    %1100 = vdwg.mxu0
    %1101 = vmatpush.bf16.msra.mxu0 %v911
    %1102 = vmatpush.bf16.msra.mxu0 %v907
    %1103 = vmatpush.bf16.msra.mxu0 %v903
    %1104 = vmatpush.bf16.msra.mxu0 %v899
    %1105 = vmatpush.bf16.msra.mxu0 %v895
    %1106 = vmatpush.bf16.msra.mxu0 %v891
    %1107 = vmatpush.bf16.msra.mxu0 %v887
    %1108 = vmatpush.bf16.msra.mxu0 %v883
    %1109 = vmatmul.bf16.gmra.mxu0 %v429
    %v1110 = vpop.f32.mrf.mxu0
    %v1111 = vadd.f32 %v1098, %v1110
    %v1112 = vpop.f32.mrf.mxu0
    %1113 = vdwg.mxu0
    %1114 = vmatpush.bf16.msra.mxu0 %v943
    %1115 = vmatpush.bf16.msra.mxu0 %v939
    %1116 = vmatpush.bf16.msra.mxu0 %v935
    %1117 = vmatpush.bf16.msra.mxu0 %v931
    %1118 = vmatpush.bf16.msra.mxu0 %v927
    %1119 = vmatpush.bf16.msra.mxu0 %v923
    %1120 = vmatpush.bf16.msra.mxu0 %v919
    %1121 = vmatpush.bf16.msra.mxu0 %v915
    %1122 = vmatmul.bf16.gmra.mxu0 %v430
    %v1123 = vpop.f32.mrf.mxu0
    %v1124 = vadd.f32 %v1111, %v1123
    %v1125 = vpop.f32.mrf.mxu0
    %1126 = vdwg.mxu0
    %1127 = vmatpush.bf16.msra.mxu0 %v848
    %1128 = vmatpush.bf16.msra.mxu0 %v844
    %1129 = vmatpush.bf16.msra.mxu0 %v840
    %1130 = vmatpush.bf16.msra.mxu0 %v836
    %1131 = vmatpush.bf16.msra.mxu0 %v832
    %1132 = vmatpush.bf16.msra.mxu0 %v828
    %1133 = vmatpush.bf16.msra.mxu0 %v824
    %1134 = vmatpush.bf16.msra.mxu0 %v820
    %1135 = vmatmul.bf16.gmra.mxu0 %v427
    %v1136 = vpop.f32.mrf.mxu0
    %v1137 = vadd.f32 %v414, %v1136
    %v1138 = vpop.f32.mrf.mxu0
    %1139 = vdwg.mxu0
    %1140 = vmatpush.bf16.msra.mxu0 %v880
    %1141 = vmatpush.bf16.msra.mxu0 %v876
    %1142 = vmatpush.bf16.msra.mxu0 %v872
    %1143 = vmatpush.bf16.msra.mxu0 %v868
    %1144 = vmatpush.bf16.msra.mxu0 %v864
    %1145 = vmatpush.bf16.msra.mxu0 %v860
    %1146 = vmatpush.bf16.msra.mxu0 %v856
    %1147 = vmatpush.bf16.msra.mxu0 %v852
    %1148 = vmatmul.bf16.gmra.mxu0 %v428
    %v1149 = vpop.f32.mrf.mxu0
    %v1150 = vadd.f32 %v1137, %v1149
    %v1151 = vpop.f32.mrf.mxu0
    %1152 = vdwg.mxu0
    %1153 = vmatpush.bf16.msra.mxu0 %v912
    %1154 = vmatpush.bf16.msra.mxu0 %v908
    %1155 = vmatpush.bf16.msra.mxu0 %v904
    %1156 = vmatpush.bf16.msra.mxu0 %v900
    %1157 = vmatpush.bf16.msra.mxu0 %v896
    %1158 = vmatpush.bf16.msra.mxu0 %v892
    %1159 = vmatpush.bf16.msra.mxu0 %v888
    %1160 = vmatpush.bf16.msra.mxu0 %v884
    %1161 = vmatmul.bf16.gmra.mxu0 %v429
    %v1162 = vpop.f32.mrf.mxu0
    %v1163 = vadd.f32 %v1150, %v1162
    %v1164 = vpop.f32.mrf.mxu0
    %1165 = vdwg.mxu0
    %1166 = vmatpush.bf16.msra.mxu0 %v944
    %1167 = vmatpush.bf16.msra.mxu0 %v940
    %1168 = vmatpush.bf16.msra.mxu0 %v936
    %1169 = vmatpush.bf16.msra.mxu0 %v932
    %1170 = vmatpush.bf16.msra.mxu0 %v928
    %1171 = vmatpush.bf16.msra.mxu0 %v924
    %1172 = vmatpush.bf16.msra.mxu0 %v920
    %1173 = vmatpush.bf16.msra.mxu0 %v916
    %1174 = vmatmul.bf16.gmra.mxu0 %v430
    %v1175 = vpop.f32.mrf.mxu0
    %v1176 = vadd.f32 %v1163, %v1175
    %v1177 = vpop.f32.mrf.mxu0
    %1178 = vdwg.mxu0
    %1179 = vmatpush.bf16.msra.mxu0 %v849
    %1180 = vmatpush.bf16.msra.mxu0 %v845
    %1181 = vmatpush.bf16.msra.mxu0 %v841
    %1182 = vmatpush.bf16.msra.mxu0 %v837
    %1183 = vmatpush.bf16.msra.mxu0 %v833
    %1184 = vmatpush.bf16.msra.mxu0 %v829
    %1185 = vmatpush.bf16.msra.mxu0 %v825
    %1186 = vmatpush.bf16.msra.mxu0 %v821
    %1187 = vmatmul.bf16.gmra.mxu0 %v427
    %v1188 = vpop.f32.mrf.mxu0
    %v1189 = vadd.f32 %v415, %v1188
    %v1190 = vpop.f32.mrf.mxu0
    %1191 = vdwg.mxu0
    %1192 = vmatpush.bf16.msra.mxu0 %v881
    %1193 = vmatpush.bf16.msra.mxu0 %v877
    %1194 = vmatpush.bf16.msra.mxu0 %v873
    %1195 = vmatpush.bf16.msra.mxu0 %v869
    %1196 = vmatpush.bf16.msra.mxu0 %v865
    %1197 = vmatpush.bf16.msra.mxu0 %v861
    %1198 = vmatpush.bf16.msra.mxu0 %v857
    %1199 = vmatpush.bf16.msra.mxu0 %v853
    %1200 = vmatmul.bf16.gmra.mxu0 %v428
    %v1201 = vpop.f32.mrf.mxu0
    %v1202 = vadd.f32 %v1189, %v1201
    %v1203 = vpop.f32.mrf.mxu0
    %1204 = vdwg.mxu0
    %1205 = vmatpush.bf16.msra.mxu0 %v913
    %1206 = vmatpush.bf16.msra.mxu0 %v909
    %1207 = vmatpush.bf16.msra.mxu0 %v905
    %1208 = vmatpush.bf16.msra.mxu0 %v901
    %1209 = vmatpush.bf16.msra.mxu0 %v897
    %1210 = vmatpush.bf16.msra.mxu0 %v893
    %1211 = vmatpush.bf16.msra.mxu0 %v889
    %1212 = vmatpush.bf16.msra.mxu0 %v885
    %1213 = vmatmul.bf16.gmra.mxu0 %v429
    %v1214 = vpop.f32.mrf.mxu0
    %v1215 = vadd.f32 %v1202, %v1214
    %v1216 = vpop.f32.mrf.mxu0
    %1217 = vdwg.mxu0
    %1218 = vmatpush.bf16.msra.mxu0 %v945
    %1219 = vmatpush.bf16.msra.mxu0 %v941
    %1220 = vmatpush.bf16.msra.mxu0 %v937
    %1221 = vmatpush.bf16.msra.mxu0 %v933
    %1222 = vmatpush.bf16.msra.mxu0 %v929
    %1223 = vmatpush.bf16.msra.mxu0 %v925
    %1224 = vmatpush.bf16.msra.mxu0 %v921
    %1225 = vmatpush.bf16.msra.mxu0 %v917
    %1226 = vmatmul.bf16.gmra.mxu0 %v430
    %v1227 = vpop.f32.mrf.mxu0
    %v1228 = vadd.f32 %v1215, %v1227
    %v1229 = vpop.f32.mrf.mxu0
    %1230 = vdwg.mxu0
    %1231 = vmatpush.bf16.msra.mxu0 %v850
    %1232 = vmatpush.bf16.msra.mxu0 %v846
    %1233 = vmatpush.bf16.msra.mxu0 %v842
    %1234 = vmatpush.bf16.msra.mxu0 %v838
    %1235 = vmatpush.bf16.msra.mxu0 %v834
    %1236 = vmatpush.bf16.msra.mxu0 %v830
    %1237 = vmatpush.bf16.msra.mxu0 %v826
    %1238 = vmatpush.bf16.msra.mxu0 %v822
    %1239 = vmatmul.bf16.gmra.mxu0 %v427
    %v1240 = vpop.f32.mrf.mxu0
    %v1241 = vadd.f32 %v416, %v1240
    %v1242 = vpop.f32.mrf.mxu0
    %1243 = vdwg.mxu0
    %1244 = vmatpush.bf16.msra.mxu0 %v882
    %1245 = vmatpush.bf16.msra.mxu0 %v878
    %1246 = vmatpush.bf16.msra.mxu0 %v874
    %1247 = vmatpush.bf16.msra.mxu0 %v870
    %1248 = vmatpush.bf16.msra.mxu0 %v866
    %1249 = vmatpush.bf16.msra.mxu0 %v862
    %1250 = vmatpush.bf16.msra.mxu0 %v858
    %1251 = vmatpush.bf16.msra.mxu0 %v854
    %1252 = vmatmul.bf16.gmra.mxu0 %v428
    %v1253 = vpop.f32.mrf.mxu0
    %v1254 = vadd.f32 %v1241, %v1253
    %v1255 = vpop.f32.mrf.mxu0
    %1256 = vdwg.mxu0
    %1257 = vmatpush.bf16.msra.mxu0 %v914
    %1258 = vmatpush.bf16.msra.mxu0 %v910
    %1259 = vmatpush.bf16.msra.mxu0 %v906
    %1260 = vmatpush.bf16.msra.mxu0 %v902
    %1261 = vmatpush.bf16.msra.mxu0 %v898
    %1262 = vmatpush.bf16.msra.mxu0 %v894
    %1263 = vmatpush.bf16.msra.mxu0 %v890
    %1264 = vmatpush.bf16.msra.mxu0 %v886
    %1265 = vmatmul.bf16.gmra.mxu0 %v429
    %v1266 = vpop.f32.mrf.mxu0
    %v1267 = vadd.f32 %v1254, %v1266
    %v1268 = vpop.f32.mrf.mxu0
    %1269 = vdwg.mxu0
    %1270 = vmatpush.bf16.msra.mxu0 %v946
    %1271 = vmatpush.bf16.msra.mxu0 %v942
    %1272 = vmatpush.bf16.msra.mxu0 %v938
    %1273 = vmatpush.bf16.msra.mxu0 %v934
    %1274 = vmatpush.bf16.msra.mxu0 %v930
    %1275 = vmatpush.bf16.msra.mxu0 %v926
    %1276 = vmatpush.bf16.msra.mxu0 %v922
    %1277 = vmatpush.bf16.msra.mxu0 %v918
    %1278 = vmatmul.bf16.gmra.mxu0 %v430
    %v1279 = vpop.f32.mrf.mxu0
    %v1280 = vadd.f32 %v1267, %v1279
    %v1281 = vpop.f32.mrf.mxu0
    %1282 = vdwg.mxu0
    %v1283 = vmax.f32 %v1124, 0.0
    %v1284 = vmax.f32 %v1176, 0.0
    %v1285 = vmax.f32 %v1228, 0.0
    %v1286 = vmax.f32 %v1280, 0.0
    %v1287 = vpack.c.bf16 %v1283, %v1283
    %v1288 = vpack.c.bf16 %v1284, %v1284
    %v1289 = vpack.c.bf16 %v1285, %v1285
    %v1290 = vpack.c.bf16 %v1286, %v1286
    %v1292 = vperm.slane %v282, 0
    %v1358 = vunpack.c.l.b16 %v218
    %v1359 = vunpack.c.l.b16 %v219
    %v1360 = vunpack.c.l.b16 %v220
    %v1361 = vunpack.c.l.b16 %v221
    %v1362 = vunpack.c.l.b16 %v222
    %v1363 = vunpack.c.l.b16 %v223
    %v1364 = vunpack.c.l.b16 %v224
    %v1365 = vunpack.c.l.b16 %v225
    %v1366 = vunpack.c.l.b16 %v226
    %v1367 = vunpack.c.l.b16 %v227
    %v1368 = vunpack.c.l.b16 %v228
    %v1369 = vunpack.c.l.b16 %v229
    %v1370 = vunpack.c.l.b16 %v230
    %v1371 = vunpack.c.l.b16 %v231
    %v1372 = vunpack.c.l.b16 %v232
    %v1373 = vunpack.c.l.b16 %v233
    %v1374 = vunpack.c.l.b16 %v234
    %v1375 = vunpack.c.l.b16 %v235
    %v1376 = vunpack.c.l.b16 %v236
    %v1377 = vunpack.c.l.b16 %v237
    %v1378 = vunpack.c.l.b16 %v238
    %v1379 = vunpack.c.l.b16 %v239
    %v1380 = vunpack.c.l.b16 %v240
    %v1381 = vunpack.c.l.b16 %v241
    %v1382 = vunpack.c.l.b16 %v242
    %v1383 = vunpack.c.l.b16 %v243
    %v1384 = vunpack.c.l.b16 %v244
    %v1385 = vunpack.c.l.b16 %v245
    %v1386 = vunpack.c.l.b16 %v246
    %v1387 = vunpack.c.l.b16 %v247
    %v1388 = vunpack.c.l.b16 %v248
    %v1389 = vunpack.c.l.b16 %v249
    %v1390 = vunpack.c.l.b16 %v250
    %v1391 = vunpack.c.l.b16 %v251
    %v1392 = vunpack.c.l.b16 %v252
    %v1393 = vunpack.c.l.b16 %v253
    %v1394 = vunpack.c.l.b16 %v254
    %v1395 = vunpack.c.l.b16 %v255
    %v1396 = vunpack.c.l.b16 %v256
    %v1397 = vunpack.c.l.b16 %v257
    %v1398 = vunpack.c.l.b16 %v258
    %v1399 = vunpack.c.l.b16 %v259
    %v1400 = vunpack.c.l.b16 %v260
    %v1401 = vunpack.c.l.b16 %v261
    %v1402 = vunpack.c.l.b16 %v262
    %v1403 = vunpack.c.l.b16 %v263
    %v1404 = vunpack.c.l.b16 %v264
    %v1405 = vunpack.c.l.b16 %v265
    %v1406 = vunpack.c.l.b16 %v266
    %v1407 = vunpack.c.l.b16 %v267
    %v1408 = vunpack.c.l.b16 %v268
    %v1409 = vunpack.c.l.b16 %v269
    %v1410 = vunpack.c.l.b16 %v270
    %v1411 = vunpack.c.l.b16 %v271
    %v1412 = vunpack.c.l.b16 %v272
    %v1413 = vunpack.c.l.b16 %v273
    %v1414 = vunpack.c.l.b16 %v274
    %v1415 = vunpack.c.l.b16 %v275
    %v1416 = vunpack.c.l.b16 %v276
    %v1417 = vunpack.c.l.b16 %v277
    %v1418 = vunpack.c.l.b16 %v278
    %v1419 = vunpack.c.l.b16 %v279
    %v1420 = vunpack.c.l.b16 %v280
    %v1421 = vunpack.c.l.b16 %v281
    %v1422 = vpack.c.b16 %v1359, %v1358
    %v1423 = vpack.c.b16 %v1361, %v1360
    %v1424 = vpack.c.b16 %v1363, %v1362
    %v1425 = vpack.c.b16 %v1365, %v1364
    %v1426 = vpack.c.b16 %v1367, %v1366
    %v1427 = vpack.c.b16 %v1369, %v1368
    %v1428 = vpack.c.b16 %v1371, %v1370
    %v1429 = vpack.c.b16 %v1373, %v1372
    %v1430 = vpack.c.b16 %v1375, %v1374
    %v1431 = vpack.c.b16 %v1377, %v1376
    %v1432 = vpack.c.b16 %v1379, %v1378
    %v1433 = vpack.c.b16 %v1381, %v1380
    %v1434 = vpack.c.b16 %v1383, %v1382
    %v1435 = vpack.c.b16 %v1385, %v1384
    %v1436 = vpack.c.b16 %v1387, %v1386
    %v1437 = vpack.c.b16 %v1389, %v1388
    %v1438 = vpack.c.b16 %v1391, %v1390
    %v1439 = vpack.c.b16 %v1393, %v1392
    %v1440 = vpack.c.b16 %v1395, %v1394
    %v1441 = vpack.c.b16 %v1397, %v1396
    %v1442 = vpack.c.b16 %v1399, %v1398
    %v1443 = vpack.c.b16 %v1401, %v1400
    %v1444 = vpack.c.b16 %v1403, %v1402
    %v1445 = vpack.c.b16 %v1405, %v1404
    %v1446 = vpack.c.b16 %v1407, %v1406
    %v1447 = vpack.c.b16 %v1409, %v1408
    %v1448 = vpack.c.b16 %v1411, %v1410
    %v1449 = vpack.c.b16 %v1413, %v1412
    %v1450 = vpack.c.b16 %v1415, %v1414
    %v1451 = vpack.c.b16 %v1417, %v1416
    %v1452 = vpack.c.b16 %v1419, %v1418
    %v1453 = vpack.c.b16 %v1421, %v1420
    %1486 = vmatpush.bf16.msra.mxu0 %v1429
    %1487 = vmatpush.bf16.msra.mxu0 %v1428
    %1488 = vmatpush.bf16.msra.mxu0 %v1427
    %1489 = vmatpush.bf16.msra.mxu0 %v1426
    %1490 = vmatpush.bf16.msra.mxu0 %v1425
    %1491 = vmatpush.bf16.msra.mxu0 %v1424
    %1492 = vmatpush.bf16.msra.mxu0 %v1423
    %1493 = vmatpush.bf16.msra.mxu0 %v1422
    %1494 = vmatmul.bf16.gmra.mxu0 %v1287
    %v1495 = vpop.f32.mrf.mxu0
    %v1496 = vadd.f32 %v1292, %v1495
    %v1497 = vpop.f32.mrf.mxu0
    %1498 = vdwg.mxu0
    %1499 = vmatpush.bf16.msra.mxu0 %v1437
    %1500 = vmatpush.bf16.msra.mxu0 %v1436
    %1501 = vmatpush.bf16.msra.mxu0 %v1435
    %1502 = vmatpush.bf16.msra.mxu0 %v1434
    %1503 = vmatpush.bf16.msra.mxu0 %v1433
    %1504 = vmatpush.bf16.msra.mxu0 %v1432
    %1505 = vmatpush.bf16.msra.mxu0 %v1431
    %1506 = vmatpush.bf16.msra.mxu0 %v1430
    %1507 = vmatmul.bf16.gmra.mxu0 %v1288
    %v1508 = vpop.f32.mrf.mxu0
    %v1509 = vadd.f32 %v1496, %v1508
    %v1510 = vpop.f32.mrf.mxu0
    %1511 = vdwg.mxu0
    %1512 = vmatpush.bf16.msra.mxu0 %v1445
    %1513 = vmatpush.bf16.msra.mxu0 %v1444
    %1514 = vmatpush.bf16.msra.mxu0 %v1443
    %1515 = vmatpush.bf16.msra.mxu0 %v1442
    %1516 = vmatpush.bf16.msra.mxu0 %v1441
    %1517 = vmatpush.bf16.msra.mxu0 %v1440
    %1518 = vmatpush.bf16.msra.mxu0 %v1439
    %1519 = vmatpush.bf16.msra.mxu0 %v1438
    %1520 = vmatmul.bf16.gmra.mxu0 %v1289
    %v1521 = vpop.f32.mrf.mxu0
    %v1522 = vadd.f32 %v1509, %v1521
    %v1523 = vpop.f32.mrf.mxu0
    %1524 = vdwg.mxu0
    %1525 = vmatpush.bf16.msra.mxu0 %v1453
    %1526 = vmatpush.bf16.msra.mxu0 %v1452
    %1527 = vmatpush.bf16.msra.mxu0 %v1451
    %1528 = vmatpush.bf16.msra.mxu0 %v1450
    %1529 = vmatpush.bf16.msra.mxu0 %v1449
    %1530 = vmatpush.bf16.msra.mxu0 %v1448
    %1531 = vmatpush.bf16.msra.mxu0 %v1447
    %1532 = vmatpush.bf16.msra.mxu0 %v1446
    %1533 = vmatmul.bf16.gmra.mxu0 %v1290
    %v1534 = vpop.f32.mrf.mxu0
    %v1535 = vadd.f32 %v1522, %v1534
    %v1536 = vpop.f32.mrf.mxu0
    %1537 = vdwg.mxu0
    %v1538 = vmax.f32 %v1535, 0.0
    %v1540 = vperm.slane %v411, 0
    %v1541 = vperm.slane %v411, 1
    %v1542 = vperm.slane %v411, 2
    %v1674 = vunpack.c.l.b16 %v283
    %v1675 = vunpack.c.h.b16 %v283
    %v1676 = vunpack.c.l.b16 %v284
    %v1677 = vunpack.c.l.b16 %v285
    %v1678 = vunpack.c.h.b16 %v285
    %v1679 = vunpack.c.l.b16 %v286
    %v1680 = vunpack.c.l.b16 %v287
    %v1681 = vunpack.c.h.b16 %v287
    %v1682 = vunpack.c.l.b16 %v288
    %v1683 = vunpack.c.l.b16 %v289
    %v1684 = vunpack.c.h.b16 %v289
    %v1685 = vunpack.c.l.b16 %v290
    %v1686 = vunpack.c.l.b16 %v291
    %v1687 = vunpack.c.h.b16 %v291
    %v1688 = vunpack.c.l.b16 %v292
    %v1689 = vunpack.c.l.b16 %v293
    %v1690 = vunpack.c.h.b16 %v293
    %v1691 = vunpack.c.l.b16 %v294
    %v1692 = vunpack.c.l.b16 %v295
    %v1693 = vunpack.c.h.b16 %v295
    %v1694 = vunpack.c.l.b16 %v296
    %v1695 = vunpack.c.l.b16 %v297
    %v1696 = vunpack.c.h.b16 %v297
    %v1697 = vunpack.c.l.b16 %v298
    %v1698 = vunpack.c.l.b16 %v299
    %v1699 = vunpack.c.h.b16 %v299
    %v1700 = vunpack.c.l.b16 %v300
    %v1701 = vunpack.c.l.b16 %v301
    %v1702 = vunpack.c.h.b16 %v301
    %v1703 = vunpack.c.l.b16 %v302
    %v1704 = vunpack.c.l.b16 %v303
    %v1705 = vunpack.c.h.b16 %v303
    %v1706 = vunpack.c.l.b16 %v304
    %v1707 = vunpack.c.l.b16 %v305
    %v1708 = vunpack.c.h.b16 %v305
    %v1709 = vunpack.c.l.b16 %v306
    %v1710 = vunpack.c.l.b16 %v307
    %v1711 = vunpack.c.h.b16 %v307
    %v1712 = vunpack.c.l.b16 %v308
    %v1713 = vunpack.c.l.b16 %v309
    %v1714 = vunpack.c.h.b16 %v309
    %v1715 = vunpack.c.l.b16 %v310
    %v1716 = vunpack.c.l.b16 %v311
    %v1717 = vunpack.c.h.b16 %v311
    %v1718 = vunpack.c.l.b16 %v312
    %v1719 = vunpack.c.l.b16 %v313
    %v1720 = vunpack.c.h.b16 %v313
    %v1721 = vunpack.c.l.b16 %v314
    %v1722 = vunpack.c.l.b16 %v315
    %v1723 = vunpack.c.h.b16 %v315
    %v1724 = vunpack.c.l.b16 %v316
    %v1725 = vunpack.c.l.b16 %v317
    %v1726 = vunpack.c.h.b16 %v317
    %v1727 = vunpack.c.l.b16 %v318
    %v1728 = vunpack.c.l.b16 %v319
    %v1729 = vunpack.c.h.b16 %v319
    %v1730 = vunpack.c.l.b16 %v320
    %v1731 = vunpack.c.l.b16 %v321
    %v1732 = vunpack.c.h.b16 %v321
    %v1733 = vunpack.c.l.b16 %v322
    %v1734 = vunpack.c.l.b16 %v323
    %v1735 = vunpack.c.h.b16 %v323
    %v1736 = vunpack.c.l.b16 %v324
    %v1737 = vunpack.c.l.b16 %v325
    %v1738 = vunpack.c.h.b16 %v325
    %v1739 = vunpack.c.l.b16 %v326
    %v1740 = vunpack.c.l.b16 %v327
    %v1741 = vunpack.c.h.b16 %v327
    %v1742 = vunpack.c.l.b16 %v328
    %v1743 = vunpack.c.l.b16 %v329
    %v1744 = vunpack.c.h.b16 %v329
    %v1745 = vunpack.c.l.b16 %v330
    %v1746 = vunpack.c.l.b16 %v331
    %v1747 = vunpack.c.h.b16 %v331
    %v1748 = vunpack.c.l.b16 %v332
    %v1749 = vunpack.c.l.b16 %v333
    %v1750 = vunpack.c.h.b16 %v333
    %v1751 = vunpack.c.l.b16 %v334
    %v1752 = vunpack.c.l.b16 %v335
    %v1753 = vunpack.c.h.b16 %v335
    %v1754 = vunpack.c.l.b16 %v336
    %v1755 = vunpack.c.l.b16 %v337
    %v1756 = vunpack.c.h.b16 %v337
    %v1757 = vunpack.c.l.b16 %v338
    %v1758 = vunpack.c.l.b16 %v339
    %v1759 = vunpack.c.h.b16 %v339
    %v1760 = vunpack.c.l.b16 %v340
    %v1761 = vunpack.c.l.b16 %v341
    %v1762 = vunpack.c.h.b16 %v341
    %v1763 = vunpack.c.l.b16 %v342
    %v1764 = vunpack.c.l.b16 %v343
    %v1765 = vunpack.c.h.b16 %v343
    %v1766 = vunpack.c.l.b16 %v344
    %v1767 = vunpack.c.l.b16 %v345
    %v1768 = vunpack.c.h.b16 %v345
    %v1769 = vunpack.c.l.b16 %v346
    %v1770 = vunpack.c.l.b16 %v347
    %v1771 = vunpack.c.h.b16 %v347
    %v1772 = vunpack.c.l.b16 %v348
    %v1773 = vunpack.c.l.b16 %v349
    %v1774 = vunpack.c.h.b16 %v349
    %v1775 = vunpack.c.l.b16 %v350
    %v1776 = vunpack.c.l.b16 %v351
    %v1777 = vunpack.c.h.b16 %v351
    %v1778 = vunpack.c.l.b16 %v352
    %v1779 = vunpack.c.l.b16 %v353
    %v1780 = vunpack.c.h.b16 %v353
    %v1781 = vunpack.c.l.b16 %v354
    %v1782 = vunpack.c.l.b16 %v355
    %v1783 = vunpack.c.h.b16 %v355
    %v1784 = vunpack.c.l.b16 %v356
    %v1785 = vunpack.c.l.b16 %v357
    %v1786 = vunpack.c.h.b16 %v357
    %v1787 = vunpack.c.l.b16 %v358
    %v1788 = vunpack.c.l.b16 %v359
    %v1789 = vunpack.c.h.b16 %v359
    %v1790 = vunpack.c.l.b16 %v360
    %v1791 = vunpack.c.l.b16 %v361
    %v1792 = vunpack.c.h.b16 %v361
    %v1793 = vunpack.c.l.b16 %v362
    %v1794 = vunpack.c.l.b16 %v363
    %v1795 = vunpack.c.h.b16 %v363
    %v1796 = vunpack.c.l.b16 %v364
    %v1797 = vunpack.c.l.b16 %v365
    %v1798 = vunpack.c.h.b16 %v365
    %v1799 = vunpack.c.l.b16 %v366
    %v1800 = vunpack.c.l.b16 %v367
    %v1801 = vunpack.c.h.b16 %v367
    %v1802 = vunpack.c.l.b16 %v368
    %v1803 = vunpack.c.l.b16 %v369
    %v1804 = vunpack.c.h.b16 %v369
    %v1805 = vunpack.c.l.b16 %v370
    %v1806 = vunpack.c.l.b16 %v371
    %v1807 = vunpack.c.h.b16 %v371
    %v1808 = vunpack.c.l.b16 %v372
    %v1809 = vunpack.c.l.b16 %v373
    %v1810 = vunpack.c.h.b16 %v373
    %v1811 = vunpack.c.l.b16 %v374
    %v1812 = vunpack.c.l.b16 %v375
    %v1813 = vunpack.c.h.b16 %v375
    %v1814 = vunpack.c.l.b16 %v376
    %v1815 = vunpack.c.l.b16 %v377
    %v1816 = vunpack.c.h.b16 %v377
    %v1817 = vunpack.c.l.b16 %v378
    %v1818 = vunpack.c.l.b16 %v379
    %v1819 = vunpack.c.h.b16 %v379
    %v1820 = vunpack.c.l.b16 %v380
    %v1821 = vunpack.c.l.b16 %v381
    %v1822 = vunpack.c.h.b16 %v381
    %v1823 = vunpack.c.l.b16 %v382
    %v1824 = vunpack.c.l.b16 %v383
    %v1825 = vunpack.c.h.b16 %v383
    %v1826 = vunpack.c.l.b16 %v384
    %v1827 = vunpack.c.l.b16 %v385
    %v1828 = vunpack.c.h.b16 %v385
    %v1829 = vunpack.c.l.b16 %v386
    %v1830 = vunpack.c.l.b16 %v387
    %v1831 = vunpack.c.h.b16 %v387
    %v1832 = vunpack.c.l.b16 %v388
    %v1833 = vunpack.c.l.b16 %v389
    %v1834 = vunpack.c.h.b16 %v389
    %v1835 = vunpack.c.l.b16 %v390
    %v1836 = vunpack.c.l.b16 %v391
    %v1837 = vunpack.c.h.b16 %v391
    %v1838 = vunpack.c.l.b16 %v392
    %v1839 = vunpack.c.l.b16 %v393
    %v1840 = vunpack.c.h.b16 %v393
    %v1841 = vunpack.c.l.b16 %v394
    %v1842 = vunpack.c.l.b16 %v395
    %v1843 = vunpack.c.h.b16 %v395
    %v1844 = vunpack.c.l.b16 %v396
    %v1845 = vunpack.c.l.b16 %v397
    %v1846 = vunpack.c.h.b16 %v397
    %v1847 = vunpack.c.l.b16 %v398
    %v1848 = vunpack.c.l.b16 %v399
    %v1849 = vunpack.c.h.b16 %v399
    %v1850 = vunpack.c.l.b16 %v400
    %v1851 = vunpack.c.l.b16 %v401
    %v1852 = vunpack.c.h.b16 %v401
    %v1853 = vunpack.c.l.b16 %v402
    %v1854 = vunpack.c.l.b16 %v403
    %v1855 = vunpack.c.h.b16 %v403
    %v1856 = vunpack.c.l.b16 %v404
    %v1857 = vunpack.c.l.b16 %v405
    %v1858 = vunpack.c.h.b16 %v405
    %v1859 = vunpack.c.l.b16 %v406
    %v1860 = vunpack.c.l.b16 %v407
    %v1861 = vunpack.c.h.b16 %v407
    %v1862 = vunpack.c.l.b16 %v408
    %v1863 = vunpack.c.l.b16 %v409
    %v1864 = vunpack.c.h.b16 %v409
    %v1865 = vunpack.c.l.b16 %v410
    %v1866 = vpack.c.b16 %v1677, %v1674
    %v1867 = vpack.c.b16 %v1678, %v1675
    %v1868 = vpack.c.b16 %v1679, %v1676
    %v1869 = vpack.c.b16 %v1683, %v1680
    %v1870 = vpack.c.b16 %v1684, %v1681
    %v1871 = vpack.c.b16 %v1685, %v1682
    %v1872 = vpack.c.b16 %v1689, %v1686
    %v1873 = vpack.c.b16 %v1690, %v1687
    %v1874 = vpack.c.b16 %v1691, %v1688
    %v1875 = vpack.c.b16 %v1695, %v1692
    %v1876 = vpack.c.b16 %v1696, %v1693
    %v1877 = vpack.c.b16 %v1697, %v1694
    %v1878 = vpack.c.b16 %v1701, %v1698
    %v1879 = vpack.c.b16 %v1702, %v1699
    %v1880 = vpack.c.b16 %v1703, %v1700
    %v1881 = vpack.c.b16 %v1707, %v1704
    %v1882 = vpack.c.b16 %v1708, %v1705
    %v1883 = vpack.c.b16 %v1709, %v1706
    %v1884 = vpack.c.b16 %v1713, %v1710
    %v1885 = vpack.c.b16 %v1714, %v1711
    %v1886 = vpack.c.b16 %v1715, %v1712
    %v1887 = vpack.c.b16 %v1719, %v1716
    %v1888 = vpack.c.b16 %v1720, %v1717
    %v1889 = vpack.c.b16 %v1721, %v1718
    %v1890 = vpack.c.b16 %v1725, %v1722
    %v1891 = vpack.c.b16 %v1726, %v1723
    %v1892 = vpack.c.b16 %v1727, %v1724
    %v1893 = vpack.c.b16 %v1731, %v1728
    %v1894 = vpack.c.b16 %v1732, %v1729
    %v1895 = vpack.c.b16 %v1733, %v1730
    %v1896 = vpack.c.b16 %v1737, %v1734
    %v1897 = vpack.c.b16 %v1738, %v1735
    %v1898 = vpack.c.b16 %v1739, %v1736
    %v1899 = vpack.c.b16 %v1743, %v1740
    %v1900 = vpack.c.b16 %v1744, %v1741
    %v1901 = vpack.c.b16 %v1745, %v1742
    %v1902 = vpack.c.b16 %v1749, %v1746
    %v1903 = vpack.c.b16 %v1750, %v1747
    %v1904 = vpack.c.b16 %v1751, %v1748
    %v1905 = vpack.c.b16 %v1755, %v1752
    %v1906 = vpack.c.b16 %v1756, %v1753
    %v1907 = vpack.c.b16 %v1757, %v1754
    %v1908 = vpack.c.b16 %v1761, %v1758
    %v1909 = vpack.c.b16 %v1762, %v1759
    %v1910 = vpack.c.b16 %v1763, %v1760
    %v1911 = vpack.c.b16 %v1767, %v1764
    %v1912 = vpack.c.b16 %v1768, %v1765
    %v1913 = vpack.c.b16 %v1769, %v1766
    %v1914 = vpack.c.b16 %v1773, %v1770
    %v1915 = vpack.c.b16 %v1774, %v1771
    %v1916 = vpack.c.b16 %v1775, %v1772
    %v1917 = vpack.c.b16 %v1779, %v1776
    %v1918 = vpack.c.b16 %v1780, %v1777
    %v1919 = vpack.c.b16 %v1781, %v1778
    %v1920 = vpack.c.b16 %v1785, %v1782
    %v1921 = vpack.c.b16 %v1786, %v1783
    %v1922 = vpack.c.b16 %v1787, %v1784
    %v1923 = vpack.c.b16 %v1791, %v1788
    %v1924 = vpack.c.b16 %v1792, %v1789
    %v1925 = vpack.c.b16 %v1793, %v1790
    %v1926 = vpack.c.b16 %v1797, %v1794
    %v1927 = vpack.c.b16 %v1798, %v1795
    %v1928 = vpack.c.b16 %v1799, %v1796
    %v1929 = vpack.c.b16 %v1803, %v1800
    %v1930 = vpack.c.b16 %v1804, %v1801
    %v1931 = vpack.c.b16 %v1805, %v1802
    %v1932 = vpack.c.b16 %v1809, %v1806
    %v1933 = vpack.c.b16 %v1810, %v1807
    %v1934 = vpack.c.b16 %v1811, %v1808
    %v1935 = vpack.c.b16 %v1815, %v1812
    %v1936 = vpack.c.b16 %v1816, %v1813
    %v1937 = vpack.c.b16 %v1817, %v1814
    %v1938 = vpack.c.b16 %v1821, %v1818
    %v1939 = vpack.c.b16 %v1822, %v1819
    %v1940 = vpack.c.b16 %v1823, %v1820
    %v1941 = vpack.c.b16 %v1827, %v1824
    %v1942 = vpack.c.b16 %v1828, %v1825
    %v1943 = vpack.c.b16 %v1829, %v1826
    %v1944 = vpack.c.b16 %v1833, %v1830
    %v1945 = vpack.c.b16 %v1834, %v1831
    %v1946 = vpack.c.b16 %v1835, %v1832
    %v1947 = vpack.c.b16 %v1839, %v1836
    %v1948 = vpack.c.b16 %v1840, %v1837
    %v1949 = vpack.c.b16 %v1841, %v1838
    %v1950 = vpack.c.b16 %v1845, %v1842
    %v1951 = vpack.c.b16 %v1846, %v1843
    %v1952 = vpack.c.b16 %v1847, %v1844
    %v1953 = vpack.c.b16 %v1851, %v1848
    %v1954 = vpack.c.b16 %v1852, %v1849
    %v1955 = vpack.c.b16 %v1853, %v1850
    %v1956 = vpack.c.b16 %v1857, %v1854
    %v1957 = vpack.c.b16 %v1858, %v1855
    %v1958 = vpack.c.b16 %v1859, %v1856
    %v1959 = vpack.c.b16 %v1863, %v1860
    %v1960 = vpack.c.b16 %v1864, %v1861
    %v1961 = vpack.c.b16 %v1865, %v1862
    %2058 = vmatpush.bf16.msra.mxu0 %v1887
    %2059 = vmatpush.bf16.msra.mxu0 %v1884
    %2060 = vmatpush.bf16.msra.mxu0 %v1881
    %2061 = vmatpush.bf16.msra.mxu0 %v1878
    %2062 = vmatpush.bf16.msra.mxu0 %v1875
    %2063 = vmatpush.bf16.msra.mxu0 %v1872
    %2064 = vmatpush.bf16.msra.mxu0 %v1869
    %2065 = vmatpush.bf16.msra.mxu0 %v1866
    %2066 = vmatmul.bf16.gmra.mxu0 %v427
    %v2067 = vpop.f32.mrf.mxu0
    %v2068 = vadd.f32 %v1540, %v2067
    %v2069 = vpop.f32.mrf.mxu0
    %2070 = vdwg.mxu0
    %2071 = vmatpush.bf16.msra.mxu0 %v1911
    %2072 = vmatpush.bf16.msra.mxu0 %v1908
    %2073 = vmatpush.bf16.msra.mxu0 %v1905
    %2074 = vmatpush.bf16.msra.mxu0 %v1902
    %2075 = vmatpush.bf16.msra.mxu0 %v1899
    %2076 = vmatpush.bf16.msra.mxu0 %v1896
    %2077 = vmatpush.bf16.msra.mxu0 %v1893
    %2078 = vmatpush.bf16.msra.mxu0 %v1890
    %2079 = vmatmul.bf16.gmra.mxu0 %v428
    %v2080 = vpop.f32.mrf.mxu0
    %v2081 = vadd.f32 %v2068, %v2080
    %v2082 = vpop.f32.mrf.mxu0
    %2083 = vdwg.mxu0
    %2084 = vmatpush.bf16.msra.mxu0 %v1935
    %2085 = vmatpush.bf16.msra.mxu0 %v1932
    %2086 = vmatpush.bf16.msra.mxu0 %v1929
    %2087 = vmatpush.bf16.msra.mxu0 %v1926
    %2088 = vmatpush.bf16.msra.mxu0 %v1923
    %2089 = vmatpush.bf16.msra.mxu0 %v1920
    %2090 = vmatpush.bf16.msra.mxu0 %v1917
    %2091 = vmatpush.bf16.msra.mxu0 %v1914
    %2092 = vmatmul.bf16.gmra.mxu0 %v429
    %v2093 = vpop.f32.mrf.mxu0
    %v2094 = vadd.f32 %v2081, %v2093
    %v2095 = vpop.f32.mrf.mxu0
    %2096 = vdwg.mxu0
    %2097 = vmatpush.bf16.msra.mxu0 %v1959
    %2098 = vmatpush.bf16.msra.mxu0 %v1956
    %2099 = vmatpush.bf16.msra.mxu0 %v1953
    %2100 = vmatpush.bf16.msra.mxu0 %v1950
    %2101 = vmatpush.bf16.msra.mxu0 %v1947
    %2102 = vmatpush.bf16.msra.mxu0 %v1944
    %2103 = vmatpush.bf16.msra.mxu0 %v1941
    %2104 = vmatpush.bf16.msra.mxu0 %v1938
    %2105 = vmatmul.bf16.gmra.mxu0 %v430
    %v2106 = vpop.f32.mrf.mxu0
    %v2107 = vadd.f32 %v2094, %v2106
    %v2108 = vpop.f32.mrf.mxu0
    %2109 = vdwg.mxu0
    %2110 = vmatpush.bf16.msra.mxu0 %v1888
    %2111 = vmatpush.bf16.msra.mxu0 %v1885
    %2112 = vmatpush.bf16.msra.mxu0 %v1882
    %2113 = vmatpush.bf16.msra.mxu0 %v1879
    %2114 = vmatpush.bf16.msra.mxu0 %v1876
    %2115 = vmatpush.bf16.msra.mxu0 %v1873
    %2116 = vmatpush.bf16.msra.mxu0 %v1870
    %2117 = vmatpush.bf16.msra.mxu0 %v1867
    %2118 = vmatmul.bf16.gmra.mxu0 %v427
    %v2119 = vpop.f32.mrf.mxu0
    %v2120 = vadd.f32 %v1541, %v2119
    %v2121 = vpop.f32.mrf.mxu0
    %2122 = vdwg.mxu0
    %2123 = vmatpush.bf16.msra.mxu0 %v1912
    %2124 = vmatpush.bf16.msra.mxu0 %v1909
    %2125 = vmatpush.bf16.msra.mxu0 %v1906
    %2126 = vmatpush.bf16.msra.mxu0 %v1903
    %2127 = vmatpush.bf16.msra.mxu0 %v1900
    %2128 = vmatpush.bf16.msra.mxu0 %v1897
    %2129 = vmatpush.bf16.msra.mxu0 %v1894
    %2130 = vmatpush.bf16.msra.mxu0 %v1891
    %2131 = vmatmul.bf16.gmra.mxu0 %v428
    %v2132 = vpop.f32.mrf.mxu0
    %v2133 = vadd.f32 %v2120, %v2132
    %v2134 = vpop.f32.mrf.mxu0
    %2135 = vdwg.mxu0
    %2136 = vmatpush.bf16.msra.mxu0 %v1936
    %2137 = vmatpush.bf16.msra.mxu0 %v1933
    %2138 = vmatpush.bf16.msra.mxu0 %v1930
    %2139 = vmatpush.bf16.msra.mxu0 %v1927
    %2140 = vmatpush.bf16.msra.mxu0 %v1924
    %2141 = vmatpush.bf16.msra.mxu0 %v1921
    %2142 = vmatpush.bf16.msra.mxu0 %v1918
    %2143 = vmatpush.bf16.msra.mxu0 %v1915
    %2144 = vmatmul.bf16.gmra.mxu0 %v429
    %v2145 = vpop.f32.mrf.mxu0
    %v2146 = vadd.f32 %v2133, %v2145
    %v2147 = vpop.f32.mrf.mxu0
    %2148 = vdwg.mxu0
    %2149 = vmatpush.bf16.msra.mxu0 %v1960
    %2150 = vmatpush.bf16.msra.mxu0 %v1957
    %2151 = vmatpush.bf16.msra.mxu0 %v1954
    %2152 = vmatpush.bf16.msra.mxu0 %v1951
    %2153 = vmatpush.bf16.msra.mxu0 %v1948
    %2154 = vmatpush.bf16.msra.mxu0 %v1945
    %2155 = vmatpush.bf16.msra.mxu0 %v1942
    %2156 = vmatpush.bf16.msra.mxu0 %v1939
    %2157 = vmatmul.bf16.gmra.mxu0 %v430
    %v2158 = vpop.f32.mrf.mxu0
    %v2159 = vadd.f32 %v2146, %v2158
    %v2160 = vpop.f32.mrf.mxu0
    %2161 = vdwg.mxu0
    %2162 = vmatpush.bf16.msra.mxu0 %v1889
    %2163 = vmatpush.bf16.msra.mxu0 %v1886
    %2164 = vmatpush.bf16.msra.mxu0 %v1883
    %2165 = vmatpush.bf16.msra.mxu0 %v1880
    %2166 = vmatpush.bf16.msra.mxu0 %v1877
    %2167 = vmatpush.bf16.msra.mxu0 %v1874
    %2168 = vmatpush.bf16.msra.mxu0 %v1871
    %2169 = vmatpush.bf16.msra.mxu0 %v1868
    %2170 = vmatmul.bf16.gmra.mxu0 %v427
    %v2171 = vpop.f32.mrf.mxu0
    %v2172 = vadd.f32 %v1542, %v2171
    %v2173 = vpop.f32.mrf.mxu0
    %2174 = vdwg.mxu0
    %2175 = vmatpush.bf16.msra.mxu0 %v1913
    %2176 = vmatpush.bf16.msra.mxu0 %v1910
    %2177 = vmatpush.bf16.msra.mxu0 %v1907
    %2178 = vmatpush.bf16.msra.mxu0 %v1904
    %2179 = vmatpush.bf16.msra.mxu0 %v1901
    %2180 = vmatpush.bf16.msra.mxu0 %v1898
    %2181 = vmatpush.bf16.msra.mxu0 %v1895
    %2182 = vmatpush.bf16.msra.mxu0 %v1892
    %2183 = vmatmul.bf16.gmra.mxu0 %v428
    %v2184 = vpop.f32.mrf.mxu0
    %v2185 = vadd.f32 %v2172, %v2184
    %v2186 = vpop.f32.mrf.mxu0
    %2187 = vdwg.mxu0
    %2188 = vmatpush.bf16.msra.mxu0 %v1937
    %2189 = vmatpush.bf16.msra.mxu0 %v1934
    %2190 = vmatpush.bf16.msra.mxu0 %v1931
    %2191 = vmatpush.bf16.msra.mxu0 %v1928
    %2192 = vmatpush.bf16.msra.mxu0 %v1925
    %2193 = vmatpush.bf16.msra.mxu0 %v1922
    %2194 = vmatpush.bf16.msra.mxu0 %v1919
    %2195 = vmatpush.bf16.msra.mxu0 %v1916
    %2196 = vmatmul.bf16.gmra.mxu0 %v429
    %v2197 = vpop.f32.mrf.mxu0
    %v2198 = vadd.f32 %v2185, %v2197
    %v2199 = vpop.f32.mrf.mxu0
    %2200 = vdwg.mxu0
    %2201 = vmatpush.bf16.msra.mxu0 %v1961
    %2202 = vmatpush.bf16.msra.mxu0 %v1958
    %2203 = vmatpush.bf16.msra.mxu0 %v1955
    %2204 = vmatpush.bf16.msra.mxu0 %v1952
    %2205 = vmatpush.bf16.msra.mxu0 %v1949
    %2206 = vmatpush.bf16.msra.mxu0 %v1946
    %2207 = vmatpush.bf16.msra.mxu0 %v1943
    %2208 = vmatpush.bf16.msra.mxu0 %v1940
    %2209 = vmatmul.bf16.gmra.mxu0 %v430
    %v2210 = vpop.f32.mrf.mxu0
    %v2211 = vadd.f32 %v2198, %v2210
    %v2212 = vpop.f32.mrf.mxu0
    %2213 = vdwg.mxu0
    %v2214 = vmax.f32 %v2107, 0.0
    %v2215 = vmax.f32 %v2159, 0.0
    %v2216 = vmax.f32 %v2211, 0.0
    %v2217 = vpack.c.bf16 %v2215, %v2214
    %v2218 = vpack.c.bf16 %v2216, %v2216
    %2219 = vst [vmem:[%s7] sm:$0xff] %v2217
    %vm2220 = vcmask 519168
    %2221 = vst.msk [vmem:[%s7 + $0x8] sm:$0xf] %vm2220, %v2218
    %v2222 = vpack.c.bf16 %v1538, %v1538
    %2223 = vst [vmem:[%s8] sm:$0xf] %v2222
    // Predicated region
    $region46: #{custom_model_forward.5} parent=1 // pred_check
      _
    $region47: #{custom_model_forward.5} parent=1 // pred_check_branch
      %2225 = sbr.rel (0) target = $region49
    $region48: #{custom_model_forward.5} parent=1 // pred_region
      _
    $region49: #{custom_model_forward.5} parent=1 // pred_fallthru
      _
    // Predicated region
    $region50: #{custom_model_forward.5} parent=1 // pred_check
      _
    $region51: #{custom_model_forward.5} parent=1 // pred_check_branch
      %2227 = sbr.rel (0) target = $region53
    $region52: #{custom_model_forward.5} parent=1 // pred_region
      _
    $region53: #{custom_model_forward.5} parent=1 // pred_fallthru
      _
    // Predicated region
    $region54: #{custom_model_forward.5} parent=1 // pred_check
      _
    $region55: #{custom_model_forward.5} parent=1 // pred_check_branch
      %2229 = sbr.rel (0) target = $region57
    $region56: #{custom_model_forward.5} parent=1 // pred_region
      _
    $region57: #{custom_model_forward.5} parent=1 // pred_fallthru
      _
    // Predicated region
    $region58: #{custom_model_forward.5} parent=1 // pred_check
      _
    $region59: #{custom_model_forward.5} parent=1 // pred_check_branch
      %2231 = sbr.rel (0) target = $region61
    $region60: #{custom_model_forward.5} parent=1 // pred_region
      _
    $region61: #{custom_model_forward.5} parent=1 // pred_fallthru
      _
    %2232 = vsyncpa [#allocation3], 1
    %2233 = vsyncpa [#allocation5], 1
    %2234 = vsyncpa [#allocation8], 1

// kernel: custom_model_forward.6
$region0: #{custom_model_forward.6}
  #allocation0 [shape = 'u32[]', space=smem, size = 0x4, offset = 0x4, fixed_abs, tag = 'smem constant byte address 0x4 - core index']
  #allocation1 [shape = 'u32[72,128]{1,0:T(1,128)}', space=vmem, size = 0x9000, scoped, tag = 'internal scratch']
  %s0 = inlined_call_operand.vmem [shape: bf16[32,320], index: 0, kind: input, shape index: {}]
  %s1 = inlined_call_operand.vmem [shape: bf16[32,320], index: 1, kind: input, shape index: {}]
  %s2 = inlined_call_operand.vmem [shape: bf16[320,320], index: 2, kind: input, shape index: {}]
  %s3 = inlined_call_operand.vmem [shape: f32[1,320], index: 3, kind: input, shape index: {}]
  %s4 = inlined_call_operand.vmem [shape: bf16[320,320], index: 4, kind: input, shape index: {}]
  %s5 = inlined_call_operand.vmem [shape: f32[1,320], index: 5, kind: input, shape index: {}]
  %s6 = inlined_call_operand.vmem [shape: bf16[320,128], index: 6, kind: input, shape index: {}]
  %s7 = inlined_call_operand.vmem [shape: f32[1,128], index: 7, kind: input, shape index: {}]
  %s8 = inlined_call_operand.vmem [shape: bf16[32,128], index: 8, kind: output, shape index: {}]
  %s9 = sld [smem:[#allocation0]]
  $region65: #{custom_model_forward.6} parent=0
    _
  %s11 = ssub.s32 1, %s9
  %s12 = scalar_select 0, %s11, %s9
  loop: start=0, step=1, limit=4
  $region2: #{custom_model_forward.6} parent=0 // loop_pre_header
    _
  $region3: #{custom_model_forward.6} parent=0 // loop_header
    %s14 = sphi 0, %s18
    %p15 = scmp.ge.s32.totalorder %s14, 4
    %s24 = sphi 0, %s26
    %s27 = sphi 0, %s24
    %s28 = sphi 0, %s27
    %s44 = sphi 0, %s28
    %s50 = sphi 0, %s52
    %s53 = sphi 0, %s50
    %s54 = sphi 0, %s53
    %s70 = sphi 0, %s54
    %s74 = sphi 0, %s74
    %s76 = sphi 0, %s74
    %s77 = sphi 0, %s76
    %s91 = sphi 0, %s77
    %s95 = sphi 0, %s95
    %s97 = sphi 0, %s95
    %s98 = sphi 0, %s97
    %s112 = sphi 0, %s98
    %s116 = sphi 0, %s116
    %s118 = sphi 0, %s116
    %s119 = sphi 0, %s118
    %s133 = sphi 0, %s119
    %s137 = sphi 0, %s137
    %s139 = sphi 0, %s137
    %s140 = sphi 0, %s139
    %s154 = sphi 0, %s140
    %s158 = sphi 0, %s158
    %s160 = sphi 0, %s158
    %s161 = sphi 0, %s160
    %s175 = sphi 0, %s161
    %s179 = sphi 0, %s179
    %s181 = sphi 0, %s179
    %s182 = sphi 0, %s181
    %s196 = sphi 0, %s182
    %s202 = sphi 0, %s204
    %s205 = sphi 0, %s202
    %s206 = sphi 0, %s205
    %s222 = sphi 0, %s206
  $region4: #{custom_model_forward.6} parent=0 // loop_header_branch
    %17 = sbr.rel (%p15) target = $region8
  $region5: #{custom_model_forward.6} parent=0 // loop_body
    %s19 = ssub.s32 %s14, 1
    %s20 = ssub.s32 %s14, 2
    %s21 = sadd.s32 %s14, 1
    %s22 = ssub.s32 %s14, %s21
    %p23 = scmp.eq.s32.totalorder %s22, 0
    %s25 = sadd.s32 %s24, 1
    %s26 = scalar_select %p23, %s24, %s25
    %p29 = pneg %p23
    %p30 = scmp.eq.s32.totalorder %s14, 1
    %p31 = por %p29, %p30
    %p32 = scmp.ne.s32.totalorder %s24, %s27
    %p33 = scmp.eq.s32.totalorder %s14, 0
    %p34 = por %p32, %p33
    %p35 = scmp.ne.s32.totalorder %s24, %s27
    %p36 = scmp.eq.s32.totalorder %s19, 1
    %p37 = por %p35, %p36
    %p38 = scmp.ne.s32.totalorder %s27, %s28
    %p39 = scmp.eq.s32.totalorder %s19, 0
    %p40 = por %p38, %p39
    %p41 = scmp.ne.s32.totalorder %s27, %s28
    %p42 = scmp.eq.s32.totalorder %s20, 1
    %p43 = por %p41, %p42
    %p45 = scmp.ne.s32.totalorder %s28, %s44
    %p46 = scmp.eq.s32.totalorder %s20, 0
    %p47 = por %p45, %p46
    %s48 = ssub.s32 %s14, %s21
    %p49 = scmp.eq.s32.totalorder %s48, 0
    %s51 = sadd.s32 %s50, 1
    %s52 = scalar_select %p49, %s50, %s51
    %p55 = pneg %p49
    %p56 = scmp.eq.s32.totalorder %s14, 1
    %p57 = por %p55, %p56
    %p58 = scmp.ne.s32.totalorder %s50, %s53
    %p59 = scmp.eq.s32.totalorder %s14, 0
    %p60 = por %p58, %p59
    %p61 = scmp.ne.s32.totalorder %s50, %s53
    %p62 = scmp.eq.s32.totalorder %s19, 1
    %p63 = por %p61, %p62
    %p64 = scmp.ne.s32.totalorder %s53, %s54
    %p65 = scmp.eq.s32.totalorder %s19, 0
    %p66 = por %p64, %p65
    %p67 = scmp.ne.s32.totalorder %s53, %s54
    %p68 = scmp.eq.s32.totalorder %s20, 1
    %p69 = por %p67, %p68
    %p71 = scmp.ne.s32.totalorder %s54, %s70
    %p72 = scmp.eq.s32.totalorder %s20, 0
    %p73 = por %p71, %p72
    %s75 = sadd.s32 %s74, 1
    %p78 = scmp.eq.s32.totalorder %s14, 1
    %p79 = scmp.ne.s32.totalorder %s74, %s76
    %p80 = scmp.eq.s32.totalorder %s14, 0
    %p81 = por %p79, %p80
    %p82 = scmp.ne.s32.totalorder %s74, %s76
    %p83 = scmp.eq.s32.totalorder %s19, 1
    %p84 = por %p82, %p83
    %p85 = scmp.ne.s32.totalorder %s76, %s77
    %p86 = scmp.eq.s32.totalorder %s19, 0
    %p87 = por %p85, %p86
    %p88 = scmp.ne.s32.totalorder %s76, %s77
    %p89 = scmp.eq.s32.totalorder %s20, 1
    %p90 = por %p88, %p89
    %p92 = scmp.ne.s32.totalorder %s77, %s91
    %p93 = scmp.eq.s32.totalorder %s20, 0
    %p94 = por %p92, %p93
    %s96 = sadd.s32 %s95, 1
    %p99 = scmp.eq.s32.totalorder %s14, 1
    %p100 = scmp.ne.s32.totalorder %s95, %s97
    %p101 = scmp.eq.s32.totalorder %s14, 0
    %p102 = por %p100, %p101
    %p103 = scmp.ne.s32.totalorder %s95, %s97
    %p104 = scmp.eq.s32.totalorder %s19, 1
    %p105 = por %p103, %p104
    %p106 = scmp.ne.s32.totalorder %s97, %s98
    %p107 = scmp.eq.s32.totalorder %s19, 0
    %p108 = por %p106, %p107
    %p109 = scmp.ne.s32.totalorder %s97, %s98
    %p110 = scmp.eq.s32.totalorder %s20, 1
    %p111 = por %p109, %p110
    %p113 = scmp.ne.s32.totalorder %s98, %s112
    %p114 = scmp.eq.s32.totalorder %s20, 0
    %p115 = por %p113, %p114
    %s117 = sadd.s32 %s116, 1
    %p120 = scmp.eq.s32.totalorder %s14, 1
    %p121 = scmp.ne.s32.totalorder %s116, %s118
    %p122 = scmp.eq.s32.totalorder %s14, 0
    %p123 = por %p121, %p122
    %p124 = scmp.ne.s32.totalorder %s116, %s118
    %p125 = scmp.eq.s32.totalorder %s19, 1
    %p126 = por %p124, %p125
    %p127 = scmp.ne.s32.totalorder %s118, %s119
    %p128 = scmp.eq.s32.totalorder %s19, 0
    %p129 = por %p127, %p128
    %p130 = scmp.ne.s32.totalorder %s118, %s119
    %p131 = scmp.eq.s32.totalorder %s20, 1
    %p132 = por %p130, %p131
    %p134 = scmp.ne.s32.totalorder %s119, %s133
    %p135 = scmp.eq.s32.totalorder %s20, 0
    %p136 = por %p134, %p135
    %s138 = sadd.s32 %s137, 1
    %p141 = scmp.eq.s32.totalorder %s14, 1
    %p142 = scmp.ne.s32.totalorder %s137, %s139
    %p143 = scmp.eq.s32.totalorder %s14, 0
    %p144 = por %p142, %p143
    %p145 = scmp.ne.s32.totalorder %s137, %s139
    %p146 = scmp.eq.s32.totalorder %s19, 1
    %p147 = por %p145, %p146
    %p148 = scmp.ne.s32.totalorder %s139, %s140
    %p149 = scmp.eq.s32.totalorder %s19, 0
    %p150 = por %p148, %p149
    %p151 = scmp.ne.s32.totalorder %s139, %s140
    %p152 = scmp.eq.s32.totalorder %s20, 1
    %p153 = por %p151, %p152
    %p155 = scmp.ne.s32.totalorder %s140, %s154
    %p156 = scmp.eq.s32.totalorder %s20, 0
    %p157 = por %p155, %p156
    %s159 = sadd.s32 %s158, 1
    %p162 = scmp.eq.s32.totalorder %s14, 1
    %p163 = scmp.ne.s32.totalorder %s158, %s160
    %p164 = scmp.eq.s32.totalorder %s14, 0
    %p165 = por %p163, %p164
    %p166 = scmp.ne.s32.totalorder %s158, %s160
    %p167 = scmp.eq.s32.totalorder %s19, 1
    %p168 = por %p166, %p167
    %p169 = scmp.ne.s32.totalorder %s160, %s161
    %p170 = scmp.eq.s32.totalorder %s19, 0
    %p171 = por %p169, %p170
    %p172 = scmp.ne.s32.totalorder %s160, %s161
    %p173 = scmp.eq.s32.totalorder %s20, 1
    %p174 = por %p172, %p173
    %p176 = scmp.ne.s32.totalorder %s161, %s175
    %p177 = scmp.eq.s32.totalorder %s20, 0
    %p178 = por %p176, %p177
    %s180 = sadd.s32 %s179, 1
    %p183 = scmp.eq.s32.totalorder %s14, 1
    %p184 = scmp.ne.s32.totalorder %s179, %s181
    %p185 = scmp.eq.s32.totalorder %s14, 0
    %p186 = por %p184, %p185
    %p187 = scmp.ne.s32.totalorder %s179, %s181
    %p188 = scmp.eq.s32.totalorder %s19, 1
    %p189 = por %p187, %p188
    %p190 = scmp.ne.s32.totalorder %s181, %s182
    %p191 = scmp.eq.s32.totalorder %s19, 0
    %p192 = por %p190, %p191
    %p193 = scmp.ne.s32.totalorder %s181, %s182
    %p194 = scmp.eq.s32.totalorder %s20, 1
    %p195 = por %p193, %p194
    %p197 = scmp.ne.s32.totalorder %s182, %s196
    %p198 = scmp.eq.s32.totalorder %s20, 0
    %p199 = por %p197, %p198
    %s200 = ssub.s32 %s14, %s21
    %p201 = scmp.eq.s32.totalorder %s200, 0
    %s203 = sadd.s32 %s202, 1
    %s204 = scalar_select %p201, %s202, %s203
    %p207 = pneg %p201
    %p208 = scmp.eq.s32.totalorder %s14, 1
    %p209 = por %p207, %p208
    %p210 = scmp.ne.s32.totalorder %s202, %s205
    %p211 = scmp.eq.s32.totalorder %s14, 0
    %p212 = por %p210, %p211
    %p213 = scmp.ne.s32.totalorder %s202, %s205
    %p214 = scmp.eq.s32.totalorder %s19, 1
    %p215 = por %p213, %p214
    %p216 = scmp.ne.s32.totalorder %s205, %s206
    %p217 = scmp.eq.s32.totalorder %s19, 0
    %p218 = por %p216, %p217
    %p219 = scmp.ne.s32.totalorder %s205, %s206
    %p220 = scmp.eq.s32.totalorder %s20, 1
    %p221 = por %p219, %p220
    %p223 = scmp.ne.s32.totalorder %s206, %s222
    %p224 = scmp.eq.s32.totalorder %s20, 0
    %p225 = por %p223, %p224
    %p226 = scmp.le.s32.totalorder 1, %s14
    %p227 = scmp.lt.s32.totalorder %s14, 3
    %p228 = pnand %p226, %p227
    %p229 = pneg %p228
    // Predicated region
    $region9: #{custom_model_forward.6} parent=5 // pred_check
      _
    $region10: #{custom_model_forward.6} parent=5 // pred_check_branch
      %231 = sbr.rel (%p228) target = $region12
    $region11: #{custom_model_forward.6} parent=5 // pred_region
      %s232 = ssub.s32 %s14, 1
      // Predicated region
      $region13: #{custom_model_forward.6} parent=11 // pred_check
        %p233 = pneg %p87
      $region14: #{custom_model_forward.6} parent=11 // pred_check_branch
        %235 = sbr.rel (%p233) target = $region16
      $region15: #{custom_model_forward.6} parent=11 // pred_region
        _
      $region16: #{custom_model_forward.6} parent=11 // pred_fallthru
        _
      // Predicated region
      $region17: #{custom_model_forward.6} parent=11 // pred_check
        %p236 = pneg %p108
      $region18: #{custom_model_forward.6} parent=11 // pred_check_branch
        %238 = sbr.rel (%p236) target = $region20
      $region19: #{custom_model_forward.6} parent=11 // pred_region
        _
      $region20: #{custom_model_forward.6} parent=11 // pred_fallthru
        _
      // Predicated region
      $region21: #{custom_model_forward.6} parent=11 // pred_check
        %p239 = pneg %p129
      $region22: #{custom_model_forward.6} parent=11 // pred_check_branch
        %241 = sbr.rel (%p239) target = $region24
      $region23: #{custom_model_forward.6} parent=11 // pred_region
        _
      $region24: #{custom_model_forward.6} parent=11 // pred_fallthru
        _
      // Predicated region
      $region25: #{custom_model_forward.6} parent=11 // pred_check
        %p242 = pneg %p150
      $region26: #{custom_model_forward.6} parent=11 // pred_check_branch
        %244 = sbr.rel (%p242) target = $region28
      $region27: #{custom_model_forward.6} parent=11 // pred_region
        _
      $region28: #{custom_model_forward.6} parent=11 // pred_fallthru
        _
      // Predicated region
      $region29: #{custom_model_forward.6} parent=11 // pred_check
        %p245 = pneg %p171
      $region30: #{custom_model_forward.6} parent=11 // pred_check_branch
        %247 = sbr.rel (%p245) target = $region32
      $region31: #{custom_model_forward.6} parent=11 // pred_region
        _
      $region32: #{custom_model_forward.6} parent=11 // pred_fallthru
        _
      // Predicated region
      $region33: #{custom_model_forward.6} parent=11 // pred_check
        %p248 = pneg %p192
      $region34: #{custom_model_forward.6} parent=11 // pred_check_branch
        %250 = sbr.rel (%p248) target = $region36
      $region35: #{custom_model_forward.6} parent=11 // pred_region
        _
      $region36: #{custom_model_forward.6} parent=11 // pred_fallthru
        _
    $region12: #{custom_model_forward.6} parent=5 // pred_fallthru
      _
    %p251 = scmp.lt.s32.totalorder %s14, 2
    // Predicated region
    $region37: #{custom_model_forward.6} parent=5 // pred_check
      %p252 = pneg %p251
    $region38: #{custom_model_forward.6} parent=5 // pred_check_branch
      %254 = sbr.rel (%p252) target = $region40
    $region39: #{custom_model_forward.6} parent=5 // pred_region
      // Predicated region
      $region41: #{custom_model_forward.6} parent=39 // pred_check
        %p255 = pneg %p34
      $region42: #{custom_model_forward.6} parent=39 // pred_check_branch
        %257 = sbr.rel (%p255) target = $region44
      $region43: #{custom_model_forward.6} parent=39 // pred_region
        %s258 = smul.u32 2, %s14
        %p259 = scmp.lt.s32.totalorder %s258, 3
        %s260 = scalar_select %p259, %s258, 3
        %s261 = smul.addr %s260, 3
        %s262 = smul.addr %s261, 4
        %s263 = scalar_lea.vmem %s0, %s262
        %s264 = smul.u32 2, %s14
      $region44: #{custom_model_forward.6} parent=39 // pred_fallthru
        _
      // Predicated region
      $region45: #{custom_model_forward.6} parent=39 // pred_check
        %p265 = pneg %p60
      $region46: #{custom_model_forward.6} parent=39 // pred_check_branch
        %267 = sbr.rel (%p265) target = $region48
      $region47: #{custom_model_forward.6} parent=39 // pred_region
        %s268 = smul.u32 2, %s14
        %p269 = scmp.lt.s32.totalorder %s268, 3
        %s270 = scalar_select %p269, %s268, 3
        %s271 = smul.addr %s270, 3
        %s272 = smul.addr %s271, 4
        %s273 = scalar_lea.vmem %s1, %s272
        %s274 = smul.u32 2, %s14
      $region48: #{custom_model_forward.6} parent=39 // pred_fallthru
        _
    $region40: #{custom_model_forward.6} parent=5 // pred_fallthru
      _
    %p275 = scmp.le.s32.totalorder 1, %s14
    %p276 = scmp.lt.s32.totalorder %s14, 3
    %p277 = pnand %p275, %p276
    %p278 = pneg %p277
    // Predicated region
    $region49: #{custom_model_forward.6} parent=5 // pred_check
      _
    $region50: #{custom_model_forward.6} parent=5 // pred_check_branch
      %280 = sbr.rel (%p277) target = $region52
    $region51: #{custom_model_forward.6} parent=5 // pred_region
      %s281 = ssub.s32 %s14, 1
      %s282 = smul.u32 2, %s19
      %p283 = scmp.lt.s32.totalorder %s282, 3
      %s284 = scalar_select %p283, %s282, 3
      %s285 = smul.addr %s284, 3
      %s286 = smul.addr %s285, 4
      %s287 = scalar_lea.vmem %s0, %s286
      %p288 = pneg %p40
      %p289 = pneg %p37
      %s290 = smul.u32 2, %s19
      %p291 = scmp.lt.s32.totalorder %s290, 3
      %s292 = scalar_select %p291, %s290, 3
      %s293 = smul.addr %s292, 3
      %s294 = smul.addr %s293, 4
      %s295 = scalar_lea.vmem %s1, %s294
      %p296 = pneg %p66
      %p297 = pneg %p63
      %p298 = pneg %p87
      %p299 = pneg %p84
      %p300 = pneg %p108
      %p301 = pneg %p105
      %p302 = pneg %p129
      %p303 = pneg %p126
      %p304 = pneg %p150
      %p305 = pneg %p147
      %p306 = pneg %p171
      %p307 = pneg %p168
      %p308 = pneg %p192
      %p309 = pneg %p189
      %p310 = pneg %p218
      %p311 = pneg %p215
      %s312 = smul.u32 2, %s19
      %p313 = scmp.lt.s32.totalorder %s312, 3
      %s314 = scalar_select %p313, %s312, 3
      %s315 = smul.addr %s314, 4
      %s316 = scalar_lea.vmem %s8, %s315
      %s317 = smul.u32 2, %s19
      %p318 = scmp.lt.s32.totalorder %s317, 3
      %s319 = scalar_select %p318, %s317, 3
      %s320 = smul.addr %s319, 3
      %s321 = smul.addr %s320, 4
      %s322 = scalar_lea.vmem %s0, %s321
      %s323 = smul.u32 2, %s19
      %s324 = smul.u32 2, %s19
      %p325 = scmp.lt.s32.totalorder %s324, 3
      %s326 = scalar_select %p325, %s324, 3
      %s327 = smul.addr %s326, 3
      %s328 = smul.addr %s327, 4
      %s329 = scalar_lea.vmem %s1, %s328
      %s330 = smul.u32 2, %s19
      %s331 = smul.u32 2, %s19
      %p332 = scmp.lt.s32.totalorder %s331, 3
      %s333 = scalar_select %p332, %s331, 3
      %s334 = smul.addr %s333, 4
      %s335 = scalar_lea.vmem %s8, %s334
      %s336 = smul.u32 2, %s19
      %v338 = vld [vmem:[%s322] sm:$0xff]
      %v339 = vld [vmem:[%s322 + $0x8] sm:$0xf]
      %v340 = vld [vmem:[%s322 + $0xc] sm:$0xff]
      %v341 = vld [vmem:[%s322 + $0x14] sm:$0xf]
      %v342 = vld [vmem:[%s329] sm:$0xff]
      %v343 = vld [vmem:[%s329 + $0x8] sm:$0xf]
      %v344 = vld [vmem:[%s329 + $0xc] sm:$0xff]
      %v345 = vld [vmem:[%s329 + $0x14] sm:$0xf]
      %v346 = vld [vmem:[%s2] sm:$0xff]
      %v347 = vld [vmem:[%s2 + $0x8] sm:$0xf]
      %v348 = vld [vmem:[%s2 + $0xc] sm:$0xff]
      %v349 = vld [vmem:[%s2 + $0x14] sm:$0xf]
      %v350 = vld [vmem:[%s2 + $0x18] sm:$0xff]
      %v351 = vld [vmem:[%s2 + $0x20] sm:$0xf]
      %v352 = vld [vmem:[%s2 + $0x24] sm:$0xff]
      %v353 = vld [vmem:[%s2 + $0x2c] sm:$0xf]
      %v354 = vld [vmem:[%s2 + $0x30] sm:$0xff]
      %v355 = vld [vmem:[%s2 + $0x38] sm:$0xf]
      %v356 = vld [vmem:[%s2 + $0x3c] sm:$0xff]
      %v357 = vld [vmem:[%s2 + $0x44] sm:$0xf]
      %v358 = vld [vmem:[%s2 + $0x48] sm:$0xff]
      %v359 = vld [vmem:[%s2 + $0x50] sm:$0xf]
      %v360 = vld [vmem:[%s2 + $0x54] sm:$0xff]
      %v361 = vld [vmem:[%s2 + $0x5c] sm:$0xf]
      %v362 = vld [vmem:[%s2 + $0x60] sm:$0xff]
      %v363 = vld [vmem:[%s2 + $0x68] sm:$0xf]
      %v364 = vld [vmem:[%s2 + $0x6c] sm:$0xff]
      %v365 = vld [vmem:[%s2 + $0x74] sm:$0xf]
      %v366 = vld [vmem:[%s2 + $0x78] sm:$0xff]
      %v367 = vld [vmem:[%s2 + $0x80] sm:$0xf]
      %v368 = vld [vmem:[%s2 + $0x84] sm:$0xff]
      %v369 = vld [vmem:[%s2 + $0x8c] sm:$0xf]
      %v370 = vld [vmem:[%s2 + $0x90] sm:$0xff]
      %v371 = vld [vmem:[%s2 + $0x98] sm:$0xf]
      %v372 = vld [vmem:[%s2 + $0x9c] sm:$0xff]
      %v373 = vld [vmem:[%s2 + $0xa4] sm:$0xf]
      %v374 = vld [vmem:[%s2 + $0xa8] sm:$0xff]
      %v375 = vld [vmem:[%s2 + $0xb0] sm:$0xf]
      %v376 = vld [vmem:[%s2 + $0xb4] sm:$0xff]
      %v377 = vld [vmem:[%s2 + $0xbc] sm:$0xf]
      %v378 = vld [vmem:[%s2 + $0xc0] sm:$0xff]
      %v379 = vld [vmem:[%s2 + $0xc8] sm:$0xf]
      %v380 = vld [vmem:[%s2 + $0xcc] sm:$0xff]
      %v381 = vld [vmem:[%s2 + $0xd4] sm:$0xf]
      %v382 = vld [vmem:[%s2 + $0xd8] sm:$0xff]
      %v383 = vld [vmem:[%s2 + $0xe0] sm:$0xf]
      %v384 = vld [vmem:[%s2 + $0xe4] sm:$0xff]
      %v385 = vld [vmem:[%s2 + $0xec] sm:$0xf]
      %v386 = vld [vmem:[%s2 + $0xf0] sm:$0xff]
      %v387 = vld [vmem:[%s2 + $0xf8] sm:$0xf]
      %v388 = vld [vmem:[%s2 + $0xfc] sm:$0xff]
      %v389 = vld [vmem:[%s2 + $0x104] sm:$0xf]
      %v390 = vld [vmem:[%s2 + $0x108] sm:$0xff]
      %v391 = vld [vmem:[%s2 + $0x110] sm:$0xf]
      %v392 = vld [vmem:[%s2 + $0x114] sm:$0xff]
      %v393 = vld [vmem:[%s2 + $0x11c] sm:$0xf]
      %v394 = vld [vmem:[%s2 + $0x120] sm:$0xff]
      %v395 = vld [vmem:[%s2 + $0x128] sm:$0xf]
      %v396 = vld [vmem:[%s2 + $0x12c] sm:$0xff]
      %v397 = vld [vmem:[%s2 + $0x134] sm:$0xf]
      %v398 = vld [vmem:[%s2 + $0x138] sm:$0xff]
      %v399 = vld [vmem:[%s2 + $0x140] sm:$0xf]
      %v400 = vld [vmem:[%s2 + $0x144] sm:$0xff]
      %v401 = vld [vmem:[%s2 + $0x14c] sm:$0xf]
      %v402 = vld [vmem:[%s2 + $0x150] sm:$0xff]
      %v403 = vld [vmem:[%s2 + $0x158] sm:$0xf]
      %v404 = vld [vmem:[%s2 + $0x15c] sm:$0xff]
      %v405 = vld [vmem:[%s2 + $0x164] sm:$0xf]
      %v406 = vld [vmem:[%s2 + $0x168] sm:$0xff]
      %v407 = vld [vmem:[%s2 + $0x170] sm:$0xf]
      %v408 = vld [vmem:[%s2 + $0x174] sm:$0xff]
      %v409 = vld [vmem:[%s2 + $0x17c] sm:$0xf]
      %v410 = vld [vmem:[%s2 + $0x180] sm:$0xff]
      %v411 = vld [vmem:[%s2 + $0x188] sm:$0xf]
      %v412 = vld [vmem:[%s2 + $0x18c] sm:$0xff]
      %v413 = vld [vmem:[%s2 + $0x194] sm:$0xf]
      %v414 = vld [vmem:[%s2 + $0x198] sm:$0xff]
      %v415 = vld [vmem:[%s2 + $0x1a0] sm:$0xf]
      %v416 = vld [vmem:[%s2 + $0x1a4] sm:$0xff]
      %v417 = vld [vmem:[%s2 + $0x1ac] sm:$0xf]
      %v418 = vld [vmem:[%s2 + $0x1b0] sm:$0xff]
      %v419 = vld [vmem:[%s2 + $0x1b8] sm:$0xf]
      %v420 = vld [vmem:[%s2 + $0x1bc] sm:$0xff]
      %v421 = vld [vmem:[%s2 + $0x1c4] sm:$0xf]
      %v422 = vld [vmem:[%s2 + $0x1c8] sm:$0xff]
      %v423 = vld [vmem:[%s2 + $0x1d0] sm:$0xf]
      %v424 = vld [vmem:[%s2 + $0x1d4] sm:$0xff]
      %v425 = vld [vmem:[%s2 + $0x1dc] sm:$0xf]
      %v426 = vld [vmem:[%s3] sm:$0x7]
      %v427 = vld [vmem:[%s4] sm:$0xff]
      %v428 = vld [vmem:[%s4 + $0x8] sm:$0xf]
      %v429 = vld [vmem:[%s4 + $0xc] sm:$0xff]
      %v430 = vld [vmem:[%s4 + $0x14] sm:$0xf]
      %v431 = vld [vmem:[%s4 + $0x18] sm:$0xff]
      %v432 = vld [vmem:[%s4 + $0x20] sm:$0xf]
      %v433 = vld [vmem:[%s4 + $0x24] sm:$0xff]
      %v434 = vld [vmem:[%s4 + $0x2c] sm:$0xf]
      %v435 = vld [vmem:[%s4 + $0x30] sm:$0xff]
      %v436 = vld [vmem:[%s4 + $0x38] sm:$0xf]
      %v437 = vld [vmem:[%s4 + $0x3c] sm:$0xff]
      %v438 = vld [vmem:[%s4 + $0x44] sm:$0xf]
      %v439 = vld [vmem:[%s4 + $0x48] sm:$0xff]
      %v440 = vld [vmem:[%s4 + $0x50] sm:$0xf]
      %v441 = vld [vmem:[%s4 + $0x54] sm:$0xff]
      %v442 = vld [vmem:[%s4 + $0x5c] sm:$0xf]
      %v443 = vld [vmem:[%s4 + $0x60] sm:$0xff]
      %v444 = vld [vmem:[%s4 + $0x68] sm:$0xf]
      %v445 = vld [vmem:[%s4 + $0x6c] sm:$0xff]
      %v446 = vld [vmem:[%s4 + $0x74] sm:$0xf]
      %v447 = vld [vmem:[%s4 + $0x78] sm:$0xff]
      %v448 = vld [vmem:[%s4 + $0x80] sm:$0xf]
      %v449 = vld [vmem:[%s4 + $0x84] sm:$0xff]
      %v450 = vld [vmem:[%s4 + $0x8c] sm:$0xf]
      %v451 = vld [vmem:[%s4 + $0x90] sm:$0xff]
      %v452 = vld [vmem:[%s4 + $0x98] sm:$0xf]
      %v453 = vld [vmem:[%s4 + $0x9c] sm:$0xff]
      %v454 = vld [vmem:[%s4 + $0xa4] sm:$0xf]
      %v455 = vld [vmem:[%s4 + $0xa8] sm:$0xff]
      %v456 = vld [vmem:[%s4 + $0xb0] sm:$0xf]
      %v457 = vld [vmem:[%s4 + $0xb4] sm:$0xff]
      %v458 = vld [vmem:[%s4 + $0xbc] sm:$0xf]
      %v459 = vld [vmem:[%s4 + $0xc0] sm:$0xff]
      %v460 = vld [vmem:[%s4 + $0xc8] sm:$0xf]
      %v461 = vld [vmem:[%s4 + $0xcc] sm:$0xff]
      %v462 = vld [vmem:[%s4 + $0xd4] sm:$0xf]
      %v463 = vld [vmem:[%s4 + $0xd8] sm:$0xff]
      %v464 = vld [vmem:[%s4 + $0xe0] sm:$0xf]
      %v465 = vld [vmem:[%s4 + $0xe4] sm:$0xff]
      %v466 = vld [vmem:[%s4 + $0xec] sm:$0xf]
      %v467 = vld [vmem:[%s4 + $0xf0] sm:$0xff]
      %v468 = vld [vmem:[%s4 + $0xf8] sm:$0xf]
      %v469 = vld [vmem:[%s4 + $0xfc] sm:$0xff]
      %v470 = vld [vmem:[%s4 + $0x104] sm:$0xf]
      %v471 = vld [vmem:[%s4 + $0x108] sm:$0xff]
      %v472 = vld [vmem:[%s4 + $0x110] sm:$0xf]
      %v473 = vld [vmem:[%s4 + $0x114] sm:$0xff]
      %v474 = vld [vmem:[%s4 + $0x11c] sm:$0xf]
      %v475 = vld [vmem:[%s4 + $0x120] sm:$0xff]
      %v476 = vld [vmem:[%s4 + $0x128] sm:$0xf]
      %v477 = vld [vmem:[%s4 + $0x12c] sm:$0xff]
      %v478 = vld [vmem:[%s4 + $0x134] sm:$0xf]
      %v479 = vld [vmem:[%s4 + $0x138] sm:$0xff]
      %v480 = vld [vmem:[%s4 + $0x140] sm:$0xf]
      %v481 = vld [vmem:[%s4 + $0x144] sm:$0xff]
      %v482 = vld [vmem:[%s4 + $0x14c] sm:$0xf]
      %v483 = vld [vmem:[%s4 + $0x150] sm:$0xff]
      %v484 = vld [vmem:[%s4 + $0x158] sm:$0xf]
      %v485 = vld [vmem:[%s4 + $0x15c] sm:$0xff]
      %v486 = vld [vmem:[%s4 + $0x164] sm:$0xf]
      %v487 = vld [vmem:[%s4 + $0x168] sm:$0xff]
      %v488 = vld [vmem:[%s4 + $0x170] sm:$0xf]
      %v489 = vld [vmem:[%s4 + $0x174] sm:$0xff]
      %v490 = vld [vmem:[%s4 + $0x17c] sm:$0xf]
      %v491 = vld [vmem:[%s4 + $0x180] sm:$0xff]
      %v492 = vld [vmem:[%s4 + $0x188] sm:$0xf]
      %v493 = vld [vmem:[%s4 + $0x18c] sm:$0xff]
      %v494 = vld [vmem:[%s4 + $0x194] sm:$0xf]
      %v495 = vld [vmem:[%s4 + $0x198] sm:$0xff]
      %v496 = vld [vmem:[%s4 + $0x1a0] sm:$0xf]
      %v497 = vld [vmem:[%s4 + $0x1a4] sm:$0xff]
      %v498 = vld [vmem:[%s4 + $0x1ac] sm:$0xf]
      %v499 = vld [vmem:[%s4 + $0x1b0] sm:$0xff]
      %v500 = vld [vmem:[%s4 + $0x1b8] sm:$0xf]
      %v501 = vld [vmem:[%s4 + $0x1bc] sm:$0xff]
      %v502 = vld [vmem:[%s4 + $0x1c4] sm:$0xf]
      %v503 = vld [vmem:[%s4 + $0x1c8] sm:$0xff]
      %v504 = vld [vmem:[%s4 + $0x1d0] sm:$0xf]
      %v505 = vld [vmem:[%s4 + $0x1d4] sm:$0xff]
      %v506 = vld [vmem:[%s4 + $0x1dc] sm:$0xf]
      %v507 = vld [vmem:[%s5] sm:$0x7]
      %v508 = vld [vmem:[%s6] sm:$0xf]
      %v509 = vld [vmem:[%s6 + $0x4] sm:$0xf]
      %v510 = vld [vmem:[%s6 + $0x8] sm:$0xf]
      %v511 = vld [vmem:[%s6 + $0xc] sm:$0xf]
      %v512 = vld [vmem:[%s6 + $0x10] sm:$0xf]
      %v513 = vld [vmem:[%s6 + $0x14] sm:$0xf]
      %v514 = vld [vmem:[%s6 + $0x18] sm:$0xf]
      %v515 = vld [vmem:[%s6 + $0x1c] sm:$0xf]
      %v516 = vld [vmem:[%s6 + $0x20] sm:$0xf]
      %v517 = vld [vmem:[%s6 + $0x24] sm:$0xf]
      %v518 = vld [vmem:[%s6 + $0x28] sm:$0xf]
      %v519 = vld [vmem:[%s6 + $0x2c] sm:$0xf]
      %v520 = vld [vmem:[%s6 + $0x30] sm:$0xf]
      %v521 = vld [vmem:[%s6 + $0x34] sm:$0xf]
      %v522 = vld [vmem:[%s6 + $0x38] sm:$0xf]
      %v523 = vld [vmem:[%s6 + $0x3c] sm:$0xf]
      %v524 = vld [vmem:[%s6 + $0x40] sm:$0xf]
      %v525 = vld [vmem:[%s6 + $0x44] sm:$0xf]
      %v526 = vld [vmem:[%s6 + $0x48] sm:$0xf]
      %v527 = vld [vmem:[%s6 + $0x4c] sm:$0xf]
      %v528 = vld [vmem:[%s6 + $0x50] sm:$0xf]
      %v529 = vld [vmem:[%s6 + $0x54] sm:$0xf]
      %v530 = vld [vmem:[%s6 + $0x58] sm:$0xf]
      %v531 = vld [vmem:[%s6 + $0x5c] sm:$0xf]
      %v532 = vld [vmem:[%s6 + $0x60] sm:$0xf]
      %v533 = vld [vmem:[%s6 + $0x64] sm:$0xf]
      %v534 = vld [vmem:[%s6 + $0x68] sm:$0xf]
      %v535 = vld [vmem:[%s6 + $0x6c] sm:$0xf]
      %v536 = vld [vmem:[%s6 + $0x70] sm:$0xf]
      %v537 = vld [vmem:[%s6 + $0x74] sm:$0xf]
      %v538 = vld [vmem:[%s6 + $0x78] sm:$0xf]
      %v539 = vld [vmem:[%s6 + $0x7c] sm:$0xf]
      %v540 = vld [vmem:[%s6 + $0x80] sm:$0xf]
      %v541 = vld [vmem:[%s6 + $0x84] sm:$0xf]
      %v542 = vld [vmem:[%s6 + $0x88] sm:$0xf]
      %v543 = vld [vmem:[%s6 + $0x8c] sm:$0xf]
      %v544 = vld [vmem:[%s6 + $0x90] sm:$0xf]
      %v545 = vld [vmem:[%s6 + $0x94] sm:$0xf]
      %v546 = vld [vmem:[%s6 + $0x98] sm:$0xf]
      %v547 = vld [vmem:[%s6 + $0x9c] sm:$0xf]
      %v548 = vld [vmem:[%s7] sm:$0x1]
      %v550 = vperm.slane %v426, 0
      %v551 = vperm.slane %v426, 1
      %v552 = vperm.slane %v426, 2
      %v560 = vunpack.c.l.b16 %v342
      %v561 = vunpack.c.h.b16 %v342
      %v562 = vunpack.c.l.b16 %v343
      %v563 = vunpack.c.l.b16 %v344
      %v564 = vunpack.c.h.b16 %v344
      %v565 = vunpack.c.l.b16 %v345
      %v566 = vpack.c.b16 %v563, %v560
      %v567 = vpack.c.b16 %v564, %v561
      %v568 = vpack.c.b16 %v565, %v562
      %v651 = vunpack.c.l.b16 %v346
      %v652 = vunpack.c.h.b16 %v346
      %v653 = vunpack.c.l.b16 %v347
      %v654 = vunpack.c.l.b16 %v348
      %v655 = vunpack.c.h.b16 %v348
      %v656 = vunpack.c.l.b16 %v349
      %v657 = vunpack.c.l.b16 %v350
      %v658 = vunpack.c.h.b16 %v350
      %v659 = vunpack.c.l.b16 %v351
      %v660 = vunpack.c.l.b16 %v352
      %v661 = vunpack.c.h.b16 %v352
      %v662 = vunpack.c.l.b16 %v353
      %v663 = vunpack.c.l.b16 %v354
      %v664 = vunpack.c.h.b16 %v354
      %v665 = vunpack.c.l.b16 %v355
      %v666 = vunpack.c.l.b16 %v356
      %v667 = vunpack.c.h.b16 %v356
      %v668 = vunpack.c.l.b16 %v357
      %v669 = vunpack.c.l.b16 %v358
      %v670 = vunpack.c.h.b16 %v358
      %v671 = vunpack.c.l.b16 %v359
      %v672 = vunpack.c.l.b16 %v360
      %v673 = vunpack.c.h.b16 %v360
      %v674 = vunpack.c.l.b16 %v361
      %v675 = vunpack.c.l.b16 %v362
      %v676 = vunpack.c.h.b16 %v362
      %v677 = vunpack.c.l.b16 %v363
      %v678 = vunpack.c.l.b16 %v364
      %v679 = vunpack.c.h.b16 %v364
      %v680 = vunpack.c.l.b16 %v365
      %v681 = vunpack.c.l.b16 %v366
      %v682 = vunpack.c.h.b16 %v366
      %v683 = vunpack.c.l.b16 %v367
      %v684 = vunpack.c.l.b16 %v368
      %v685 = vunpack.c.h.b16 %v368
      %v686 = vunpack.c.l.b16 %v369
      %v687 = vunpack.c.l.b16 %v370
      %v688 = vunpack.c.h.b16 %v370
      %v689 = vunpack.c.l.b16 %v371
      %v690 = vunpack.c.l.b16 %v372
      %v691 = vunpack.c.h.b16 %v372
      %v692 = vunpack.c.l.b16 %v373
      %v693 = vunpack.c.l.b16 %v374
      %v694 = vunpack.c.h.b16 %v374
      %v695 = vunpack.c.l.b16 %v375
      %v696 = vunpack.c.l.b16 %v376
      %v697 = vunpack.c.h.b16 %v376
      %v698 = vunpack.c.l.b16 %v377
      %v699 = vunpack.c.l.b16 %v378
      %v700 = vunpack.c.h.b16 %v378
      %v701 = vunpack.c.l.b16 %v379
      %v702 = vunpack.c.l.b16 %v380
      %v703 = vunpack.c.h.b16 %v380
      %v704 = vunpack.c.l.b16 %v381
      %v705 = vunpack.c.l.b16 %v382
      %v706 = vunpack.c.h.b16 %v382
      %v707 = vunpack.c.l.b16 %v383
      %v708 = vunpack.c.l.b16 %v384
      %v709 = vunpack.c.h.b16 %v384
      %v710 = vunpack.c.l.b16 %v385
      %v711 = vunpack.c.l.b16 %v386
      %v712 = vunpack.c.h.b16 %v386
      %v713 = vunpack.c.l.b16 %v387
      %v714 = vunpack.c.l.b16 %v388
      %v715 = vunpack.c.h.b16 %v388
      %v716 = vunpack.c.l.b16 %v389
      %v717 = vunpack.c.l.b16 %v390
      %v718 = vunpack.c.h.b16 %v390
      %v719 = vunpack.c.l.b16 %v391
      %v720 = vunpack.c.l.b16 %v392
      %v721 = vunpack.c.h.b16 %v392
      %v722 = vunpack.c.l.b16 %v393
      %v723 = vunpack.c.l.b16 %v394
      %v724 = vunpack.c.h.b16 %v394
      %v725 = vunpack.c.l.b16 %v395
      %v726 = vunpack.c.l.b16 %v396
      %v727 = vunpack.c.h.b16 %v396
      %v728 = vunpack.c.l.b16 %v397
      %v729 = vunpack.c.l.b16 %v398
      %v730 = vunpack.c.h.b16 %v398
      %v731 = vunpack.c.l.b16 %v399
      %v732 = vunpack.c.l.b16 %v400
      %v733 = vunpack.c.h.b16 %v400
      %v734 = vunpack.c.l.b16 %v401
      %v735 = vunpack.c.l.b16 %v402
      %v736 = vunpack.c.h.b16 %v402
      %v737 = vunpack.c.l.b16 %v403
      %v738 = vunpack.c.l.b16 %v404
      %v739 = vunpack.c.h.b16 %v404
      %v740 = vunpack.c.l.b16 %v405
      %v741 = vunpack.c.l.b16 %v406
      %v742 = vunpack.c.h.b16 %v406
      %v743 = vunpack.c.l.b16 %v407
      %v744 = vunpack.c.l.b16 %v408
      %v745 = vunpack.c.h.b16 %v408
      %v746 = vunpack.c.l.b16 %v409
      %v747 = vunpack.c.l.b16 %v410
      %v748 = vunpack.c.h.b16 %v410
      %v749 = vunpack.c.l.b16 %v411
      %v750 = vunpack.c.l.b16 %v412
      %v751 = vunpack.c.h.b16 %v412
      %v752 = vunpack.c.l.b16 %v413
      %v753 = vunpack.c.l.b16 %v414
      %v754 = vunpack.c.h.b16 %v414
      %v755 = vunpack.c.l.b16 %v415
      %v756 = vunpack.c.l.b16 %v416
      %v757 = vunpack.c.h.b16 %v416
      %v758 = vunpack.c.l.b16 %v417
      %v759 = vunpack.c.l.b16 %v418
      %v760 = vunpack.c.h.b16 %v418
      %v761 = vunpack.c.l.b16 %v419
      %v762 = vunpack.c.l.b16 %v420
      %v763 = vunpack.c.h.b16 %v420
      %v764 = vunpack.c.l.b16 %v421
      %v765 = vunpack.c.l.b16 %v422
      %v766 = vunpack.c.h.b16 %v422
      %v767 = vunpack.c.l.b16 %v423
      %v768 = vunpack.c.l.b16 %v424
      %v769 = vunpack.c.h.b16 %v424
      %v770 = vunpack.c.l.b16 %v425
      %v771 = vpack.c.b16 %v654, %v651
      %v772 = vpack.c.b16 %v655, %v652
      %v773 = vpack.c.b16 %v656, %v653
      %v774 = vpack.c.b16 %v660, %v657
      %v775 = vpack.c.b16 %v661, %v658
      %v776 = vpack.c.b16 %v662, %v659
      %v777 = vpack.c.b16 %v666, %v663
      %v778 = vpack.c.b16 %v667, %v664
      %v779 = vpack.c.b16 %v668, %v665
      %v780 = vpack.c.b16 %v672, %v669
      %v781 = vpack.c.b16 %v673, %v670
      %v782 = vpack.c.b16 %v674, %v671
      %v783 = vpack.c.b16 %v678, %v675
      %v784 = vpack.c.b16 %v679, %v676
      %v785 = vpack.c.b16 %v680, %v677
      %v786 = vpack.c.b16 %v684, %v681
      %v787 = vpack.c.b16 %v685, %v682
      %v788 = vpack.c.b16 %v686, %v683
      %v789 = vpack.c.b16 %v690, %v687
      %v790 = vpack.c.b16 %v691, %v688
      %v791 = vpack.c.b16 %v692, %v689
      %v792 = vpack.c.b16 %v696, %v693
      %v793 = vpack.c.b16 %v697, %v694
      %v794 = vpack.c.b16 %v698, %v695
      %v795 = vpack.c.b16 %v702, %v699
      %v796 = vpack.c.b16 %v703, %v700
      %v797 = vpack.c.b16 %v704, %v701
      %v798 = vpack.c.b16 %v708, %v705
      %v799 = vpack.c.b16 %v709, %v706
      %v800 = vpack.c.b16 %v710, %v707
      %v801 = vpack.c.b16 %v714, %v711
      %v802 = vpack.c.b16 %v715, %v712
      %v803 = vpack.c.b16 %v716, %v713
      %v804 = vpack.c.b16 %v720, %v717
      %v805 = vpack.c.b16 %v721, %v718
      %v806 = vpack.c.b16 %v722, %v719
      %v807 = vpack.c.b16 %v726, %v723
      %v808 = vpack.c.b16 %v727, %v724
      %v809 = vpack.c.b16 %v728, %v725
      %v810 = vpack.c.b16 %v732, %v729
      %v811 = vpack.c.b16 %v733, %v730
      %v812 = vpack.c.b16 %v734, %v731
      %v813 = vpack.c.b16 %v738, %v735
      %v814 = vpack.c.b16 %v739, %v736
      %v815 = vpack.c.b16 %v740, %v737
      %v816 = vpack.c.b16 %v744, %v741
      %v817 = vpack.c.b16 %v745, %v742
      %v818 = vpack.c.b16 %v746, %v743
      %v819 = vpack.c.b16 %v750, %v747
      %v820 = vpack.c.b16 %v751, %v748
      %v821 = vpack.c.b16 %v752, %v749
      %v822 = vpack.c.b16 %v756, %v753
      %v823 = vpack.c.b16 %v757, %v754
      %v824 = vpack.c.b16 %v758, %v755
      %v825 = vpack.c.b16 %v762, %v759
      %v826 = vpack.c.b16 %v763, %v760
      %v827 = vpack.c.b16 %v764, %v761
      %v828 = vpack.c.b16 %v768, %v765
      %v829 = vpack.c.b16 %v769, %v766
      %v830 = vpack.c.b16 %v770, %v767
      %vm891 = vcmask 523264
      %v893 = vsel %vm891, %v568, 0
      %895 = vmatpush.bf16.msra.mxu0 %v792
      %896 = vmatpush.bf16.msra.mxu0 %v789
      %897 = vmatpush.bf16.msra.mxu0 %v786
      %898 = vmatpush.bf16.msra.mxu0 %v783
      %899 = vmatpush.bf16.msra.mxu0 %v780
      %900 = vmatpush.bf16.msra.mxu0 %v777
      %901 = vmatpush.bf16.msra.mxu0 %v774
      %902 = vmatpush.bf16.msra.mxu0 %v771
      %903 = vmatmul.bf16.gmra.mxu0 %v566
      %v904 = vpop.f32.mrf.mxu0
      %v905 = vadd.f32 %v550, %v904
      %v906 = vpop.f32.mrf.mxu0
      %v907 = vadd.f32 %v550, %v906
      %908 = vdwg.mxu0
      %909 = vmatpush.bf16.msra.mxu0 %v816
      %910 = vmatpush.bf16.msra.mxu0 %v813
      %911 = vmatpush.bf16.msra.mxu0 %v810
      %912 = vmatpush.bf16.msra.mxu0 %v807
      %913 = vmatpush.bf16.msra.mxu0 %v804
      %914 = vmatpush.bf16.msra.mxu0 %v801
      %915 = vmatpush.bf16.msra.mxu0 %v798
      %916 = vmatpush.bf16.msra.mxu0 %v795
      %917 = vmatmul.bf16.gmra.mxu0 %v567
      %v918 = vpop.f32.mrf.mxu0
      %v919 = vadd.f32 %v905, %v918
      %v920 = vpop.f32.mrf.mxu0
      %v921 = vadd.f32 %v907, %v920
      %922 = vdwg.mxu0
      %923 = vmatpush.bf16.msra.mxu0 0
      %924 = vmatpush.bf16.msra.mxu0 0
      %925 = vmatpush.bf16.msra.mxu0 0
      %926 = vmatpush.bf16.msra.mxu0 0
      %927 = vmatpush.bf16.msra.mxu0 %v828
      %928 = vmatpush.bf16.msra.mxu0 %v825
      %929 = vmatpush.bf16.msra.mxu0 %v822
      %930 = vmatpush.bf16.msra.mxu0 %v819
      %931 = vmatmul.bf16.gmra.mxu0 %v893
      %v932 = vpop.f32.mrf.mxu0
      %v933 = vadd.f32 %v919, %v932
      %v934 = vpop.f32.mrf.mxu0
      %v935 = vadd.f32 %v921, %v934
      %936 = vdwg.mxu0
      %937 = vmatpush.bf16.msra.mxu0 %v793
      %938 = vmatpush.bf16.msra.mxu0 %v790
      %939 = vmatpush.bf16.msra.mxu0 %v787
      %940 = vmatpush.bf16.msra.mxu0 %v784
      %941 = vmatpush.bf16.msra.mxu0 %v781
      %942 = vmatpush.bf16.msra.mxu0 %v778
      %943 = vmatpush.bf16.msra.mxu0 %v775
      %944 = vmatpush.bf16.msra.mxu0 %v772
      %945 = vmatmul.bf16.gmra.mxu0 %v566
      %v946 = vpop.f32.mrf.mxu0
      %v947 = vadd.f32 %v551, %v946
      %v948 = vpop.f32.mrf.mxu0
      %v949 = vadd.f32 %v551, %v948
      %950 = vdwg.mxu0
      %951 = vmatpush.bf16.msra.mxu0 %v817
      %952 = vmatpush.bf16.msra.mxu0 %v814
      %953 = vmatpush.bf16.msra.mxu0 %v811
      %954 = vmatpush.bf16.msra.mxu0 %v808
      %955 = vmatpush.bf16.msra.mxu0 %v805
      %956 = vmatpush.bf16.msra.mxu0 %v802
      %957 = vmatpush.bf16.msra.mxu0 %v799
      %958 = vmatpush.bf16.msra.mxu0 %v796
      %959 = vmatmul.bf16.gmra.mxu0 %v567
      %v960 = vpop.f32.mrf.mxu0
      %v961 = vadd.f32 %v947, %v960
      %v962 = vpop.f32.mrf.mxu0
      %v963 = vadd.f32 %v949, %v962
      %964 = vdwg.mxu0
      %965 = vmatpush.bf16.msra.mxu0 0
      %966 = vmatpush.bf16.msra.mxu0 0
      %967 = vmatpush.bf16.msra.mxu0 0
      %968 = vmatpush.bf16.msra.mxu0 0
      %969 = vmatpush.bf16.msra.mxu0 %v829
      %970 = vmatpush.bf16.msra.mxu0 %v826
      %971 = vmatpush.bf16.msra.mxu0 %v823
      %972 = vmatpush.bf16.msra.mxu0 %v820
      %973 = vmatmul.bf16.gmra.mxu0 %v893
      %v974 = vpop.f32.mrf.mxu0
      %v975 = vadd.f32 %v961, %v974
      %v976 = vpop.f32.mrf.mxu0
      %v977 = vadd.f32 %v963, %v976
      %978 = vdwg.mxu0
      %979 = vmatpush.bf16.msra.mxu0 %v794
      %980 = vmatpush.bf16.msra.mxu0 %v791
      %981 = vmatpush.bf16.msra.mxu0 %v788
      %982 = vmatpush.bf16.msra.mxu0 %v785
      %983 = vmatpush.bf16.msra.mxu0 %v782
      %984 = vmatpush.bf16.msra.mxu0 %v779
      %985 = vmatpush.bf16.msra.mxu0 %v776
      %986 = vmatpush.bf16.msra.mxu0 %v773
      %987 = vmatmul.bf16.gmra.mxu0 %v566
      %v988 = vpop.f32.mrf.mxu0
      %v989 = vadd.f32 %v552, %v988
      %v990 = vpop.f32.mrf.mxu0
      %v991 = vadd.f32 %v552, %v990
      %992 = vdwg.mxu0
      %993 = vmatpush.bf16.msra.mxu0 %v818
      %994 = vmatpush.bf16.msra.mxu0 %v815
      %995 = vmatpush.bf16.msra.mxu0 %v812
      %996 = vmatpush.bf16.msra.mxu0 %v809
      %997 = vmatpush.bf16.msra.mxu0 %v806
      %998 = vmatpush.bf16.msra.mxu0 %v803
      %999 = vmatpush.bf16.msra.mxu0 %v800
      %1000 = vmatpush.bf16.msra.mxu0 %v797
      %1001 = vmatmul.bf16.gmra.mxu0 %v567
      %v1002 = vpop.f32.mrf.mxu0
      %v1003 = vadd.f32 %v989, %v1002
      %v1004 = vpop.f32.mrf.mxu0
      %v1005 = vadd.f32 %v991, %v1004
      %1006 = vdwg.mxu0
      %1007 = vmatpush.bf16.msra.mxu0 0
      %1008 = vmatpush.bf16.msra.mxu0 0
      %1009 = vmatpush.bf16.msra.mxu0 0
      %1010 = vmatpush.bf16.msra.mxu0 0
      %1011 = vmatpush.bf16.msra.mxu0 %v830
      %1012 = vmatpush.bf16.msra.mxu0 %v827
      %1013 = vmatpush.bf16.msra.mxu0 %v824
      %1014 = vmatpush.bf16.msra.mxu0 %v821
      %1015 = vmatmul.bf16.gmra.mxu0 %v893
      %v1016 = vpop.f32.mrf.mxu0
      %v1017 = vadd.f32 %v1003, %v1016
      %v1018 = vpop.f32.mrf.mxu0
      %v1019 = vadd.f32 %v1005, %v1018
      %1020 = vdwg.mxu0
      %v1021 = vmax.f32 %v933, 0.0
      %v1022 = vmax.f32 %v975, 0.0
      %v1023 = vmax.f32 %v1017, 0.0
      %v1024 = vmax.f32 %v935, 0.0
      %v1025 = vmax.f32 %v977, 0.0
      %v1026 = vmax.f32 %v1019, 0.0
      %v1027 = vunpack.c.l.bf16 %v342
      %v1028 = vunpack.c.h.bf16 %v342
      %v1029 = vunpack.c.l.bf16 %v343
      %v1030 = vunpack.c.l.bf16 %v344
      %v1031 = vunpack.c.h.bf16 %v344
      %v1032 = vunpack.c.l.bf16 %v345
      %v1033 = vadd.f32 %v1021, %v1027
      %v1034 = vadd.f32 %v1022, %v1028
      %v1035 = vadd.f32 %v1023, %v1029
      %v1036 = vadd.f32 %v1024, %v1030
      %v1037 = vadd.f32 %v1025, %v1031
      %v1038 = vadd.f32 %v1026, %v1032
      %v1039 = vunpack.c.l.bf16 %v338
      %v1040 = vunpack.c.h.bf16 %v338
      %v1041 = vunpack.c.l.bf16 %v339
      %v1042 = vunpack.c.l.bf16 %v340
      %v1043 = vunpack.c.h.bf16 %v340
      %v1044 = vunpack.c.l.bf16 %v341
      %v1045 = vadd.f32 %v1039, %v1033
      %v1046 = vadd.f32 %v1040, %v1034
      %v1047 = vadd.f32 %v1041, %v1035
      %v1048 = vadd.f32 %v1042, %v1036
      %v1049 = vadd.f32 %v1043, %v1037
      %v1050 = vadd.f32 %v1044, %v1038
      %v1051 = vpack.c.bf16 %v1048, %v1045
      %v1052 = vpack.c.bf16 %v1049, %v1046
      %v1053 = vpack.c.bf16 %v1050, %v1047
      %v1055 = vperm.slane %v507, 0
      %v1056 = vperm.slane %v507, 1
      %v1057 = vperm.slane %v507, 2
      %v1141 = vunpack.c.l.b16 %v427
      %v1142 = vunpack.c.h.b16 %v427
      %v1143 = vunpack.c.l.b16 %v428
      %v1144 = vunpack.c.l.b16 %v429
      %v1145 = vunpack.c.h.b16 %v429
      %v1146 = vunpack.c.l.b16 %v430
      %v1147 = vunpack.c.l.b16 %v431
      %v1148 = vunpack.c.h.b16 %v431
      %v1149 = vunpack.c.l.b16 %v432
      %v1150 = vunpack.c.l.b16 %v433
      %v1151 = vunpack.c.h.b16 %v433
      %v1152 = vunpack.c.l.b16 %v434
      %v1153 = vunpack.c.l.b16 %v435
      %v1154 = vunpack.c.h.b16 %v435
      %v1155 = vunpack.c.l.b16 %v436
      %v1156 = vunpack.c.l.b16 %v437
      %v1157 = vunpack.c.h.b16 %v437
      %v1158 = vunpack.c.l.b16 %v438
      %v1159 = vunpack.c.l.b16 %v439
      %v1160 = vunpack.c.h.b16 %v439
      %v1161 = vunpack.c.l.b16 %v440
      %v1162 = vunpack.c.l.b16 %v441
      %v1163 = vunpack.c.h.b16 %v441
      %v1164 = vunpack.c.l.b16 %v442
      %v1165 = vunpack.c.l.b16 %v443
      %v1166 = vunpack.c.h.b16 %v443
      %v1167 = vunpack.c.l.b16 %v444
      %v1168 = vunpack.c.l.b16 %v445
      %v1169 = vunpack.c.h.b16 %v445
      %v1170 = vunpack.c.l.b16 %v446
      %v1171 = vunpack.c.l.b16 %v447
      %v1172 = vunpack.c.h.b16 %v447
      %v1173 = vunpack.c.l.b16 %v448
      %v1174 = vunpack.c.l.b16 %v449
      %v1175 = vunpack.c.h.b16 %v449
      %v1176 = vunpack.c.l.b16 %v450
      %v1177 = vunpack.c.l.b16 %v451
      %v1178 = vunpack.c.h.b16 %v451
      %v1179 = vunpack.c.l.b16 %v452
      %v1180 = vunpack.c.l.b16 %v453
      %v1181 = vunpack.c.h.b16 %v453
      %v1182 = vunpack.c.l.b16 %v454
      %v1183 = vunpack.c.l.b16 %v455
      %v1184 = vunpack.c.h.b16 %v455
      %v1185 = vunpack.c.l.b16 %v456
      %v1186 = vunpack.c.l.b16 %v457
      %v1187 = vunpack.c.h.b16 %v457
      %v1188 = vunpack.c.l.b16 %v458
      %v1189 = vunpack.c.l.b16 %v459
      %v1190 = vunpack.c.h.b16 %v459
      %v1191 = vunpack.c.l.b16 %v460
      %v1192 = vunpack.c.l.b16 %v461
      %v1193 = vunpack.c.h.b16 %v461
      %v1194 = vunpack.c.l.b16 %v462
      %v1195 = vunpack.c.l.b16 %v463
      %v1196 = vunpack.c.h.b16 %v463
      %v1197 = vunpack.c.l.b16 %v464
      %v1198 = vunpack.c.l.b16 %v465
      %v1199 = vunpack.c.h.b16 %v465
      %v1200 = vunpack.c.l.b16 %v466
      %v1201 = vunpack.c.l.b16 %v467
      %v1202 = vunpack.c.h.b16 %v467
      %v1203 = vunpack.c.l.b16 %v468
      %v1204 = vunpack.c.l.b16 %v469
      %v1205 = vunpack.c.h.b16 %v469
      %v1206 = vunpack.c.l.b16 %v470
      %v1207 = vunpack.c.l.b16 %v471
      %v1208 = vunpack.c.h.b16 %v471
      %v1209 = vunpack.c.l.b16 %v472
      %v1210 = vunpack.c.l.b16 %v473
      %v1211 = vunpack.c.h.b16 %v473
      %v1212 = vunpack.c.l.b16 %v474
      %v1213 = vunpack.c.l.b16 %v475
      %v1214 = vunpack.c.h.b16 %v475
      %v1215 = vunpack.c.l.b16 %v476
      %v1216 = vunpack.c.l.b16 %v477
      %v1217 = vunpack.c.h.b16 %v477
      %v1218 = vunpack.c.l.b16 %v478
      %v1219 = vunpack.c.l.b16 %v479
      %v1220 = vunpack.c.h.b16 %v479
      %v1221 = vunpack.c.l.b16 %v480
      %v1222 = vunpack.c.l.b16 %v481
      %v1223 = vunpack.c.h.b16 %v481
      %v1224 = vunpack.c.l.b16 %v482
      %v1225 = vunpack.c.l.b16 %v483
      %v1226 = vunpack.c.h.b16 %v483
      %v1227 = vunpack.c.l.b16 %v484
      %v1228 = vunpack.c.l.b16 %v485
      %v1229 = vunpack.c.h.b16 %v485
      %v1230 = vunpack.c.l.b16 %v486
      %v1231 = vunpack.c.l.b16 %v487
      %v1232 = vunpack.c.h.b16 %v487
      %v1233 = vunpack.c.l.b16 %v488
      %v1234 = vunpack.c.l.b16 %v489
      %v1235 = vunpack.c.h.b16 %v489
      %v1236 = vunpack.c.l.b16 %v490
      %v1237 = vunpack.c.l.b16 %v491
      %v1238 = vunpack.c.h.b16 %v491
      %v1239 = vunpack.c.l.b16 %v492
      %v1240 = vunpack.c.l.b16 %v493
      %v1241 = vunpack.c.h.b16 %v493
      %v1242 = vunpack.c.l.b16 %v494
      %v1243 = vunpack.c.l.b16 %v495
      %v1244 = vunpack.c.h.b16 %v495
      %v1245 = vunpack.c.l.b16 %v496
      %v1246 = vunpack.c.l.b16 %v497
      %v1247 = vunpack.c.h.b16 %v497
      %v1248 = vunpack.c.l.b16 %v498
      %v1249 = vunpack.c.l.b16 %v499
      %v1250 = vunpack.c.h.b16 %v499
      %v1251 = vunpack.c.l.b16 %v500
      %v1252 = vunpack.c.l.b16 %v501
      %v1253 = vunpack.c.h.b16 %v501
      %v1254 = vunpack.c.l.b16 %v502
      %v1255 = vunpack.c.l.b16 %v503
      %v1256 = vunpack.c.h.b16 %v503
      %v1257 = vunpack.c.l.b16 %v504
      %v1258 = vunpack.c.l.b16 %v505
      %v1259 = vunpack.c.h.b16 %v505
      %v1260 = vunpack.c.l.b16 %v506
      %v1261 = vpack.c.b16 %v1144, %v1141
      %v1262 = vpack.c.b16 %v1145, %v1142
      %v1263 = vpack.c.b16 %v1146, %v1143
      %v1264 = vpack.c.b16 %v1150, %v1147
      %v1265 = vpack.c.b16 %v1151, %v1148
      %v1266 = vpack.c.b16 %v1152, %v1149
      %v1267 = vpack.c.b16 %v1156, %v1153
      %v1268 = vpack.c.b16 %v1157, %v1154
      %v1269 = vpack.c.b16 %v1158, %v1155
      %v1270 = vpack.c.b16 %v1162, %v1159
      %v1271 = vpack.c.b16 %v1163, %v1160
      %v1272 = vpack.c.b16 %v1164, %v1161
      %v1273 = vpack.c.b16 %v1168, %v1165
      %v1274 = vpack.c.b16 %v1169, %v1166
      %v1275 = vpack.c.b16 %v1170, %v1167
      %v1276 = vpack.c.b16 %v1174, %v1171
      %v1277 = vpack.c.b16 %v1175, %v1172
      %v1278 = vpack.c.b16 %v1176, %v1173
      %v1279 = vpack.c.b16 %v1180, %v1177
      %v1280 = vpack.c.b16 %v1181, %v1178
      %v1281 = vpack.c.b16 %v1182, %v1179
      %v1282 = vpack.c.b16 %v1186, %v1183
      %v1283 = vpack.c.b16 %v1187, %v1184
      %v1284 = vpack.c.b16 %v1188, %v1185
      %v1285 = vpack.c.b16 %v1192, %v1189
      %v1286 = vpack.c.b16 %v1193, %v1190
      %v1287 = vpack.c.b16 %v1194, %v1191
      %v1288 = vpack.c.b16 %v1198, %v1195
      %v1289 = vpack.c.b16 %v1199, %v1196
      %v1290 = vpack.c.b16 %v1200, %v1197
      %v1291 = vpack.c.b16 %v1204, %v1201
      %v1292 = vpack.c.b16 %v1205, %v1202
      %v1293 = vpack.c.b16 %v1206, %v1203
      %v1294 = vpack.c.b16 %v1210, %v1207
      %v1295 = vpack.c.b16 %v1211, %v1208
      %v1296 = vpack.c.b16 %v1212, %v1209
      %v1297 = vpack.c.b16 %v1216, %v1213
      %v1298 = vpack.c.b16 %v1217, %v1214
      %v1299 = vpack.c.b16 %v1218, %v1215
      %v1300 = vpack.c.b16 %v1222, %v1219
      %v1301 = vpack.c.b16 %v1223, %v1220
      %v1302 = vpack.c.b16 %v1224, %v1221
      %v1303 = vpack.c.b16 %v1228, %v1225
      %v1304 = vpack.c.b16 %v1229, %v1226
      %v1305 = vpack.c.b16 %v1230, %v1227
      %v1306 = vpack.c.b16 %v1234, %v1231
      %v1307 = vpack.c.b16 %v1235, %v1232
      %v1308 = vpack.c.b16 %v1236, %v1233
      %v1309 = vpack.c.b16 %v1240, %v1237
      %v1310 = vpack.c.b16 %v1241, %v1238
      %v1311 = vpack.c.b16 %v1242, %v1239
      %v1312 = vpack.c.b16 %v1246, %v1243
      %v1313 = vpack.c.b16 %v1247, %v1244
      %v1314 = vpack.c.b16 %v1248, %v1245
      %v1315 = vpack.c.b16 %v1252, %v1249
      %v1316 = vpack.c.b16 %v1253, %v1250
      %v1317 = vpack.c.b16 %v1254, %v1251
      %v1318 = vpack.c.b16 %v1258, %v1255
      %v1319 = vpack.c.b16 %v1259, %v1256
      %v1320 = vpack.c.b16 %v1260, %v1257
      %v1382 = vsel %vm891, %v1053, 0
      %1384 = vmatpush.bf16.msra.mxu0 %v1282
      %1385 = vmatpush.bf16.msra.mxu0 %v1279
      %1386 = vmatpush.bf16.msra.mxu0 %v1276
      %1387 = vmatpush.bf16.msra.mxu0 %v1273
      %1388 = vmatpush.bf16.msra.mxu0 %v1270
      %1389 = vmatpush.bf16.msra.mxu0 %v1267
      %1390 = vmatpush.bf16.msra.mxu0 %v1264
      %1391 = vmatpush.bf16.msra.mxu0 %v1261
      %1392 = vmatmul.bf16.gmra.mxu0 %v1051
      %v1393 = vpop.f32.mrf.mxu0
      %v1394 = vadd.f32 %v1055, %v1393
      %v1395 = vpop.f32.mrf.mxu0
      %v1396 = vadd.f32 %v1055, %v1395
      %1397 = vdwg.mxu0
      %1398 = vmatpush.bf16.msra.mxu0 %v1306
      %1399 = vmatpush.bf16.msra.mxu0 %v1303
      %1400 = vmatpush.bf16.msra.mxu0 %v1300
      %1401 = vmatpush.bf16.msra.mxu0 %v1297
      %1402 = vmatpush.bf16.msra.mxu0 %v1294
      %1403 = vmatpush.bf16.msra.mxu0 %v1291
      %1404 = vmatpush.bf16.msra.mxu0 %v1288
      %1405 = vmatpush.bf16.msra.mxu0 %v1285
      %1406 = vmatmul.bf16.gmra.mxu0 %v1052
      %v1407 = vpop.f32.mrf.mxu0
      %v1408 = vadd.f32 %v1394, %v1407
      %v1409 = vpop.f32.mrf.mxu0
      %v1410 = vadd.f32 %v1396, %v1409
      %1411 = vdwg.mxu0
      %1412 = vmatpush.bf16.msra.mxu0 0
      %1413 = vmatpush.bf16.msra.mxu0 0
      %1414 = vmatpush.bf16.msra.mxu0 0
      %1415 = vmatpush.bf16.msra.mxu0 0
      %1416 = vmatpush.bf16.msra.mxu0 %v1318
      %1417 = vmatpush.bf16.msra.mxu0 %v1315
      %1418 = vmatpush.bf16.msra.mxu0 %v1312
      %1419 = vmatpush.bf16.msra.mxu0 %v1309
      %1420 = vmatmul.bf16.gmra.mxu0 %v1382
      %v1421 = vpop.f32.mrf.mxu0
      %v1422 = vadd.f32 %v1408, %v1421
      %v1423 = vpop.f32.mrf.mxu0
      %v1424 = vadd.f32 %v1410, %v1423
      %1425 = vdwg.mxu0
      %1426 = vmatpush.bf16.msra.mxu0 %v1283
      %1427 = vmatpush.bf16.msra.mxu0 %v1280
      %1428 = vmatpush.bf16.msra.mxu0 %v1277
      %1429 = vmatpush.bf16.msra.mxu0 %v1274
      %1430 = vmatpush.bf16.msra.mxu0 %v1271
      %1431 = vmatpush.bf16.msra.mxu0 %v1268
      %1432 = vmatpush.bf16.msra.mxu0 %v1265
      %1433 = vmatpush.bf16.msra.mxu0 %v1262
      %1434 = vmatmul.bf16.gmra.mxu0 %v1051
      %v1435 = vpop.f32.mrf.mxu0
      %v1436 = vadd.f32 %v1056, %v1435
      %v1437 = vpop.f32.mrf.mxu0
      %v1438 = vadd.f32 %v1056, %v1437
      %1439 = vdwg.mxu0
      %1440 = vmatpush.bf16.msra.mxu0 %v1307
      %1441 = vmatpush.bf16.msra.mxu0 %v1304
      %1442 = vmatpush.bf16.msra.mxu0 %v1301
      %1443 = vmatpush.bf16.msra.mxu0 %v1298
      %1444 = vmatpush.bf16.msra.mxu0 %v1295
      %1445 = vmatpush.bf16.msra.mxu0 %v1292
      %1446 = vmatpush.bf16.msra.mxu0 %v1289
      %1447 = vmatpush.bf16.msra.mxu0 %v1286
      %1448 = vmatmul.bf16.gmra.mxu0 %v1052
      %v1449 = vpop.f32.mrf.mxu0
      %v1450 = vadd.f32 %v1436, %v1449
      %v1451 = vpop.f32.mrf.mxu0
      %v1452 = vadd.f32 %v1438, %v1451
      %1453 = vdwg.mxu0
      %1454 = vmatpush.bf16.msra.mxu0 0
      %1455 = vmatpush.bf16.msra.mxu0 0
      %1456 = vmatpush.bf16.msra.mxu0 0
      %1457 = vmatpush.bf16.msra.mxu0 0
      %1458 = vmatpush.bf16.msra.mxu0 %v1319
      %1459 = vmatpush.bf16.msra.mxu0 %v1316
      %1460 = vmatpush.bf16.msra.mxu0 %v1313
      %1461 = vmatpush.bf16.msra.mxu0 %v1310
      %1462 = vmatmul.bf16.gmra.mxu0 %v1382
      %v1463 = vpop.f32.mrf.mxu0
      %v1464 = vadd.f32 %v1450, %v1463
      %v1465 = vpop.f32.mrf.mxu0
      %v1466 = vadd.f32 %v1452, %v1465
      %1467 = vdwg.mxu0
      %1468 = vmatpush.bf16.msra.mxu0 %v1284
      %1469 = vmatpush.bf16.msra.mxu0 %v1281
      %1470 = vmatpush.bf16.msra.mxu0 %v1278
      %1471 = vmatpush.bf16.msra.mxu0 %v1275
      %1472 = vmatpush.bf16.msra.mxu0 %v1272
      %1473 = vmatpush.bf16.msra.mxu0 %v1269
      %1474 = vmatpush.bf16.msra.mxu0 %v1266
      %1475 = vmatpush.bf16.msra.mxu0 %v1263
      %1476 = vmatmul.bf16.gmra.mxu0 %v1051
      %v1477 = vpop.f32.mrf.mxu0
      %v1478 = vadd.f32 %v1057, %v1477
      %v1479 = vpop.f32.mrf.mxu0
      %v1480 = vadd.f32 %v1057, %v1479
      %1481 = vdwg.mxu0
      %1482 = vmatpush.bf16.msra.mxu0 %v1308
      %1483 = vmatpush.bf16.msra.mxu0 %v1305
      %1484 = vmatpush.bf16.msra.mxu0 %v1302
      %1485 = vmatpush.bf16.msra.mxu0 %v1299
      %1486 = vmatpush.bf16.msra.mxu0 %v1296
      %1487 = vmatpush.bf16.msra.mxu0 %v1293
      %1488 = vmatpush.bf16.msra.mxu0 %v1290
      %1489 = vmatpush.bf16.msra.mxu0 %v1287
      %1490 = vmatmul.bf16.gmra.mxu0 %v1052
      %v1491 = vpop.f32.mrf.mxu0
      %v1492 = vadd.f32 %v1478, %v1491
      %v1493 = vpop.f32.mrf.mxu0
      %v1494 = vadd.f32 %v1480, %v1493
      %1495 = vdwg.mxu0
      %1496 = vmatpush.bf16.msra.mxu0 0
      %1497 = vmatpush.bf16.msra.mxu0 0
      %1498 = vmatpush.bf16.msra.mxu0 0
      %1499 = vmatpush.bf16.msra.mxu0 0
      %1500 = vmatpush.bf16.msra.mxu0 %v1320
      %1501 = vmatpush.bf16.msra.mxu0 %v1317
      %1502 = vmatpush.bf16.msra.mxu0 %v1314
      %1503 = vmatpush.bf16.msra.mxu0 %v1311
      %1504 = vmatmul.bf16.gmra.mxu0 %v1382
      %v1505 = vpop.f32.mrf.mxu0
      %v1506 = vadd.f32 %v1492, %v1505
      %v1507 = vpop.f32.mrf.mxu0
      %v1508 = vadd.f32 %v1494, %v1507
      %1509 = vdwg.mxu0
      %v1510 = vmax.f32 %v1422, 0.0
      %v1511 = vmax.f32 %v1464, 0.0
      %v1512 = vmax.f32 %v1506, 0.0
      %v1513 = vmax.f32 %v1424, 0.0
      %v1514 = vmax.f32 %v1466, 0.0
      %v1515 = vmax.f32 %v1508, 0.0
      %v1516 = vpack.c.bf16 %v1513, %v1510
      %v1517 = vpack.c.bf16 %v1514, %v1511
      %v1518 = vpack.c.bf16 %v1515, %v1512
      %v1520 = vperm.slane %v548, 0
      %v1562 = vunpack.c.l.b16 %v508
      %v1563 = vunpack.c.l.b16 %v509
      %v1564 = vunpack.c.l.b16 %v510
      %v1565 = vunpack.c.l.b16 %v511
      %v1566 = vunpack.c.l.b16 %v512
      %v1567 = vunpack.c.l.b16 %v513
      %v1568 = vunpack.c.l.b16 %v514
      %v1569 = vunpack.c.l.b16 %v515
      %v1570 = vunpack.c.l.b16 %v516
      %v1571 = vunpack.c.l.b16 %v517
      %v1572 = vunpack.c.l.b16 %v518
      %v1573 = vunpack.c.l.b16 %v519
      %v1574 = vunpack.c.l.b16 %v520
      %v1575 = vunpack.c.l.b16 %v521
      %v1576 = vunpack.c.l.b16 %v522
      %v1577 = vunpack.c.l.b16 %v523
      %v1578 = vunpack.c.l.b16 %v524
      %v1579 = vunpack.c.l.b16 %v525
      %v1580 = vunpack.c.l.b16 %v526
      %v1581 = vunpack.c.l.b16 %v527
      %v1582 = vunpack.c.l.b16 %v528
      %v1583 = vunpack.c.l.b16 %v529
      %v1584 = vunpack.c.l.b16 %v530
      %v1585 = vunpack.c.l.b16 %v531
      %v1586 = vunpack.c.l.b16 %v532
      %v1587 = vunpack.c.l.b16 %v533
      %v1588 = vunpack.c.l.b16 %v534
      %v1589 = vunpack.c.l.b16 %v535
      %v1590 = vunpack.c.l.b16 %v536
      %v1591 = vunpack.c.l.b16 %v537
      %v1592 = vunpack.c.l.b16 %v538
      %v1593 = vunpack.c.l.b16 %v539
      %v1594 = vunpack.c.l.b16 %v540
      %v1595 = vunpack.c.l.b16 %v541
      %v1596 = vunpack.c.l.b16 %v542
      %v1597 = vunpack.c.l.b16 %v543
      %v1598 = vunpack.c.l.b16 %v544
      %v1599 = vunpack.c.l.b16 %v545
      %v1600 = vunpack.c.l.b16 %v546
      %v1601 = vunpack.c.l.b16 %v547
      %v1602 = vpack.c.b16 %v1563, %v1562
      %v1603 = vpack.c.b16 %v1565, %v1564
      %v1604 = vpack.c.b16 %v1567, %v1566
      %v1605 = vpack.c.b16 %v1569, %v1568
      %v1606 = vpack.c.b16 %v1571, %v1570
      %v1607 = vpack.c.b16 %v1573, %v1572
      %v1608 = vpack.c.b16 %v1575, %v1574
      %v1609 = vpack.c.b16 %v1577, %v1576
      %v1610 = vpack.c.b16 %v1579, %v1578
      %v1611 = vpack.c.b16 %v1581, %v1580
      %v1612 = vpack.c.b16 %v1583, %v1582
      %v1613 = vpack.c.b16 %v1585, %v1584
      %v1614 = vpack.c.b16 %v1587, %v1586
      %v1615 = vpack.c.b16 %v1589, %v1588
      %v1616 = vpack.c.b16 %v1591, %v1590
      %v1617 = vpack.c.b16 %v1593, %v1592
      %v1618 = vpack.c.b16 %v1595, %v1594
      %v1619 = vpack.c.b16 %v1597, %v1596
      %v1620 = vpack.c.b16 %v1599, %v1598
      %v1621 = vpack.c.b16 %v1601, %v1600
      %v1643 = vsel %vm891, %v1518, 0
      %1645 = vmatpush.bf16.msra.mxu0 %v1609
      %1646 = vmatpush.bf16.msra.mxu0 %v1608
      %1647 = vmatpush.bf16.msra.mxu0 %v1607
      %1648 = vmatpush.bf16.msra.mxu0 %v1606
      %1649 = vmatpush.bf16.msra.mxu0 %v1605
      %1650 = vmatpush.bf16.msra.mxu0 %v1604
      %1651 = vmatpush.bf16.msra.mxu0 %v1603
      %1652 = vmatpush.bf16.msra.mxu0 %v1602
      %1653 = vmatmul.bf16.gmra.mxu0 %v1516
      %v1654 = vpop.f32.mrf.mxu0
      %v1655 = vadd.f32 %v1520, %v1654
      %v1656 = vpop.f32.mrf.mxu0
      %v1657 = vadd.f32 %v1520, %v1656
      %1658 = vdwg.mxu0
      %1659 = vmatpush.bf16.msra.mxu0 %v1617
      %1660 = vmatpush.bf16.msra.mxu0 %v1616
      %1661 = vmatpush.bf16.msra.mxu0 %v1615
      %1662 = vmatpush.bf16.msra.mxu0 %v1614
      %1663 = vmatpush.bf16.msra.mxu0 %v1613
      %1664 = vmatpush.bf16.msra.mxu0 %v1612
      %1665 = vmatpush.bf16.msra.mxu0 %v1611
      %1666 = vmatpush.bf16.msra.mxu0 %v1610
      %1667 = vmatmul.bf16.gmra.mxu0 %v1517
      %v1668 = vpop.f32.mrf.mxu0
      %v1669 = vadd.f32 %v1655, %v1668
      %v1670 = vpop.f32.mrf.mxu0
      %v1671 = vadd.f32 %v1657, %v1670
      %1672 = vdwg.mxu0
      %1673 = vmatpush.bf16.msra.mxu0 0
      %1674 = vmatpush.bf16.msra.mxu0 0
      %1675 = vmatpush.bf16.msra.mxu0 0
      %1676 = vmatpush.bf16.msra.mxu0 0
      %1677 = vmatpush.bf16.msra.mxu0 %v1621
      %1678 = vmatpush.bf16.msra.mxu0 %v1620
      %1679 = vmatpush.bf16.msra.mxu0 %v1619
      %1680 = vmatpush.bf16.msra.mxu0 %v1618
      %1681 = vmatmul.bf16.gmra.mxu0 %v1643
      %v1682 = vpop.f32.mrf.mxu0
      %v1683 = vadd.f32 %v1669, %v1682
      %v1684 = vpop.f32.mrf.mxu0
      %v1685 = vadd.f32 %v1671, %v1684
      %1686 = vdwg.mxu0
      %v1687 = vmax.f32 %v1683, 0.0
      %v1688 = vmax.f32 %v1685, 0.0
      %v1689 = vpack.c.bf16 %v1687, %v1687
      %v1690 = vpack.c.bf16 %v1688, %v1688
      %1691 = vst [vmem:[%s335] sm:$0xf] %v1689
      %1692 = vst [vmem:[%s335 + $0x4] sm:$0xf] %v1690
      %s1693 = smul.u32 2, %s19
      %p1694 = scmp.lt.s32.totalorder %s1693, 3
      %s1695 = scalar_select %p1694, %s1693, 3
      %s1696 = smul.addr %s1695, 4
      %s1697 = scalar_lea.vmem %s8, %s1696
      // Predicated region
      $region53: #{custom_model_forward.6} parent=51 // pred_check
        %p1698 = pneg %p215
      $region54: #{custom_model_forward.6} parent=51 // pred_check_branch
        %1700 = sbr.rel (%p1698) target = $region56
      $region55: #{custom_model_forward.6} parent=51 // pred_region
        %s1701 = smul.u32 2, %s19
      $region56: #{custom_model_forward.6} parent=51 // pred_fallthru
        _
    $region52: #{custom_model_forward.6} parent=5 // pred_fallthru
      _
    %p1702 = scmp.le.s32.totalorder 2, %s14
    // Predicated region
    $region57: #{custom_model_forward.6} parent=5 // pred_check
      %p1703 = pneg %p1702
    $region58: #{custom_model_forward.6} parent=5 // pred_check_branch
      %1705 = sbr.rel (%p1703) target = $region60
    $region59: #{custom_model_forward.6} parent=5 // pred_region
      %s1706 = ssub.s32 %s14, 2
      // Predicated region
      $region61: #{custom_model_forward.6} parent=59 // pred_check
        %p1707 = pneg %p221
      $region62: #{custom_model_forward.6} parent=59 // pred_check_branch
        %1709 = sbr.rel (%p1707) target = $region64
      $region63: #{custom_model_forward.6} parent=59 // pred_region
        %s1710 = smul.u32 2, %s20
        %p1711 = scmp.lt.s32.totalorder %s1710, 3
        %s1712 = scalar_select %p1711, %s1710, 3
        %s1713 = smul.addr %s1712, 4
        %s1714 = scalar_lea.vmem %s8, %s1713
      $region64: #{custom_model_forward.6} parent=59 // pred_fallthru
        _
    $region60: #{custom_model_forward.6} parent=5 // pred_fallthru
      _
  $region6: #{custom_model_forward.6} parent=0 // loop_footer
    %s18 = sadd.s32 1, %s14
  $region7: #{custom_model_forward.6} parent=0 // loop_footer_branch
    %13 = sbr.rel target = $region3
  $region8: #{custom_model_forward.6} parent=0 // loop_exit
    _

// kernel: custom_model_forward.7
$region0: #{custom_model_forward.7}
  #allocation0 [shape = 'u32[]', space=smem, size = 0x4, offset = 0x4, fixed_abs, tag = 'smem constant byte address 0x4 - core index']
  #allocation1 [shape = 'u32[72,128]{1,0:T(1,128)}', space=vmem, size = 0x9000, scoped, tag = 'internal scratch']
  %s0 = inlined_call_operand.vmem [shape: bf16[32,128], index: 0, kind: input, shape index: {}]
  %s1 = inlined_call_operand.vmem [shape: bf16[32,128], index: 1, kind: input, shape index: {}]
  %s2 = inlined_call_operand.vmem [shape: bf16[128,128], index: 2, kind: input, shape index: {}]
  %s3 = inlined_call_operand.vmem [shape: f32[1,128], index: 3, kind: input, shape index: {}]
  %s4 = inlined_call_operand.vmem [shape: bf16[32,128], index: 4, kind: output, shape index: {}]
  %s5 = sld [smem:[#allocation0]]
  $region49: #{custom_model_forward.7} parent=0
    _
  %s7 = ssub.s32 1, %s5
  %s8 = scalar_select 0, %s7, %s5
  loop: start=0, step=1, limit=4
  $region2: #{custom_model_forward.7} parent=0 // loop_pre_header
    _
  $region3: #{custom_model_forward.7} parent=0 // loop_header
    %s10 = sphi 0, %s14
    %p11 = scmp.ge.s32.totalorder %s10, 4
    %s20 = sphi 0, %s22
    %s23 = sphi 0, %s20
    %s24 = sphi 0, %s23
    %s40 = sphi 0, %s24
    %s46 = sphi 0, %s48
    %s49 = sphi 0, %s46
    %s50 = sphi 0, %s49
    %s66 = sphi 0, %s50
    %s70 = sphi 0, %s70
    %s72 = sphi 0, %s70
    %s73 = sphi 0, %s72
    %s87 = sphi 0, %s73
    %s91 = sphi 0, %s91
    %s93 = sphi 0, %s91
    %s94 = sphi 0, %s93
    %s108 = sphi 0, %s94
    %s114 = sphi 0, %s116
    %s117 = sphi 0, %s114
    %s118 = sphi 0, %s117
    %s134 = sphi 0, %s118
  $region4: #{custom_model_forward.7} parent=0 // loop_header_branch
    %13 = sbr.rel (%p11) target = $region8
  $region5: #{custom_model_forward.7} parent=0 // loop_body
    %s15 = ssub.s32 %s10, 1
    %s16 = ssub.s32 %s10, 2
    %s17 = sadd.s32 %s10, 1
    %s18 = ssub.s32 %s10, %s17
    %p19 = scmp.eq.s32.totalorder %s18, 0
    %s21 = sadd.s32 %s20, 1
    %s22 = scalar_select %p19, %s20, %s21
    %p25 = pneg %p19
    %p26 = scmp.eq.s32.totalorder %s10, 1
    %p27 = por %p25, %p26
    %p28 = scmp.ne.s32.totalorder %s20, %s23
    %p29 = scmp.eq.s32.totalorder %s10, 0
    %p30 = por %p28, %p29
    %p31 = scmp.ne.s32.totalorder %s20, %s23
    %p32 = scmp.eq.s32.totalorder %s15, 1
    %p33 = por %p31, %p32
    %p34 = scmp.ne.s32.totalorder %s23, %s24
    %p35 = scmp.eq.s32.totalorder %s15, 0
    %p36 = por %p34, %p35
    %p37 = scmp.ne.s32.totalorder %s23, %s24
    %p38 = scmp.eq.s32.totalorder %s16, 1
    %p39 = por %p37, %p38
    %p41 = scmp.ne.s32.totalorder %s24, %s40
    %p42 = scmp.eq.s32.totalorder %s16, 0
    %p43 = por %p41, %p42
    %s44 = ssub.s32 %s10, %s17
    %p45 = scmp.eq.s32.totalorder %s44, 0
    %s47 = sadd.s32 %s46, 1
    %s48 = scalar_select %p45, %s46, %s47
    %p51 = pneg %p45
    %p52 = scmp.eq.s32.totalorder %s10, 1
    %p53 = por %p51, %p52
    %p54 = scmp.ne.s32.totalorder %s46, %s49
    %p55 = scmp.eq.s32.totalorder %s10, 0
    %p56 = por %p54, %p55
    %p57 = scmp.ne.s32.totalorder %s46, %s49
    %p58 = scmp.eq.s32.totalorder %s15, 1
    %p59 = por %p57, %p58
    %p60 = scmp.ne.s32.totalorder %s49, %s50
    %p61 = scmp.eq.s32.totalorder %s15, 0
    %p62 = por %p60, %p61
    %p63 = scmp.ne.s32.totalorder %s49, %s50
    %p64 = scmp.eq.s32.totalorder %s16, 1
    %p65 = por %p63, %p64
    %p67 = scmp.ne.s32.totalorder %s50, %s66
    %p68 = scmp.eq.s32.totalorder %s16, 0
    %p69 = por %p67, %p68
    %s71 = sadd.s32 %s70, 1
    %p74 = scmp.eq.s32.totalorder %s10, 1
    %p75 = scmp.ne.s32.totalorder %s70, %s72
    %p76 = scmp.eq.s32.totalorder %s10, 0
    %p77 = por %p75, %p76
    %p78 = scmp.ne.s32.totalorder %s70, %s72
    %p79 = scmp.eq.s32.totalorder %s15, 1
    %p80 = por %p78, %p79
    %p81 = scmp.ne.s32.totalorder %s72, %s73
    %p82 = scmp.eq.s32.totalorder %s15, 0
    %p83 = por %p81, %p82
    %p84 = scmp.ne.s32.totalorder %s72, %s73
    %p85 = scmp.eq.s32.totalorder %s16, 1
    %p86 = por %p84, %p85
    %p88 = scmp.ne.s32.totalorder %s73, %s87
    %p89 = scmp.eq.s32.totalorder %s16, 0
    %p90 = por %p88, %p89
    %s92 = sadd.s32 %s91, 1
    %p95 = scmp.eq.s32.totalorder %s10, 1
    %p96 = scmp.ne.s32.totalorder %s91, %s93
    %p97 = scmp.eq.s32.totalorder %s10, 0
    %p98 = por %p96, %p97
    %p99 = scmp.ne.s32.totalorder %s91, %s93
    %p100 = scmp.eq.s32.totalorder %s15, 1
    %p101 = por %p99, %p100
    %p102 = scmp.ne.s32.totalorder %s93, %s94
    %p103 = scmp.eq.s32.totalorder %s15, 0
    %p104 = por %p102, %p103
    %p105 = scmp.ne.s32.totalorder %s93, %s94
    %p106 = scmp.eq.s32.totalorder %s16, 1
    %p107 = por %p105, %p106
    %p109 = scmp.ne.s32.totalorder %s94, %s108
    %p110 = scmp.eq.s32.totalorder %s16, 0
    %p111 = por %p109, %p110
    %s112 = ssub.s32 %s10, %s17
    %p113 = scmp.eq.s32.totalorder %s112, 0
    %s115 = sadd.s32 %s114, 1
    %s116 = scalar_select %p113, %s114, %s115
    %p119 = pneg %p113
    %p120 = scmp.eq.s32.totalorder %s10, 1
    %p121 = por %p119, %p120
    %p122 = scmp.ne.s32.totalorder %s114, %s117
    %p123 = scmp.eq.s32.totalorder %s10, 0
    %p124 = por %p122, %p123
    %p125 = scmp.ne.s32.totalorder %s114, %s117
    %p126 = scmp.eq.s32.totalorder %s15, 1
    %p127 = por %p125, %p126
    %p128 = scmp.ne.s32.totalorder %s117, %s118
    %p129 = scmp.eq.s32.totalorder %s15, 0
    %p130 = por %p128, %p129
    %p131 = scmp.ne.s32.totalorder %s117, %s118
    %p132 = scmp.eq.s32.totalorder %s16, 1
    %p133 = por %p131, %p132
    %p135 = scmp.ne.s32.totalorder %s118, %s134
    %p136 = scmp.eq.s32.totalorder %s16, 0
    %p137 = por %p135, %p136
    %p138 = scmp.le.s32.totalorder 1, %s10
    %p139 = scmp.lt.s32.totalorder %s10, 3
    %p140 = pnand %p138, %p139
    %p141 = pneg %p140
    // Predicated region
    $region9: #{custom_model_forward.7} parent=5 // pred_check
      _
    $region10: #{custom_model_forward.7} parent=5 // pred_check_branch
      %143 = sbr.rel (%p140) target = $region12
    $region11: #{custom_model_forward.7} parent=5 // pred_region
      %s144 = ssub.s32 %s10, 1
      // Predicated region
      $region13: #{custom_model_forward.7} parent=11 // pred_check
        %p145 = pneg %p83
      $region14: #{custom_model_forward.7} parent=11 // pred_check_branch
        %147 = sbr.rel (%p145) target = $region16
      $region15: #{custom_model_forward.7} parent=11 // pred_region
        _
      $region16: #{custom_model_forward.7} parent=11 // pred_fallthru
        _
      // Predicated region
      $region17: #{custom_model_forward.7} parent=11 // pred_check
        %p148 = pneg %p104
      $region18: #{custom_model_forward.7} parent=11 // pred_check_branch
        %150 = sbr.rel (%p148) target = $region20
      $region19: #{custom_model_forward.7} parent=11 // pred_region
        _
      $region20: #{custom_model_forward.7} parent=11 // pred_fallthru
        _
    $region12: #{custom_model_forward.7} parent=5 // pred_fallthru
      _
    %p151 = scmp.lt.s32.totalorder %s10, 2
    // Predicated region
    $region21: #{custom_model_forward.7} parent=5 // pred_check
      %p152 = pneg %p151
    $region22: #{custom_model_forward.7} parent=5 // pred_check_branch
      %154 = sbr.rel (%p152) target = $region24
    $region23: #{custom_model_forward.7} parent=5 // pred_region
      // Predicated region
      $region25: #{custom_model_forward.7} parent=23 // pred_check
        %p155 = pneg %p30
      $region26: #{custom_model_forward.7} parent=23 // pred_check_branch
        %157 = sbr.rel (%p155) target = $region28
      $region27: #{custom_model_forward.7} parent=23 // pred_region
        %s158 = smul.u32 2, %s10
        %p159 = scmp.lt.s32.totalorder %s158, 3
        %s160 = scalar_select %p159, %s158, 3
        %s161 = smul.addr %s160, 4
        %s162 = scalar_lea.vmem %s0, %s161
        %s163 = smul.u32 2, %s10
      $region28: #{custom_model_forward.7} parent=23 // pred_fallthru
        _
      // Predicated region
      $region29: #{custom_model_forward.7} parent=23 // pred_check
        %p164 = pneg %p56
      $region30: #{custom_model_forward.7} parent=23 // pred_check_branch
        %166 = sbr.rel (%p164) target = $region32
      $region31: #{custom_model_forward.7} parent=23 // pred_region
        %s167 = smul.u32 2, %s10
        %p168 = scmp.lt.s32.totalorder %s167, 3
        %s169 = scalar_select %p168, %s167, 3
        %s170 = smul.addr %s169, 4
        %s171 = scalar_lea.vmem %s1, %s170
        %s172 = smul.u32 2, %s10
      $region32: #{custom_model_forward.7} parent=23 // pred_fallthru
        _
    $region24: #{custom_model_forward.7} parent=5 // pred_fallthru
      _
    %p173 = scmp.le.s32.totalorder 1, %s10
    %p174 = scmp.lt.s32.totalorder %s10, 3
    %p175 = pnand %p173, %p174
    %p176 = pneg %p175
    // Predicated region
    $region33: #{custom_model_forward.7} parent=5 // pred_check
      _
    $region34: #{custom_model_forward.7} parent=5 // pred_check_branch
      %178 = sbr.rel (%p175) target = $region36
    $region35: #{custom_model_forward.7} parent=5 // pred_region
      %s179 = ssub.s32 %s10, 1
      %s180 = smul.u32 2, %s15
      %p181 = scmp.lt.s32.totalorder %s180, 3
      %s182 = scalar_select %p181, %s180, 3
      %s183 = smul.addr %s182, 4
      %s184 = scalar_lea.vmem %s0, %s183
      %p185 = pneg %p36
      %p186 = pneg %p33
      %s187 = smul.u32 2, %s15
      %p188 = scmp.lt.s32.totalorder %s187, 3
      %s189 = scalar_select %p188, %s187, 3
      %s190 = smul.addr %s189, 4
      %s191 = scalar_lea.vmem %s1, %s190
      %p192 = pneg %p62
      %p193 = pneg %p59
      %p194 = pneg %p83
      %p195 = pneg %p80
      %p196 = pneg %p104
      %p197 = pneg %p101
      %p198 = pneg %p130
      %p199 = pneg %p127
      %s200 = smul.u32 2, %s15
      %p201 = scmp.lt.s32.totalorder %s200, 3
      %s202 = scalar_select %p201, %s200, 3
      %s203 = smul.addr %s202, 4
      %s204 = scalar_lea.vmem %s4, %s203
      %s205 = smul.u32 2, %s15
      %p206 = scmp.lt.s32.totalorder %s205, 3
      %s207 = scalar_select %p206, %s205, 3
      %s208 = smul.addr %s207, 4
      %s209 = scalar_lea.vmem %s0, %s208
      %s210 = smul.u32 2, %s15
      %s211 = smul.u32 2, %s15
      %p212 = scmp.lt.s32.totalorder %s211, 3
      %s213 = scalar_select %p212, %s211, 3
      %s214 = smul.addr %s213, 4
      %s215 = scalar_lea.vmem %s1, %s214
      %s216 = smul.u32 2, %s15
      %s217 = smul.u32 2, %s15
      %p218 = scmp.lt.s32.totalorder %s217, 3
      %s219 = scalar_select %p218, %s217, 3
      %s220 = smul.addr %s219, 4
      %s221 = scalar_lea.vmem %s4, %s220
      %s222 = smul.u32 2, %s15
      %v223 = vld [vmem:[%s209] sm:$0xf]
      %v224 = vld [vmem:[%s209 + $0x4] sm:$0xf]
      %v225 = vld [vmem:[%s215] sm:$0xf]
      %v226 = vld [vmem:[%s215 + $0x4] sm:$0xf]
      %v227 = vld [vmem:[%s2] sm:$0xf]
      %v228 = vld [vmem:[%s2 + $0x4] sm:$0xf]
      %v229 = vld [vmem:[%s2 + $0x8] sm:$0xf]
      %v230 = vld [vmem:[%s2 + $0xc] sm:$0xf]
      %v231 = vld [vmem:[%s2 + $0x10] sm:$0xf]
      %v232 = vld [vmem:[%s2 + $0x14] sm:$0xf]
      %v233 = vld [vmem:[%s2 + $0x18] sm:$0xf]
      %v234 = vld [vmem:[%s2 + $0x1c] sm:$0xf]
      %v235 = vld [vmem:[%s2 + $0x20] sm:$0xf]
      %v236 = vld [vmem:[%s2 + $0x24] sm:$0xf]
      %v237 = vld [vmem:[%s2 + $0x28] sm:$0xf]
      %v238 = vld [vmem:[%s2 + $0x2c] sm:$0xf]
      %v239 = vld [vmem:[%s2 + $0x30] sm:$0xf]
      %v240 = vld [vmem:[%s2 + $0x34] sm:$0xf]
      %v241 = vld [vmem:[%s2 + $0x38] sm:$0xf]
      %v242 = vld [vmem:[%s2 + $0x3c] sm:$0xf]
      %v243 = vld [vmem:[%s3] sm:$0x1]
      %v244 = vunpack.c.l.bf16 %v223
      %v245 = vunpack.c.l.bf16 %v224
      %v246 = vunpack.c.l.bf16 %v225
      %v247 = vunpack.c.l.bf16 %v226
      %v248 = vadd.f32 %v244, %v246
      %v249 = vadd.f32 %v245, %v247
      %v250 = vpack.c.bf16 %v249, %v248
      %v252 = vperm.slane %v243, 0
      %v270 = vunpack.c.l.b16 %v227
      %v271 = vunpack.c.l.b16 %v228
      %v272 = vunpack.c.l.b16 %v229
      %v273 = vunpack.c.l.b16 %v230
      %v274 = vunpack.c.l.b16 %v231
      %v275 = vunpack.c.l.b16 %v232
      %v276 = vunpack.c.l.b16 %v233
      %v277 = vunpack.c.l.b16 %v234
      %v278 = vunpack.c.l.b16 %v235
      %v279 = vunpack.c.l.b16 %v236
      %v280 = vunpack.c.l.b16 %v237
      %v281 = vunpack.c.l.b16 %v238
      %v282 = vunpack.c.l.b16 %v239
      %v283 = vunpack.c.l.b16 %v240
      %v284 = vunpack.c.l.b16 %v241
      %v285 = vunpack.c.l.b16 %v242
      %v286 = vpack.c.b16 %v271, %v270
      %v287 = vpack.c.b16 %v273, %v272
      %v288 = vpack.c.b16 %v275, %v274
      %v289 = vpack.c.b16 %v277, %v276
      %v290 = vpack.c.b16 %v279, %v278
      %v291 = vpack.c.b16 %v281, %v280
      %v292 = vpack.c.b16 %v283, %v282
      %v293 = vpack.c.b16 %v285, %v284
      %302 = vmatpush.bf16.msra.mxu0 %v293
      %303 = vmatpush.bf16.msra.mxu0 %v292
      %304 = vmatpush.bf16.msra.mxu0 %v291
      %305 = vmatpush.bf16.msra.mxu0 %v290
      %306 = vmatpush.bf16.msra.mxu0 %v289
      %307 = vmatpush.bf16.msra.mxu0 %v288
      %308 = vmatpush.bf16.msra.mxu0 %v287
      %309 = vmatpush.bf16.msra.mxu0 %v286
      %310 = vmatmul.bf16.gmra.mxu0 %v250
      %v311 = vpop.f32.mrf.mxu0
      %v312 = vadd.f32 %v252, %v311
      %v313 = vpop.f32.mrf.mxu0
      %v314 = vadd.f32 %v252, %v313
      %315 = vdwg.mxu0
      %v316 = vmax.f32 %v312, 0.0
      %v317 = vmax.f32 %v314, 0.0
      %v318 = vpack.c.bf16 %v316, %v316
      %v319 = vpack.c.bf16 %v317, %v317
      %320 = vst [vmem:[%s221] sm:$0xf] %v318
      %321 = vst [vmem:[%s221 + $0x4] sm:$0xf] %v319
      %s322 = smul.u32 2, %s15
      %p323 = scmp.lt.s32.totalorder %s322, 3
      %s324 = scalar_select %p323, %s322, 3
      %s325 = smul.addr %s324, 4
      %s326 = scalar_lea.vmem %s4, %s325
      // Predicated region
      $region37: #{custom_model_forward.7} parent=35 // pred_check
        %p327 = pneg %p127
      $region38: #{custom_model_forward.7} parent=35 // pred_check_branch
        %329 = sbr.rel (%p327) target = $region40
      $region39: #{custom_model_forward.7} parent=35 // pred_region
        %s330 = smul.u32 2, %s15
      $region40: #{custom_model_forward.7} parent=35 // pred_fallthru
        _
    $region36: #{custom_model_forward.7} parent=5 // pred_fallthru
      _
    %p331 = scmp.le.s32.totalorder 2, %s10
    // Predicated region
    $region41: #{custom_model_forward.7} parent=5 // pred_check
      %p332 = pneg %p331
    $region42: #{custom_model_forward.7} parent=5 // pred_check_branch
      %334 = sbr.rel (%p332) target = $region44
    $region43: #{custom_model_forward.7} parent=5 // pred_region
      %s335 = ssub.s32 %s10, 2
      // Predicated region
      $region45: #{custom_model_forward.7} parent=43 // pred_check
        %p336 = pneg %p133
      $region46: #{custom_model_forward.7} parent=43 // pred_check_branch
        %338 = sbr.rel (%p336) target = $region48
      $region47: #{custom_model_forward.7} parent=43 // pred_region
        %s339 = smul.u32 2, %s16
        %p340 = scmp.lt.s32.totalorder %s339, 3
        %s341 = scalar_select %p340, %s339, 3
        %s342 = smul.addr %s341, 4
        %s343 = scalar_lea.vmem %s4, %s342
      $region48: #{custom_model_forward.7} parent=43 // pred_fallthru
        _
    $region44: #{custom_model_forward.7} parent=5 // pred_fallthru
      _
  $region6: #{custom_model_forward.7} parent=0 // loop_footer
    %s14 = sadd.s32 1, %s10
  $region7: #{custom_model_forward.7} parent=0 // loop_footer_branch
    %9 = sbr.rel target = $region3
  $region8: #{custom_model_forward.7} parent=0 // loop_exit
    _

// kernel: custom_model_forward.8
$region0: #{custom_model_forward.8}
  #allocation0 [shape = 'u32[]', space=smem, size = 0x4, offset = 0x4, fixed_abs, tag = 'smem constant byte address 0x4 - core index']
  #allocation1 [shape = 'u32[72,128]{1,0:T(1,128)}', space=vmem, size = 0x9000, scoped, tag = 'internal scratch']
  %s0 = inlined_call_operand.vmem [shape: bf16[128,128], index: 0, kind: input, shape index: {}]
  %s1 = inlined_call_operand.vmem [shape: bf16[128,128], index: 1, kind: input, shape index: {}]
  %s2 = inlined_call_operand.vmem [shape: bf16[128,128], index: 2, kind: input, shape index: {}]
  %s3 = inlined_call_operand.vmem [shape: f32[1,128], index: 3, kind: input, shape index: {}]
  %s4 = inlined_call_operand.vmem [shape: bf16[128,128], index: 4, kind: input, shape index: {}]
  %s5 = inlined_call_operand.vmem [shape: f32[1,128], index: 5, kind: input, shape index: {}]
  %s6 = inlined_call_operand.vmem [shape: bf16[128,128], index: 6, kind: input, shape index: {}]
  %s7 = inlined_call_operand.vmem [shape: f32[1,128], index: 7, kind: input, shape index: {}]
  %s8 = inlined_call_operand.vmem [shape: bf16[128,32], index: 8, kind: input, shape index: {}]
  %s9 = inlined_call_operand.vmem [shape: f32[1,32], index: 9, kind: input, shape index: {}]
  %s10 = inlined_call_operand.vmem [shape: bf16[128,64], index: 10, kind: input, shape index: {}]
  %s11 = inlined_call_operand.vmem [shape: f32[1,64], index: 11, kind: input, shape index: {}]
  %s12 = inlined_call_operand.vmem [shape: bf16[128,32], index: 12, kind: output, shape index: {0}]
  %s13 = inlined_call_operand.vmem [shape: bf16[128,64], index: 13, kind: output, shape index: {1}]
  %14 = xla_tuple %s12, %s13
  %s15 = sld [smem:[#allocation0]]
  $region89: #{custom_model_forward.8} parent=0
    _
  %s17 = ssub.s32 1, %s15
  %s18 = scalar_select 0, %s17, %s15
  loop: start=0, step=1, limit=4
  $region2: #{custom_model_forward.8} parent=0 // loop_pre_header
    _
  $region3: #{custom_model_forward.8} parent=0 // loop_header
    %s20 = sphi 0, %s24
    %p21 = scmp.ge.s32.totalorder %s20, 4
    %s30 = sphi 0, %s32
    %s33 = sphi 0, %s30
    %s34 = sphi 0, %s33
    %s50 = sphi 0, %s34
    %s56 = sphi 0, %s58
    %s59 = sphi 0, %s56
    %s60 = sphi 0, %s59
    %s76 = sphi 0, %s60
    %s80 = sphi 0, %s80
    %s82 = sphi 0, %s80
    %s83 = sphi 0, %s82
    %s97 = sphi 0, %s83
    %s101 = sphi 0, %s101
    %s103 = sphi 0, %s101
    %s104 = sphi 0, %s103
    %s118 = sphi 0, %s104
    %s122 = sphi 0, %s122
    %s124 = sphi 0, %s122
    %s125 = sphi 0, %s124
    %s139 = sphi 0, %s125
    %s143 = sphi 0, %s143
    %s145 = sphi 0, %s143
    %s146 = sphi 0, %s145
    %s160 = sphi 0, %s146
    %s164 = sphi 0, %s164
    %s166 = sphi 0, %s164
    %s167 = sphi 0, %s166
    %s181 = sphi 0, %s167
    %s185 = sphi 0, %s185
    %s187 = sphi 0, %s185
    %s188 = sphi 0, %s187
    %s202 = sphi 0, %s188
    %s206 = sphi 0, %s206
    %s208 = sphi 0, %s206
    %s209 = sphi 0, %s208
    %s223 = sphi 0, %s209
    %s227 = sphi 0, %s227
    %s229 = sphi 0, %s227
    %s230 = sphi 0, %s229
    %s244 = sphi 0, %s230
    %s248 = sphi 0, %s248
    %s250 = sphi 0, %s248
    %s251 = sphi 0, %s250
    %s265 = sphi 0, %s251
    %s269 = sphi 0, %s269
    %s271 = sphi 0, %s269
    %s272 = sphi 0, %s271
    %s286 = sphi 0, %s272
    %s292 = sphi 0, %s294
    %s295 = sphi 0, %s292
    %s296 = sphi 0, %s295
    %s312 = sphi 0, %s296
    %s318 = sphi 0, %s320
    %s321 = sphi 0, %s318
    %s322 = sphi 0, %s321
    %s338 = sphi 0, %s322
  $region4: #{custom_model_forward.8} parent=0 // loop_header_branch
    %23 = sbr.rel (%p21) target = $region8
  $region5: #{custom_model_forward.8} parent=0 // loop_body
    %s25 = ssub.s32 %s20, 1
    %s26 = ssub.s32 %s20, 2
    %s27 = sadd.s32 %s20, 1
    %s28 = ssub.s32 %s20, %s27
    %p29 = scmp.eq.s32.totalorder %s28, 0
    %s31 = sadd.s32 %s30, 1
    %s32 = scalar_select %p29, %s30, %s31
    %p35 = pneg %p29
    %p36 = scmp.eq.s32.totalorder %s20, 1
    %p37 = por %p35, %p36
    %p38 = scmp.ne.s32.totalorder %s30, %s33
    %p39 = scmp.eq.s32.totalorder %s20, 0
    %p40 = por %p38, %p39
    %p41 = scmp.ne.s32.totalorder %s30, %s33
    %p42 = scmp.eq.s32.totalorder %s25, 1
    %p43 = por %p41, %p42
    %p44 = scmp.ne.s32.totalorder %s33, %s34
    %p45 = scmp.eq.s32.totalorder %s25, 0
    %p46 = por %p44, %p45
    %p47 = scmp.ne.s32.totalorder %s33, %s34
    %p48 = scmp.eq.s32.totalorder %s26, 1
    %p49 = por %p47, %p48
    %p51 = scmp.ne.s32.totalorder %s34, %s50
    %p52 = scmp.eq.s32.totalorder %s26, 0
    %p53 = por %p51, %p52
    %s54 = ssub.s32 %s20, %s27
    %p55 = scmp.eq.s32.totalorder %s54, 0
    %s57 = sadd.s32 %s56, 1
    %s58 = scalar_select %p55, %s56, %s57
    %p61 = pneg %p55
    %p62 = scmp.eq.s32.totalorder %s20, 1
    %p63 = por %p61, %p62
    %p64 = scmp.ne.s32.totalorder %s56, %s59
    %p65 = scmp.eq.s32.totalorder %s20, 0
    %p66 = por %p64, %p65
    %p67 = scmp.ne.s32.totalorder %s56, %s59
    %p68 = scmp.eq.s32.totalorder %s25, 1
    %p69 = por %p67, %p68
    %p70 = scmp.ne.s32.totalorder %s59, %s60
    %p71 = scmp.eq.s32.totalorder %s25, 0
    %p72 = por %p70, %p71
    %p73 = scmp.ne.s32.totalorder %s59, %s60
    %p74 = scmp.eq.s32.totalorder %s26, 1
    %p75 = por %p73, %p74
    %p77 = scmp.ne.s32.totalorder %s60, %s76
    %p78 = scmp.eq.s32.totalorder %s26, 0
    %p79 = por %p77, %p78
    %s81 = sadd.s32 %s80, 1
    %p84 = scmp.eq.s32.totalorder %s20, 1
    %p85 = scmp.ne.s32.totalorder %s80, %s82
    %p86 = scmp.eq.s32.totalorder %s20, 0
    %p87 = por %p85, %p86
    %p88 = scmp.ne.s32.totalorder %s80, %s82
    %p89 = scmp.eq.s32.totalorder %s25, 1
    %p90 = por %p88, %p89
    %p91 = scmp.ne.s32.totalorder %s82, %s83
    %p92 = scmp.eq.s32.totalorder %s25, 0
    %p93 = por %p91, %p92
    %p94 = scmp.ne.s32.totalorder %s82, %s83
    %p95 = scmp.eq.s32.totalorder %s26, 1
    %p96 = por %p94, %p95
    %p98 = scmp.ne.s32.totalorder %s83, %s97
    %p99 = scmp.eq.s32.totalorder %s26, 0
    %p100 = por %p98, %p99
    %s102 = sadd.s32 %s101, 1
    %p105 = scmp.eq.s32.totalorder %s20, 1
    %p106 = scmp.ne.s32.totalorder %s101, %s103
    %p107 = scmp.eq.s32.totalorder %s20, 0
    %p108 = por %p106, %p107
    %p109 = scmp.ne.s32.totalorder %s101, %s103
    %p110 = scmp.eq.s32.totalorder %s25, 1
    %p111 = por %p109, %p110
    %p112 = scmp.ne.s32.totalorder %s103, %s104
    %p113 = scmp.eq.s32.totalorder %s25, 0
    %p114 = por %p112, %p113
    %p115 = scmp.ne.s32.totalorder %s103, %s104
    %p116 = scmp.eq.s32.totalorder %s26, 1
    %p117 = por %p115, %p116
    %p119 = scmp.ne.s32.totalorder %s104, %s118
    %p120 = scmp.eq.s32.totalorder %s26, 0
    %p121 = por %p119, %p120
    %s123 = sadd.s32 %s122, 1
    %p126 = scmp.eq.s32.totalorder %s20, 1
    %p127 = scmp.ne.s32.totalorder %s122, %s124
    %p128 = scmp.eq.s32.totalorder %s20, 0
    %p129 = por %p127, %p128
    %p130 = scmp.ne.s32.totalorder %s122, %s124
    %p131 = scmp.eq.s32.totalorder %s25, 1
    %p132 = por %p130, %p131
    %p133 = scmp.ne.s32.totalorder %s124, %s125
    %p134 = scmp.eq.s32.totalorder %s25, 0
    %p135 = por %p133, %p134
    %p136 = scmp.ne.s32.totalorder %s124, %s125
    %p137 = scmp.eq.s32.totalorder %s26, 1
    %p138 = por %p136, %p137
    %p140 = scmp.ne.s32.totalorder %s125, %s139
    %p141 = scmp.eq.s32.totalorder %s26, 0
    %p142 = por %p140, %p141
    %s144 = sadd.s32 %s143, 1
    %p147 = scmp.eq.s32.totalorder %s20, 1
    %p148 = scmp.ne.s32.totalorder %s143, %s145
    %p149 = scmp.eq.s32.totalorder %s20, 0
    %p150 = por %p148, %p149
    %p151 = scmp.ne.s32.totalorder %s143, %s145
    %p152 = scmp.eq.s32.totalorder %s25, 1
    %p153 = por %p151, %p152
    %p154 = scmp.ne.s32.totalorder %s145, %s146
    %p155 = scmp.eq.s32.totalorder %s25, 0
    %p156 = por %p154, %p155
    %p157 = scmp.ne.s32.totalorder %s145, %s146
    %p158 = scmp.eq.s32.totalorder %s26, 1
    %p159 = por %p157, %p158
    %p161 = scmp.ne.s32.totalorder %s146, %s160
    %p162 = scmp.eq.s32.totalorder %s26, 0
    %p163 = por %p161, %p162
    %s165 = sadd.s32 %s164, 1
    %p168 = scmp.eq.s32.totalorder %s20, 1
    %p169 = scmp.ne.s32.totalorder %s164, %s166
    %p170 = scmp.eq.s32.totalorder %s20, 0
    %p171 = por %p169, %p170
    %p172 = scmp.ne.s32.totalorder %s164, %s166
    %p173 = scmp.eq.s32.totalorder %s25, 1
    %p174 = por %p172, %p173
    %p175 = scmp.ne.s32.totalorder %s166, %s167
    %p176 = scmp.eq.s32.totalorder %s25, 0
    %p177 = por %p175, %p176
    %p178 = scmp.ne.s32.totalorder %s166, %s167
    %p179 = scmp.eq.s32.totalorder %s26, 1
    %p180 = por %p178, %p179
    %p182 = scmp.ne.s32.totalorder %s167, %s181
    %p183 = scmp.eq.s32.totalorder %s26, 0
    %p184 = por %p182, %p183
    %s186 = sadd.s32 %s185, 1
    %p189 = scmp.eq.s32.totalorder %s20, 1
    %p190 = scmp.ne.s32.totalorder %s185, %s187
    %p191 = scmp.eq.s32.totalorder %s20, 0
    %p192 = por %p190, %p191
    %p193 = scmp.ne.s32.totalorder %s185, %s187
    %p194 = scmp.eq.s32.totalorder %s25, 1
    %p195 = por %p193, %p194
    %p196 = scmp.ne.s32.totalorder %s187, %s188
    %p197 = scmp.eq.s32.totalorder %s25, 0
    %p198 = por %p196, %p197
    %p199 = scmp.ne.s32.totalorder %s187, %s188
    %p200 = scmp.eq.s32.totalorder %s26, 1
    %p201 = por %p199, %p200
    %p203 = scmp.ne.s32.totalorder %s188, %s202
    %p204 = scmp.eq.s32.totalorder %s26, 0
    %p205 = por %p203, %p204
    %s207 = sadd.s32 %s206, 1
    %p210 = scmp.eq.s32.totalorder %s20, 1
    %p211 = scmp.ne.s32.totalorder %s206, %s208
    %p212 = scmp.eq.s32.totalorder %s20, 0
    %p213 = por %p211, %p212
    %p214 = scmp.ne.s32.totalorder %s206, %s208
    %p215 = scmp.eq.s32.totalorder %s25, 1
    %p216 = por %p214, %p215
    %p217 = scmp.ne.s32.totalorder %s208, %s209
    %p218 = scmp.eq.s32.totalorder %s25, 0
    %p219 = por %p217, %p218
    %p220 = scmp.ne.s32.totalorder %s208, %s209
    %p221 = scmp.eq.s32.totalorder %s26, 1
    %p222 = por %p220, %p221
    %p224 = scmp.ne.s32.totalorder %s209, %s223
    %p225 = scmp.eq.s32.totalorder %s26, 0
    %p226 = por %p224, %p225
    %s228 = sadd.s32 %s227, 1
    %p231 = scmp.eq.s32.totalorder %s20, 1
    %p232 = scmp.ne.s32.totalorder %s227, %s229
    %p233 = scmp.eq.s32.totalorder %s20, 0
    %p234 = por %p232, %p233
    %p235 = scmp.ne.s32.totalorder %s227, %s229
    %p236 = scmp.eq.s32.totalorder %s25, 1
    %p237 = por %p235, %p236
    %p238 = scmp.ne.s32.totalorder %s229, %s230
    %p239 = scmp.eq.s32.totalorder %s25, 0
    %p240 = por %p238, %p239
    %p241 = scmp.ne.s32.totalorder %s229, %s230
    %p242 = scmp.eq.s32.totalorder %s26, 1
    %p243 = por %p241, %p242
    %p245 = scmp.ne.s32.totalorder %s230, %s244
    %p246 = scmp.eq.s32.totalorder %s26, 0
    %p247 = por %p245, %p246
    %s249 = sadd.s32 %s248, 1
    %p252 = scmp.eq.s32.totalorder %s20, 1
    %p253 = scmp.ne.s32.totalorder %s248, %s250
    %p254 = scmp.eq.s32.totalorder %s20, 0
    %p255 = por %p253, %p254
    %p256 = scmp.ne.s32.totalorder %s248, %s250
    %p257 = scmp.eq.s32.totalorder %s25, 1
    %p258 = por %p256, %p257
    %p259 = scmp.ne.s32.totalorder %s250, %s251
    %p260 = scmp.eq.s32.totalorder %s25, 0
    %p261 = por %p259, %p260
    %p262 = scmp.ne.s32.totalorder %s250, %s251
    %p263 = scmp.eq.s32.totalorder %s26, 1
    %p264 = por %p262, %p263
    %p266 = scmp.ne.s32.totalorder %s251, %s265
    %p267 = scmp.eq.s32.totalorder %s26, 0
    %p268 = por %p266, %p267
    %s270 = sadd.s32 %s269, 1
    %p273 = scmp.eq.s32.totalorder %s20, 1
    %p274 = scmp.ne.s32.totalorder %s269, %s271
    %p275 = scmp.eq.s32.totalorder %s20, 0
    %p276 = por %p274, %p275
    %p277 = scmp.ne.s32.totalorder %s269, %s271
    %p278 = scmp.eq.s32.totalorder %s25, 1
    %p279 = por %p277, %p278
    %p280 = scmp.ne.s32.totalorder %s271, %s272
    %p281 = scmp.eq.s32.totalorder %s25, 0
    %p282 = por %p280, %p281
    %p283 = scmp.ne.s32.totalorder %s271, %s272
    %p284 = scmp.eq.s32.totalorder %s26, 1
    %p285 = por %p283, %p284
    %p287 = scmp.ne.s32.totalorder %s272, %s286
    %p288 = scmp.eq.s32.totalorder %s26, 0
    %p289 = por %p287, %p288
    %s290 = ssub.s32 %s20, %s27
    %p291 = scmp.eq.s32.totalorder %s290, 0
    %s293 = sadd.s32 %s292, 1
    %s294 = scalar_select %p291, %s292, %s293
    %p297 = pneg %p291
    %p298 = scmp.eq.s32.totalorder %s20, 1
    %p299 = por %p297, %p298
    %p300 = scmp.ne.s32.totalorder %s292, %s295
    %p301 = scmp.eq.s32.totalorder %s20, 0
    %p302 = por %p300, %p301
    %p303 = scmp.ne.s32.totalorder %s292, %s295
    %p304 = scmp.eq.s32.totalorder %s25, 1
    %p305 = por %p303, %p304
    %p306 = scmp.ne.s32.totalorder %s295, %s296
    %p307 = scmp.eq.s32.totalorder %s25, 0
    %p308 = por %p306, %p307
    %p309 = scmp.ne.s32.totalorder %s295, %s296
    %p310 = scmp.eq.s32.totalorder %s26, 1
    %p311 = por %p309, %p310
    %p313 = scmp.ne.s32.totalorder %s296, %s312
    %p314 = scmp.eq.s32.totalorder %s26, 0
    %p315 = por %p313, %p314
    %s316 = ssub.s32 %s20, %s27
    %p317 = scmp.eq.s32.totalorder %s316, 0
    %s319 = sadd.s32 %s318, 1
    %s320 = scalar_select %p317, %s318, %s319
    %p323 = pneg %p317
    %p324 = scmp.eq.s32.totalorder %s20, 1
    %p325 = por %p323, %p324
    %p326 = scmp.ne.s32.totalorder %s318, %s321
    %p327 = scmp.eq.s32.totalorder %s20, 0
    %p328 = por %p326, %p327
    %p329 = scmp.ne.s32.totalorder %s318, %s321
    %p330 = scmp.eq.s32.totalorder %s25, 1
    %p331 = por %p329, %p330
    %p332 = scmp.ne.s32.totalorder %s321, %s322
    %p333 = scmp.eq.s32.totalorder %s25, 0
    %p334 = por %p332, %p333
    %p335 = scmp.ne.s32.totalorder %s321, %s322
    %p336 = scmp.eq.s32.totalorder %s26, 1
    %p337 = por %p335, %p336
    %p339 = scmp.ne.s32.totalorder %s322, %s338
    %p340 = scmp.eq.s32.totalorder %s26, 0
    %p341 = por %p339, %p340
    %p342 = scmp.le.s32.totalorder 1, %s20
    %p343 = scmp.lt.s32.totalorder %s20, 3
    %p344 = pnand %p342, %p343
    %p345 = pneg %p344
    // Predicated region
    $region9: #{custom_model_forward.8} parent=5 // pred_check
      _
    $region10: #{custom_model_forward.8} parent=5 // pred_check_branch
      %347 = sbr.rel (%p344) target = $region12
    $region11: #{custom_model_forward.8} parent=5 // pred_region
      %s348 = ssub.s32 %s20, 1
      // Predicated region
      $region13: #{custom_model_forward.8} parent=11 // pred_check
        %p349 = pneg %p93
      $region14: #{custom_model_forward.8} parent=11 // pred_check_branch
        %351 = sbr.rel (%p349) target = $region16
      $region15: #{custom_model_forward.8} parent=11 // pred_region
        _
      $region16: #{custom_model_forward.8} parent=11 // pred_fallthru
        _
      // Predicated region
      $region17: #{custom_model_forward.8} parent=11 // pred_check
        %p352 = pneg %p114
      $region18: #{custom_model_forward.8} parent=11 // pred_check_branch
        %354 = sbr.rel (%p352) target = $region20
      $region19: #{custom_model_forward.8} parent=11 // pred_region
        _
      $region20: #{custom_model_forward.8} parent=11 // pred_fallthru
        _
      // Predicated region
      $region21: #{custom_model_forward.8} parent=11 // pred_check
        %p355 = pneg %p135
      $region22: #{custom_model_forward.8} parent=11 // pred_check_branch
        %357 = sbr.rel (%p355) target = $region24
      $region23: #{custom_model_forward.8} parent=11 // pred_region
        _
      $region24: #{custom_model_forward.8} parent=11 // pred_fallthru
        _
      // Predicated region
      $region25: #{custom_model_forward.8} parent=11 // pred_check
        %p358 = pneg %p156
      $region26: #{custom_model_forward.8} parent=11 // pred_check_branch
        %360 = sbr.rel (%p358) target = $region28
      $region27: #{custom_model_forward.8} parent=11 // pred_region
        _
      $region28: #{custom_model_forward.8} parent=11 // pred_fallthru
        _
      // Predicated region
      $region29: #{custom_model_forward.8} parent=11 // pred_check
        %p361 = pneg %p177
      $region30: #{custom_model_forward.8} parent=11 // pred_check_branch
        %363 = sbr.rel (%p361) target = $region32
      $region31: #{custom_model_forward.8} parent=11 // pred_region
        _
      $region32: #{custom_model_forward.8} parent=11 // pred_fallthru
        _
      // Predicated region
      $region33: #{custom_model_forward.8} parent=11 // pred_check
        %p364 = pneg %p198
      $region34: #{custom_model_forward.8} parent=11 // pred_check_branch
        %366 = sbr.rel (%p364) target = $region36
      $region35: #{custom_model_forward.8} parent=11 // pred_region
        _
      $region36: #{custom_model_forward.8} parent=11 // pred_fallthru
        _
      // Predicated region
      $region37: #{custom_model_forward.8} parent=11 // pred_check
        %p367 = pneg %p219
      $region38: #{custom_model_forward.8} parent=11 // pred_check_branch
        %369 = sbr.rel (%p367) target = $region40
      $region39: #{custom_model_forward.8} parent=11 // pred_region
        _
      $region40: #{custom_model_forward.8} parent=11 // pred_fallthru
        _
      // Predicated region
      $region41: #{custom_model_forward.8} parent=11 // pred_check
        %p370 = pneg %p240
      $region42: #{custom_model_forward.8} parent=11 // pred_check_branch
        %372 = sbr.rel (%p370) target = $region44
      $region43: #{custom_model_forward.8} parent=11 // pred_region
        _
      $region44: #{custom_model_forward.8} parent=11 // pred_fallthru
        _
      // Predicated region
      $region45: #{custom_model_forward.8} parent=11 // pred_check
        %p373 = pneg %p261
      $region46: #{custom_model_forward.8} parent=11 // pred_check_branch
        %375 = sbr.rel (%p373) target = $region48
      $region47: #{custom_model_forward.8} parent=11 // pred_region
        _
      $region48: #{custom_model_forward.8} parent=11 // pred_fallthru
        _
      // Predicated region
      $region49: #{custom_model_forward.8} parent=11 // pred_check
        %p376 = pneg %p282
      $region50: #{custom_model_forward.8} parent=11 // pred_check_branch
        %378 = sbr.rel (%p376) target = $region52
      $region51: #{custom_model_forward.8} parent=11 // pred_region
        _
      $region52: #{custom_model_forward.8} parent=11 // pred_fallthru
        _
    $region12: #{custom_model_forward.8} parent=5 // pred_fallthru
      _
    %p379 = scmp.lt.s32.totalorder %s20, 2
    // Predicated region
    $region53: #{custom_model_forward.8} parent=5 // pred_check
      %p380 = pneg %p379
    $region54: #{custom_model_forward.8} parent=5 // pred_check_branch
      %382 = sbr.rel (%p380) target = $region56
    $region55: #{custom_model_forward.8} parent=5 // pred_region
      // Predicated region
      $region57: #{custom_model_forward.8} parent=55 // pred_check
        %p383 = pneg %p40
      $region58: #{custom_model_forward.8} parent=55 // pred_check_branch
        %385 = sbr.rel (%p383) target = $region60
      $region59: #{custom_model_forward.8} parent=55 // pred_region
        %s386 = smul.u32 8, %s20
        %p387 = scmp.lt.s32.totalorder %s386, 15
        %s388 = scalar_select %p387, %s386, 15
        %s389 = smul.addr %s388, 4
        %s390 = scalar_lea.vmem %s0, %s389
        %s391 = smul.u32 8, %s20
      $region60: #{custom_model_forward.8} parent=55 // pred_fallthru
        _
      // Predicated region
      $region61: #{custom_model_forward.8} parent=55 // pred_check
        %p392 = pneg %p66
      $region62: #{custom_model_forward.8} parent=55 // pred_check_branch
        %394 = sbr.rel (%p392) target = $region64
      $region63: #{custom_model_forward.8} parent=55 // pred_region
        %s395 = smul.u32 8, %s20
        %p396 = scmp.lt.s32.totalorder %s395, 15
        %s397 = scalar_select %p396, %s395, 15
        %s398 = smul.addr %s397, 4
        %s399 = scalar_lea.vmem %s1, %s398
        %s400 = smul.u32 8, %s20
      $region64: #{custom_model_forward.8} parent=55 // pred_fallthru
        _
    $region56: #{custom_model_forward.8} parent=5 // pred_fallthru
      _
    %p401 = scmp.le.s32.totalorder 1, %s20
    %p402 = scmp.lt.s32.totalorder %s20, 3
    %p403 = pnand %p401, %p402
    %p404 = pneg %p403
    // Predicated region
    $region65: #{custom_model_forward.8} parent=5 // pred_check
      _
    $region66: #{custom_model_forward.8} parent=5 // pred_check_branch
      %406 = sbr.rel (%p403) target = $region68
    $region67: #{custom_model_forward.8} parent=5 // pred_region
      %s407 = ssub.s32 %s20, 1
      %s408 = smul.u32 8, %s25
      %p409 = scmp.lt.s32.totalorder %s408, 15
      %s410 = scalar_select %p409, %s408, 15
      %s411 = smul.addr %s410, 4
      %s412 = scalar_lea.vmem %s0, %s411
      %p413 = pneg %p46
      %p414 = pneg %p43
      %s415 = smul.u32 8, %s25
      %p416 = scmp.lt.s32.totalorder %s415, 15
      %s417 = scalar_select %p416, %s415, 15
      %s418 = smul.addr %s417, 4
      %s419 = scalar_lea.vmem %s1, %s418
      %p420 = pneg %p72
      %p421 = pneg %p69
      %p422 = pneg %p93
      %p423 = pneg %p90
      %p424 = pneg %p114
      %p425 = pneg %p111
      %p426 = pneg %p135
      %p427 = pneg %p132
      %p428 = pneg %p156
      %p429 = pneg %p153
      %p430 = pneg %p177
      %p431 = pneg %p174
      %p432 = pneg %p198
      %p433 = pneg %p195
      %p434 = pneg %p219
      %p435 = pneg %p216
      %p436 = pneg %p240
      %p437 = pneg %p237
      %p438 = pneg %p261
      %p439 = pneg %p258
      %p440 = pneg %p282
      %p441 = pneg %p279
      %p442 = pneg %p308
      %p443 = pneg %p305
      %s444 = smul.u32 8, %s25
      %p445 = scmp.lt.s32.totalorder %s444, 15
      %s446 = scalar_select %p445, %s444, 15
      %s447 = smul.addr %s446, 4
      %s448 = scalar_lea.vmem %s12, %s447
      %p449 = pneg %p334
      %p450 = pneg %p331
      %s451 = smul.u32 8, %s25
      %p452 = scmp.lt.s32.totalorder %s451, 15
      %s453 = scalar_select %p452, %s451, 15
      %s454 = smul.addr %s453, 4
      %s455 = scalar_lea.vmem %s13, %s454
      %s456 = smul.u32 8, %s25
      %p457 = scmp.lt.s32.totalorder %s456, 15
      %s458 = scalar_select %p457, %s456, 15
      %s459 = smul.addr %s458, 4
      %s460 = scalar_lea.vmem %s0, %s459
      %s461 = smul.u32 8, %s25
      %s462 = smul.u32 8, %s25
      %p463 = scmp.lt.s32.totalorder %s462, 15
      %s464 = scalar_select %p463, %s462, 15
      %s465 = smul.addr %s464, 4
      %s466 = scalar_lea.vmem %s1, %s465
      %s467 = smul.u32 8, %s25
      %s468 = smul.u32 8, %s25
      %p469 = scmp.lt.s32.totalorder %s468, 15
      %s470 = scalar_select %p469, %s468, 15
      %s471 = smul.addr %s470, 4
      %s472 = scalar_lea.vmem %s12, %s471
      %s473 = smul.u32 8, %s25
      %s474 = smul.u32 8, %s25
      %p475 = scmp.lt.s32.totalorder %s474, 15
      %s476 = scalar_select %p475, %s474, 15
      %s477 = smul.addr %s476, 4
      %s478 = scalar_lea.vmem %s13, %s477
      %s479 = smul.u32 8, %s25
      %v480 = vld [vmem:[%s460] sm:$0xf]
      %v481 = vld [vmem:[%s460 + $0x4] sm:$0xf]
      %v482 = vld [vmem:[%s460 + $0x8] sm:$0xf]
      %v483 = vld [vmem:[%s460 + $0xc] sm:$0xf]
      %v484 = vld [vmem:[%s460 + $0x10] sm:$0xf]
      %v485 = vld [vmem:[%s460 + $0x14] sm:$0xf]
      %v486 = vld [vmem:[%s460 + $0x18] sm:$0xf]
      %v487 = vld [vmem:[%s460 + $0x1c] sm:$0xf]
      %v488 = vld [vmem:[%s466] sm:$0xf]
      %v489 = vld [vmem:[%s466 + $0x4] sm:$0xf]
      %v490 = vld [vmem:[%s466 + $0x8] sm:$0xf]
      %v491 = vld [vmem:[%s466 + $0xc] sm:$0xf]
      %v492 = vld [vmem:[%s466 + $0x10] sm:$0xf]
      %v493 = vld [vmem:[%s466 + $0x14] sm:$0xf]
      %v494 = vld [vmem:[%s466 + $0x18] sm:$0xf]
      %v495 = vld [vmem:[%s466 + $0x1c] sm:$0xf]
      %v496 = vld [vmem:[%s2] sm:$0xf]
      %v497 = vld [vmem:[%s2 + $0x4] sm:$0xf]
      %v498 = vld [vmem:[%s2 + $0x8] sm:$0xf]
      %v499 = vld [vmem:[%s2 + $0xc] sm:$0xf]
      %v500 = vld [vmem:[%s2 + $0x10] sm:$0xf]
      %v501 = vld [vmem:[%s2 + $0x14] sm:$0xf]
      %v502 = vld [vmem:[%s2 + $0x18] sm:$0xf]
      %v503 = vld [vmem:[%s2 + $0x1c] sm:$0xf]
      %v504 = vld [vmem:[%s2 + $0x20] sm:$0xf]
      %v505 = vld [vmem:[%s2 + $0x24] sm:$0xf]
      %v506 = vld [vmem:[%s2 + $0x28] sm:$0xf]
      %v507 = vld [vmem:[%s2 + $0x2c] sm:$0xf]
      %v508 = vld [vmem:[%s2 + $0x30] sm:$0xf]
      %v509 = vld [vmem:[%s2 + $0x34] sm:$0xf]
      %v510 = vld [vmem:[%s2 + $0x38] sm:$0xf]
      %v511 = vld [vmem:[%s2 + $0x3c] sm:$0xf]
      %v512 = vld [vmem:[%s3] sm:$0x1]
      %v513 = vld [vmem:[%s4] sm:$0xf]
      %v514 = vld [vmem:[%s4 + $0x4] sm:$0xf]
      %v515 = vld [vmem:[%s4 + $0x8] sm:$0xf]
      %v516 = vld [vmem:[%s4 + $0xc] sm:$0xf]
      %v517 = vld [vmem:[%s4 + $0x10] sm:$0xf]
      %v518 = vld [vmem:[%s4 + $0x14] sm:$0xf]
      %v519 = vld [vmem:[%s4 + $0x18] sm:$0xf]
      %v520 = vld [vmem:[%s4 + $0x1c] sm:$0xf]
      %v521 = vld [vmem:[%s4 + $0x20] sm:$0xf]
      %v522 = vld [vmem:[%s4 + $0x24] sm:$0xf]
      %v523 = vld [vmem:[%s4 + $0x28] sm:$0xf]
      %v524 = vld [vmem:[%s4 + $0x2c] sm:$0xf]
      %v525 = vld [vmem:[%s4 + $0x30] sm:$0xf]
      %v526 = vld [vmem:[%s4 + $0x34] sm:$0xf]
      %v527 = vld [vmem:[%s4 + $0x38] sm:$0xf]
      %v528 = vld [vmem:[%s4 + $0x3c] sm:$0xf]
      %v529 = vld [vmem:[%s5] sm:$0x1]
      %v530 = vld [vmem:[%s6] sm:$0xf]
      %v531 = vld [vmem:[%s6 + $0x4] sm:$0xf]
      %v532 = vld [vmem:[%s6 + $0x8] sm:$0xf]
      %v533 = vld [vmem:[%s6 + $0xc] sm:$0xf]
      %v534 = vld [vmem:[%s6 + $0x10] sm:$0xf]
      %v535 = vld [vmem:[%s6 + $0x14] sm:$0xf]
      %v536 = vld [vmem:[%s6 + $0x18] sm:$0xf]
      %v537 = vld [vmem:[%s6 + $0x1c] sm:$0xf]
      %v538 = vld [vmem:[%s6 + $0x20] sm:$0xf]
      %v539 = vld [vmem:[%s6 + $0x24] sm:$0xf]
      %v540 = vld [vmem:[%s6 + $0x28] sm:$0xf]
      %v541 = vld [vmem:[%s6 + $0x2c] sm:$0xf]
      %v542 = vld [vmem:[%s6 + $0x30] sm:$0xf]
      %v543 = vld [vmem:[%s6 + $0x34] sm:$0xf]
      %v544 = vld [vmem:[%s6 + $0x38] sm:$0xf]
      %v545 = vld [vmem:[%s6 + $0x3c] sm:$0xf]
      %v546 = vld [vmem:[%s7] sm:$0x1]
      %v547 = vld [vmem:[%s8] sm:$0xf]
      %v548 = vld [vmem:[%s8 + $0x4] sm:$0xf]
      %v549 = vld [vmem:[%s8 + $0x8] sm:$0xf]
      %v550 = vld [vmem:[%s8 + $0xc] sm:$0xf]
      %v551 = vld [vmem:[%s8 + $0x10] sm:$0xf]
      %v552 = vld [vmem:[%s8 + $0x14] sm:$0xf]
      %v553 = vld [vmem:[%s8 + $0x18] sm:$0xf]
      %v554 = vld [vmem:[%s8 + $0x1c] sm:$0xf]
      %v555 = vld [vmem:[%s8 + $0x20] sm:$0xf]
      %v556 = vld [vmem:[%s8 + $0x24] sm:$0xf]
      %v557 = vld [vmem:[%s8 + $0x28] sm:$0xf]
      %v558 = vld [vmem:[%s8 + $0x2c] sm:$0xf]
      %v559 = vld [vmem:[%s8 + $0x30] sm:$0xf]
      %v560 = vld [vmem:[%s8 + $0x34] sm:$0xf]
      %v561 = vld [vmem:[%s8 + $0x38] sm:$0xf]
      %v562 = vld [vmem:[%s8 + $0x3c] sm:$0xf]
      %v563 = vld [vmem:[%s9] sm:$0x1]
      %v564 = vld [vmem:[%s10] sm:$0xf]
      %v565 = vld [vmem:[%s10 + $0x4] sm:$0xf]
      %v566 = vld [vmem:[%s10 + $0x8] sm:$0xf]
      %v567 = vld [vmem:[%s10 + $0xc] sm:$0xf]
      %v568 = vld [vmem:[%s10 + $0x10] sm:$0xf]
      %v569 = vld [vmem:[%s10 + $0x14] sm:$0xf]
      %v570 = vld [vmem:[%s10 + $0x18] sm:$0xf]
      %v571 = vld [vmem:[%s10 + $0x1c] sm:$0xf]
      %v572 = vld [vmem:[%s10 + $0x20] sm:$0xf]
      %v573 = vld [vmem:[%s10 + $0x24] sm:$0xf]
      %v574 = vld [vmem:[%s10 + $0x28] sm:$0xf]
      %v575 = vld [vmem:[%s10 + $0x2c] sm:$0xf]
      %v576 = vld [vmem:[%s10 + $0x30] sm:$0xf]
      %v577 = vld [vmem:[%s10 + $0x34] sm:$0xf]
      %v578 = vld [vmem:[%s10 + $0x38] sm:$0xf]
      %v579 = vld [vmem:[%s10 + $0x3c] sm:$0xf]
      %v580 = vld [vmem:[%s11] sm:$0x1]
      %v582 = vperm.slane %v512, 0
      %v592 = vunpack.c.l.b16 %v488
      %v593 = vunpack.c.l.b16 %v489
      %v594 = vunpack.c.l.b16 %v490
      %v595 = vunpack.c.l.b16 %v491
      %v596 = vunpack.c.l.b16 %v492
      %v597 = vunpack.c.l.b16 %v493
      %v598 = vunpack.c.l.b16 %v494
      %v599 = vunpack.c.l.b16 %v495
      %v600 = vpack.c.b16 %v593, %v592
      %v601 = vpack.c.b16 %v595, %v594
      %v602 = vpack.c.b16 %v597, %v596
      %v603 = vpack.c.b16 %v599, %v598
      %v624 = vunpack.c.l.b16 %v496
      %v625 = vunpack.c.l.b16 %v497
      %v626 = vunpack.c.l.b16 %v498
      %v627 = vunpack.c.l.b16 %v499
      %v628 = vunpack.c.l.b16 %v500
      %v629 = vunpack.c.l.b16 %v501
      %v630 = vunpack.c.l.b16 %v502
      %v631 = vunpack.c.l.b16 %v503
      %v632 = vunpack.c.l.b16 %v504
      %v633 = vunpack.c.l.b16 %v505
      %v634 = vunpack.c.l.b16 %v506
      %v635 = vunpack.c.l.b16 %v507
      %v636 = vunpack.c.l.b16 %v508
      %v637 = vunpack.c.l.b16 %v509
      %v638 = vunpack.c.l.b16 %v510
      %v639 = vunpack.c.l.b16 %v511
      %v640 = vpack.c.b16 %v625, %v624
      %v641 = vpack.c.b16 %v627, %v626
      %v642 = vpack.c.b16 %v629, %v628
      %v643 = vpack.c.b16 %v631, %v630
      %v644 = vpack.c.b16 %v633, %v632
      %v645 = vpack.c.b16 %v635, %v634
      %v646 = vpack.c.b16 %v637, %v636
      %v647 = vpack.c.b16 %v639, %v638
      %656 = vmatpush.bf16.msra.mxu0 %v647
      %657 = vmatpush.bf16.msra.mxu0 %v646
      %658 = vmatpush.bf16.msra.mxu0 %v645
      %659 = vmatpush.bf16.msra.mxu0 %v644
      %660 = vmatpush.bf16.msra.mxu0 %v643
      %661 = vmatpush.bf16.msra.mxu0 %v642
      %662 = vmatpush.bf16.msra.mxu0 %v641
      %663 = vmatpush.bf16.msra.mxu0 %v640
      %664 = vmatmul.bf16.gmra.mxu0 %v600
      %v665 = vpop.f32.mrf.mxu0
      %v666 = vadd.f32 %v582, %v665
      %v667 = vpop.f32.mrf.mxu0
      %v668 = vadd.f32 %v582, %v667
      %669 = vmatmul.bf16.gmra.mxu0 %v601
      %v670 = vpop.f32.mrf.mxu0
      %v671 = vadd.f32 %v582, %v670
      %v672 = vpop.f32.mrf.mxu0
      %v673 = vadd.f32 %v582, %v672
      %674 = vmatmul.bf16.gmra.mxu0 %v602
      %v675 = vpop.f32.mrf.mxu0
      %v676 = vadd.f32 %v582, %v675
      %v677 = vpop.f32.mrf.mxu0
      %v678 = vadd.f32 %v582, %v677
      %679 = vmatmul.bf16.gmra.mxu0 %v603
      %v680 = vpop.f32.mrf.mxu0
      %v681 = vadd.f32 %v582, %v680
      %v682 = vpop.f32.mrf.mxu0
      %v683 = vadd.f32 %v582, %v682
      %684 = vdwg.mxu0
      %v685 = vmax.f32 %v666, 0.0
      %v686 = vmax.f32 %v668, 0.0
      %v687 = vmax.f32 %v671, 0.0
      %v688 = vmax.f32 %v673, 0.0
      %v689 = vmax.f32 %v676, 0.0
      %v690 = vmax.f32 %v678, 0.0
      %v691 = vmax.f32 %v681, 0.0
      %v692 = vmax.f32 %v683, 0.0
      %v693 = vunpack.c.l.bf16 %v488
      %v694 = vunpack.c.l.bf16 %v489
      %v695 = vunpack.c.l.bf16 %v490
      %v696 = vunpack.c.l.bf16 %v491
      %v697 = vunpack.c.l.bf16 %v492
      %v698 = vunpack.c.l.bf16 %v493
      %v699 = vunpack.c.l.bf16 %v494
      %v700 = vunpack.c.l.bf16 %v495
      %v701 = vadd.f32 %v685, %v693
      %v702 = vadd.f32 %v686, %v694
      %v703 = vadd.f32 %v687, %v695
      %v704 = vadd.f32 %v688, %v696
      %v705 = vadd.f32 %v689, %v697
      %v706 = vadd.f32 %v690, %v698
      %v707 = vadd.f32 %v691, %v699
      %v708 = vadd.f32 %v692, %v700
      %v709 = vunpack.c.l.bf16 %v480
      %v710 = vunpack.c.l.bf16 %v481
      %v711 = vunpack.c.l.bf16 %v482
      %v712 = vunpack.c.l.bf16 %v483
      %v713 = vunpack.c.l.bf16 %v484
      %v714 = vunpack.c.l.bf16 %v485
      %v715 = vunpack.c.l.bf16 %v486
      %v716 = vunpack.c.l.bf16 %v487
      %v717 = vadd.f32 %v709, %v701
      %v718 = vadd.f32 %v710, %v702
      %v719 = vadd.f32 %v711, %v703
      %v720 = vadd.f32 %v712, %v704
      %v721 = vadd.f32 %v713, %v705
      %v722 = vadd.f32 %v714, %v706
      %v723 = vadd.f32 %v715, %v707
      %v724 = vadd.f32 %v716, %v708
      %v725 = vpack.c.bf16 %v718, %v717
      %v726 = vpack.c.bf16 %v720, %v719
      %v727 = vpack.c.bf16 %v722, %v721
      %v728 = vpack.c.bf16 %v724, %v723
      %v730 = vperm.slane %v529, 0
      %v748 = vunpack.c.l.b16 %v513
      %v749 = vunpack.c.l.b16 %v514
      %v750 = vunpack.c.l.b16 %v515
      %v751 = vunpack.c.l.b16 %v516
      %v752 = vunpack.c.l.b16 %v517
      %v753 = vunpack.c.l.b16 %v518
      %v754 = vunpack.c.l.b16 %v519
      %v755 = vunpack.c.l.b16 %v520
      %v756 = vunpack.c.l.b16 %v521
      %v757 = vunpack.c.l.b16 %v522
      %v758 = vunpack.c.l.b16 %v523
      %v759 = vunpack.c.l.b16 %v524
      %v760 = vunpack.c.l.b16 %v525
      %v761 = vunpack.c.l.b16 %v526
      %v762 = vunpack.c.l.b16 %v527
      %v763 = vunpack.c.l.b16 %v528
      %v764 = vpack.c.b16 %v749, %v748
      %v765 = vpack.c.b16 %v751, %v750
      %v766 = vpack.c.b16 %v753, %v752
      %v767 = vpack.c.b16 %v755, %v754
      %v768 = vpack.c.b16 %v757, %v756
      %v769 = vpack.c.b16 %v759, %v758
      %v770 = vpack.c.b16 %v761, %v760
      %v771 = vpack.c.b16 %v763, %v762
      %780 = vmatpush.bf16.msra.mxu0 %v771
      %781 = vmatpush.bf16.msra.mxu0 %v770
      %782 = vmatpush.bf16.msra.mxu0 %v769
      %783 = vmatpush.bf16.msra.mxu0 %v768
      %784 = vmatpush.bf16.msra.mxu0 %v767
      %785 = vmatpush.bf16.msra.mxu0 %v766
      %786 = vmatpush.bf16.msra.mxu0 %v765
      %787 = vmatpush.bf16.msra.mxu0 %v764
      %788 = vmatmul.bf16.gmra.mxu0 %v725
      %v789 = vpop.f32.mrf.mxu0
      %v790 = vadd.f32 %v730, %v789
      %v791 = vpop.f32.mrf.mxu0
      %v792 = vadd.f32 %v730, %v791
      %793 = vmatmul.bf16.gmra.mxu0 %v726
      %v794 = vpop.f32.mrf.mxu0
      %v795 = vadd.f32 %v730, %v794
      %v796 = vpop.f32.mrf.mxu0
      %v797 = vadd.f32 %v730, %v796
      %798 = vmatmul.bf16.gmra.mxu0 %v727
      %v799 = vpop.f32.mrf.mxu0
      %v800 = vadd.f32 %v730, %v799
      %v801 = vpop.f32.mrf.mxu0
      %v802 = vadd.f32 %v730, %v801
      %803 = vmatmul.bf16.gmra.mxu0 %v728
      %v804 = vpop.f32.mrf.mxu0
      %v805 = vadd.f32 %v730, %v804
      %v806 = vpop.f32.mrf.mxu0
      %v807 = vadd.f32 %v730, %v806
      %808 = vdwg.mxu0
      %v809 = vmax.f32 %v790, 0.0
      %v810 = vmax.f32 %v792, 0.0
      %v811 = vmax.f32 %v795, 0.0
      %v812 = vmax.f32 %v797, 0.0
      %v813 = vmax.f32 %v800, 0.0
      %v814 = vmax.f32 %v802, 0.0
      %v815 = vmax.f32 %v805, 0.0
      %v816 = vmax.f32 %v807, 0.0
      %v817 = vpack.c.bf16 %v810, %v809
      %v818 = vpack.c.bf16 %v812, %v811
      %v819 = vpack.c.bf16 %v814, %v813
      %v820 = vpack.c.bf16 %v816, %v815
      %v822 = vperm.slane %v546, 0
      %v840 = vunpack.c.l.b16 %v530
      %v841 = vunpack.c.l.b16 %v531
      %v842 = vunpack.c.l.b16 %v532
      %v843 = vunpack.c.l.b16 %v533
      %v844 = vunpack.c.l.b16 %v534
      %v845 = vunpack.c.l.b16 %v535
      %v846 = vunpack.c.l.b16 %v536
      %v847 = vunpack.c.l.b16 %v537
      %v848 = vunpack.c.l.b16 %v538
      %v849 = vunpack.c.l.b16 %v539
      %v850 = vunpack.c.l.b16 %v540
      %v851 = vunpack.c.l.b16 %v541
      %v852 = vunpack.c.l.b16 %v542
      %v853 = vunpack.c.l.b16 %v543
      %v854 = vunpack.c.l.b16 %v544
      %v855 = vunpack.c.l.b16 %v545
      %v856 = vpack.c.b16 %v841, %v840
      %v857 = vpack.c.b16 %v843, %v842
      %v858 = vpack.c.b16 %v845, %v844
      %v859 = vpack.c.b16 %v847, %v846
      %v860 = vpack.c.b16 %v849, %v848
      %v861 = vpack.c.b16 %v851, %v850
      %v862 = vpack.c.b16 %v853, %v852
      %v863 = vpack.c.b16 %v855, %v854
      %872 = vmatpush.bf16.msra.mxu0 %v863
      %873 = vmatpush.bf16.msra.mxu0 %v862
      %874 = vmatpush.bf16.msra.mxu0 %v861
      %875 = vmatpush.bf16.msra.mxu0 %v860
      %876 = vmatpush.bf16.msra.mxu0 %v859
      %877 = vmatpush.bf16.msra.mxu0 %v858
      %878 = vmatpush.bf16.msra.mxu0 %v857
      %879 = vmatpush.bf16.msra.mxu0 %v856
      %880 = vmatmul.bf16.gmra.mxu0 %v817
      %v881 = vpop.f32.mrf.mxu0
      %v882 = vadd.f32 %v822, %v881
      %v883 = vpop.f32.mrf.mxu0
      %v884 = vadd.f32 %v822, %v883
      %885 = vmatmul.bf16.gmra.mxu0 %v818
      %v886 = vpop.f32.mrf.mxu0
      %v887 = vadd.f32 %v822, %v886
      %v888 = vpop.f32.mrf.mxu0
      %v889 = vadd.f32 %v822, %v888
      %890 = vmatmul.bf16.gmra.mxu0 %v819
      %v891 = vpop.f32.mrf.mxu0
      %v892 = vadd.f32 %v822, %v891
      %v893 = vpop.f32.mrf.mxu0
      %v894 = vadd.f32 %v822, %v893
      %895 = vmatmul.bf16.gmra.mxu0 %v820
      %v896 = vpop.f32.mrf.mxu0
      %v897 = vadd.f32 %v822, %v896
      %v898 = vpop.f32.mrf.mxu0
      %v899 = vadd.f32 %v822, %v898
      %900 = vdwg.mxu0
      %v901 = vmax.f32 %v882, 0.0
      %v902 = vmax.f32 %v884, 0.0
      %v903 = vmax.f32 %v887, 0.0
      %v904 = vmax.f32 %v889, 0.0
      %v905 = vmax.f32 %v892, 0.0
      %v906 = vmax.f32 %v894, 0.0
      %v907 = vmax.f32 %v897, 0.0
      %v908 = vmax.f32 %v899, 0.0
      %v909 = vpack.c.bf16 %v902, %v901
      %v910 = vpack.c.bf16 %v904, %v903
      %v911 = vpack.c.bf16 %v906, %v905
      %v912 = vpack.c.bf16 %v908, %v907
      %v914 = vperm.slane %v563, 0
      %v932 = vunpack.c.l.b16 %v547
      %v933 = vunpack.c.l.b16 %v548
      %v934 = vunpack.c.l.b16 %v549
      %v935 = vunpack.c.l.b16 %v550
      %v936 = vunpack.c.l.b16 %v551
      %v937 = vunpack.c.l.b16 %v552
      %v938 = vunpack.c.l.b16 %v553
      %v939 = vunpack.c.l.b16 %v554
      %v940 = vunpack.c.l.b16 %v555
      %v941 = vunpack.c.l.b16 %v556
      %v942 = vunpack.c.l.b16 %v557
      %v943 = vunpack.c.l.b16 %v558
      %v944 = vunpack.c.l.b16 %v559
      %v945 = vunpack.c.l.b16 %v560
      %v946 = vunpack.c.l.b16 %v561
      %v947 = vunpack.c.l.b16 %v562
      %v948 = vpack.c.b16 %v933, %v932
      %v949 = vpack.c.b16 %v935, %v934
      %v950 = vpack.c.b16 %v937, %v936
      %v951 = vpack.c.b16 %v939, %v938
      %v952 = vpack.c.b16 %v941, %v940
      %v953 = vpack.c.b16 %v943, %v942
      %v954 = vpack.c.b16 %v945, %v944
      %v955 = vpack.c.b16 %v947, %v946
      %964 = vmatpush.bf16.msra.mxu0 %v955
      %965 = vmatpush.bf16.msra.mxu0 %v954
      %966 = vmatpush.bf16.msra.mxu0 %v953
      %967 = vmatpush.bf16.msra.mxu0 %v952
      %968 = vmatpush.bf16.msra.mxu0 %v951
      %969 = vmatpush.bf16.msra.mxu0 %v950
      %970 = vmatpush.bf16.msra.mxu0 %v949
      %971 = vmatpush.bf16.msra.mxu0 %v948
      %972 = vmatmul.bf16.gmra.mxu0 %v909
      %v973 = vpop.f32.mrf.mxu0
      %v974 = vadd.f32 %v914, %v973
      %v975 = vpop.f32.mrf.mxu0
      %v976 = vadd.f32 %v914, %v975
      %977 = vmatmul.bf16.gmra.mxu0 %v910
      %v978 = vpop.f32.mrf.mxu0
      %v979 = vadd.f32 %v914, %v978
      %v980 = vpop.f32.mrf.mxu0
      %v981 = vadd.f32 %v914, %v980
      %982 = vmatmul.bf16.gmra.mxu0 %v911
      %v983 = vpop.f32.mrf.mxu0
      %v984 = vadd.f32 %v914, %v983
      %v985 = vpop.f32.mrf.mxu0
      %v986 = vadd.f32 %v914, %v985
      %987 = vmatmul.bf16.gmra.mxu0 %v912
      %v988 = vpop.f32.mrf.mxu0
      %v989 = vadd.f32 %v914, %v988
      %v990 = vpop.f32.mrf.mxu0
      %v991 = vadd.f32 %v914, %v990
      %992 = vdwg.mxu0
      %v993 = vmax.f32 %v974, 0.0
      %v994 = vmax.f32 %v976, 0.0
      %v995 = vmax.f32 %v979, 0.0
      %v996 = vmax.f32 %v981, 0.0
      %v997 = vmax.f32 %v984, 0.0
      %v998 = vmax.f32 %v986, 0.0
      %v999 = vmax.f32 %v989, 0.0
      %v1000 = vmax.f32 %v991, 0.0
      %v1002 = vperm.slane %v580, 0
      %v1020 = vunpack.c.l.b16 %v564
      %v1021 = vunpack.c.l.b16 %v565
      %v1022 = vunpack.c.l.b16 %v566
      %v1023 = vunpack.c.l.b16 %v567
      %v1024 = vunpack.c.l.b16 %v568
      %v1025 = vunpack.c.l.b16 %v569
      %v1026 = vunpack.c.l.b16 %v570
      %v1027 = vunpack.c.l.b16 %v571
      %v1028 = vunpack.c.l.b16 %v572
      %v1029 = vunpack.c.l.b16 %v573
      %v1030 = vunpack.c.l.b16 %v574
      %v1031 = vunpack.c.l.b16 %v575
      %v1032 = vunpack.c.l.b16 %v576
      %v1033 = vunpack.c.l.b16 %v577
      %v1034 = vunpack.c.l.b16 %v578
      %v1035 = vunpack.c.l.b16 %v579
      %v1036 = vpack.c.b16 %v1021, %v1020
      %v1037 = vpack.c.b16 %v1023, %v1022
      %v1038 = vpack.c.b16 %v1025, %v1024
      %v1039 = vpack.c.b16 %v1027, %v1026
      %v1040 = vpack.c.b16 %v1029, %v1028
      %v1041 = vpack.c.b16 %v1031, %v1030
      %v1042 = vpack.c.b16 %v1033, %v1032
      %v1043 = vpack.c.b16 %v1035, %v1034
      %1052 = vmatpush.bf16.msra.mxu0 %v1043
      %1053 = vmatpush.bf16.msra.mxu0 %v1042
      %1054 = vmatpush.bf16.msra.mxu0 %v1041
      %1055 = vmatpush.bf16.msra.mxu0 %v1040
      %1056 = vmatpush.bf16.msra.mxu0 %v1039
      %1057 = vmatpush.bf16.msra.mxu0 %v1038
      %1058 = vmatpush.bf16.msra.mxu0 %v1037
      %1059 = vmatpush.bf16.msra.mxu0 %v1036
      %1060 = vmatmul.bf16.gmra.mxu0 %v817
      %v1061 = vpop.f32.mrf.mxu0
      %v1062 = vadd.f32 %v1002, %v1061
      %v1063 = vpop.f32.mrf.mxu0
      %v1064 = vadd.f32 %v1002, %v1063
      %1065 = vmatmul.bf16.gmra.mxu0 %v818
      %v1066 = vpop.f32.mrf.mxu0
      %v1067 = vadd.f32 %v1002, %v1066
      %v1068 = vpop.f32.mrf.mxu0
      %v1069 = vadd.f32 %v1002, %v1068
      %1070 = vmatmul.bf16.gmra.mxu0 %v819
      %v1071 = vpop.f32.mrf.mxu0
      %v1072 = vadd.f32 %v1002, %v1071
      %v1073 = vpop.f32.mrf.mxu0
      %v1074 = vadd.f32 %v1002, %v1073
      %1075 = vmatmul.bf16.gmra.mxu0 %v820
      %v1076 = vpop.f32.mrf.mxu0
      %v1077 = vadd.f32 %v1002, %v1076
      %v1078 = vpop.f32.mrf.mxu0
      %v1079 = vadd.f32 %v1002, %v1078
      %1080 = vdwg.mxu0
      %v1081 = vmax.f32 %v1062, 0.0
      %v1082 = vmax.f32 %v1064, 0.0
      %v1083 = vmax.f32 %v1067, 0.0
      %v1084 = vmax.f32 %v1069, 0.0
      %v1085 = vmax.f32 %v1072, 0.0
      %v1086 = vmax.f32 %v1074, 0.0
      %v1087 = vmax.f32 %v1077, 0.0
      %v1088 = vmax.f32 %v1079, 0.0
      %v1089 = vpack.c.bf16 %v993, %v993
      %v1090 = vpack.c.bf16 %v994, %v994
      %v1091 = vpack.c.bf16 %v995, %v995
      %v1092 = vpack.c.bf16 %v996, %v996
      %v1093 = vpack.c.bf16 %v997, %v997
      %v1094 = vpack.c.bf16 %v998, %v998
      %v1095 = vpack.c.bf16 %v999, %v999
      %v1096 = vpack.c.bf16 %v1000, %v1000
      %vm1097 = vcmask 257024
      %1098 = vst.msk [vmem:[%s472] sm:$0xf] %vm1097, %v1089
      %1099 = vst.msk [vmem:[%s472 + $0x4] sm:$0xf] %vm1097, %v1090
      %1100 = vst.msk [vmem:[%s472 + $0x8] sm:$0xf] %vm1097, %v1091
      %1101 = vst.msk [vmem:[%s472 + $0xc] sm:$0xf] %vm1097, %v1092
      %1102 = vst.msk [vmem:[%s472 + $0x10] sm:$0xf] %vm1097, %v1093
      %1103 = vst.msk [vmem:[%s472 + $0x14] sm:$0xf] %vm1097, %v1094
      %1104 = vst.msk [vmem:[%s472 + $0x18] sm:$0xf] %vm1097, %v1095
      %1105 = vst.msk [vmem:[%s472 + $0x1c] sm:$0xf] %vm1097, %v1096
      %v1106 = vpack.c.bf16 %v1081, %v1081
      %v1107 = vpack.c.bf16 %v1082, %v1082
      %v1108 = vpack.c.bf16 %v1083, %v1083
      %v1109 = vpack.c.bf16 %v1084, %v1084
      %v1110 = vpack.c.bf16 %v1085, %v1085
      %v1111 = vpack.c.bf16 %v1086, %v1086
      %v1112 = vpack.c.bf16 %v1087, %v1087
      %v1113 = vpack.c.bf16 %v1088, %v1088
      %vm1114 = vcmask 519168
      %1115 = vst.msk [vmem:[%s478] sm:$0xf] %vm1114, %v1106
      %1116 = vst.msk [vmem:[%s478 + $0x4] sm:$0xf] %vm1114, %v1107
      %1117 = vst.msk [vmem:[%s478 + $0x8] sm:$0xf] %vm1114, %v1108
      %1118 = vst.msk [vmem:[%s478 + $0xc] sm:$0xf] %vm1114, %v1109
      %1119 = vst.msk [vmem:[%s478 + $0x10] sm:$0xf] %vm1114, %v1110
      %1120 = vst.msk [vmem:[%s478 + $0x14] sm:$0xf] %vm1114, %v1111
      %1121 = vst.msk [vmem:[%s478 + $0x18] sm:$0xf] %vm1114, %v1112
      %1122 = vst.msk [vmem:[%s478 + $0x1c] sm:$0xf] %vm1114, %v1113
      %s1123 = smul.u32 8, %s25
      %p1124 = scmp.lt.s32.totalorder %s1123, 15
      %s1125 = scalar_select %p1124, %s1123, 15
      %s1126 = smul.addr %s1125, 4
      %s1127 = scalar_lea.vmem %s12, %s1126
      %s1128 = smul.u32 8, %s25
      %p1129 = scmp.lt.s32.totalorder %s1128, 15
      %s1130 = scalar_select %p1129, %s1128, 15
      %s1131 = smul.addr %s1130, 4
      %s1132 = scalar_lea.vmem %s13, %s1131
      // Predicated region
      $region69: #{custom_model_forward.8} parent=67 // pred_check
        %p1133 = pneg %p305
      $region70: #{custom_model_forward.8} parent=67 // pred_check_branch
        %1135 = sbr.rel (%p1133) target = $region72
      $region71: #{custom_model_forward.8} parent=67 // pred_region
        %s1136 = smul.u32 8, %s25
      $region72: #{custom_model_forward.8} parent=67 // pred_fallthru
        _
      // Predicated region
      $region73: #{custom_model_forward.8} parent=67 // pred_check
        %p1137 = pneg %p331
      $region74: #{custom_model_forward.8} parent=67 // pred_check_branch
        %1139 = sbr.rel (%p1137) target = $region76
      $region75: #{custom_model_forward.8} parent=67 // pred_region
        %s1140 = smul.u32 8, %s25
      $region76: #{custom_model_forward.8} parent=67 // pred_fallthru
        _
    $region68: #{custom_model_forward.8} parent=5 // pred_fallthru
      _
    %p1141 = scmp.le.s32.totalorder 2, %s20
    // Predicated region
    $region77: #{custom_model_forward.8} parent=5 // pred_check
      %p1142 = pneg %p1141
    $region78: #{custom_model_forward.8} parent=5 // pred_check_branch
      %1144 = sbr.rel (%p1142) target = $region80
    $region79: #{custom_model_forward.8} parent=5 // pred_region
      %s1145 = ssub.s32 %s20, 2
      // Predicated region
      $region81: #{custom_model_forward.8} parent=79 // pred_check
        %p1146 = pneg %p311
      $region82: #{custom_model_forward.8} parent=79 // pred_check_branch
        %1148 = sbr.rel (%p1146) target = $region84
      $region83: #{custom_model_forward.8} parent=79 // pred_region
        %s1149 = smul.u32 8, %s26
        %p1150 = scmp.lt.s32.totalorder %s1149, 15
        %s1151 = scalar_select %p1150, %s1149, 15
        %s1152 = smul.addr %s1151, 4
        %s1153 = scalar_lea.vmem %s12, %s1152
      $region84: #{custom_model_forward.8} parent=79 // pred_fallthru
        _
      // Predicated region
      $region85: #{custom_model_forward.8} parent=79 // pred_check
        %p1154 = pneg %p337
      $region86: #{custom_model_forward.8} parent=79 // pred_check_branch
        %1156 = sbr.rel (%p1154) target = $region88
      $region87: #{custom_model_forward.8} parent=79 // pred_region
        %s1157 = smul.u32 8, %s26
        %p1158 = scmp.lt.s32.totalorder %s1157, 15
        %s1159 = scalar_select %p1158, %s1157, 15
        %s1160 = smul.addr %s1159, 4
        %s1161 = scalar_lea.vmem %s13, %s1160
      $region88: #{custom_model_forward.8} parent=79 // pred_fallthru
        _
    $region80: #{custom_model_forward.8} parent=5 // pred_fallthru
      _
  $region6: #{custom_model_forward.8} parent=0 // loop_footer
    %s24 = sadd.s32 1, %s20
  $region7: #{custom_model_forward.8} parent=0 // loop_footer_branch
    %19 = sbr.rel target = $region3
  $region8: #{custom_model_forward.8} parent=0 // loop_exit
    _

// kernel: custom_model_forward.9
$region0: #{custom_model_forward.9}
  #allocation0 [shape = 'u32[]', space=smem, size = 0x4, offset = 0x4, fixed_abs, tag = 'smem constant byte address 0x4 - core index']
  #allocation1 [shape = 'u32[72,128]{1,0:T(1,128)}', space=vmem, size = 0x9000, scoped, tag = 'internal scratch']
  #allocation2 [shape = 'f32[1,1]{1,0:T(1,128)S(1)}', space=vmem, size = 0x200, scoped, tag = 'scoped memory for custom_model_forward.9']
  %s0 = inlined_call_operand.vmem [shape: bf16[512,64], index: 0, kind: input, shape index: {}]
  %s1 = inlined_call_operand.vmem [shape: bf16[512,64], index: 1, kind: input, shape index: {}]
  %s2 = inlined_call_operand.vmem [shape: bf16[512,32], index: 2, kind: input, shape index: {}]
  %s3 = inlined_call_operand.vmem [shape: bf16[64,64], index: 3, kind: input, shape index: {}]
  %s4 = inlined_call_operand.vmem [shape: f32[1,64], index: 4, kind: input, shape index: {}]
  %s5 = inlined_call_operand.vmem [shape: bf16[64,64], index: 5, kind: input, shape index: {}]
  %s6 = inlined_call_operand.vmem [shape: f32[1,64], index: 6, kind: input, shape index: {}]
  %s7 = inlined_call_operand.vmem [shape: bf16[64,32], index: 7, kind: input, shape index: {}]
  %s8 = inlined_call_operand.vmem [shape: f32[1,32], index: 8, kind: input, shape index: {}]
  %s9 = inlined_call_operand.vmem [shape: bf16[32,32], index: 9, kind: input, shape index: {}]
  %s10 = inlined_call_operand.vmem [shape: f32[1,32], index: 10, kind: input, shape index: {}]
  %s11 = inlined_call_operand.vmem [shape: bf16[32,1], index: 11, kind: input, shape index: {}]
  %s12 = inlined_call_operand.<no memory space> [shape: f32[1,1], index: 12, kind: input, shape index: {}]
  %s13 = inlined_call_operand.vmem [shape: f32[512,1], index: 13, kind: output, shape index: {}]
  %s14 = sld [smem:[#allocation0]]
  $region85: #{custom_model_forward.9} parent=0
    _
  %s16 = ssub.s32 1, %s14
  %s17 = scalar_select 0, %s16, %s14
  %v18 = vstv %s12
  %19 = vst [vmem:[#allocation2] sm:$0x1] %v18
  loop: start=0, step=1, limit=4
  $region2: #{custom_model_forward.9} parent=0 // loop_pre_header
    _
  $region3: #{custom_model_forward.9} parent=0 // loop_header
    %s21 = sphi 0, %s25
    %p22 = scmp.ge.s32.totalorder %s21, 4
    %s31 = sphi 0, %s33
    %s34 = sphi 0, %s31
    %s35 = sphi 0, %s34
    %s51 = sphi 0, %s35
    %s57 = sphi 0, %s59
    %s60 = sphi 0, %s57
    %s61 = sphi 0, %s60
    %s77 = sphi 0, %s61
    %s83 = sphi 0, %s85
    %s86 = sphi 0, %s83
    %s87 = sphi 0, %s86
    %s103 = sphi 0, %s87
    %s107 = sphi 0, %s107
    %s109 = sphi 0, %s107
    %s110 = sphi 0, %s109
    %s124 = sphi 0, %s110
    %s128 = sphi 0, %s128
    %s130 = sphi 0, %s128
    %s131 = sphi 0, %s130
    %s145 = sphi 0, %s131
    %s149 = sphi 0, %s149
    %s151 = sphi 0, %s149
    %s152 = sphi 0, %s151
    %s166 = sphi 0, %s152
    %s170 = sphi 0, %s170
    %s172 = sphi 0, %s170
    %s173 = sphi 0, %s172
    %s187 = sphi 0, %s173
    %s191 = sphi 0, %s191
    %s193 = sphi 0, %s191
    %s194 = sphi 0, %s193
    %s208 = sphi 0, %s194
    %s212 = sphi 0, %s212
    %s214 = sphi 0, %s212
    %s215 = sphi 0, %s214
    %s229 = sphi 0, %s215
    %s233 = sphi 0, %s233
    %s235 = sphi 0, %s233
    %s236 = sphi 0, %s235
    %s250 = sphi 0, %s236
    %s254 = sphi 0, %s254
    %s256 = sphi 0, %s254
    %s257 = sphi 0, %s256
    %s271 = sphi 0, %s257
    %s275 = sphi 0, %s275
    %s277 = sphi 0, %s275
    %s278 = sphi 0, %s277
    %s292 = sphi 0, %s278
    %s296 = sphi 0, %s296
    %s298 = sphi 0, %s296
    %s299 = sphi 0, %s298
    %s313 = sphi 0, %s299
    %s319 = sphi 0, %s321
    %s322 = sphi 0, %s319
    %s323 = sphi 0, %s322
    %s339 = sphi 0, %s323
  $region4: #{custom_model_forward.9} parent=0 // loop_header_branch
    %24 = sbr.rel (%p22) target = $region8
  $region5: #{custom_model_forward.9} parent=0 // loop_body
    %s26 = ssub.s32 %s21, 1
    %s27 = ssub.s32 %s21, 2
    %s28 = sadd.s32 %s21, 1
    %s29 = ssub.s32 %s21, %s28
    %p30 = scmp.eq.s32.totalorder %s29, 0
    %s32 = sadd.s32 %s31, 1
    %s33 = scalar_select %p30, %s31, %s32
    %p36 = pneg %p30
    %p37 = scmp.eq.s32.totalorder %s21, 1
    %p38 = por %p36, %p37
    %p39 = scmp.ne.s32.totalorder %s31, %s34
    %p40 = scmp.eq.s32.totalorder %s21, 0
    %p41 = por %p39, %p40
    %p42 = scmp.ne.s32.totalorder %s31, %s34
    %p43 = scmp.eq.s32.totalorder %s26, 1
    %p44 = por %p42, %p43
    %p45 = scmp.ne.s32.totalorder %s34, %s35
    %p46 = scmp.eq.s32.totalorder %s26, 0
    %p47 = por %p45, %p46
    %p48 = scmp.ne.s32.totalorder %s34, %s35
    %p49 = scmp.eq.s32.totalorder %s27, 1
    %p50 = por %p48, %p49
    %p52 = scmp.ne.s32.totalorder %s35, %s51
    %p53 = scmp.eq.s32.totalorder %s27, 0
    %p54 = por %p52, %p53
    %s55 = ssub.s32 %s21, %s28
    %p56 = scmp.eq.s32.totalorder %s55, 0
    %s58 = sadd.s32 %s57, 1
    %s59 = scalar_select %p56, %s57, %s58
    %p62 = pneg %p56
    %p63 = scmp.eq.s32.totalorder %s21, 1
    %p64 = por %p62, %p63
    %p65 = scmp.ne.s32.totalorder %s57, %s60
    %p66 = scmp.eq.s32.totalorder %s21, 0
    %p67 = por %p65, %p66
    %p68 = scmp.ne.s32.totalorder %s57, %s60
    %p69 = scmp.eq.s32.totalorder %s26, 1
    %p70 = por %p68, %p69
    %p71 = scmp.ne.s32.totalorder %s60, %s61
    %p72 = scmp.eq.s32.totalorder %s26, 0
    %p73 = por %p71, %p72
    %p74 = scmp.ne.s32.totalorder %s60, %s61
    %p75 = scmp.eq.s32.totalorder %s27, 1
    %p76 = por %p74, %p75
    %p78 = scmp.ne.s32.totalorder %s61, %s77
    %p79 = scmp.eq.s32.totalorder %s27, 0
    %p80 = por %p78, %p79
    %s81 = ssub.s32 %s21, %s28
    %p82 = scmp.eq.s32.totalorder %s81, 0
    %s84 = sadd.s32 %s83, 1
    %s85 = scalar_select %p82, %s83, %s84
    %p88 = pneg %p82
    %p89 = scmp.eq.s32.totalorder %s21, 1
    %p90 = por %p88, %p89
    %p91 = scmp.ne.s32.totalorder %s83, %s86
    %p92 = scmp.eq.s32.totalorder %s21, 0
    %p93 = por %p91, %p92
    %p94 = scmp.ne.s32.totalorder %s83, %s86
    %p95 = scmp.eq.s32.totalorder %s26, 1
    %p96 = por %p94, %p95
    %p97 = scmp.ne.s32.totalorder %s86, %s87
    %p98 = scmp.eq.s32.totalorder %s26, 0
    %p99 = por %p97, %p98
    %p100 = scmp.ne.s32.totalorder %s86, %s87
    %p101 = scmp.eq.s32.totalorder %s27, 1
    %p102 = por %p100, %p101
    %p104 = scmp.ne.s32.totalorder %s87, %s103
    %p105 = scmp.eq.s32.totalorder %s27, 0
    %p106 = por %p104, %p105
    %s108 = sadd.s32 %s107, 1
    %p111 = scmp.eq.s32.totalorder %s21, 1
    %p112 = scmp.ne.s32.totalorder %s107, %s109
    %p113 = scmp.eq.s32.totalorder %s21, 0
    %p114 = por %p112, %p113
    %p115 = scmp.ne.s32.totalorder %s107, %s109
    %p116 = scmp.eq.s32.totalorder %s26, 1
    %p117 = por %p115, %p116
    %p118 = scmp.ne.s32.totalorder %s109, %s110
    %p119 = scmp.eq.s32.totalorder %s26, 0
    %p120 = por %p118, %p119
    %p121 = scmp.ne.s32.totalorder %s109, %s110
    %p122 = scmp.eq.s32.totalorder %s27, 1
    %p123 = por %p121, %p122
    %p125 = scmp.ne.s32.totalorder %s110, %s124
    %p126 = scmp.eq.s32.totalorder %s27, 0
    %p127 = por %p125, %p126
    %s129 = sadd.s32 %s128, 1
    %p132 = scmp.eq.s32.totalorder %s21, 1
    %p133 = scmp.ne.s32.totalorder %s128, %s130
    %p134 = scmp.eq.s32.totalorder %s21, 0
    %p135 = por %p133, %p134
    %p136 = scmp.ne.s32.totalorder %s128, %s130
    %p137 = scmp.eq.s32.totalorder %s26, 1
    %p138 = por %p136, %p137
    %p139 = scmp.ne.s32.totalorder %s130, %s131
    %p140 = scmp.eq.s32.totalorder %s26, 0
    %p141 = por %p139, %p140
    %p142 = scmp.ne.s32.totalorder %s130, %s131
    %p143 = scmp.eq.s32.totalorder %s27, 1
    %p144 = por %p142, %p143
    %p146 = scmp.ne.s32.totalorder %s131, %s145
    %p147 = scmp.eq.s32.totalorder %s27, 0
    %p148 = por %p146, %p147
    %s150 = sadd.s32 %s149, 1
    %p153 = scmp.eq.s32.totalorder %s21, 1
    %p154 = scmp.ne.s32.totalorder %s149, %s151
    %p155 = scmp.eq.s32.totalorder %s21, 0
    %p156 = por %p154, %p155
    %p157 = scmp.ne.s32.totalorder %s149, %s151
    %p158 = scmp.eq.s32.totalorder %s26, 1
    %p159 = por %p157, %p158
    %p160 = scmp.ne.s32.totalorder %s151, %s152
    %p161 = scmp.eq.s32.totalorder %s26, 0
    %p162 = por %p160, %p161
    %p163 = scmp.ne.s32.totalorder %s151, %s152
    %p164 = scmp.eq.s32.totalorder %s27, 1
    %p165 = por %p163, %p164
    %p167 = scmp.ne.s32.totalorder %s152, %s166
    %p168 = scmp.eq.s32.totalorder %s27, 0
    %p169 = por %p167, %p168
    %s171 = sadd.s32 %s170, 1
    %p174 = scmp.eq.s32.totalorder %s21, 1
    %p175 = scmp.ne.s32.totalorder %s170, %s172
    %p176 = scmp.eq.s32.totalorder %s21, 0
    %p177 = por %p175, %p176
    %p178 = scmp.ne.s32.totalorder %s170, %s172
    %p179 = scmp.eq.s32.totalorder %s26, 1
    %p180 = por %p178, %p179
    %p181 = scmp.ne.s32.totalorder %s172, %s173
    %p182 = scmp.eq.s32.totalorder %s26, 0
    %p183 = por %p181, %p182
    %p184 = scmp.ne.s32.totalorder %s172, %s173
    %p185 = scmp.eq.s32.totalorder %s27, 1
    %p186 = por %p184, %p185
    %p188 = scmp.ne.s32.totalorder %s173, %s187
    %p189 = scmp.eq.s32.totalorder %s27, 0
    %p190 = por %p188, %p189
    %s192 = sadd.s32 %s191, 1
    %p195 = scmp.eq.s32.totalorder %s21, 1
    %p196 = scmp.ne.s32.totalorder %s191, %s193
    %p197 = scmp.eq.s32.totalorder %s21, 0
    %p198 = por %p196, %p197
    %p199 = scmp.ne.s32.totalorder %s191, %s193
    %p200 = scmp.eq.s32.totalorder %s26, 1
    %p201 = por %p199, %p200
    %p202 = scmp.ne.s32.totalorder %s193, %s194
    %p203 = scmp.eq.s32.totalorder %s26, 0
    %p204 = por %p202, %p203
    %p205 = scmp.ne.s32.totalorder %s193, %s194
    %p206 = scmp.eq.s32.totalorder %s27, 1
    %p207 = por %p205, %p206
    %p209 = scmp.ne.s32.totalorder %s194, %s208
    %p210 = scmp.eq.s32.totalorder %s27, 0
    %p211 = por %p209, %p210
    %s213 = sadd.s32 %s212, 1
    %p216 = scmp.eq.s32.totalorder %s21, 1
    %p217 = scmp.ne.s32.totalorder %s212, %s214
    %p218 = scmp.eq.s32.totalorder %s21, 0
    %p219 = por %p217, %p218
    %p220 = scmp.ne.s32.totalorder %s212, %s214
    %p221 = scmp.eq.s32.totalorder %s26, 1
    %p222 = por %p220, %p221
    %p223 = scmp.ne.s32.totalorder %s214, %s215
    %p224 = scmp.eq.s32.totalorder %s26, 0
    %p225 = por %p223, %p224
    %p226 = scmp.ne.s32.totalorder %s214, %s215
    %p227 = scmp.eq.s32.totalorder %s27, 1
    %p228 = por %p226, %p227
    %p230 = scmp.ne.s32.totalorder %s215, %s229
    %p231 = scmp.eq.s32.totalorder %s27, 0
    %p232 = por %p230, %p231
    %s234 = sadd.s32 %s233, 1
    %p237 = scmp.eq.s32.totalorder %s21, 1
    %p238 = scmp.ne.s32.totalorder %s233, %s235
    %p239 = scmp.eq.s32.totalorder %s21, 0
    %p240 = por %p238, %p239
    %p241 = scmp.ne.s32.totalorder %s233, %s235
    %p242 = scmp.eq.s32.totalorder %s26, 1
    %p243 = por %p241, %p242
    %p244 = scmp.ne.s32.totalorder %s235, %s236
    %p245 = scmp.eq.s32.totalorder %s26, 0
    %p246 = por %p244, %p245
    %p247 = scmp.ne.s32.totalorder %s235, %s236
    %p248 = scmp.eq.s32.totalorder %s27, 1
    %p249 = por %p247, %p248
    %p251 = scmp.ne.s32.totalorder %s236, %s250
    %p252 = scmp.eq.s32.totalorder %s27, 0
    %p253 = por %p251, %p252
    %s255 = sadd.s32 %s254, 1
    %p258 = scmp.eq.s32.totalorder %s21, 1
    %p259 = scmp.ne.s32.totalorder %s254, %s256
    %p260 = scmp.eq.s32.totalorder %s21, 0
    %p261 = por %p259, %p260
    %p262 = scmp.ne.s32.totalorder %s254, %s256
    %p263 = scmp.eq.s32.totalorder %s26, 1
    %p264 = por %p262, %p263
    %p265 = scmp.ne.s32.totalorder %s256, %s257
    %p266 = scmp.eq.s32.totalorder %s26, 0
    %p267 = por %p265, %p266
    %p268 = scmp.ne.s32.totalorder %s256, %s257
    %p269 = scmp.eq.s32.totalorder %s27, 1
    %p270 = por %p268, %p269
    %p272 = scmp.ne.s32.totalorder %s257, %s271
    %p273 = scmp.eq.s32.totalorder %s27, 0
    %p274 = por %p272, %p273
    %s276 = sadd.s32 %s275, 1
    %p279 = scmp.eq.s32.totalorder %s21, 1
    %p280 = scmp.ne.s32.totalorder %s275, %s277
    %p281 = scmp.eq.s32.totalorder %s21, 0
    %p282 = por %p280, %p281
    %p283 = scmp.ne.s32.totalorder %s275, %s277
    %p284 = scmp.eq.s32.totalorder %s26, 1
    %p285 = por %p283, %p284
    %p286 = scmp.ne.s32.totalorder %s277, %s278
    %p287 = scmp.eq.s32.totalorder %s26, 0
    %p288 = por %p286, %p287
    %p289 = scmp.ne.s32.totalorder %s277, %s278
    %p290 = scmp.eq.s32.totalorder %s27, 1
    %p291 = por %p289, %p290
    %p293 = scmp.ne.s32.totalorder %s278, %s292
    %p294 = scmp.eq.s32.totalorder %s27, 0
    %p295 = por %p293, %p294
    %s297 = sadd.s32 %s296, 1
    %p300 = scmp.eq.s32.totalorder %s21, 1
    %p301 = scmp.ne.s32.totalorder %s296, %s298
    %p302 = scmp.eq.s32.totalorder %s21, 0
    %p303 = por %p301, %p302
    %p304 = scmp.ne.s32.totalorder %s296, %s298
    %p305 = scmp.eq.s32.totalorder %s26, 1
    %p306 = por %p304, %p305
    %p307 = scmp.ne.s32.totalorder %s298, %s299
    %p308 = scmp.eq.s32.totalorder %s26, 0
    %p309 = por %p307, %p308
    %p310 = scmp.ne.s32.totalorder %s298, %s299
    %p311 = scmp.eq.s32.totalorder %s27, 1
    %p312 = por %p310, %p311
    %p314 = scmp.ne.s32.totalorder %s299, %s313
    %p315 = scmp.eq.s32.totalorder %s27, 0
    %p316 = por %p314, %p315
    %s317 = ssub.s32 %s21, %s28
    %p318 = scmp.eq.s32.totalorder %s317, 0
    %s320 = sadd.s32 %s319, 1
    %s321 = scalar_select %p318, %s319, %s320
    %p324 = pneg %p318
    %p325 = scmp.eq.s32.totalorder %s21, 1
    %p326 = por %p324, %p325
    %p327 = scmp.ne.s32.totalorder %s319, %s322
    %p328 = scmp.eq.s32.totalorder %s21, 0
    %p329 = por %p327, %p328
    %p330 = scmp.ne.s32.totalorder %s319, %s322
    %p331 = scmp.eq.s32.totalorder %s26, 1
    %p332 = por %p330, %p331
    %p333 = scmp.ne.s32.totalorder %s322, %s323
    %p334 = scmp.eq.s32.totalorder %s26, 0
    %p335 = por %p333, %p334
    %p336 = scmp.ne.s32.totalorder %s322, %s323
    %p337 = scmp.eq.s32.totalorder %s27, 1
    %p338 = por %p336, %p337
    %p340 = scmp.ne.s32.totalorder %s323, %s339
    %p341 = scmp.eq.s32.totalorder %s27, 0
    %p342 = por %p340, %p341
    %p343 = scmp.le.s32.totalorder 1, %s21
    %p344 = scmp.lt.s32.totalorder %s21, 3
    %p345 = pnand %p343, %p344
    %p346 = pneg %p345
    // Predicated region
    $region9: #{custom_model_forward.9} parent=5 // pred_check
      _
    $region10: #{custom_model_forward.9} parent=5 // pred_check_branch
      %348 = sbr.rel (%p345) target = $region12
    $region11: #{custom_model_forward.9} parent=5 // pred_region
      %s349 = ssub.s32 %s21, 1
      // Predicated region
      $region13: #{custom_model_forward.9} parent=11 // pred_check
        %p350 = pneg %p120
      $region14: #{custom_model_forward.9} parent=11 // pred_check_branch
        %352 = sbr.rel (%p350) target = $region16
      $region15: #{custom_model_forward.9} parent=11 // pred_region
        _
      $region16: #{custom_model_forward.9} parent=11 // pred_fallthru
        _
      // Predicated region
      $region17: #{custom_model_forward.9} parent=11 // pred_check
        %p353 = pneg %p141
      $region18: #{custom_model_forward.9} parent=11 // pred_check_branch
        %355 = sbr.rel (%p353) target = $region20
      $region19: #{custom_model_forward.9} parent=11 // pred_region
        _
      $region20: #{custom_model_forward.9} parent=11 // pred_fallthru
        _
      // Predicated region
      $region21: #{custom_model_forward.9} parent=11 // pred_check
        %p356 = pneg %p162
      $region22: #{custom_model_forward.9} parent=11 // pred_check_branch
        %358 = sbr.rel (%p356) target = $region24
      $region23: #{custom_model_forward.9} parent=11 // pred_region
        _
      $region24: #{custom_model_forward.9} parent=11 // pred_fallthru
        _
      // Predicated region
      $region25: #{custom_model_forward.9} parent=11 // pred_check
        %p359 = pneg %p183
      $region26: #{custom_model_forward.9} parent=11 // pred_check_branch
        %361 = sbr.rel (%p359) target = $region28
      $region27: #{custom_model_forward.9} parent=11 // pred_region
        _
      $region28: #{custom_model_forward.9} parent=11 // pred_fallthru
        _
      // Predicated region
      $region29: #{custom_model_forward.9} parent=11 // pred_check
        %p362 = pneg %p204
      $region30: #{custom_model_forward.9} parent=11 // pred_check_branch
        %364 = sbr.rel (%p362) target = $region32
      $region31: #{custom_model_forward.9} parent=11 // pred_region
        _
      $region32: #{custom_model_forward.9} parent=11 // pred_fallthru
        _
      // Predicated region
      $region33: #{custom_model_forward.9} parent=11 // pred_check
        %p365 = pneg %p225
      $region34: #{custom_model_forward.9} parent=11 // pred_check_branch
        %367 = sbr.rel (%p365) target = $region36
      $region35: #{custom_model_forward.9} parent=11 // pred_region
        _
      $region36: #{custom_model_forward.9} parent=11 // pred_fallthru
        _
      // Predicated region
      $region37: #{custom_model_forward.9} parent=11 // pred_check
        %p368 = pneg %p246
      $region38: #{custom_model_forward.9} parent=11 // pred_check_branch
        %370 = sbr.rel (%p368) target = $region40
      $region39: #{custom_model_forward.9} parent=11 // pred_region
        _
      $region40: #{custom_model_forward.9} parent=11 // pred_fallthru
        _
      // Predicated region
      $region41: #{custom_model_forward.9} parent=11 // pred_check
        %p371 = pneg %p267
      $region42: #{custom_model_forward.9} parent=11 // pred_check_branch
        %373 = sbr.rel (%p371) target = $region44
      $region43: #{custom_model_forward.9} parent=11 // pred_region
        _
      $region44: #{custom_model_forward.9} parent=11 // pred_fallthru
        _
      // Predicated region
      $region45: #{custom_model_forward.9} parent=11 // pred_check
        %p374 = pneg %p288
      $region46: #{custom_model_forward.9} parent=11 // pred_check_branch
        %376 = sbr.rel (%p374) target = $region48
      $region47: #{custom_model_forward.9} parent=11 // pred_region
        _
      $region48: #{custom_model_forward.9} parent=11 // pred_fallthru
        _
      // Predicated region
      $region49: #{custom_model_forward.9} parent=11 // pred_check
        %p377 = pneg %p309
      $region50: #{custom_model_forward.9} parent=11 // pred_check_branch
        %379 = sbr.rel (%p377) target = $region52
      $region51: #{custom_model_forward.9} parent=11 // pred_region
        _
      $region52: #{custom_model_forward.9} parent=11 // pred_fallthru
        _
    $region12: #{custom_model_forward.9} parent=5 // pred_fallthru
      _
    %p380 = scmp.lt.s32.totalorder %s21, 2
    // Predicated region
    $region53: #{custom_model_forward.9} parent=5 // pred_check
      %p381 = pneg %p380
    $region54: #{custom_model_forward.9} parent=5 // pred_check_branch
      %383 = sbr.rel (%p381) target = $region56
    $region55: #{custom_model_forward.9} parent=5 // pred_region
      // Predicated region
      $region57: #{custom_model_forward.9} parent=55 // pred_check
        %p384 = pneg %p41
      $region58: #{custom_model_forward.9} parent=55 // pred_check_branch
        %386 = sbr.rel (%p384) target = $region60
      $region59: #{custom_model_forward.9} parent=55 // pred_region
        %s387 = smul.u32 32, %s21
        %p388 = scmp.lt.s32.totalorder %s387, 63
        %s389 = scalar_select %p388, %s387, 63
        %s390 = smul.addr %s389, 4
        %s391 = scalar_lea.vmem %s0, %s390
        %s392 = smul.u32 32, %s21
      $region60: #{custom_model_forward.9} parent=55 // pred_fallthru
        _
      // Predicated region
      $region61: #{custom_model_forward.9} parent=55 // pred_check
        %p393 = pneg %p67
      $region62: #{custom_model_forward.9} parent=55 // pred_check_branch
        %395 = sbr.rel (%p393) target = $region64
      $region63: #{custom_model_forward.9} parent=55 // pred_region
        %s396 = smul.u32 32, %s21
        %p397 = scmp.lt.s32.totalorder %s396, 63
        %s398 = scalar_select %p397, %s396, 63
        %s399 = smul.addr %s398, 4
        %s400 = scalar_lea.vmem %s1, %s399
        %s401 = smul.u32 32, %s21
      $region64: #{custom_model_forward.9} parent=55 // pred_fallthru
        _
      // Predicated region
      $region65: #{custom_model_forward.9} parent=55 // pred_check
        %p402 = pneg %p93
      $region66: #{custom_model_forward.9} parent=55 // pred_check_branch
        %404 = sbr.rel (%p402) target = $region68
      $region67: #{custom_model_forward.9} parent=55 // pred_region
        %s405 = smul.u32 32, %s21
        %p406 = scmp.lt.s32.totalorder %s405, 63
        %s407 = scalar_select %p406, %s405, 63
        %s408 = smul.addr %s407, 4
        %s409 = scalar_lea.vmem %s2, %s408
        %s410 = smul.u32 32, %s21
      $region68: #{custom_model_forward.9} parent=55 // pred_fallthru
        _
    $region56: #{custom_model_forward.9} parent=5 // pred_fallthru
      _
    %p411 = scmp.le.s32.totalorder 1, %s21
    %p412 = scmp.lt.s32.totalorder %s21, 3
    %p413 = pnand %p411, %p412
    %p414 = pneg %p413
    // Predicated region
    $region69: #{custom_model_forward.9} parent=5 // pred_check
      _
    $region70: #{custom_model_forward.9} parent=5 // pred_check_branch
      %416 = sbr.rel (%p413) target = $region72
    $region71: #{custom_model_forward.9} parent=5 // pred_region
      %s417 = ssub.s32 %s21, 1
      %s418 = smul.u32 32, %s26
      %p419 = scmp.lt.s32.totalorder %s418, 63
      %s420 = scalar_select %p419, %s418, 63
      %s421 = smul.addr %s420, 4
      %s422 = scalar_lea.vmem %s0, %s421
      %p423 = pneg %p47
      %p424 = pneg %p44
      %s425 = smul.u32 32, %s26
      %p426 = scmp.lt.s32.totalorder %s425, 63
      %s427 = scalar_select %p426, %s425, 63
      %s428 = smul.addr %s427, 4
      %s429 = scalar_lea.vmem %s1, %s428
      %p430 = pneg %p73
      %p431 = pneg %p70
      %s432 = smul.u32 32, %s26
      %p433 = scmp.lt.s32.totalorder %s432, 63
      %s434 = scalar_select %p433, %s432, 63
      %s435 = smul.addr %s434, 4
      %s436 = scalar_lea.vmem %s2, %s435
      %p437 = pneg %p99
      %p438 = pneg %p96
      %p439 = pneg %p120
      %p440 = pneg %p117
      %p441 = pneg %p141
      %p442 = pneg %p138
      %p443 = pneg %p162
      %p444 = pneg %p159
      %p445 = pneg %p183
      %p446 = pneg %p180
      %p447 = pneg %p204
      %p448 = pneg %p201
      %p449 = pneg %p225
      %p450 = pneg %p222
      %p451 = pneg %p246
      %p452 = pneg %p243
      %p453 = pneg %p267
      %p454 = pneg %p264
      %p455 = pneg %p288
      %p456 = pneg %p285
      %p457 = pneg %p309
      %p458 = pneg %p306
      %p459 = pneg %p335
      %p460 = pneg %p332
      %s461 = smul.u32 32, %s26
      %p462 = scmp.lt.s32.totalorder %s461, 63
      %s463 = scalar_select %p462, %s461, 63
      %s464 = smul.addr %s463, 8
      %s465 = scalar_lea.vmem %s13, %s464
      %s466 = smul.u32 32, %s26
      %p467 = scmp.lt.s32.totalorder %s466, 63
      %s468 = scalar_select %p467, %s466, 63
      %s469 = smul.addr %s468, 4
      %s470 = scalar_lea.vmem %s0, %s469
      %s471 = smul.u32 32, %s26
      %s472 = smul.u32 32, %s26
      %p473 = scmp.lt.s32.totalorder %s472, 63
      %s474 = scalar_select %p473, %s472, 63
      %s475 = smul.addr %s474, 4
      %s476 = scalar_lea.vmem %s1, %s475
      %s477 = smul.u32 32, %s26
      %s478 = smul.u32 32, %s26
      %p479 = scmp.lt.s32.totalorder %s478, 63
      %s480 = scalar_select %p479, %s478, 63
      %s481 = smul.addr %s480, 4
      %s482 = scalar_lea.vmem %s2, %s481
      %s483 = smul.u32 32, %s26
      %s484 = smul.u32 32, %s26
      %p485 = scmp.lt.s32.totalorder %s484, 63
      %s486 = scalar_select %p485, %s484, 63
      %s487 = smul.addr %s486, 8
      %s488 = scalar_lea.vmem %s13, %s487
      %s489 = smul.u32 32, %s26
      %v491 = vld [vmem:[%s470] sm:$0xf]
      %v492 = vld [vmem:[%s470 + $0x4] sm:$0xf]
      %v493 = vld [vmem:[%s470 + $0x8] sm:$0xf]
      %v494 = vld [vmem:[%s470 + $0xc] sm:$0xf]
      %v495 = vld [vmem:[%s470 + $0x10] sm:$0xf]
      %v496 = vld [vmem:[%s470 + $0x14] sm:$0xf]
      %v497 = vld [vmem:[%s470 + $0x18] sm:$0xf]
      %v498 = vld [vmem:[%s470 + $0x1c] sm:$0xf]
      %v499 = vld [vmem:[%s470 + $0x20] sm:$0xf]
      %v500 = vld [vmem:[%s470 + $0x24] sm:$0xf]
      %v501 = vld [vmem:[%s470 + $0x28] sm:$0xf]
      %v502 = vld [vmem:[%s470 + $0x2c] sm:$0xf]
      %v503 = vld [vmem:[%s470 + $0x30] sm:$0xf]
      %v504 = vld [vmem:[%s470 + $0x34] sm:$0xf]
      %v505 = vld [vmem:[%s470 + $0x38] sm:$0xf]
      %v506 = vld [vmem:[%s470 + $0x3c] sm:$0xf]
      %v507 = vld [vmem:[%s470 + $0x40] sm:$0xf]
      %v508 = vld [vmem:[%s470 + $0x44] sm:$0xf]
      %v509 = vld [vmem:[%s470 + $0x48] sm:$0xf]
      %v510 = vld [vmem:[%s470 + $0x4c] sm:$0xf]
      %v511 = vld [vmem:[%s470 + $0x50] sm:$0xf]
      %v512 = vld [vmem:[%s470 + $0x54] sm:$0xf]
      %v513 = vld [vmem:[%s470 + $0x58] sm:$0xf]
      %v514 = vld [vmem:[%s470 + $0x5c] sm:$0xf]
      %v515 = vld [vmem:[%s470 + $0x60] sm:$0xf]
      %v516 = vld [vmem:[%s470 + $0x64] sm:$0xf]
      %v517 = vld [vmem:[%s470 + $0x68] sm:$0xf]
      %v518 = vld [vmem:[%s470 + $0x6c] sm:$0xf]
      %v519 = vld [vmem:[%s470 + $0x70] sm:$0xf]
      %v520 = vld [vmem:[%s470 + $0x74] sm:$0xf]
      %v521 = vld [vmem:[%s470 + $0x78] sm:$0xf]
      %v522 = vld [vmem:[%s470 + $0x7c] sm:$0xf]
      %v523 = vld [vmem:[%s476] sm:$0xf]
      %v524 = vld [vmem:[%s476 + $0x4] sm:$0xf]
      %v525 = vld [vmem:[%s476 + $0x8] sm:$0xf]
      %v526 = vld [vmem:[%s476 + $0xc] sm:$0xf]
      %v527 = vld [vmem:[%s476 + $0x10] sm:$0xf]
      %v528 = vld [vmem:[%s476 + $0x14] sm:$0xf]
      %v529 = vld [vmem:[%s476 + $0x18] sm:$0xf]
      %v530 = vld [vmem:[%s476 + $0x1c] sm:$0xf]
      %v531 = vld [vmem:[%s476 + $0x20] sm:$0xf]
      %v532 = vld [vmem:[%s476 + $0x24] sm:$0xf]
      %v533 = vld [vmem:[%s476 + $0x28] sm:$0xf]
      %v534 = vld [vmem:[%s476 + $0x2c] sm:$0xf]
      %v535 = vld [vmem:[%s476 + $0x30] sm:$0xf]
      %v536 = vld [vmem:[%s476 + $0x34] sm:$0xf]
      %v537 = vld [vmem:[%s476 + $0x38] sm:$0xf]
      %v538 = vld [vmem:[%s476 + $0x3c] sm:$0xf]
      %v539 = vld [vmem:[%s476 + $0x40] sm:$0xf]
      %v540 = vld [vmem:[%s476 + $0x44] sm:$0xf]
      %v541 = vld [vmem:[%s476 + $0x48] sm:$0xf]
      %v542 = vld [vmem:[%s476 + $0x4c] sm:$0xf]
      %v543 = vld [vmem:[%s476 + $0x50] sm:$0xf]
      %v544 = vld [vmem:[%s476 + $0x54] sm:$0xf]
      %v545 = vld [vmem:[%s476 + $0x58] sm:$0xf]
      %v546 = vld [vmem:[%s476 + $0x5c] sm:$0xf]
      %v547 = vld [vmem:[%s476 + $0x60] sm:$0xf]
      %v548 = vld [vmem:[%s476 + $0x64] sm:$0xf]
      %v549 = vld [vmem:[%s476 + $0x68] sm:$0xf]
      %v550 = vld [vmem:[%s476 + $0x6c] sm:$0xf]
      %v551 = vld [vmem:[%s476 + $0x70] sm:$0xf]
      %v552 = vld [vmem:[%s476 + $0x74] sm:$0xf]
      %v553 = vld [vmem:[%s476 + $0x78] sm:$0xf]
      %v554 = vld [vmem:[%s476 + $0x7c] sm:$0xf]
      %v555 = vld [vmem:[%s482] sm:$0xf]
      %v556 = vld [vmem:[%s482 + $0x4] sm:$0xf]
      %v557 = vld [vmem:[%s482 + $0x8] sm:$0xf]
      %v558 = vld [vmem:[%s482 + $0xc] sm:$0xf]
      %v559 = vld [vmem:[%s482 + $0x10] sm:$0xf]
      %v560 = vld [vmem:[%s482 + $0x14] sm:$0xf]
      %v561 = vld [vmem:[%s482 + $0x18] sm:$0xf]
      %v562 = vld [vmem:[%s482 + $0x1c] sm:$0xf]
      %v563 = vld [vmem:[%s482 + $0x20] sm:$0xf]
      %v564 = vld [vmem:[%s482 + $0x24] sm:$0xf]
      %v565 = vld [vmem:[%s482 + $0x28] sm:$0xf]
      %v566 = vld [vmem:[%s482 + $0x2c] sm:$0xf]
      %v567 = vld [vmem:[%s482 + $0x30] sm:$0xf]
      %v568 = vld [vmem:[%s482 + $0x34] sm:$0xf]
      %v569 = vld [vmem:[%s482 + $0x38] sm:$0xf]
      %v570 = vld [vmem:[%s482 + $0x3c] sm:$0xf]
      %v571 = vld [vmem:[%s482 + $0x40] sm:$0xf]
      %v572 = vld [vmem:[%s482 + $0x44] sm:$0xf]
      %v573 = vld [vmem:[%s482 + $0x48] sm:$0xf]
      %v574 = vld [vmem:[%s482 + $0x4c] sm:$0xf]
      %v575 = vld [vmem:[%s482 + $0x50] sm:$0xf]
      %v576 = vld [vmem:[%s482 + $0x54] sm:$0xf]
      %v577 = vld [vmem:[%s482 + $0x58] sm:$0xf]
      %v578 = vld [vmem:[%s482 + $0x5c] sm:$0xf]
      %v579 = vld [vmem:[%s482 + $0x60] sm:$0xf]
      %v580 = vld [vmem:[%s482 + $0x64] sm:$0xf]
      %v581 = vld [vmem:[%s482 + $0x68] sm:$0xf]
      %v582 = vld [vmem:[%s482 + $0x6c] sm:$0xf]
      %v583 = vld [vmem:[%s482 + $0x70] sm:$0xf]
      %v584 = vld [vmem:[%s482 + $0x74] sm:$0xf]
      %v585 = vld [vmem:[%s482 + $0x78] sm:$0xf]
      %v586 = vld [vmem:[%s482 + $0x7c] sm:$0xf]
      %v587 = vld [vmem:[%s3] sm:$0xf]
      %v588 = vld [vmem:[%s3 + $0x4] sm:$0xf]
      %v589 = vld [vmem:[%s3 + $0x8] sm:$0xf]
      %v590 = vld [vmem:[%s3 + $0xc] sm:$0xf]
      %v591 = vld [vmem:[%s3 + $0x10] sm:$0xf]
      %v592 = vld [vmem:[%s3 + $0x14] sm:$0xf]
      %v593 = vld [vmem:[%s3 + $0x18] sm:$0xf]
      %v594 = vld [vmem:[%s3 + $0x1c] sm:$0xf]
      %v595 = vld [vmem:[%s4] sm:$0x1]
      %v596 = vld [vmem:[%s5] sm:$0xf]
      %v597 = vld [vmem:[%s5 + $0x4] sm:$0xf]
      %v598 = vld [vmem:[%s5 + $0x8] sm:$0xf]
      %v599 = vld [vmem:[%s5 + $0xc] sm:$0xf]
      %v600 = vld [vmem:[%s5 + $0x10] sm:$0xf]
      %v601 = vld [vmem:[%s5 + $0x14] sm:$0xf]
      %v602 = vld [vmem:[%s5 + $0x18] sm:$0xf]
      %v603 = vld [vmem:[%s5 + $0x1c] sm:$0xf]
      %v604 = vld [vmem:[%s6] sm:$0x1]
      %v605 = vld [vmem:[%s7] sm:$0xf]
      %v606 = vld [vmem:[%s7 + $0x4] sm:$0xf]
      %v607 = vld [vmem:[%s7 + $0x8] sm:$0xf]
      %v608 = vld [vmem:[%s7 + $0xc] sm:$0xf]
      %v609 = vld [vmem:[%s7 + $0x10] sm:$0xf]
      %v610 = vld [vmem:[%s7 + $0x14] sm:$0xf]
      %v611 = vld [vmem:[%s7 + $0x18] sm:$0xf]
      %v612 = vld [vmem:[%s7 + $0x1c] sm:$0xf]
      %v613 = vld [vmem:[%s8] sm:$0x1]
      %v614 = vld [vmem:[%s9] sm:$0xf]
      %v615 = vld [vmem:[%s9 + $0x4] sm:$0xf]
      %v616 = vld [vmem:[%s9 + $0x8] sm:$0xf]
      %v617 = vld [vmem:[%s9 + $0xc] sm:$0xf]
      %v618 = vld [vmem:[%s10] sm:$0x1]
      %v619 = vld [vmem:[%s11] sm:$0xf]
      %v620 = vld [vmem:[%s11 + $0x4] sm:$0xf]
      %v621 = vld [vmem:[%s11 + $0x8] sm:$0xf]
      %v622 = vld [vmem:[%s11 + $0xc] sm:$0xf]
      %v623 = vld [vmem:[#allocation2] sm:$0x1]
      %v625 = vperm.slane %v595, 0
      %v659 = vunpack.c.l.b16 %v523
      %v660 = vunpack.c.l.b16 %v524
      %v661 = vunpack.c.l.b16 %v525
      %v662 = vunpack.c.l.b16 %v526
      %v663 = vunpack.c.l.b16 %v527
      %v664 = vunpack.c.l.b16 %v528
      %v665 = vunpack.c.l.b16 %v529
      %v666 = vunpack.c.l.b16 %v530
      %v667 = vunpack.c.l.b16 %v531
      %v668 = vunpack.c.l.b16 %v532
      %v669 = vunpack.c.l.b16 %v533
      %v670 = vunpack.c.l.b16 %v534
      %v671 = vunpack.c.l.b16 %v535
      %v672 = vunpack.c.l.b16 %v536
      %v673 = vunpack.c.l.b16 %v537
      %v674 = vunpack.c.l.b16 %v538
      %v675 = vunpack.c.l.b16 %v539
      %v676 = vunpack.c.l.b16 %v540
      %v677 = vunpack.c.l.b16 %v541
      %v678 = vunpack.c.l.b16 %v542
      %v679 = vunpack.c.l.b16 %v543
      %v680 = vunpack.c.l.b16 %v544
      %v681 = vunpack.c.l.b16 %v545
      %v682 = vunpack.c.l.b16 %v546
      %v683 = vunpack.c.l.b16 %v547
      %v684 = vunpack.c.l.b16 %v548
      %v685 = vunpack.c.l.b16 %v549
      %v686 = vunpack.c.l.b16 %v550
      %v687 = vunpack.c.l.b16 %v551
      %v688 = vunpack.c.l.b16 %v552
      %v689 = vunpack.c.l.b16 %v553
      %v690 = vunpack.c.l.b16 %v554
      %v691 = vpack.c.b16 %v660, %v659
      %v692 = vpack.c.b16 %v662, %v661
      %v693 = vpack.c.b16 %v664, %v663
      %v694 = vpack.c.b16 %v666, %v665
      %v695 = vpack.c.b16 %v668, %v667
      %v696 = vpack.c.b16 %v670, %v669
      %v697 = vpack.c.b16 %v672, %v671
      %v698 = vpack.c.b16 %v674, %v673
      %v699 = vpack.c.b16 %v676, %v675
      %v700 = vpack.c.b16 %v678, %v677
      %v701 = vpack.c.b16 %v680, %v679
      %v702 = vpack.c.b16 %v682, %v681
      %v703 = vpack.c.b16 %v684, %v683
      %v704 = vpack.c.b16 %v686, %v685
      %v705 = vpack.c.b16 %v688, %v687
      %v706 = vpack.c.b16 %v690, %v689
      %v715 = vunpack.c.l.b16 %v587
      %v716 = vunpack.c.l.b16 %v588
      %v717 = vunpack.c.l.b16 %v589
      %v718 = vunpack.c.l.b16 %v590
      %v719 = vunpack.c.l.b16 %v591
      %v720 = vunpack.c.l.b16 %v592
      %v721 = vunpack.c.l.b16 %v593
      %v722 = vunpack.c.l.b16 %v594
      %v723 = vpack.c.b16 %v716, %v715
      %v724 = vpack.c.b16 %v718, %v717
      %v725 = vpack.c.b16 %v720, %v719
      %v726 = vpack.c.b16 %v722, %v721
      %vm731 = vcmask 523264
      %v733 = vsel %vm731, %v691, 0
      %v736 = vsel %vm731, %v692, 0
      %v739 = vsel %vm731, %v693, 0
      %v742 = vsel %vm731, %v694, 0
      %v745 = vsel %vm731, %v695, 0
      %v748 = vsel %vm731, %v696, 0
      %v751 = vsel %vm731, %v697, 0
      %v754 = vsel %vm731, %v698, 0
      %v757 = vsel %vm731, %v699, 0
      %v760 = vsel %vm731, %v700, 0
      %v763 = vsel %vm731, %v701, 0
      %v766 = vsel %vm731, %v702, 0
      %v769 = vsel %vm731, %v703, 0
      %v772 = vsel %vm731, %v704, 0
      %v775 = vsel %vm731, %v705, 0
      %v778 = vsel %vm731, %v706, 0
      %780 = vmatpush.bf16.msra.mxu0 0
      %781 = vmatpush.bf16.msra.mxu0 0
      %782 = vmatpush.bf16.msra.mxu0 0
      %783 = vmatpush.bf16.msra.mxu0 0
      %784 = vmatpush.bf16.msra.mxu0 %v726
      %785 = vmatpush.bf16.msra.mxu0 %v725
      %786 = vmatpush.bf16.msra.mxu0 %v724
      %787 = vmatpush.bf16.msra.mxu0 %v723
      %788 = vmatmul.bf16.gmra.mxu0 %v733
      %v789 = vpop.f32.mrf.mxu0
      %v790 = vadd.f32 %v625, %v789
      %v791 = vpop.f32.mrf.mxu0
      %v792 = vadd.f32 %v625, %v791
      %793 = vmatmul.bf16.gmra.mxu0 %v736
      %v794 = vpop.f32.mrf.mxu0
      %v795 = vadd.f32 %v625, %v794
      %v796 = vpop.f32.mrf.mxu0
      %v797 = vadd.f32 %v625, %v796
      %798 = vmatmul.bf16.gmra.mxu0 %v739
      %v799 = vpop.f32.mrf.mxu0
      %v800 = vadd.f32 %v625, %v799
      %v801 = vpop.f32.mrf.mxu0
      %v802 = vadd.f32 %v625, %v801
      %803 = vmatmul.bf16.gmra.mxu0 %v742
      %v804 = vpop.f32.mrf.mxu0
      %v805 = vadd.f32 %v625, %v804
      %v806 = vpop.f32.mrf.mxu0
      %v807 = vadd.f32 %v625, %v806
      %808 = vmatmul.bf16.gmra.mxu0 %v745
      %v809 = vpop.f32.mrf.mxu0
      %v810 = vadd.f32 %v625, %v809
      %v811 = vpop.f32.mrf.mxu0
      %v812 = vadd.f32 %v625, %v811
      %813 = vmatmul.bf16.gmra.mxu0 %v748
      %v814 = vpop.f32.mrf.mxu0
      %v815 = vadd.f32 %v625, %v814
      %v816 = vpop.f32.mrf.mxu0
      %v817 = vadd.f32 %v625, %v816
      %818 = vmatmul.bf16.gmra.mxu0 %v751
      %v819 = vpop.f32.mrf.mxu0
      %v820 = vadd.f32 %v625, %v819
      %v821 = vpop.f32.mrf.mxu0
      %v822 = vadd.f32 %v625, %v821
      %823 = vmatmul.bf16.gmra.mxu0 %v754
      %v824 = vpop.f32.mrf.mxu0
      %v825 = vadd.f32 %v625, %v824
      %v826 = vpop.f32.mrf.mxu0
      %v827 = vadd.f32 %v625, %v826
      %828 = vmatmul.bf16.gmra.mxu0 %v757
      %v829 = vpop.f32.mrf.mxu0
      %v830 = vadd.f32 %v625, %v829
      %v831 = vpop.f32.mrf.mxu0
      %v832 = vadd.f32 %v625, %v831
      %833 = vmatmul.bf16.gmra.mxu0 %v760
      %v834 = vpop.f32.mrf.mxu0
      %v835 = vadd.f32 %v625, %v834
      %v836 = vpop.f32.mrf.mxu0
      %v837 = vadd.f32 %v625, %v836
      %838 = vmatmul.bf16.gmra.mxu0 %v763
      %v839 = vpop.f32.mrf.mxu0
      %v840 = vadd.f32 %v625, %v839
      %v841 = vpop.f32.mrf.mxu0
      %v842 = vadd.f32 %v625, %v841
      %843 = vmatmul.bf16.gmra.mxu0 %v766
      %v844 = vpop.f32.mrf.mxu0
      %v845 = vadd.f32 %v625, %v844
      %v846 = vpop.f32.mrf.mxu0
      %v847 = vadd.f32 %v625, %v846
      %848 = vmatmul.bf16.gmra.mxu0 %v769
      %v849 = vpop.f32.mrf.mxu0
      %v850 = vadd.f32 %v625, %v849
      %v851 = vpop.f32.mrf.mxu0
      %v852 = vadd.f32 %v625, %v851
      %853 = vmatmul.bf16.gmra.mxu0 %v772
      %v854 = vpop.f32.mrf.mxu0
      %v855 = vadd.f32 %v625, %v854
      %v856 = vpop.f32.mrf.mxu0
      %v857 = vadd.f32 %v625, %v856
      %858 = vmatmul.bf16.gmra.mxu0 %v775
      %v859 = vpop.f32.mrf.mxu0
      %v860 = vadd.f32 %v625, %v859
      %v861 = vpop.f32.mrf.mxu0
      %v862 = vadd.f32 %v625, %v861
      %863 = vmatmul.bf16.gmra.mxu0 %v778
      %v864 = vpop.f32.mrf.mxu0
      %v865 = vadd.f32 %v625, %v864
      %v866 = vpop.f32.mrf.mxu0
      %v867 = vadd.f32 %v625, %v866
      %868 = vdwg.mxu0
      %v869 = vmax.f32 %v790, 0.0
      %v870 = vmax.f32 %v792, 0.0
      %v871 = vmax.f32 %v795, 0.0
      %v872 = vmax.f32 %v797, 0.0
      %v873 = vmax.f32 %v800, 0.0
      %v874 = vmax.f32 %v802, 0.0
      %v875 = vmax.f32 %v805, 0.0
      %v876 = vmax.f32 %v807, 0.0
      %v877 = vmax.f32 %v810, 0.0
      %v878 = vmax.f32 %v812, 0.0
      %v879 = vmax.f32 %v815, 0.0
      %v880 = vmax.f32 %v817, 0.0
      %v881 = vmax.f32 %v820, 0.0
      %v882 = vmax.f32 %v822, 0.0
      %v883 = vmax.f32 %v825, 0.0
      %v884 = vmax.f32 %v827, 0.0
      %v885 = vmax.f32 %v830, 0.0
      %v886 = vmax.f32 %v832, 0.0
      %v887 = vmax.f32 %v835, 0.0
      %v888 = vmax.f32 %v837, 0.0
      %v889 = vmax.f32 %v840, 0.0
      %v890 = vmax.f32 %v842, 0.0
      %v891 = vmax.f32 %v845, 0.0
      %v892 = vmax.f32 %v847, 0.0
      %v893 = vmax.f32 %v850, 0.0
      %v894 = vmax.f32 %v852, 0.0
      %v895 = vmax.f32 %v855, 0.0
      %v896 = vmax.f32 %v857, 0.0
      %v897 = vmax.f32 %v860, 0.0
      %v898 = vmax.f32 %v862, 0.0
      %v899 = vmax.f32 %v865, 0.0
      %v900 = vmax.f32 %v867, 0.0
      %v901 = vunpack.c.l.bf16 %v523
      %v902 = vunpack.c.l.bf16 %v524
      %v903 = vunpack.c.l.bf16 %v525
      %v904 = vunpack.c.l.bf16 %v526
      %v905 = vunpack.c.l.bf16 %v527
      %v906 = vunpack.c.l.bf16 %v528
      %v907 = vunpack.c.l.bf16 %v529
      %v908 = vunpack.c.l.bf16 %v530
      %v909 = vunpack.c.l.bf16 %v531
      %v910 = vunpack.c.l.bf16 %v532
      %v911 = vunpack.c.l.bf16 %v533
      %v912 = vunpack.c.l.bf16 %v534
      %v913 = vunpack.c.l.bf16 %v535
      %v914 = vunpack.c.l.bf16 %v536
      %v915 = vunpack.c.l.bf16 %v537
      %v916 = vunpack.c.l.bf16 %v538
      %v917 = vunpack.c.l.bf16 %v539
      %v918 = vunpack.c.l.bf16 %v540
      %v919 = vunpack.c.l.bf16 %v541
      %v920 = vunpack.c.l.bf16 %v542
      %v921 = vunpack.c.l.bf16 %v543
      %v922 = vunpack.c.l.bf16 %v544
      %v923 = vunpack.c.l.bf16 %v545
      %v924 = vunpack.c.l.bf16 %v546
      %v925 = vunpack.c.l.bf16 %v547
      %v926 = vunpack.c.l.bf16 %v548
      %v927 = vunpack.c.l.bf16 %v549
      %v928 = vunpack.c.l.bf16 %v550
      %v929 = vunpack.c.l.bf16 %v551
      %v930 = vunpack.c.l.bf16 %v552
      %v931 = vunpack.c.l.bf16 %v553
      %v932 = vunpack.c.l.bf16 %v554
      %v933 = vadd.f32 %v869, %v901
      %v934 = vadd.f32 %v870, %v902
      %v935 = vadd.f32 %v871, %v903
      %v936 = vadd.f32 %v872, %v904
      %v937 = vadd.f32 %v873, %v905
      %v938 = vadd.f32 %v874, %v906
      %v939 = vadd.f32 %v875, %v907
      %v940 = vadd.f32 %v876, %v908
      %v941 = vadd.f32 %v877, %v909
      %v942 = vadd.f32 %v878, %v910
      %v943 = vadd.f32 %v879, %v911
      %v944 = vadd.f32 %v880, %v912
      %v945 = vadd.f32 %v881, %v913
      %v946 = vadd.f32 %v882, %v914
      %v947 = vadd.f32 %v883, %v915
      %v948 = vadd.f32 %v884, %v916
      %v949 = vadd.f32 %v885, %v917
      %v950 = vadd.f32 %v886, %v918
      %v951 = vadd.f32 %v887, %v919
      %v952 = vadd.f32 %v888, %v920
      %v953 = vadd.f32 %v889, %v921
      %v954 = vadd.f32 %v890, %v922
      %v955 = vadd.f32 %v891, %v923
      %v956 = vadd.f32 %v892, %v924
      %v957 = vadd.f32 %v893, %v925
      %v958 = vadd.f32 %v894, %v926
      %v959 = vadd.f32 %v895, %v927
      %v960 = vadd.f32 %v896, %v928
      %v961 = vadd.f32 %v897, %v929
      %v962 = vadd.f32 %v898, %v930
      %v963 = vadd.f32 %v899, %v931
      %v964 = vadd.f32 %v900, %v932
      %v965 = vunpack.c.l.bf16 %v491
      %v966 = vunpack.c.l.bf16 %v492
      %v967 = vunpack.c.l.bf16 %v493
      %v968 = vunpack.c.l.bf16 %v494
      %v969 = vunpack.c.l.bf16 %v495
      %v970 = vunpack.c.l.bf16 %v496
      %v971 = vunpack.c.l.bf16 %v497
      %v972 = vunpack.c.l.bf16 %v498
      %v973 = vunpack.c.l.bf16 %v499
      %v974 = vunpack.c.l.bf16 %v500
      %v975 = vunpack.c.l.bf16 %v501
      %v976 = vunpack.c.l.bf16 %v502
      %v977 = vunpack.c.l.bf16 %v503
      %v978 = vunpack.c.l.bf16 %v504
      %v979 = vunpack.c.l.bf16 %v505
      %v980 = vunpack.c.l.bf16 %v506
      %v981 = vunpack.c.l.bf16 %v507
      %v982 = vunpack.c.l.bf16 %v508
      %v983 = vunpack.c.l.bf16 %v509
      %v984 = vunpack.c.l.bf16 %v510
      %v985 = vunpack.c.l.bf16 %v511
      %v986 = vunpack.c.l.bf16 %v512
      %v987 = vunpack.c.l.bf16 %v513
      %v988 = vunpack.c.l.bf16 %v514
      %v989 = vunpack.c.l.bf16 %v515
      %v990 = vunpack.c.l.bf16 %v516
      %v991 = vunpack.c.l.bf16 %v517
      %v992 = vunpack.c.l.bf16 %v518
      %v993 = vunpack.c.l.bf16 %v519
      %v994 = vunpack.c.l.bf16 %v520
      %v995 = vunpack.c.l.bf16 %v521
      %v996 = vunpack.c.l.bf16 %v522
      %v997 = vadd.f32 %v965, %v933
      %v998 = vadd.f32 %v966, %v934
      %v999 = vadd.f32 %v967, %v935
      %v1000 = vadd.f32 %v968, %v936
      %v1001 = vadd.f32 %v969, %v937
      %v1002 = vadd.f32 %v970, %v938
      %v1003 = vadd.f32 %v971, %v939
      %v1004 = vadd.f32 %v972, %v940
      %v1005 = vadd.f32 %v973, %v941
      %v1006 = vadd.f32 %v974, %v942
      %v1007 = vadd.f32 %v975, %v943
      %v1008 = vadd.f32 %v976, %v944
      %v1009 = vadd.f32 %v977, %v945
      %v1010 = vadd.f32 %v978, %v946
      %v1011 = vadd.f32 %v979, %v947
      %v1012 = vadd.f32 %v980, %v948
      %v1013 = vadd.f32 %v981, %v949
      %v1014 = vadd.f32 %v982, %v950
      %v1015 = vadd.f32 %v983, %v951
      %v1016 = vadd.f32 %v984, %v952
      %v1017 = vadd.f32 %v985, %v953
      %v1018 = vadd.f32 %v986, %v954
      %v1019 = vadd.f32 %v987, %v955
      %v1020 = vadd.f32 %v988, %v956
      %v1021 = vadd.f32 %v989, %v957
      %v1022 = vadd.f32 %v990, %v958
      %v1023 = vadd.f32 %v991, %v959
      %v1024 = vadd.f32 %v992, %v960
      %v1025 = vadd.f32 %v993, %v961
      %v1026 = vadd.f32 %v994, %v962
      %v1027 = vadd.f32 %v995, %v963
      %v1028 = vadd.f32 %v996, %v964
      %v1029 = vpack.c.bf16 %v998, %v997
      %v1030 = vpack.c.bf16 %v1000, %v999
      %v1031 = vpack.c.bf16 %v1002, %v1001
      %v1032 = vpack.c.bf16 %v1004, %v1003
      %v1033 = vpack.c.bf16 %v1006, %v1005
      %v1034 = vpack.c.bf16 %v1008, %v1007
      %v1035 = vpack.c.bf16 %v1010, %v1009
      %v1036 = vpack.c.bf16 %v1012, %v1011
      %v1037 = vpack.c.bf16 %v1014, %v1013
      %v1038 = vpack.c.bf16 %v1016, %v1015
      %v1039 = vpack.c.bf16 %v1018, %v1017
      %v1040 = vpack.c.bf16 %v1020, %v1019
      %v1041 = vpack.c.bf16 %v1022, %v1021
      %v1042 = vpack.c.bf16 %v1024, %v1023
      %v1043 = vpack.c.bf16 %v1026, %v1025
      %v1044 = vpack.c.bf16 %v1028, %v1027
      %v1046 = vperm.slane %v604, 0
      %v1056 = vunpack.c.l.b16 %v596
      %v1057 = vunpack.c.l.b16 %v597
      %v1058 = vunpack.c.l.b16 %v598
      %v1059 = vunpack.c.l.b16 %v599
      %v1060 = vunpack.c.l.b16 %v600
      %v1061 = vunpack.c.l.b16 %v601
      %v1062 = vunpack.c.l.b16 %v602
      %v1063 = vunpack.c.l.b16 %v603
      %v1064 = vpack.c.b16 %v1057, %v1056
      %v1065 = vpack.c.b16 %v1059, %v1058
      %v1066 = vpack.c.b16 %v1061, %v1060
      %v1067 = vpack.c.b16 %v1063, %v1062
      %v1073 = vsel %vm731, %v1029, 0
      %v1076 = vsel %vm731, %v1030, 0
      %v1079 = vsel %vm731, %v1031, 0
      %v1082 = vsel %vm731, %v1032, 0
      %v1085 = vsel %vm731, %v1033, 0
      %v1088 = vsel %vm731, %v1034, 0
      %v1091 = vsel %vm731, %v1035, 0
      %v1094 = vsel %vm731, %v1036, 0
      %v1097 = vsel %vm731, %v1037, 0
      %v1100 = vsel %vm731, %v1038, 0
      %v1103 = vsel %vm731, %v1039, 0
      %v1106 = vsel %vm731, %v1040, 0
      %v1109 = vsel %vm731, %v1041, 0
      %v1112 = vsel %vm731, %v1042, 0
      %v1115 = vsel %vm731, %v1043, 0
      %v1118 = vsel %vm731, %v1044, 0
      %1120 = vmatpush.bf16.msra.mxu0 0
      %1121 = vmatpush.bf16.msra.mxu0 0
      %1122 = vmatpush.bf16.msra.mxu0 0
      %1123 = vmatpush.bf16.msra.mxu0 0
      %1124 = vmatpush.bf16.msra.mxu0 %v1067
      %1125 = vmatpush.bf16.msra.mxu0 %v1066
      %1126 = vmatpush.bf16.msra.mxu0 %v1065
      %1127 = vmatpush.bf16.msra.mxu0 %v1064
      %1128 = vmatmul.bf16.gmra.mxu0 %v1073
      %v1129 = vpop.f32.mrf.mxu0
      %v1130 = vadd.f32 %v1046, %v1129
      %v1131 = vpop.f32.mrf.mxu0
      %v1132 = vadd.f32 %v1046, %v1131
      %1133 = vmatmul.bf16.gmra.mxu0 %v1076
      %v1134 = vpop.f32.mrf.mxu0
      %v1135 = vadd.f32 %v1046, %v1134
      %v1136 = vpop.f32.mrf.mxu0
      %v1137 = vadd.f32 %v1046, %v1136
      %1138 = vmatmul.bf16.gmra.mxu0 %v1079
      %v1139 = vpop.f32.mrf.mxu0
      %v1140 = vadd.f32 %v1046, %v1139
      %v1141 = vpop.f32.mrf.mxu0
      %v1142 = vadd.f32 %v1046, %v1141
      %1143 = vmatmul.bf16.gmra.mxu0 %v1082
      %v1144 = vpop.f32.mrf.mxu0
      %v1145 = vadd.f32 %v1046, %v1144
      %v1146 = vpop.f32.mrf.mxu0
      %v1147 = vadd.f32 %v1046, %v1146
      %1148 = vmatmul.bf16.gmra.mxu0 %v1085
      %v1149 = vpop.f32.mrf.mxu0
      %v1150 = vadd.f32 %v1046, %v1149
      %v1151 = vpop.f32.mrf.mxu0
      %v1152 = vadd.f32 %v1046, %v1151
      %1153 = vmatmul.bf16.gmra.mxu0 %v1088
      %v1154 = vpop.f32.mrf.mxu0
      %v1155 = vadd.f32 %v1046, %v1154
      %v1156 = vpop.f32.mrf.mxu0
      %v1157 = vadd.f32 %v1046, %v1156
      %1158 = vmatmul.bf16.gmra.mxu0 %v1091
      %v1159 = vpop.f32.mrf.mxu0
      %v1160 = vadd.f32 %v1046, %v1159
      %v1161 = vpop.f32.mrf.mxu0
      %v1162 = vadd.f32 %v1046, %v1161
      %1163 = vmatmul.bf16.gmra.mxu0 %v1094
      %v1164 = vpop.f32.mrf.mxu0
      %v1165 = vadd.f32 %v1046, %v1164
      %v1166 = vpop.f32.mrf.mxu0
      %v1167 = vadd.f32 %v1046, %v1166
      %1168 = vmatmul.bf16.gmra.mxu0 %v1097
      %v1169 = vpop.f32.mrf.mxu0
      %v1170 = vadd.f32 %v1046, %v1169
      %v1171 = vpop.f32.mrf.mxu0
      %v1172 = vadd.f32 %v1046, %v1171
      %1173 = vmatmul.bf16.gmra.mxu0 %v1100
      %v1174 = vpop.f32.mrf.mxu0
      %v1175 = vadd.f32 %v1046, %v1174
      %v1176 = vpop.f32.mrf.mxu0
      %v1177 = vadd.f32 %v1046, %v1176
      %1178 = vmatmul.bf16.gmra.mxu0 %v1103
      %v1179 = vpop.f32.mrf.mxu0
      %v1180 = vadd.f32 %v1046, %v1179
      %v1181 = vpop.f32.mrf.mxu0
      %v1182 = vadd.f32 %v1046, %v1181
      %1183 = vmatmul.bf16.gmra.mxu0 %v1106
      %v1184 = vpop.f32.mrf.mxu0
      %v1185 = vadd.f32 %v1046, %v1184
      %v1186 = vpop.f32.mrf.mxu0
      %v1187 = vadd.f32 %v1046, %v1186
      %1188 = vmatmul.bf16.gmra.mxu0 %v1109
      %v1189 = vpop.f32.mrf.mxu0
      %v1190 = vadd.f32 %v1046, %v1189
      %v1191 = vpop.f32.mrf.mxu0
      %v1192 = vadd.f32 %v1046, %v1191
      %1193 = vmatmul.bf16.gmra.mxu0 %v1112
      %v1194 = vpop.f32.mrf.mxu0
      %v1195 = vadd.f32 %v1046, %v1194
      %v1196 = vpop.f32.mrf.mxu0
      %v1197 = vadd.f32 %v1046, %v1196
      %1198 = vmatmul.bf16.gmra.mxu0 %v1115
      %v1199 = vpop.f32.mrf.mxu0
      %v1200 = vadd.f32 %v1046, %v1199
      %v1201 = vpop.f32.mrf.mxu0
      %v1202 = vadd.f32 %v1046, %v1201
      %1203 = vmatmul.bf16.gmra.mxu0 %v1118
      %v1204 = vpop.f32.mrf.mxu0
      %v1205 = vadd.f32 %v1046, %v1204
      %v1206 = vpop.f32.mrf.mxu0
      %v1207 = vadd.f32 %v1046, %v1206
      %1208 = vdwg.mxu0
      %v1209 = vmax.f32 %v1130, 0.0
      %v1210 = vmax.f32 %v1132, 0.0
      %v1211 = vmax.f32 %v1135, 0.0
      %v1212 = vmax.f32 %v1137, 0.0
      %v1213 = vmax.f32 %v1140, 0.0
      %v1214 = vmax.f32 %v1142, 0.0
      %v1215 = vmax.f32 %v1145, 0.0
      %v1216 = vmax.f32 %v1147, 0.0
      %v1217 = vmax.f32 %v1150, 0.0
      %v1218 = vmax.f32 %v1152, 0.0
      %v1219 = vmax.f32 %v1155, 0.0
      %v1220 = vmax.f32 %v1157, 0.0
      %v1221 = vmax.f32 %v1160, 0.0
      %v1222 = vmax.f32 %v1162, 0.0
      %v1223 = vmax.f32 %v1165, 0.0
      %v1224 = vmax.f32 %v1167, 0.0
      %v1225 = vmax.f32 %v1170, 0.0
      %v1226 = vmax.f32 %v1172, 0.0
      %v1227 = vmax.f32 %v1175, 0.0
      %v1228 = vmax.f32 %v1177, 0.0
      %v1229 = vmax.f32 %v1180, 0.0
      %v1230 = vmax.f32 %v1182, 0.0
      %v1231 = vmax.f32 %v1185, 0.0
      %v1232 = vmax.f32 %v1187, 0.0
      %v1233 = vmax.f32 %v1190, 0.0
      %v1234 = vmax.f32 %v1192, 0.0
      %v1235 = vmax.f32 %v1195, 0.0
      %v1236 = vmax.f32 %v1197, 0.0
      %v1237 = vmax.f32 %v1200, 0.0
      %v1238 = vmax.f32 %v1202, 0.0
      %v1239 = vmax.f32 %v1205, 0.0
      %v1240 = vmax.f32 %v1207, 0.0
      %v1241 = vpack.c.bf16 %v1210, %v1209
      %v1242 = vpack.c.bf16 %v1212, %v1211
      %v1243 = vpack.c.bf16 %v1214, %v1213
      %v1244 = vpack.c.bf16 %v1216, %v1215
      %v1245 = vpack.c.bf16 %v1218, %v1217
      %v1246 = vpack.c.bf16 %v1220, %v1219
      %v1247 = vpack.c.bf16 %v1222, %v1221
      %v1248 = vpack.c.bf16 %v1224, %v1223
      %v1249 = vpack.c.bf16 %v1226, %v1225
      %v1250 = vpack.c.bf16 %v1228, %v1227
      %v1251 = vpack.c.bf16 %v1230, %v1229
      %v1252 = vpack.c.bf16 %v1232, %v1231
      %v1253 = vpack.c.bf16 %v1234, %v1233
      %v1254 = vpack.c.bf16 %v1236, %v1235
      %v1255 = vpack.c.bf16 %v1238, %v1237
      %v1256 = vpack.c.bf16 %v1240, %v1239
      %v1258 = vperm.slane %v613, 0
      %v1268 = vunpack.c.l.b16 %v605
      %v1269 = vunpack.c.l.b16 %v606
      %v1270 = vunpack.c.l.b16 %v607
      %v1271 = vunpack.c.l.b16 %v608
      %v1272 = vunpack.c.l.b16 %v609
      %v1273 = vunpack.c.l.b16 %v610
      %v1274 = vunpack.c.l.b16 %v611
      %v1275 = vunpack.c.l.b16 %v612
      %v1276 = vpack.c.b16 %v1269, %v1268
      %v1277 = vpack.c.b16 %v1271, %v1270
      %v1278 = vpack.c.b16 %v1273, %v1272
      %v1279 = vpack.c.b16 %v1275, %v1274
      %v1285 = vsel %vm731, %v1241, 0
      %v1288 = vsel %vm731, %v1242, 0
      %v1291 = vsel %vm731, %v1243, 0
      %v1294 = vsel %vm731, %v1244, 0
      %v1297 = vsel %vm731, %v1245, 0
      %v1300 = vsel %vm731, %v1246, 0
      %v1303 = vsel %vm731, %v1247, 0
      %v1306 = vsel %vm731, %v1248, 0
      %v1309 = vsel %vm731, %v1249, 0
      %v1312 = vsel %vm731, %v1250, 0
      %v1315 = vsel %vm731, %v1251, 0
      %v1318 = vsel %vm731, %v1252, 0
      %v1321 = vsel %vm731, %v1253, 0
      %v1324 = vsel %vm731, %v1254, 0
      %v1327 = vsel %vm731, %v1255, 0
      %v1330 = vsel %vm731, %v1256, 0
      %1332 = vmatpush.bf16.msra.mxu0 0
      %1333 = vmatpush.bf16.msra.mxu0 0
      %1334 = vmatpush.bf16.msra.mxu0 0
      %1335 = vmatpush.bf16.msra.mxu0 0
      %1336 = vmatpush.bf16.msra.mxu0 %v1279
      %1337 = vmatpush.bf16.msra.mxu0 %v1278
      %1338 = vmatpush.bf16.msra.mxu0 %v1277
      %1339 = vmatpush.bf16.msra.mxu0 %v1276
      %1340 = vmatmul.bf16.gmra.mxu0 %v1285
      %v1341 = vpop.f32.mrf.mxu0
      %v1342 = vadd.f32 %v1258, %v1341
      %v1343 = vpop.f32.mrf.mxu0
      %v1344 = vadd.f32 %v1258, %v1343
      %1345 = vmatmul.bf16.gmra.mxu0 %v1288
      %v1346 = vpop.f32.mrf.mxu0
      %v1347 = vadd.f32 %v1258, %v1346
      %v1348 = vpop.f32.mrf.mxu0
      %v1349 = vadd.f32 %v1258, %v1348
      %1350 = vmatmul.bf16.gmra.mxu0 %v1291
      %v1351 = vpop.f32.mrf.mxu0
      %v1352 = vadd.f32 %v1258, %v1351
      %v1353 = vpop.f32.mrf.mxu0
      %v1354 = vadd.f32 %v1258, %v1353
      %1355 = vmatmul.bf16.gmra.mxu0 %v1294
      %v1356 = vpop.f32.mrf.mxu0
      %v1357 = vadd.f32 %v1258, %v1356
      %v1358 = vpop.f32.mrf.mxu0
      %v1359 = vadd.f32 %v1258, %v1358
      %1360 = vmatmul.bf16.gmra.mxu0 %v1297
      %v1361 = vpop.f32.mrf.mxu0
      %v1362 = vadd.f32 %v1258, %v1361
      %v1363 = vpop.f32.mrf.mxu0
      %v1364 = vadd.f32 %v1258, %v1363
      %1365 = vmatmul.bf16.gmra.mxu0 %v1300
      %v1366 = vpop.f32.mrf.mxu0
      %v1367 = vadd.f32 %v1258, %v1366
      %v1368 = vpop.f32.mrf.mxu0
      %v1369 = vadd.f32 %v1258, %v1368
      %1370 = vmatmul.bf16.gmra.mxu0 %v1303
      %v1371 = vpop.f32.mrf.mxu0
      %v1372 = vadd.f32 %v1258, %v1371
      %v1373 = vpop.f32.mrf.mxu0
      %v1374 = vadd.f32 %v1258, %v1373
      %1375 = vmatmul.bf16.gmra.mxu0 %v1306
      %v1376 = vpop.f32.mrf.mxu0
      %v1377 = vadd.f32 %v1258, %v1376
      %v1378 = vpop.f32.mrf.mxu0
      %v1379 = vadd.f32 %v1258, %v1378
      %1380 = vmatmul.bf16.gmra.mxu0 %v1309
      %v1381 = vpop.f32.mrf.mxu0
      %v1382 = vadd.f32 %v1258, %v1381
      %v1383 = vpop.f32.mrf.mxu0
      %v1384 = vadd.f32 %v1258, %v1383
      %1385 = vmatmul.bf16.gmra.mxu0 %v1312
      %v1386 = vpop.f32.mrf.mxu0
      %v1387 = vadd.f32 %v1258, %v1386
      %v1388 = vpop.f32.mrf.mxu0
      %v1389 = vadd.f32 %v1258, %v1388
      %1390 = vmatmul.bf16.gmra.mxu0 %v1315
      %v1391 = vpop.f32.mrf.mxu0
      %v1392 = vadd.f32 %v1258, %v1391
      %v1393 = vpop.f32.mrf.mxu0
      %v1394 = vadd.f32 %v1258, %v1393
      %1395 = vmatmul.bf16.gmra.mxu0 %v1318
      %v1396 = vpop.f32.mrf.mxu0
      %v1397 = vadd.f32 %v1258, %v1396
      %v1398 = vpop.f32.mrf.mxu0
      %v1399 = vadd.f32 %v1258, %v1398
      %1400 = vmatmul.bf16.gmra.mxu0 %v1321
      %v1401 = vpop.f32.mrf.mxu0
      %v1402 = vadd.f32 %v1258, %v1401
      %v1403 = vpop.f32.mrf.mxu0
      %v1404 = vadd.f32 %v1258, %v1403
      %1405 = vmatmul.bf16.gmra.mxu0 %v1324
      %v1406 = vpop.f32.mrf.mxu0
      %v1407 = vadd.f32 %v1258, %v1406
      %v1408 = vpop.f32.mrf.mxu0
      %v1409 = vadd.f32 %v1258, %v1408
      %1410 = vmatmul.bf16.gmra.mxu0 %v1327
      %v1411 = vpop.f32.mrf.mxu0
      %v1412 = vadd.f32 %v1258, %v1411
      %v1413 = vpop.f32.mrf.mxu0
      %v1414 = vadd.f32 %v1258, %v1413
      %1415 = vmatmul.bf16.gmra.mxu0 %v1330
      %v1416 = vpop.f32.mrf.mxu0
      %v1417 = vadd.f32 %v1258, %v1416
      %v1418 = vpop.f32.mrf.mxu0
      %v1419 = vadd.f32 %v1258, %v1418
      %1420 = vdwg.mxu0
      %v1421 = vmax.f32 %v1342, 0.0
      %v1422 = vmax.f32 %v1344, 0.0
      %v1423 = vmax.f32 %v1347, 0.0
      %v1424 = vmax.f32 %v1349, 0.0
      %v1425 = vmax.f32 %v1352, 0.0
      %v1426 = vmax.f32 %v1354, 0.0
      %v1427 = vmax.f32 %v1357, 0.0
      %v1428 = vmax.f32 %v1359, 0.0
      %v1429 = vmax.f32 %v1362, 0.0
      %v1430 = vmax.f32 %v1364, 0.0
      %v1431 = vmax.f32 %v1367, 0.0
      %v1432 = vmax.f32 %v1369, 0.0
      %v1433 = vmax.f32 %v1372, 0.0
      %v1434 = vmax.f32 %v1374, 0.0
      %v1435 = vmax.f32 %v1377, 0.0
      %v1436 = vmax.f32 %v1379, 0.0
      %v1437 = vmax.f32 %v1382, 0.0
      %v1438 = vmax.f32 %v1384, 0.0
      %v1439 = vmax.f32 %v1387, 0.0
      %v1440 = vmax.f32 %v1389, 0.0
      %v1441 = vmax.f32 %v1392, 0.0
      %v1442 = vmax.f32 %v1394, 0.0
      %v1443 = vmax.f32 %v1397, 0.0
      %v1444 = vmax.f32 %v1399, 0.0
      %v1445 = vmax.f32 %v1402, 0.0
      %v1446 = vmax.f32 %v1404, 0.0
      %v1447 = vmax.f32 %v1407, 0.0
      %v1448 = vmax.f32 %v1409, 0.0
      %v1449 = vmax.f32 %v1412, 0.0
      %v1450 = vmax.f32 %v1414, 0.0
      %v1451 = vmax.f32 %v1417, 0.0
      %v1452 = vmax.f32 %v1419, 0.0
      %v1453 = vunpack.c.l.bf16 %v555
      %v1454 = vunpack.c.l.bf16 %v556
      %v1455 = vunpack.c.l.bf16 %v557
      %v1456 = vunpack.c.l.bf16 %v558
      %v1457 = vunpack.c.l.bf16 %v559
      %v1458 = vunpack.c.l.bf16 %v560
      %v1459 = vunpack.c.l.bf16 %v561
      %v1460 = vunpack.c.l.bf16 %v562
      %v1461 = vunpack.c.l.bf16 %v563
      %v1462 = vunpack.c.l.bf16 %v564
      %v1463 = vunpack.c.l.bf16 %v565
      %v1464 = vunpack.c.l.bf16 %v566
      %v1465 = vunpack.c.l.bf16 %v567
      %v1466 = vunpack.c.l.bf16 %v568
      %v1467 = vunpack.c.l.bf16 %v569
      %v1468 = vunpack.c.l.bf16 %v570
      %v1469 = vunpack.c.l.bf16 %v571
      %v1470 = vunpack.c.l.bf16 %v572
      %v1471 = vunpack.c.l.bf16 %v573
      %v1472 = vunpack.c.l.bf16 %v574
      %v1473 = vunpack.c.l.bf16 %v575
      %v1474 = vunpack.c.l.bf16 %v576
      %v1475 = vunpack.c.l.bf16 %v577
      %v1476 = vunpack.c.l.bf16 %v578
      %v1477 = vunpack.c.l.bf16 %v579
      %v1478 = vunpack.c.l.bf16 %v580
      %v1479 = vunpack.c.l.bf16 %v581
      %v1480 = vunpack.c.l.bf16 %v582
      %v1481 = vunpack.c.l.bf16 %v583
      %v1482 = vunpack.c.l.bf16 %v584
      %v1483 = vunpack.c.l.bf16 %v585
      %v1484 = vunpack.c.l.bf16 %v586
      %v1485 = vadd.f32 %v1421, %v1453
      %v1486 = vadd.f32 %v1422, %v1454
      %v1487 = vadd.f32 %v1423, %v1455
      %v1488 = vadd.f32 %v1424, %v1456
      %v1489 = vadd.f32 %v1425, %v1457
      %v1490 = vadd.f32 %v1426, %v1458
      %v1491 = vadd.f32 %v1427, %v1459
      %v1492 = vadd.f32 %v1428, %v1460
      %v1493 = vadd.f32 %v1429, %v1461
      %v1494 = vadd.f32 %v1430, %v1462
      %v1495 = vadd.f32 %v1431, %v1463
      %v1496 = vadd.f32 %v1432, %v1464
      %v1497 = vadd.f32 %v1433, %v1465
      %v1498 = vadd.f32 %v1434, %v1466
      %v1499 = vadd.f32 %v1435, %v1467
      %v1500 = vadd.f32 %v1436, %v1468
      %v1501 = vadd.f32 %v1437, %v1469
      %v1502 = vadd.f32 %v1438, %v1470
      %v1503 = vadd.f32 %v1439, %v1471
      %v1504 = vadd.f32 %v1440, %v1472
      %v1505 = vadd.f32 %v1441, %v1473
      %v1506 = vadd.f32 %v1442, %v1474
      %v1507 = vadd.f32 %v1443, %v1475
      %v1508 = vadd.f32 %v1444, %v1476
      %v1509 = vadd.f32 %v1445, %v1477
      %v1510 = vadd.f32 %v1446, %v1478
      %v1511 = vadd.f32 %v1447, %v1479
      %v1512 = vadd.f32 %v1448, %v1480
      %v1513 = vadd.f32 %v1449, %v1481
      %v1514 = vadd.f32 %v1450, %v1482
      %v1515 = vadd.f32 %v1451, %v1483
      %v1516 = vadd.f32 %v1452, %v1484
      %v1517 = vpack.c.bf16 %v1486, %v1485
      %v1518 = vpack.c.bf16 %v1488, %v1487
      %v1519 = vpack.c.bf16 %v1490, %v1489
      %v1520 = vpack.c.bf16 %v1492, %v1491
      %v1521 = vpack.c.bf16 %v1494, %v1493
      %v1522 = vpack.c.bf16 %v1496, %v1495
      %v1523 = vpack.c.bf16 %v1498, %v1497
      %v1524 = vpack.c.bf16 %v1500, %v1499
      %v1525 = vpack.c.bf16 %v1502, %v1501
      %v1526 = vpack.c.bf16 %v1504, %v1503
      %v1527 = vpack.c.bf16 %v1506, %v1505
      %v1528 = vpack.c.bf16 %v1508, %v1507
      %v1529 = vpack.c.bf16 %v1510, %v1509
      %v1530 = vpack.c.bf16 %v1512, %v1511
      %v1531 = vpack.c.bf16 %v1514, %v1513
      %v1532 = vpack.c.bf16 %v1516, %v1515
      %v1534 = vperm.slane %v618, 0
      %v1540 = vunpack.c.l.b16 %v614
      %v1541 = vunpack.c.l.b16 %v615
      %v1542 = vunpack.c.l.b16 %v616
      %v1543 = vunpack.c.l.b16 %v617
      %v1544 = vpack.c.b16 %v1541, %v1540
      %v1545 = vpack.c.b16 %v1543, %v1542
      %vm1548 = vcmask 261120
      %v1550 = vsel %vm1548, %v1517, 0
      %v1553 = vsel %vm1548, %v1518, 0
      %v1556 = vsel %vm1548, %v1519, 0
      %v1559 = vsel %vm1548, %v1520, 0
      %v1562 = vsel %vm1548, %v1521, 0
      %v1565 = vsel %vm1548, %v1522, 0
      %v1568 = vsel %vm1548, %v1523, 0
      %v1571 = vsel %vm1548, %v1524, 0
      %v1574 = vsel %vm1548, %v1525, 0
      %v1577 = vsel %vm1548, %v1526, 0
      %v1580 = vsel %vm1548, %v1527, 0
      %v1583 = vsel %vm1548, %v1528, 0
      %v1586 = vsel %vm1548, %v1529, 0
      %v1589 = vsel %vm1548, %v1530, 0
      %v1592 = vsel %vm1548, %v1531, 0
      %v1595 = vsel %vm1548, %v1532, 0
      %1597 = vmatpush.bf16.msra.mxu0 0
      %1598 = vmatpush.bf16.msra.mxu0 0
      %1599 = vmatpush.bf16.msra.mxu0 0
      %1600 = vmatpush.bf16.msra.mxu0 0
      %1601 = vmatpush.bf16.msra.mxu0 0
      %1602 = vmatpush.bf16.msra.mxu0 0
      %1603 = vmatpush.bf16.msra.mxu0 %v1545
      %1604 = vmatpush.bf16.msra.mxu0 %v1544
      %1605 = vmatmul.bf16.gmra.mxu0 %v1550
      %v1606 = vpop.f32.mrf.mxu0
      %v1607 = vadd.f32 %v1534, %v1606
      %v1608 = vpop.f32.mrf.mxu0
      %v1609 = vadd.f32 %v1534, %v1608
      %1610 = vmatmul.bf16.gmra.mxu0 %v1553
      %v1611 = vpop.f32.mrf.mxu0
      %v1612 = vadd.f32 %v1534, %v1611
      %v1613 = vpop.f32.mrf.mxu0
      %v1614 = vadd.f32 %v1534, %v1613
      %1615 = vmatmul.bf16.gmra.mxu0 %v1556
      %v1616 = vpop.f32.mrf.mxu0
      %v1617 = vadd.f32 %v1534, %v1616
      %v1618 = vpop.f32.mrf.mxu0
      %v1619 = vadd.f32 %v1534, %v1618
      %1620 = vmatmul.bf16.gmra.mxu0 %v1559
      %v1621 = vpop.f32.mrf.mxu0
      %v1622 = vadd.f32 %v1534, %v1621
      %v1623 = vpop.f32.mrf.mxu0
      %v1624 = vadd.f32 %v1534, %v1623
      %1625 = vmatmul.bf16.gmra.mxu0 %v1562
      %v1626 = vpop.f32.mrf.mxu0
      %v1627 = vadd.f32 %v1534, %v1626
      %v1628 = vpop.f32.mrf.mxu0
      %v1629 = vadd.f32 %v1534, %v1628
      %1630 = vmatmul.bf16.gmra.mxu0 %v1565
      %v1631 = vpop.f32.mrf.mxu0
      %v1632 = vadd.f32 %v1534, %v1631
      %v1633 = vpop.f32.mrf.mxu0
      %v1634 = vadd.f32 %v1534, %v1633
      %1635 = vmatmul.bf16.gmra.mxu0 %v1568
      %v1636 = vpop.f32.mrf.mxu0
      %v1637 = vadd.f32 %v1534, %v1636
      %v1638 = vpop.f32.mrf.mxu0
      %v1639 = vadd.f32 %v1534, %v1638
      %1640 = vmatmul.bf16.gmra.mxu0 %v1571
      %v1641 = vpop.f32.mrf.mxu0
      %v1642 = vadd.f32 %v1534, %v1641
      %v1643 = vpop.f32.mrf.mxu0
      %v1644 = vadd.f32 %v1534, %v1643
      %1645 = vmatmul.bf16.gmra.mxu0 %v1574
      %v1646 = vpop.f32.mrf.mxu0
      %v1647 = vadd.f32 %v1534, %v1646
      %v1648 = vpop.f32.mrf.mxu0
      %v1649 = vadd.f32 %v1534, %v1648
      %1650 = vmatmul.bf16.gmra.mxu0 %v1577
      %v1651 = vpop.f32.mrf.mxu0
      %v1652 = vadd.f32 %v1534, %v1651
      %v1653 = vpop.f32.mrf.mxu0
      %v1654 = vadd.f32 %v1534, %v1653
      %1655 = vmatmul.bf16.gmra.mxu0 %v1580
      %v1656 = vpop.f32.mrf.mxu0
      %v1657 = vadd.f32 %v1534, %v1656
      %v1658 = vpop.f32.mrf.mxu0
      %v1659 = vadd.f32 %v1534, %v1658
      %1660 = vmatmul.bf16.gmra.mxu0 %v1583
      %v1661 = vpop.f32.mrf.mxu0
      %v1662 = vadd.f32 %v1534, %v1661
      %v1663 = vpop.f32.mrf.mxu0
      %v1664 = vadd.f32 %v1534, %v1663
      %1665 = vmatmul.bf16.gmra.mxu0 %v1586
      %v1666 = vpop.f32.mrf.mxu0
      %v1667 = vadd.f32 %v1534, %v1666
      %v1668 = vpop.f32.mrf.mxu0
      %v1669 = vadd.f32 %v1534, %v1668
      %1670 = vmatmul.bf16.gmra.mxu0 %v1589
      %v1671 = vpop.f32.mrf.mxu0
      %v1672 = vadd.f32 %v1534, %v1671
      %v1673 = vpop.f32.mrf.mxu0
      %v1674 = vadd.f32 %v1534, %v1673
      %1675 = vmatmul.bf16.gmra.mxu0 %v1592
      %v1676 = vpop.f32.mrf.mxu0
      %v1677 = vadd.f32 %v1534, %v1676
      %v1678 = vpop.f32.mrf.mxu0
      %v1679 = vadd.f32 %v1534, %v1678
      %1680 = vmatmul.bf16.gmra.mxu0 %v1595
      %v1681 = vpop.f32.mrf.mxu0
      %v1682 = vadd.f32 %v1534, %v1681
      %v1683 = vpop.f32.mrf.mxu0
      %v1684 = vadd.f32 %v1534, %v1683
      %1685 = vdwg.mxu0
      %v1686 = vmax.f32 %v1607, 0.0
      %v1687 = vmax.f32 %v1609, 0.0
      %v1688 = vmax.f32 %v1612, 0.0
      %v1689 = vmax.f32 %v1614, 0.0
      %v1690 = vmax.f32 %v1617, 0.0
      %v1691 = vmax.f32 %v1619, 0.0
      %v1692 = vmax.f32 %v1622, 0.0
      %v1693 = vmax.f32 %v1624, 0.0
      %v1694 = vmax.f32 %v1627, 0.0
      %v1695 = vmax.f32 %v1629, 0.0
      %v1696 = vmax.f32 %v1632, 0.0
      %v1697 = vmax.f32 %v1634, 0.0
      %v1698 = vmax.f32 %v1637, 0.0
      %v1699 = vmax.f32 %v1639, 0.0
      %v1700 = vmax.f32 %v1642, 0.0
      %v1701 = vmax.f32 %v1644, 0.0
      %v1702 = vmax.f32 %v1647, 0.0
      %v1703 = vmax.f32 %v1649, 0.0
      %v1704 = vmax.f32 %v1652, 0.0
      %v1705 = vmax.f32 %v1654, 0.0
      %v1706 = vmax.f32 %v1657, 0.0
      %v1707 = vmax.f32 %v1659, 0.0
      %v1708 = vmax.f32 %v1662, 0.0
      %v1709 = vmax.f32 %v1664, 0.0
      %v1710 = vmax.f32 %v1667, 0.0
      %v1711 = vmax.f32 %v1669, 0.0
      %v1712 = vmax.f32 %v1672, 0.0
      %v1713 = vmax.f32 %v1674, 0.0
      %v1714 = vmax.f32 %v1677, 0.0
      %v1715 = vmax.f32 %v1679, 0.0
      %v1716 = vmax.f32 %v1682, 0.0
      %v1717 = vmax.f32 %v1684, 0.0
      %v1718 = vpack.c.bf16 %v1687, %v1686
      %v1719 = vpack.c.bf16 %v1689, %v1688
      %v1720 = vpack.c.bf16 %v1691, %v1690
      %v1721 = vpack.c.bf16 %v1693, %v1692
      %v1722 = vpack.c.bf16 %v1695, %v1694
      %v1723 = vpack.c.bf16 %v1697, %v1696
      %v1724 = vpack.c.bf16 %v1699, %v1698
      %v1725 = vpack.c.bf16 %v1701, %v1700
      %v1726 = vpack.c.bf16 %v1703, %v1702
      %v1727 = vpack.c.bf16 %v1705, %v1704
      %v1728 = vpack.c.bf16 %v1707, %v1706
      %v1729 = vpack.c.bf16 %v1709, %v1708
      %v1730 = vpack.c.bf16 %v1711, %v1710
      %v1731 = vpack.c.bf16 %v1713, %v1712
      %v1732 = vpack.c.bf16 %v1715, %v1714
      %v1733 = vpack.c.bf16 %v1717, %v1716
      %v1735 = vperm.slane %v623, 0
      %v1741 = vunpack.c.l.b16 %v619
      %v1742 = vunpack.c.l.b16 %v620
      %v1743 = vunpack.c.l.b16 %v621
      %v1744 = vunpack.c.l.b16 %v622
      %v1745 = vpack.c.b16 %v1742, %v1741
      %v1746 = vpack.c.b16 %v1744, %v1743
      %v1750 = vsel %vm1548, %v1718, 0
      %v1753 = vsel %vm1548, %v1719, 0
      %v1756 = vsel %vm1548, %v1720, 0
      %v1759 = vsel %vm1548, %v1721, 0
      %v1762 = vsel %vm1548, %v1722, 0
      %v1765 = vsel %vm1548, %v1723, 0
      %v1768 = vsel %vm1548, %v1724, 0
      %v1771 = vsel %vm1548, %v1725, 0
      %v1774 = vsel %vm1548, %v1726, 0
      %v1777 = vsel %vm1548, %v1727, 0
      %v1780 = vsel %vm1548, %v1728, 0
      %v1783 = vsel %vm1548, %v1729, 0
      %v1786 = vsel %vm1548, %v1730, 0
      %v1789 = vsel %vm1548, %v1731, 0
      %v1792 = vsel %vm1548, %v1732, 0
      %v1795 = vsel %vm1548, %v1733, 0
      %1797 = vmatpush.bf16.msra.mxu0 0
      %1798 = vmatpush.bf16.msra.mxu0 0
      %1799 = vmatpush.bf16.msra.mxu0 0
      %1800 = vmatpush.bf16.msra.mxu0 0
      %1801 = vmatpush.bf16.msra.mxu0 0
      %1802 = vmatpush.bf16.msra.mxu0 0
      %1803 = vmatpush.bf16.msra.mxu0 %v1746
      %1804 = vmatpush.bf16.msra.mxu0 %v1745
      %1805 = vmatmul.bf16.gmra.mxu0 %v1750
      %v1806 = vpop.f32.mrf.mxu0
      %v1807 = vadd.f32 %v1735, %v1806
      %v1808 = vpop.f32.mrf.mxu0
      %v1809 = vadd.f32 %v1735, %v1808
      %1810 = vmatmul.bf16.gmra.mxu0 %v1753
      %v1811 = vpop.f32.mrf.mxu0
      %v1812 = vadd.f32 %v1735, %v1811
      %v1813 = vpop.f32.mrf.mxu0
      %v1814 = vadd.f32 %v1735, %v1813
      %1815 = vmatmul.bf16.gmra.mxu0 %v1756
      %v1816 = vpop.f32.mrf.mxu0
      %v1817 = vadd.f32 %v1735, %v1816
      %v1818 = vpop.f32.mrf.mxu0
      %v1819 = vadd.f32 %v1735, %v1818
      %1820 = vmatmul.bf16.gmra.mxu0 %v1759
      %v1821 = vpop.f32.mrf.mxu0
      %v1822 = vadd.f32 %v1735, %v1821
      %v1823 = vpop.f32.mrf.mxu0
      %v1824 = vadd.f32 %v1735, %v1823
      %1825 = vmatmul.bf16.gmra.mxu0 %v1762
      %v1826 = vpop.f32.mrf.mxu0
      %v1827 = vadd.f32 %v1735, %v1826
      %v1828 = vpop.f32.mrf.mxu0
      %v1829 = vadd.f32 %v1735, %v1828
      %1830 = vmatmul.bf16.gmra.mxu0 %v1765
      %v1831 = vpop.f32.mrf.mxu0
      %v1832 = vadd.f32 %v1735, %v1831
      %v1833 = vpop.f32.mrf.mxu0
      %v1834 = vadd.f32 %v1735, %v1833
      %1835 = vmatmul.bf16.gmra.mxu0 %v1768
      %v1836 = vpop.f32.mrf.mxu0
      %v1837 = vadd.f32 %v1735, %v1836
      %v1838 = vpop.f32.mrf.mxu0
      %v1839 = vadd.f32 %v1735, %v1838
      %1840 = vmatmul.bf16.gmra.mxu0 %v1771
      %v1841 = vpop.f32.mrf.mxu0
      %v1842 = vadd.f32 %v1735, %v1841
      %v1843 = vpop.f32.mrf.mxu0
      %v1844 = vadd.f32 %v1735, %v1843
      %1845 = vmatmul.bf16.gmra.mxu0 %v1774
      %v1846 = vpop.f32.mrf.mxu0
      %v1847 = vadd.f32 %v1735, %v1846
      %v1848 = vpop.f32.mrf.mxu0
      %v1849 = vadd.f32 %v1735, %v1848
      %1850 = vmatmul.bf16.gmra.mxu0 %v1777
      %v1851 = vpop.f32.mrf.mxu0
      %v1852 = vadd.f32 %v1735, %v1851
      %v1853 = vpop.f32.mrf.mxu0
      %v1854 = vadd.f32 %v1735, %v1853
      %1855 = vmatmul.bf16.gmra.mxu0 %v1780
      %v1856 = vpop.f32.mrf.mxu0
      %v1857 = vadd.f32 %v1735, %v1856
      %v1858 = vpop.f32.mrf.mxu0
      %v1859 = vadd.f32 %v1735, %v1858
      %1860 = vmatmul.bf16.gmra.mxu0 %v1783
      %v1861 = vpop.f32.mrf.mxu0
      %v1862 = vadd.f32 %v1735, %v1861
      %v1863 = vpop.f32.mrf.mxu0
      %v1864 = vadd.f32 %v1735, %v1863
      %1865 = vmatmul.bf16.gmra.mxu0 %v1786
      %v1866 = vpop.f32.mrf.mxu0
      %v1867 = vadd.f32 %v1735, %v1866
      %v1868 = vpop.f32.mrf.mxu0
      %v1869 = vadd.f32 %v1735, %v1868
      %1870 = vmatmul.bf16.gmra.mxu0 %v1789
      %v1871 = vpop.f32.mrf.mxu0
      %v1872 = vadd.f32 %v1735, %v1871
      %v1873 = vpop.f32.mrf.mxu0
      %v1874 = vadd.f32 %v1735, %v1873
      %1875 = vmatmul.bf16.gmra.mxu0 %v1792
      %v1876 = vpop.f32.mrf.mxu0
      %v1877 = vadd.f32 %v1735, %v1876
      %v1878 = vpop.f32.mrf.mxu0
      %v1879 = vadd.f32 %v1735, %v1878
      %1880 = vmatmul.bf16.gmra.mxu0 %v1795
      %v1881 = vpop.f32.mrf.mxu0
      %v1882 = vadd.f32 %v1735, %v1881
      %v1883 = vpop.f32.mrf.mxu0
      %v1884 = vadd.f32 %v1735, %v1883
      %1885 = vdwg.mxu0
      %v1886 = vxor.u32 %v1807, 2147483648
      %v1887 = vxor.u32 %v1809, 2147483648
      %v1888 = vxor.u32 %v1812, 2147483648
      %v1889 = vxor.u32 %v1814, 2147483648
      %v1890 = vxor.u32 %v1817, 2147483648
      %v1891 = vxor.u32 %v1819, 2147483648
      %v1892 = vxor.u32 %v1822, 2147483648
      %v1893 = vxor.u32 %v1824, 2147483648
      %v1894 = vxor.u32 %v1827, 2147483648
      %v1895 = vxor.u32 %v1829, 2147483648
      %v1896 = vxor.u32 %v1832, 2147483648
      %v1897 = vxor.u32 %v1834, 2147483648
      %v1898 = vxor.u32 %v1837, 2147483648
      %v1899 = vxor.u32 %v1839, 2147483648
      %v1900 = vxor.u32 %v1842, 2147483648
      %v1901 = vxor.u32 %v1844, 2147483648
      %v1902 = vxor.u32 %v1847, 2147483648
      %v1903 = vxor.u32 %v1849, 2147483648
      %v1904 = vxor.u32 %v1852, 2147483648
      %v1905 = vxor.u32 %v1854, 2147483648
      %v1906 = vxor.u32 %v1857, 2147483648
      %v1907 = vxor.u32 %v1859, 2147483648
      %v1908 = vxor.u32 %v1862, 2147483648
      %v1909 = vxor.u32 %v1864, 2147483648
      %v1910 = vxor.u32 %v1867, 2147483648
      %v1911 = vxor.u32 %v1869, 2147483648
      %v1912 = vxor.u32 %v1872, 2147483648
      %v1913 = vxor.u32 %v1874, 2147483648
      %v1914 = vxor.u32 %v1877, 2147483648
      %v1915 = vxor.u32 %v1879, 2147483648
      %v1916 = vxor.u32 %v1882, 2147483648
      %v1917 = vxor.u32 %v1884, 2147483648
      %v1918 = vmul.f32 %v1886, 1.442695
      %v1919 = vpow.pop %v1918
      %v1920 = vmul.f32 %v1887, 1.442695
      %v1921 = vpow.pop %v1920
      %v1922 = vmul.f32 %v1888, 1.442695
      %v1923 = vpow.pop %v1922
      %v1924 = vmul.f32 %v1889, 1.442695
      %v1925 = vpow.pop %v1924
      %v1926 = vmul.f32 %v1890, 1.442695
      %v1927 = vpow.pop %v1926
      %v1928 = vmul.f32 %v1891, 1.442695
      %v1929 = vpow.pop %v1928
      %v1930 = vmul.f32 %v1892, 1.442695
      %v1931 = vpow.pop %v1930
      %v1932 = vmul.f32 %v1893, 1.442695
      %v1933 = vpow.pop %v1932
      %v1934 = vmul.f32 %v1894, 1.442695
      %v1935 = vpow.pop %v1934
      %v1936 = vmul.f32 %v1895, 1.442695
      %v1937 = vpow.pop %v1936
      %v1938 = vmul.f32 %v1896, 1.442695
      %v1939 = vpow.pop %v1938
      %v1940 = vmul.f32 %v1897, 1.442695
      %v1941 = vpow.pop %v1940
      %v1942 = vmul.f32 %v1898, 1.442695
      %v1943 = vpow.pop %v1942
      %v1944 = vmul.f32 %v1899, 1.442695
      %v1945 = vpow.pop %v1944
      %v1946 = vmul.f32 %v1900, 1.442695
      %v1947 = vpow.pop %v1946
      %v1948 = vmul.f32 %v1901, 1.442695
      %v1949 = vpow.pop %v1948
      %v1950 = vmul.f32 %v1902, 1.442695
      %v1951 = vpow.pop %v1950
      %v1952 = vmul.f32 %v1903, 1.442695
      %v1953 = vpow.pop %v1952
      %v1954 = vmul.f32 %v1904, 1.442695
      %v1955 = vpow.pop %v1954
      %v1956 = vmul.f32 %v1905, 1.442695
      %v1957 = vpow.pop %v1956
      %v1958 = vmul.f32 %v1906, 1.442695
      %v1959 = vpow.pop %v1958
      %v1960 = vmul.f32 %v1907, 1.442695
      %v1961 = vpow.pop %v1960
      %v1962 = vmul.f32 %v1908, 1.442695
      %v1963 = vpow.pop %v1962
      %v1964 = vmul.f32 %v1909, 1.442695
      %v1965 = vpow.pop %v1964
      %v1966 = vmul.f32 %v1910, 1.442695
      %v1967 = vpow.pop %v1966
      %v1968 = vmul.f32 %v1911, 1.442695
      %v1969 = vpow.pop %v1968
      %v1970 = vmul.f32 %v1912, 1.442695
      %v1971 = vpow.pop %v1970
      %v1972 = vmul.f32 %v1913, 1.442695
      %v1973 = vpow.pop %v1972
      %v1974 = vmul.f32 %v1914, 1.442695
      %v1975 = vpow.pop %v1974
      %v1976 = vmul.f32 %v1915, 1.442695
      %v1977 = vpow.pop %v1976
      %v1978 = vmul.f32 %v1916, 1.442695
      %v1979 = vpow.pop %v1978
      %v1980 = vmul.f32 %v1917, 1.442695
      %v1981 = vpow.pop %v1980
      %v1982 = vadd.f32 %v1919, 1.0
      %v1983 = vadd.f32 %v1921, 1.0
      %v1984 = vadd.f32 %v1923, 1.0
      %v1985 = vadd.f32 %v1925, 1.0
      %v1986 = vadd.f32 %v1927, 1.0
      %v1987 = vadd.f32 %v1929, 1.0
      %v1988 = vadd.f32 %v1931, 1.0
      %v1989 = vadd.f32 %v1933, 1.0
      %v1990 = vadd.f32 %v1935, 1.0
      %v1991 = vadd.f32 %v1937, 1.0
      %v1992 = vadd.f32 %v1939, 1.0
      %v1993 = vadd.f32 %v1941, 1.0
      %v1994 = vadd.f32 %v1943, 1.0
      %v1995 = vadd.f32 %v1945, 1.0
      %v1996 = vadd.f32 %v1947, 1.0
      %v1997 = vadd.f32 %v1949, 1.0
      %v1998 = vadd.f32 %v1951, 1.0
      %v1999 = vadd.f32 %v1953, 1.0
      %v2000 = vadd.f32 %v1955, 1.0
      %v2001 = vadd.f32 %v1957, 1.0
      %v2002 = vadd.f32 %v1959, 1.0
      %v2003 = vadd.f32 %v1961, 1.0
      %v2004 = vadd.f32 %v1963, 1.0
      %v2005 = vadd.f32 %v1965, 1.0
      %v2006 = vadd.f32 %v1967, 1.0
      %v2007 = vadd.f32 %v1969, 1.0
      %v2008 = vadd.f32 %v1971, 1.0
      %v2009 = vadd.f32 %v1973, 1.0
      %v2010 = vadd.f32 %v1975, 1.0
      %v2011 = vadd.f32 %v1977, 1.0
      %v2012 = vadd.f32 %v1979, 1.0
      %v2013 = vadd.f32 %v1981, 1.0
      %v2014 = vrcp.pop %v1982
      %v2015 = vmul.f32 %v1982, %v2014
      %v2016 = vsub.f32 1.0, %v2015
      %v2017 = vmul.f32 %v2014, %v2016
      %v2018 = vadd.f32 %v2014, %v2017
      %vm2019 = vweird.f32 %v1982
      %vm2020 = vweird.f32 %v2014
      %vm2021 = vmor %vm2019, %vm2020
      %v2022 = vsel %vm2021, %v2014, %v2018
      %v2023 = vand.u32 2147483647, %v1982
      %vm2024 = vcmp.eq.f32.partialorder %v2023, 8.507059e+37
      %v2025 = vand.u32 %v1982, 2147483648
      %v2026 = vor.u32 1.1754944e-38, %v2025
      %v2027 = vsel %vm2024, %v2026, %v2022
      %v2028 = vmul.f32 1.0, %v2027
      %v2029 = vrcp.pop %v1983
      %v2030 = vmul.f32 %v1983, %v2029
      %v2031 = vsub.f32 1.0, %v2030
      %v2032 = vmul.f32 %v2029, %v2031
      %v2033 = vadd.f32 %v2029, %v2032
      %vm2034 = vweird.f32 %v1983
      %vm2035 = vweird.f32 %v2029
      %vm2036 = vmor %vm2034, %vm2035
      %v2037 = vsel %vm2036, %v2029, %v2033
      %v2038 = vand.u32 2147483647, %v1983
      %vm2039 = vcmp.eq.f32.partialorder %v2038, 8.507059e+37
      %v2040 = vand.u32 %v1983, 2147483648
      %v2041 = vor.u32 1.1754944e-38, %v2040
      %v2042 = vsel %vm2039, %v2041, %v2037
      %v2043 = vmul.f32 1.0, %v2042
      %v2044 = vrcp.pop %v1984
      %v2045 = vmul.f32 %v1984, %v2044
      %v2046 = vsub.f32 1.0, %v2045
      %v2047 = vmul.f32 %v2044, %v2046
      %v2048 = vadd.f32 %v2044, %v2047
      %vm2049 = vweird.f32 %v1984
      %vm2050 = vweird.f32 %v2044
      %vm2051 = vmor %vm2049, %vm2050
      %v2052 = vsel %vm2051, %v2044, %v2048
      %v2053 = vand.u32 2147483647, %v1984
      %vm2054 = vcmp.eq.f32.partialorder %v2053, 8.507059e+37
      %v2055 = vand.u32 %v1984, 2147483648
      %v2056 = vor.u32 1.1754944e-38, %v2055
      %v2057 = vsel %vm2054, %v2056, %v2052
      %v2058 = vmul.f32 1.0, %v2057
      %v2059 = vrcp.pop %v1985
      %v2060 = vmul.f32 %v1985, %v2059
      %v2061 = vsub.f32 1.0, %v2060
      %v2062 = vmul.f32 %v2059, %v2061
      %v2063 = vadd.f32 %v2059, %v2062
      %vm2064 = vweird.f32 %v1985
      %vm2065 = vweird.f32 %v2059
      %vm2066 = vmor %vm2064, %vm2065
      %v2067 = vsel %vm2066, %v2059, %v2063
      %v2068 = vand.u32 2147483647, %v1985
      %vm2069 = vcmp.eq.f32.partialorder %v2068, 8.507059e+37
      %v2070 = vand.u32 %v1985, 2147483648
      %v2071 = vor.u32 1.1754944e-38, %v2070
      %v2072 = vsel %vm2069, %v2071, %v2067
      %v2073 = vmul.f32 1.0, %v2072
      %v2074 = vrcp.pop %v1986
      %v2075 = vmul.f32 %v1986, %v2074
      %v2076 = vsub.f32 1.0, %v2075
      %v2077 = vmul.f32 %v2074, %v2076
      %v2078 = vadd.f32 %v2074, %v2077
      %vm2079 = vweird.f32 %v1986
      %vm2080 = vweird.f32 %v2074
      %vm2081 = vmor %vm2079, %vm2080
      %v2082 = vsel %vm2081, %v2074, %v2078
      %v2083 = vand.u32 2147483647, %v1986
      %vm2084 = vcmp.eq.f32.partialorder %v2083, 8.507059e+37
      %v2085 = vand.u32 %v1986, 2147483648
      %v2086 = vor.u32 1.1754944e-38, %v2085
      %v2087 = vsel %vm2084, %v2086, %v2082
      %v2088 = vmul.f32 1.0, %v2087
      %v2089 = vrcp.pop %v1987
      %v2090 = vmul.f32 %v1987, %v2089
      %v2091 = vsub.f32 1.0, %v2090
      %v2092 = vmul.f32 %v2089, %v2091
      %v2093 = vadd.f32 %v2089, %v2092
      %vm2094 = vweird.f32 %v1987
      %vm2095 = vweird.f32 %v2089
      %vm2096 = vmor %vm2094, %vm2095
      %v2097 = vsel %vm2096, %v2089, %v2093
      %v2098 = vand.u32 2147483647, %v1987
      %vm2099 = vcmp.eq.f32.partialorder %v2098, 8.507059e+37
      %v2100 = vand.u32 %v1987, 2147483648
      %v2101 = vor.u32 1.1754944e-38, %v2100
      %v2102 = vsel %vm2099, %v2101, %v2097
      %v2103 = vmul.f32 1.0, %v2102
      %v2104 = vrcp.pop %v1988
      %v2105 = vmul.f32 %v1988, %v2104
      %v2106 = vsub.f32 1.0, %v2105
      %v2107 = vmul.f32 %v2104, %v2106
      %v2108 = vadd.f32 %v2104, %v2107
      %vm2109 = vweird.f32 %v1988
      %vm2110 = vweird.f32 %v2104
      %vm2111 = vmor %vm2109, %vm2110
      %v2112 = vsel %vm2111, %v2104, %v2108
      %v2113 = vand.u32 2147483647, %v1988
      %vm2114 = vcmp.eq.f32.partialorder %v2113, 8.507059e+37
      %v2115 = vand.u32 %v1988, 2147483648
      %v2116 = vor.u32 1.1754944e-38, %v2115
      %v2117 = vsel %vm2114, %v2116, %v2112
      %v2118 = vmul.f32 1.0, %v2117
      %v2119 = vrcp.pop %v1989
      %v2120 = vmul.f32 %v1989, %v2119
      %v2121 = vsub.f32 1.0, %v2120
      %v2122 = vmul.f32 %v2119, %v2121
      %v2123 = vadd.f32 %v2119, %v2122
      %vm2124 = vweird.f32 %v1989
      %vm2125 = vweird.f32 %v2119
      %vm2126 = vmor %vm2124, %vm2125
      %v2127 = vsel %vm2126, %v2119, %v2123
      %v2128 = vand.u32 2147483647, %v1989
      %vm2129 = vcmp.eq.f32.partialorder %v2128, 8.507059e+37
      %v2130 = vand.u32 %v1989, 2147483648
      %v2131 = vor.u32 1.1754944e-38, %v2130
      %v2132 = vsel %vm2129, %v2131, %v2127
      %v2133 = vmul.f32 1.0, %v2132
      %v2134 = vrcp.pop %v1990
      %v2135 = vmul.f32 %v1990, %v2134
      %v2136 = vsub.f32 1.0, %v2135
      %v2137 = vmul.f32 %v2134, %v2136
      %v2138 = vadd.f32 %v2134, %v2137
      %vm2139 = vweird.f32 %v1990
      %vm2140 = vweird.f32 %v2134
      %vm2141 = vmor %vm2139, %vm2140
      %v2142 = vsel %vm2141, %v2134, %v2138
      %v2143 = vand.u32 2147483647, %v1990
      %vm2144 = vcmp.eq.f32.partialorder %v2143, 8.507059e+37
      %v2145 = vand.u32 %v1990, 2147483648
      %v2146 = vor.u32 1.1754944e-38, %v2145
      %v2147 = vsel %vm2144, %v2146, %v2142
      %v2148 = vmul.f32 1.0, %v2147
      %v2149 = vrcp.pop %v1991
      %v2150 = vmul.f32 %v1991, %v2149
      %v2151 = vsub.f32 1.0, %v2150
      %v2152 = vmul.f32 %v2149, %v2151
      %v2153 = vadd.f32 %v2149, %v2152
      %vm2154 = vweird.f32 %v1991
      %vm2155 = vweird.f32 %v2149
      %vm2156 = vmor %vm2154, %vm2155
      %v2157 = vsel %vm2156, %v2149, %v2153
      %v2158 = vand.u32 2147483647, %v1991
      %vm2159 = vcmp.eq.f32.partialorder %v2158, 8.507059e+37
      %v2160 = vand.u32 %v1991, 2147483648
      %v2161 = vor.u32 1.1754944e-38, %v2160
      %v2162 = vsel %vm2159, %v2161, %v2157
      %v2163 = vmul.f32 1.0, %v2162
      %v2164 = vrcp.pop %v1992
      %v2165 = vmul.f32 %v1992, %v2164
      %v2166 = vsub.f32 1.0, %v2165
      %v2167 = vmul.f32 %v2164, %v2166
      %v2168 = vadd.f32 %v2164, %v2167
      %vm2169 = vweird.f32 %v1992
      %vm2170 = vweird.f32 %v2164
      %vm2171 = vmor %vm2169, %vm2170
      %v2172 = vsel %vm2171, %v2164, %v2168
      %v2173 = vand.u32 2147483647, %v1992
      %vm2174 = vcmp.eq.f32.partialorder %v2173, 8.507059e+37
      %v2175 = vand.u32 %v1992, 2147483648
      %v2176 = vor.u32 1.1754944e-38, %v2175
      %v2177 = vsel %vm2174, %v2176, %v2172
      %v2178 = vmul.f32 1.0, %v2177
      %v2179 = vrcp.pop %v1993
      %v2180 = vmul.f32 %v1993, %v2179
      %v2181 = vsub.f32 1.0, %v2180
      %v2182 = vmul.f32 %v2179, %v2181
      %v2183 = vadd.f32 %v2179, %v2182
      %vm2184 = vweird.f32 %v1993
      %vm2185 = vweird.f32 %v2179
      %vm2186 = vmor %vm2184, %vm2185
      %v2187 = vsel %vm2186, %v2179, %v2183
      %v2188 = vand.u32 2147483647, %v1993
      %vm2189 = vcmp.eq.f32.partialorder %v2188, 8.507059e+37
      %v2190 = vand.u32 %v1993, 2147483648
      %v2191 = vor.u32 1.1754944e-38, %v2190
      %v2192 = vsel %vm2189, %v2191, %v2187
      %v2193 = vmul.f32 1.0, %v2192
      %v2194 = vrcp.pop %v1994
      %v2195 = vmul.f32 %v1994, %v2194
      %v2196 = vsub.f32 1.0, %v2195
      %v2197 = vmul.f32 %v2194, %v2196
      %v2198 = vadd.f32 %v2194, %v2197
      %vm2199 = vweird.f32 %v1994
      %vm2200 = vweird.f32 %v2194
      %vm2201 = vmor %vm2199, %vm2200
      %v2202 = vsel %vm2201, %v2194, %v2198
      %v2203 = vand.u32 2147483647, %v1994
      %vm2204 = vcmp.eq.f32.partialorder %v2203, 8.507059e+37
      %v2205 = vand.u32 %v1994, 2147483648
      %v2206 = vor.u32 1.1754944e-38, %v2205
      %v2207 = vsel %vm2204, %v2206, %v2202
      %v2208 = vmul.f32 1.0, %v2207
      %v2209 = vrcp.pop %v1995
      %v2210 = vmul.f32 %v1995, %v2209
      %v2211 = vsub.f32 1.0, %v2210
      %v2212 = vmul.f32 %v2209, %v2211
      %v2213 = vadd.f32 %v2209, %v2212
      %vm2214 = vweird.f32 %v1995
      %vm2215 = vweird.f32 %v2209
      %vm2216 = vmor %vm2214, %vm2215
      %v2217 = vsel %vm2216, %v2209, %v2213
      %v2218 = vand.u32 2147483647, %v1995
      %vm2219 = vcmp.eq.f32.partialorder %v2218, 8.507059e+37
      %v2220 = vand.u32 %v1995, 2147483648
      %v2221 = vor.u32 1.1754944e-38, %v2220
      %v2222 = vsel %vm2219, %v2221, %v2217
      %v2223 = vmul.f32 1.0, %v2222
      %v2224 = vrcp.pop %v1996
      %v2225 = vmul.f32 %v1996, %v2224
      %v2226 = vsub.f32 1.0, %v2225
      %v2227 = vmul.f32 %v2224, %v2226
      %v2228 = vadd.f32 %v2224, %v2227
      %vm2229 = vweird.f32 %v1996
      %vm2230 = vweird.f32 %v2224
      %vm2231 = vmor %vm2229, %vm2230
      %v2232 = vsel %vm2231, %v2224, %v2228
      %v2233 = vand.u32 2147483647, %v1996
      %vm2234 = vcmp.eq.f32.partialorder %v2233, 8.507059e+37
      %v2235 = vand.u32 %v1996, 2147483648
      %v2236 = vor.u32 1.1754944e-38, %v2235
      %v2237 = vsel %vm2234, %v2236, %v2232
      %v2238 = vmul.f32 1.0, %v2237
      %v2239 = vrcp.pop %v1997
      %v2240 = vmul.f32 %v1997, %v2239
      %v2241 = vsub.f32 1.0, %v2240
      %v2242 = vmul.f32 %v2239, %v2241
      %v2243 = vadd.f32 %v2239, %v2242
      %vm2244 = vweird.f32 %v1997
      %vm2245 = vweird.f32 %v2239
      %vm2246 = vmor %vm2244, %vm2245
      %v2247 = vsel %vm2246, %v2239, %v2243
      %v2248 = vand.u32 2147483647, %v1997
      %vm2249 = vcmp.eq.f32.partialorder %v2248, 8.507059e+37
      %v2250 = vand.u32 %v1997, 2147483648
      %v2251 = vor.u32 1.1754944e-38, %v2250
      %v2252 = vsel %vm2249, %v2251, %v2247
      %v2253 = vmul.f32 1.0, %v2252
      %v2254 = vrcp.pop %v1998
      %v2255 = vmul.f32 %v1998, %v2254
      %v2256 = vsub.f32 1.0, %v2255
      %v2257 = vmul.f32 %v2254, %v2256
      %v2258 = vadd.f32 %v2254, %v2257
      %vm2259 = vweird.f32 %v1998
      %vm2260 = vweird.f32 %v2254
      %vm2261 = vmor %vm2259, %vm2260
      %v2262 = vsel %vm2261, %v2254, %v2258
      %v2263 = vand.u32 2147483647, %v1998
      %vm2264 = vcmp.eq.f32.partialorder %v2263, 8.507059e+37
      %v2265 = vand.u32 %v1998, 2147483648
      %v2266 = vor.u32 1.1754944e-38, %v2265
      %v2267 = vsel %vm2264, %v2266, %v2262
      %v2268 = vmul.f32 1.0, %v2267
      %v2269 = vrcp.pop %v1999
      %v2270 = vmul.f32 %v1999, %v2269
      %v2271 = vsub.f32 1.0, %v2270
      %v2272 = vmul.f32 %v2269, %v2271
      %v2273 = vadd.f32 %v2269, %v2272
      %vm2274 = vweird.f32 %v1999
      %vm2275 = vweird.f32 %v2269
      %vm2276 = vmor %vm2274, %vm2275
      %v2277 = vsel %vm2276, %v2269, %v2273
      %v2278 = vand.u32 2147483647, %v1999
      %vm2279 = vcmp.eq.f32.partialorder %v2278, 8.507059e+37
      %v2280 = vand.u32 %v1999, 2147483648
      %v2281 = vor.u32 1.1754944e-38, %v2280
      %v2282 = vsel %vm2279, %v2281, %v2277
      %v2283 = vmul.f32 1.0, %v2282
      %v2284 = vrcp.pop %v2000
      %v2285 = vmul.f32 %v2000, %v2284
      %v2286 = vsub.f32 1.0, %v2285
      %v2287 = vmul.f32 %v2284, %v2286
      %v2288 = vadd.f32 %v2284, %v2287
      %vm2289 = vweird.f32 %v2000
      %vm2290 = vweird.f32 %v2284
      %vm2291 = vmor %vm2289, %vm2290
      %v2292 = vsel %vm2291, %v2284, %v2288
      %v2293 = vand.u32 2147483647, %v2000
      %vm2294 = vcmp.eq.f32.partialorder %v2293, 8.507059e+37
      %v2295 = vand.u32 %v2000, 2147483648
      %v2296 = vor.u32 1.1754944e-38, %v2295
      %v2297 = vsel %vm2294, %v2296, %v2292
      %v2298 = vmul.f32 1.0, %v2297
      %v2299 = vrcp.pop %v2001
      %v2300 = vmul.f32 %v2001, %v2299
      %v2301 = vsub.f32 1.0, %v2300
      %v2302 = vmul.f32 %v2299, %v2301
      %v2303 = vadd.f32 %v2299, %v2302
      %vm2304 = vweird.f32 %v2001
      %vm2305 = vweird.f32 %v2299
      %vm2306 = vmor %vm2304, %vm2305
      %v2307 = vsel %vm2306, %v2299, %v2303
      %v2308 = vand.u32 2147483647, %v2001
      %vm2309 = vcmp.eq.f32.partialorder %v2308, 8.507059e+37
      %v2310 = vand.u32 %v2001, 2147483648
      %v2311 = vor.u32 1.1754944e-38, %v2310
      %v2312 = vsel %vm2309, %v2311, %v2307
      %v2313 = vmul.f32 1.0, %v2312
      %v2314 = vrcp.pop %v2002
      %v2315 = vmul.f32 %v2002, %v2314
      %v2316 = vsub.f32 1.0, %v2315
      %v2317 = vmul.f32 %v2314, %v2316
      %v2318 = vadd.f32 %v2314, %v2317
      %vm2319 = vweird.f32 %v2002
      %vm2320 = vweird.f32 %v2314
      %vm2321 = vmor %vm2319, %vm2320
      %v2322 = vsel %vm2321, %v2314, %v2318
      %v2323 = vand.u32 2147483647, %v2002
      %vm2324 = vcmp.eq.f32.partialorder %v2323, 8.507059e+37
      %v2325 = vand.u32 %v2002, 2147483648
      %v2326 = vor.u32 1.1754944e-38, %v2325
      %v2327 = vsel %vm2324, %v2326, %v2322
      %v2328 = vmul.f32 1.0, %v2327
      %v2329 = vrcp.pop %v2003
      %v2330 = vmul.f32 %v2003, %v2329
      %v2331 = vsub.f32 1.0, %v2330
      %v2332 = vmul.f32 %v2329, %v2331
      %v2333 = vadd.f32 %v2329, %v2332
      %vm2334 = vweird.f32 %v2003
      %vm2335 = vweird.f32 %v2329
      %vm2336 = vmor %vm2334, %vm2335
      %v2337 = vsel %vm2336, %v2329, %v2333
      %v2338 = vand.u32 2147483647, %v2003
      %vm2339 = vcmp.eq.f32.partialorder %v2338, 8.507059e+37
      %v2340 = vand.u32 %v2003, 2147483648
      %v2341 = vor.u32 1.1754944e-38, %v2340
      %v2342 = vsel %vm2339, %v2341, %v2337
      %v2343 = vmul.f32 1.0, %v2342
      %v2344 = vrcp.pop %v2004
      %v2345 = vmul.f32 %v2004, %v2344
      %v2346 = vsub.f32 1.0, %v2345
      %v2347 = vmul.f32 %v2344, %v2346
      %v2348 = vadd.f32 %v2344, %v2347
      %vm2349 = vweird.f32 %v2004
      %vm2350 = vweird.f32 %v2344
      %vm2351 = vmor %vm2349, %vm2350
      %v2352 = vsel %vm2351, %v2344, %v2348
      %v2353 = vand.u32 2147483647, %v2004
      %vm2354 = vcmp.eq.f32.partialorder %v2353, 8.507059e+37
      %v2355 = vand.u32 %v2004, 2147483648
      %v2356 = vor.u32 1.1754944e-38, %v2355
      %v2357 = vsel %vm2354, %v2356, %v2352
      %v2358 = vmul.f32 1.0, %v2357
      %v2359 = vrcp.pop %v2005
      %v2360 = vmul.f32 %v2005, %v2359
      %v2361 = vsub.f32 1.0, %v2360
      %v2362 = vmul.f32 %v2359, %v2361
      %v2363 = vadd.f32 %v2359, %v2362
      %vm2364 = vweird.f32 %v2005
      %vm2365 = vweird.f32 %v2359
      %vm2366 = vmor %vm2364, %vm2365
      %v2367 = vsel %vm2366, %v2359, %v2363
      %v2368 = vand.u32 2147483647, %v2005
      %vm2369 = vcmp.eq.f32.partialorder %v2368, 8.507059e+37
      %v2370 = vand.u32 %v2005, 2147483648
      %v2371 = vor.u32 1.1754944e-38, %v2370
      %v2372 = vsel %vm2369, %v2371, %v2367
      %v2373 = vmul.f32 1.0, %v2372
      %v2374 = vrcp.pop %v2006
      %v2375 = vmul.f32 %v2006, %v2374
      %v2376 = vsub.f32 1.0, %v2375
      %v2377 = vmul.f32 %v2374, %v2376
      %v2378 = vadd.f32 %v2374, %v2377
      %vm2379 = vweird.f32 %v2006
      %vm2380 = vweird.f32 %v2374
      %vm2381 = vmor %vm2379, %vm2380
      %v2382 = vsel %vm2381, %v2374, %v2378
      %v2383 = vand.u32 2147483647, %v2006
      %vm2384 = vcmp.eq.f32.partialorder %v2383, 8.507059e+37
      %v2385 = vand.u32 %v2006, 2147483648
      %v2386 = vor.u32 1.1754944e-38, %v2385
      %v2387 = vsel %vm2384, %v2386, %v2382
      %v2388 = vmul.f32 1.0, %v2387
      %v2389 = vrcp.pop %v2007
      %v2390 = vmul.f32 %v2007, %v2389
      %v2391 = vsub.f32 1.0, %v2390
      %v2392 = vmul.f32 %v2389, %v2391
      %v2393 = vadd.f32 %v2389, %v2392
      %vm2394 = vweird.f32 %v2007
      %vm2395 = vweird.f32 %v2389
      %vm2396 = vmor %vm2394, %vm2395
      %v2397 = vsel %vm2396, %v2389, %v2393
      %v2398 = vand.u32 2147483647, %v2007
      %vm2399 = vcmp.eq.f32.partialorder %v2398, 8.507059e+37
      %v2400 = vand.u32 %v2007, 2147483648
      %v2401 = vor.u32 1.1754944e-38, %v2400
      %v2402 = vsel %vm2399, %v2401, %v2397
      %v2403 = vmul.f32 1.0, %v2402
      %v2404 = vrcp.pop %v2008
      %v2405 = vmul.f32 %v2008, %v2404
      %v2406 = vsub.f32 1.0, %v2405
      %v2407 = vmul.f32 %v2404, %v2406
      %v2408 = vadd.f32 %v2404, %v2407
      %vm2409 = vweird.f32 %v2008
      %vm2410 = vweird.f32 %v2404
      %vm2411 = vmor %vm2409, %vm2410
      %v2412 = vsel %vm2411, %v2404, %v2408
      %v2413 = vand.u32 2147483647, %v2008
      %vm2414 = vcmp.eq.f32.partialorder %v2413, 8.507059e+37
      %v2415 = vand.u32 %v2008, 2147483648
      %v2416 = vor.u32 1.1754944e-38, %v2415
      %v2417 = vsel %vm2414, %v2416, %v2412
      %v2418 = vmul.f32 1.0, %v2417
      %v2419 = vrcp.pop %v2009
      %v2420 = vmul.f32 %v2009, %v2419
      %v2421 = vsub.f32 1.0, %v2420
      %v2422 = vmul.f32 %v2419, %v2421
      %v2423 = vadd.f32 %v2419, %v2422
      %vm2424 = vweird.f32 %v2009
      %vm2425 = vweird.f32 %v2419
      %vm2426 = vmor %vm2424, %vm2425
      %v2427 = vsel %vm2426, %v2419, %v2423
      %v2428 = vand.u32 2147483647, %v2009
      %vm2429 = vcmp.eq.f32.partialorder %v2428, 8.507059e+37
      %v2430 = vand.u32 %v2009, 2147483648
      %v2431 = vor.u32 1.1754944e-38, %v2430
      %v2432 = vsel %vm2429, %v2431, %v2427
      %v2433 = vmul.f32 1.0, %v2432
      %v2434 = vrcp.pop %v2010
      %v2435 = vmul.f32 %v2010, %v2434
      %v2436 = vsub.f32 1.0, %v2435
      %v2437 = vmul.f32 %v2434, %v2436
      %v2438 = vadd.f32 %v2434, %v2437
      %vm2439 = vweird.f32 %v2010
      %vm2440 = vweird.f32 %v2434
      %vm2441 = vmor %vm2439, %vm2440
      %v2442 = vsel %vm2441, %v2434, %v2438
      %v2443 = vand.u32 2147483647, %v2010
      %vm2444 = vcmp.eq.f32.partialorder %v2443, 8.507059e+37
      %v2445 = vand.u32 %v2010, 2147483648
      %v2446 = vor.u32 1.1754944e-38, %v2445
      %v2447 = vsel %vm2444, %v2446, %v2442
      %v2448 = vmul.f32 1.0, %v2447
      %v2449 = vrcp.pop %v2011
      %v2450 = vmul.f32 %v2011, %v2449
      %v2451 = vsub.f32 1.0, %v2450
      %v2452 = vmul.f32 %v2449, %v2451
      %v2453 = vadd.f32 %v2449, %v2452
      %vm2454 = vweird.f32 %v2011
      %vm2455 = vweird.f32 %v2449
      %vm2456 = vmor %vm2454, %vm2455
      %v2457 = vsel %vm2456, %v2449, %v2453
      %v2458 = vand.u32 2147483647, %v2011
      %vm2459 = vcmp.eq.f32.partialorder %v2458, 8.507059e+37
      %v2460 = vand.u32 %v2011, 2147483648
      %v2461 = vor.u32 1.1754944e-38, %v2460
      %v2462 = vsel %vm2459, %v2461, %v2457
      %v2463 = vmul.f32 1.0, %v2462
      %v2464 = vrcp.pop %v2012
      %v2465 = vmul.f32 %v2012, %v2464
      %v2466 = vsub.f32 1.0, %v2465
      %v2467 = vmul.f32 %v2464, %v2466
      %v2468 = vadd.f32 %v2464, %v2467
      %vm2469 = vweird.f32 %v2012
      %vm2470 = vweird.f32 %v2464
      %vm2471 = vmor %vm2469, %vm2470
      %v2472 = vsel %vm2471, %v2464, %v2468
      %v2473 = vand.u32 2147483647, %v2012
      %vm2474 = vcmp.eq.f32.partialorder %v2473, 8.507059e+37
      %v2475 = vand.u32 %v2012, 2147483648
      %v2476 = vor.u32 1.1754944e-38, %v2475
      %v2477 = vsel %vm2474, %v2476, %v2472
      %v2478 = vmul.f32 1.0, %v2477
      %v2479 = vrcp.pop %v2013
      %v2480 = vmul.f32 %v2013, %v2479
      %v2481 = vsub.f32 1.0, %v2480
      %v2482 = vmul.f32 %v2479, %v2481
      %v2483 = vadd.f32 %v2479, %v2482
      %vm2484 = vweird.f32 %v2013
      %vm2485 = vweird.f32 %v2479
      %vm2486 = vmor %vm2484, %vm2485
      %v2487 = vsel %vm2486, %v2479, %v2483
      %v2488 = vand.u32 2147483647, %v2013
      %vm2489 = vcmp.eq.f32.partialorder %v2488, 8.507059e+37
      %v2490 = vand.u32 %v2013, 2147483648
      %v2491 = vor.u32 1.1754944e-38, %v2490
      %v2492 = vsel %vm2489, %v2491, %v2487
      %v2493 = vmul.f32 1.0, %v2492
      %vm2494 = vcmask 7168
      %2495 = vst.msk [vmem:[%s488] sm:$0xff] %vm2494, %v2028
      %2496 = vst.msk [vmem:[%s488 + $0x8] sm:$0xff] %vm2494, %v2043
      %2497 = vst.msk [vmem:[%s488 + $0x10] sm:$0xff] %vm2494, %v2058
      %2498 = vst.msk [vmem:[%s488 + $0x18] sm:$0xff] %vm2494, %v2073
      %2499 = vst.msk [vmem:[%s488 + $0x20] sm:$0xff] %vm2494, %v2088
      %2500 = vst.msk [vmem:[%s488 + $0x28] sm:$0xff] %vm2494, %v2103
      %2501 = vst.msk [vmem:[%s488 + $0x30] sm:$0xff] %vm2494, %v2118
      %2502 = vst.msk [vmem:[%s488 + $0x38] sm:$0xff] %vm2494, %v2133
      %2503 = vst.msk [vmem:[%s488 + $0x40] sm:$0xff] %vm2494, %v2148
      %2504 = vst.msk [vmem:[%s488 + $0x48] sm:$0xff] %vm2494, %v2163
      %2505 = vst.msk [vmem:[%s488 + $0x50] sm:$0xff] %vm2494, %v2178
      %2506 = vst.msk [vmem:[%s488 + $0x58] sm:$0xff] %vm2494, %v2193
      %2507 = vst.msk [vmem:[%s488 + $0x60] sm:$0xff] %vm2494, %v2208
      %2508 = vst.msk [vmem:[%s488 + $0x68] sm:$0xff] %vm2494, %v2223
      %2509 = vst.msk [vmem:[%s488 + $0x70] sm:$0xff] %vm2494, %v2238
      %2510 = vst.msk [vmem:[%s488 + $0x78] sm:$0xff] %vm2494, %v2253
      %2511 = vst.msk [vmem:[%s488 + $0x80] sm:$0xff] %vm2494, %v2268
      %2512 = vst.msk [vmem:[%s488 + $0x88] sm:$0xff] %vm2494, %v2283
      %2513 = vst.msk [vmem:[%s488 + $0x90] sm:$0xff] %vm2494, %v2298
      %2514 = vst.msk [vmem:[%s488 + $0x98] sm:$0xff] %vm2494, %v2313
      %2515 = vst.msk [vmem:[%s488 + $0xa0] sm:$0xff] %vm2494, %v2328
      %2516 = vst.msk [vmem:[%s488 + $0xa8] sm:$0xff] %vm2494, %v2343
      %2517 = vst.msk [vmem:[%s488 + $0xb0] sm:$0xff] %vm2494, %v2358
      %2518 = vst.msk [vmem:[%s488 + $0xb8] sm:$0xff] %vm2494, %v2373
      %2519 = vst.msk [vmem:[%s488 + $0xc0] sm:$0xff] %vm2494, %v2388
      %2520 = vst.msk [vmem:[%s488 + $0xc8] sm:$0xff] %vm2494, %v2403
      %2521 = vst.msk [vmem:[%s488 + $0xd0] sm:$0xff] %vm2494, %v2418
      %2522 = vst.msk [vmem:[%s488 + $0xd8] sm:$0xff] %vm2494, %v2433
      %2523 = vst.msk [vmem:[%s488 + $0xe0] sm:$0xff] %vm2494, %v2448
      %2524 = vst.msk [vmem:[%s488 + $0xe8] sm:$0xff] %vm2494, %v2463
      %2525 = vst.msk [vmem:[%s488 + $0xf0] sm:$0xff] %vm2494, %v2478
      %2526 = vst.msk [vmem:[%s488 + $0xf8] sm:$0xff] %vm2494, %v2493
      %s2527 = smul.u32 32, %s26
      %p2528 = scmp.lt.s32.totalorder %s2527, 63
      %s2529 = scalar_select %p2528, %s2527, 63
      %s2530 = smul.addr %s2529, 8
      %s2531 = scalar_lea.vmem %s13, %s2530
      // Predicated region
      $region73: #{custom_model_forward.9} parent=71 // pred_check
        %p2532 = pneg %p332
      $region74: #{custom_model_forward.9} parent=71 // pred_check_branch
        %2534 = sbr.rel (%p2532) target = $region76
      $region75: #{custom_model_forward.9} parent=71 // pred_region
        %s2535 = smul.u32 32, %s26
      $region76: #{custom_model_forward.9} parent=71 // pred_fallthru
        _
    $region72: #{custom_model_forward.9} parent=5 // pred_fallthru
      _
    %p2536 = scmp.le.s32.totalorder 2, %s21
    // Predicated region
    $region77: #{custom_model_forward.9} parent=5 // pred_check
      %p2537 = pneg %p2536
    $region78: #{custom_model_forward.9} parent=5 // pred_check_branch
      %2539 = sbr.rel (%p2537) target = $region80
    $region79: #{custom_model_forward.9} parent=5 // pred_region
      %s2540 = ssub.s32 %s21, 2
      // Predicated region
      $region81: #{custom_model_forward.9} parent=79 // pred_check
        %p2541 = pneg %p338
      $region82: #{custom_model_forward.9} parent=79 // pred_check_branch
        %2543 = sbr.rel (%p2541) target = $region84
      $region83: #{custom_model_forward.9} parent=79 // pred_region
        %s2544 = smul.u32 32, %s27
        %p2545 = scmp.lt.s32.totalorder %s2544, 63
        %s2546 = scalar_select %p2545, %s2544, 63
        %s2547 = smul.addr %s2546, 8
        %s2548 = scalar_lea.vmem %s13, %s2547
      $region84: #{custom_model_forward.9} parent=79 // pred_fallthru
        _
    $region80: #{custom_model_forward.9} parent=5 // pred_fallthru
      _
  $region6: #{custom_model_forward.9} parent=0 // loop_footer
    %s25 = sadd.s32 1, %s21
  $region7: #{custom_model_forward.9} parent=0 // loop_footer_branch
    %20 = sbr.rel target = $region3
  $region8: #{custom_model_forward.9} parent=0 // loop_exit
    _

</llo_original>
